<compile_context>
chip_gen: v5e
topology: v5e:2x2
jax: 0.10.0
libtpu: 0.0.40
codegen_flags: <defaults>
</compile_context>

<pallas_src>
import functools

import jax
import jax.numpy as jnp
from jax import lax
from jax.experimental import pallas as pl
from jax.experimental.pallas import tpu as pltpu


def _nbytes(*arrs):
    return sum(int(a.size) * a.dtype.itemsize for a in arrs)


def _vmem_limit_bytes(working_set_bytes):
    # double-buffered blocks + scratch + headroom; clamp to [32 MiB, 64 MiB] so the limit is
    # valid on every generation (v7x physical VMEM is 64 MiB).
    return int(min(max(2 * working_set_bytes + (4 << 20), 32 << 20), 64 << 20))


# --------------------- fused bidirectional multi-layer LSTM ---------------------
def _bilstm_stack_kernel(x_ref, *refs, h, num_layers, seq_len, bc):
    """Whole multi-layer bidirectional LSTM for one batch chunk, in a single kernel.

    Packed per-layer weights (prepared at init time):
      wih : (in_dim, 8h) bf16, columns interleaved per gate [i_f,i_b,f_f,f_b,g_f,g_b,o_f,o_b]
      whh : (2h, 8h) f32, block-diagonal (rows = [h_fwd ; h_bwd]) matching that layout
      b   : (1, 8h) f32, b_ih + b_hh in the same column layout
    Sequence slabs are (T, Bc, feature), Bc a multiple of 8 (sublane-aligned).
    NOTE: whole-sequence slabs are VMEM-resident per batch chunk; for long sequences the
    input projection should be computed in time chunks (or streamed) to fit v7x's 64 MiB.
    The fused block-diagonal recurrent matmul is only used because 8h <= 128 here; at
    h >= 128 it should be split into two dense per-direction matmuls.
    """
    n_w = 3 * num_layers
    w_refs = refs[:n_w]
    out_ref = refs[n_w]
    gin_sc, act_sc, fwd_sc, bwd_sc, hc_sc, cc_sc = refs[n_w + 1:n_w + 7]

    # Hoisted constants: forward-direction gate columns (period 2h) and forward half of 2h.
    is_fwd_col = (lax.broadcasted_iota(jnp.int32, (1, 8 * h), 1) % (2 * h)) < h
    is_fwd_half = lax.broadcasted_iota(jnp.int32, (1, 1, 2 * h), 2) < h

    for layer in range(num_layers):
        wih_ref = w_refs[3 * layer]
        whh_ref = w_refs[3 * layer + 1]
        b_ref = w_refs[3 * layer + 2]
        src_ref = x_ref if layer == 0 else act_sc
        dst_ref = out_ref if layer == num_layers - 1 else act_sc
        in_dim = src_ref.shape[-1]

        # Hoisted input projection: one big bf16 MXU matmul per layer (f32 accumulate)
        # instead of 2*T tiny matmuls on the serial critical path.
        src2d = src_ref[...].reshape(seq_len * bc, in_dim).astype(jnp.bfloat16)
        gin = jnp.dot(src2d, wih_ref[...], preferred_element_type=jnp.float32) + b_ref[...]
        gin_sc[...] = gin.reshape(seq_len, bc, 8 * h)

        whh = whh_ref[...]                    # loop-invariant recurrent weights (f32)
        hc_sc[...] = jnp.zeros_like(hc_sc)    # [h_fwd | h_bwd]
        cc_sc[...] = jnp.zeros_like(cc_sc)    # [c_fwd | c_bwd]

        def step(s, carry):
            # forward direction consumes time s, backward consumes time T-1-s
            g_in = jnp.where(is_fwd_col, gin_sc[s], gin_sc[seq_len - 1 - s])
            # one lane-dense (Bc,2h)x(2h,8h) block-diagonal recurrent matmul for both dirs
            gates = g_in + jnp.dot(hc_sc[...], whh, preferred_element_type=jnp.float32)
            i_g = jax.nn.sigmoid(gates[:, 0:2 * h])
            f_g = jax.nn.sigmoid(gates[:, 2 * h:4 * h])
            g_g = jnp.tanh(gates[:, 4 * h:6 * h])
            o_g = jax.nn.sigmoid(gates[:, 6 * h:8 * h])
            c_new = f_g * cc_sc[...] + i_g * g_g
            h_new = o_g * jnp.tanh(c_new)
            cc_sc[...] = c_new
            hc_sc[...] = h_new
            # full-row, sublane-aligned stores into per-direction slabs (no column stripes)
            fwd_sc[s] = h_new
            bwd_sc[seq_len - 1 - s] = h_new
            return carry

        lax.fori_loop(0, seq_len, step, 0, unroll=True)

        # single lane-select merge per layer: fwd half from fwd slab, bwd half from bwd slab
        dst_ref[...] = jnp.where(is_fwd_half, fwd_sc[...], bwd_sc[...])


def bilstm_stack(x, lstm_params, *, seq_len, bp, bc, h, num_layers):
    flat = []
    in_specs = [pl.BlockSpec((seq_len, bc, int(x.shape[-1])), lambda i: (0, i, 0))]
    for lp in lstm_params:
        for name in ('wih', 'whh', 'b'):
            w = lp[name]
            flat.append(w)
            in_specs.append(pl.BlockSpec(tuple(int(d) for d in w.shape), lambda i: (0, 0)))
    blk = seq_len * bc
    ws = (_nbytes(*flat)
          + 4 * blk * (int(x.shape[-1]) + 2 * h)      # x block + out block
          + 4 * blk * (8 * h + 3 * 2 * h)             # gin + act + fwd + bwd scratch
          + 4 * bc * 4 * h)                           # h/c state
    return pl.pallas_call(
        functools.partial(_bilstm_stack_kernel, h=h, num_layers=num_layers,
                          seq_len=seq_len, bc=bc),
        grid=(bp // bc,),
        out_shape=jax.ShapeDtypeStruct((seq_len, bp, 2 * h), jnp.float32),
        in_specs=in_specs,
        out_specs=pl.BlockSpec((seq_len, bc, 2 * h), lambda i: (0, i, 0)),
        scratch_shapes=[pltpu.VMEM((seq_len, bc, 8 * h), jnp.float32),   # gate inputs
                        pltpu.VMEM((seq_len, bc, 2 * h), jnp.float32),   # inter-layer acts
                        pltpu.VMEM((seq_len, bc, 2 * h), jnp.float32),   # fwd-direction slab
                        pltpu.VMEM((seq_len, bc, 2 * h), jnp.float32),   # bwd-direction slab
                        pltpu.VMEM((bc, 2 * h), jnp.float32),            # h state
                        pltpu.VMEM((bc, 2 * h), jnp.float32)],           # c state
        compiler_params=pltpu.CompilerParams(
            dimension_semantics=("parallel",),
            vmem_limit_bytes=_vmem_limit_bytes(ws)),
    )(x, *flat)


# --------- fused classifier + CRF (Viterbi + log-partition + gold-path score) ---------
def _cls_crf_kernel(feat_ref, w_ref, b_ref, vl_ref, lab_ref, st_ref, et_ref, tr_ref, trt_ref,
                    score_ref, hist_ref, logz_ref, numer_ref,
                    em_sc, v_sc, n_sc, *, seq_len, bc, ntags, hidden):
    # Classifier fused in: emissions for all timesteps in one bf16 MXU matmul; they stay in
    # VMEM (em_sc) and are never written back to HBM.
    feats2d = feat_ref[...].reshape(seq_len * bc, hidden).astype(jnp.bfloat16)
    em = jnp.dot(feats2d, w_ref[...], preferred_element_type=jnp.float32) + b_ref[...]
    em_sc[...] = em.reshape(seq_len, bc, ntags)

    trt = trt_ref[...]        # (K, K) transposed transitions, hoisted
    trn = tr_ref[...]         # (K, K) transitions, hoisted
    endr = et_ref[...]        # (1, K), hoisted
    startr = st_ref[...]      # (1, K), hoisted
    vl = vl_ref[...]          # (Bc, 1) int32 valid lengths
    ii = lax.broadcasted_iota(jnp.int32, (bc, ntags, ntags), 2)    # hoisted
    lane_k = lax.broadcasted_iota(jnp.int32, (bc, ntags), 1)       # hoisted

    em0 = em_sc[0]
    init = startr + em0
    v_sc[...] = init                                   # Viterbi scores
    n_sc[...] = init                                   # log-sum-exp scores
    hist_ref[0] = jnp.zeros((bc, ntags), jnp.int32)    # slot 0 never read by backtrack

    lab0 = lab_ref[0]                                  # (Bc, 1) int32
    oh0 = (lane_k == lab0).astype(jnp.float32)         # one-hot of gold tag at t=0
    num0 = jnp.sum(init * oh0, axis=-1, keepdims=True)

    def step(t, carry):
        num, oh_prev = carry
        em_t = em_sc[t]                                # (Bc, K) aligned tile load
        m_t = t < vl                                   # (Bc, 1) bool
        # Viterbi max-plus: bro[b, j, i] = score[b, i] + trans[i, j]
        bro = v_sc[...][:, None, :] + trt[None, :, :]
        best = jnp.max(bro, axis=-1)
        idx = jnp.min(jnp.where(bro >= best[:, :, None], ii, ntags), axis=-1)
        v_sc[...] = jnp.where(m_t, best + em_t, v_sc[...])
        hist_ref[t] = idx
        # CRF log-partition recursion (shares em_t / mask / hoisted trt)
        bro_n = n_sc[...][:, None, :] + trt[None, :, :] + em_t[:, :, None]
        mx = jnp.max(bro_n, axis=-1)
        lse = mx + jnp.log(jnp.sum(jnp.exp(bro_n - mx[:, :, None]), axis=-1))
        n_sc[...] = jnp.where(m_t, lse, n_sc[...])
        # Gold-path numerator via one-hot selects (labels VMEM-resident, no HBM roundtrip)
        oh_t = (lane_k == lab_ref[t]).astype(jnp.float32)
        tr_col = jnp.sum(trn[None, :, :] * oh_t[:, None, :], axis=-1)    # trans[:, lab_t]
        t_sel = jnp.sum(tr_col * oh_prev, axis=-1, keepdims=True)        # trans[lab_{t-1}, lab_t]
        e_sel = jnp.sum(em_t * oh_t, axis=-1, keepdims=True)
        num = num + (t_sel + e_sel) * m_t.astype(jnp.float32)
        oh_prev = jnp.where(m_t, oh_t, oh_prev)        # one-hot of last *valid* gold tag
        return num, oh_prev

    num, oh_last = lax.fori_loop(1, seq_len, step, (num0, oh0), unroll=True)

    score_ref[...] = v_sc[...] + endr
    fin = n_sc[...] + endr
    fm = jnp.max(fin, axis=-1, keepdims=True)
    logz_ref[...] = fm + jnp.log(jnp.sum(jnp.exp(fin - fm), axis=-1, keepdims=True))
    numer_ref[...] = num + jnp.sum(endr * oh_last, axis=-1, keepdims=True)


def classifier_crf(feats, cls_w_t, cls_b, vl, labels_tm, start_row, end_row, trans, trans_t,
                   *, seq_len, bp, bc, ntags, hidden):
    blk = seq_len * bc
    ws = (_nbytes(cls_w_t, cls_b, start_row, end_row, trans, trans_t)
          + 4 * blk * (hidden + 1 + 2 * ntags)          # feats + labels + hist + em scratch
          + 4 * bc * (3 * ntags + 4))                   # score, v, n, vl, logz, numer
    return pl.pallas_call(
        functools.partial(_cls_crf_kernel, seq_len=seq_len, bc=bc, ntags=ntags, hidden=hidden),
        grid=(bp // bc,),
        out_shape=(jax.ShapeDtypeStruct((bp, ntags), jnp.float32),           # viterbi score
                   jax.ShapeDtypeStruct((seq_len, bp, ntags), jnp.int32),    # backpointers
                   jax.ShapeDtypeStruct((bp, 1), jnp.float32),               # log Z
                   jax.ShapeDtypeStruct((bp, 1), jnp.float32)),              # gold-path score
        in_specs=[pl.BlockSpec((seq_len, bc, hidden), lambda i: (0, i, 0)),
                  pl.BlockSpec((hidden, ntags), lambda i: (0, 0)),
                  pl.BlockSpec((1, ntags), lambda i: (0, 0)),
                  pl.BlockSpec((bc, 1), lambda i: (i, 0)),
                  pl.BlockSpec((seq_len, bc, 1), lambda i: (0, i, 0)),
                  pl.BlockSpec((1, ntags), lambda i: (0, 0)),
                  pl.BlockSpec((1, ntags), lambda i: (0, 0)),
                  pl.BlockSpec((ntags, ntags), lambda i: (0, 0)),
                  pl.BlockSpec((ntags, ntags), lambda i: (0, 0))],
        out_specs=(pl.BlockSpec((bc, ntags), lambda i: (i, 0)),
                   pl.BlockSpec((seq_len, bc, ntags), lambda i: (0, i, 0)),
                   pl.BlockSpec((bc, 1), lambda i: (i, 0)),
                   pl.BlockSpec((bc, 1), lambda i: (i, 0))),
        scratch_shapes=[pltpu.VMEM((seq_len, bc, ntags), jnp.float32),   # emissions (VMEM only)
                        pltpu.VMEM((bc, ntags), jnp.float32),            # viterbi state
                        pltpu.VMEM((bc, ntags), jnp.float32)],           # lse state
        compiler_params=pltpu.CompilerParams(
            dimension_semantics=("parallel",),
            vmem_limit_bytes=_vmem_limit_bytes(ws)),
    )(feats, cls_w_t, cls_b, vl, labels_tm, start_row, end_row, trans, trans_t)


# --------------------------------- JAX glue pieces ---------------------------------
def _viterbi_backtrack(final_score, history, valid_lens):
    """final_score: (B,K), history: (T,B,K), valid_lens: (B,) -> (B,T) int32, 0-padded."""
    # TODO(synk): the reverse per-sequence scalar walk stays in JAX glue (tiny, data-dependent).
    seq_len = history.shape[0]

    def one(score_b, hist_b, length):
        seq_end = length.astype(jnp.int32) - 1
        cur = jnp.argmax(score_b).astype(jnp.int32)
        tags = jnp.zeros((seq_len,), jnp.int32)
        tags = tags.at[seq_end].set(cur)

        def body(i, carry):
            tags_c, cur_c = carry
            t = seq_len - 1 - i                      # t from T-1 down to 1
            valid = t <= seq_end
            prev = hist_b[t, cur_c]
            new_cur = jnp.where(valid, prev, cur_c)
            tags_n = jnp.where(valid, tags_c.at[t - 1].set(new_cur), tags_c)
            return tags_n, new_cur

        tags, _ = lax.fori_loop(0, seq_len - 1, body, (tags, cur))
        return tags

    return jax.vmap(one, in_axes=(0, 1, 0))(final_score, history, valid_lens)


# ----------------------------------- Parameters -----------------------------------
def _interleave_gate_cols(w_f, w_b, h):
    """(rows,4h) x2 -> (rows,8h) with columns [i_f,i_b,f_f,f_b,g_f,g_b,o_f,o_b]."""
    blocks = []
    for g in range(4):
        blocks.append(w_f[:, g * h:(g + 1) * h])
        blocks.append(w_b[:, g * h:(g + 1) * h])
    return jnp.concatenate(blocks, axis=1)


def _pack_whh_blockdiag(u_f, u_b, h):
    """(h,4h) x2 -> (2h,8h) block-diagonal matching the interleaved gate columns."""
    z = jnp.zeros((h, h), jnp.float32)
    cols = []
    for g in range(4):
        cols.append(jnp.concatenate([u_f[:, g * h:(g + 1) * h], z], axis=0))
        cols.append(jnp.concatenate([z, u_b[:, g * h:(g + 1) * h]], axis=0))
    return jnp.concatenate(cols, axis=1)


def init_params(key, vocab_size, tag_size, embedding_dim, hidden_dim, num_layers):
    h = hidden_dim // 2
    kiter = iter(jax.random.split(key, 6 + num_layers * 8))
    params = {}
    params['embedding'] = jax.random.normal(next(kiter), (vocab_size, embedding_dim),
                                            jnp.float32)
    bc = 1.0 / float(hidden_dim) ** 0.5
    params['cls_w_t'] = jax.random.uniform(next(kiter), (hidden_dim, tag_size),
                                           jnp.float32, -bc, bc).astype(jnp.bfloat16)
    params['cls_b'] = jax.random.uniform(next(kiter), (1, tag_size), jnp.float32, -bc, bc)
    params['crf_start'] = jax.random.uniform(next(kiter), (tag_size,), jnp.float32, -0.1, 0.1)
    params['crf_end'] = jax.random.uniform(next(kiter), (tag_size,), jnp.float32, -0.1, 0.1)
    params['crf_trans'] = jax.random.uniform(next(kiter), (tag_size, tag_size),
                                             jnp.float32, -0.1, 0.1)
    bl = 1.0 / float(h) ** 0.5
    layers = []
    for layer in range(num_layers):
        in_dim = embedding_dim if layer == 0 else hidden_dim
        per_dir = []
        for _ in range(2):                              # fwd, bwd (PyTorch-style init)
            w_ih_t = jax.random.uniform(next(kiter), (in_dim, 4 * h), jnp.float32, -bl, bl)
            w_hh_t = jax.random.uniform(next(kiter), (h, 4 * h), jnp.float32, -bl, bl)
            b_ih = jax.random.uniform(next(kiter), (1, 4 * h), jnp.float32, -bl, bl)
            b_hh = jax.random.uniform(next(kiter), (1, 4 * h), jnp.float32, -bl, bl)
            per_dir.append((w_ih_t, w_hh_t, b_ih + b_hh))
        (wf, uf, bf), (wb, ub, bb) = per_dir
        layers.append({'wih': _interleave_gate_cols(wf, wb, h).astype(jnp.bfloat16),
                       'whh': _pack_whh_blockdiag(uf, ub, h),
                       'b': _interleave_gate_cols(bf, bb, h)})
    params['lstm'] = layers
    return params


# ------------------------------------- Forward -------------------------------------
def ner_forward(params, input_ids, valid_lens, labels=None,
                *, hidden_dim, num_layers, tag_size):
    batch, seq_len = input_ids.shape
    h = hidden_dim // 2
    bc = 8                                    # f32 sublane count: batch chunk per grid step
    bp = ((batch + bc - 1) // bc) * bc        # batch padded to a sublane multiple

    ids = jnp.zeros((bp, seq_len), jnp.int32).at[:batch].set(input_ids.astype(jnp.int32))
    # Embedding gathered directly in time-major order (no float transpose pass afterwards).
    x = jnp.take(params['embedding'], ids.T.reshape(-1), axis=0)
    x = x.reshape(seq_len, bp, -1).astype(jnp.float32)

    # Entire bidirectional LSTM stack: one Pallas kernel, batch-chunk parallel grid.
    feats = bilstm_stack(x, params['lstm'], seq_len=seq_len, bp=bp, bc=bc,
                         h=h, num_layers=num_layers)          # (T, Bp, hidden_dim)
    # TODO(synk): inter-layer LSTM dropout and post-LSTM nn.Dropout are identity (eval mode).

    vl = jnp.ones((bp,), jnp.int32).at[:batch].set(valid_lens.astype(jnp.int32)).reshape(bp, 1)
    if labels is not None:
        lab = jnp.zeros((bp, seq_len), jnp.int32).at[:batch].set(labels.astype(jnp.int32))
    else:
        lab = jnp.zeros((bp, seq_len), jnp.int32)
    lab_tm = lab.T.reshape(seq_len, bp, 1)

    # Classifier + CRF Viterbi forward + log-partition + gold-path score: one fused kernel.
    score, hist, logz, numer = classifier_crf(
        feats, params['cls_w_t'], params['cls_b'], vl, lab_tm,
        params['crf_start'][None, :], params['crf_end'][None, :],
        params['crf_trans'], params['crf_trans'].T,
        seq_len=seq_len, bp=bp, bc=bc, ntags=tag_size, hidden=hidden_dim)

    # (B, T) int32; positions >= valid_lens[b] are 0-padded (PyTorch returns ragged lists).
    tag_ids = _viterbi_backtrack(score[:batch], hist[:, :batch], valid_lens)

    loss = None
    if labels is not None:
        loss = -jnp.mean(numer[:batch, 0] - logz[:batch, 0])   # reduction='mean', negated
    return tag_ids, loss


# --------------------------------------- Main ---------------------------------------
if __name__ == "__main__":
    vocab_size = 50
    tag_size = 8
    embedding_dim = 32
    hidden_dim = 32          # h = 16 -> 8h = 128 lane-dense gate matmuls
    num_layers = 2
    batch, seq_len = 2, 8

    key = jax.random.PRNGKey(0)
    k_par, k_ids, k_lab = jax.random.split(key, 3)
    params = init_params(k_par, vocab_size, tag_size, embedding_dim, hidden_dim, num_layers)

    input_ids = jax.random.randint(k_ids, (batch, seq_len), 0, vocab_size, jnp.int32)
    valid_lens = jnp.array([8, 5], jnp.int32)
    labels = jax.random.randint(k_lab, (batch, seq_len), 0, tag_size, jnp.int32)

    fwd = jax.jit(functools.partial(ner_forward, hidden_dim=hidden_dim,
                                    num_layers=num_layers, tag_size=tag_size))
    tag_ids, loss = fwd(params, input_ids, valid_lens, labels)
    jax.block_until_ready((tag_ids, loss))
    print("KERNEL_OK")
</pallas_src>

<mosaic_0001>
module attributes {stable_mosaic.version = 11 : i64} {
  func.func @_bilstm_stack_kernel(%arg0: i32, %arg1: memref<8x8x32xf32, #tpu.memory_space<vmem>>, %arg2: memref<32x128xbf16, #tpu.memory_space<vmem>>, %arg3: memref<32x128xf32, #tpu.memory_space<vmem>>, %arg4: memref<1x128xf32, #tpu.memory_space<vmem>>, %arg5: memref<32x128xbf16, #tpu.memory_space<vmem>>, %arg6: memref<32x128xf32, #tpu.memory_space<vmem>>, %arg7: memref<1x128xf32, #tpu.memory_space<vmem>>, %arg8: memref<8x8x32xf32, #tpu.memory_space<vmem>>, %arg9: memref<8x8x128xf32, #tpu.memory_space<vmem>>, %arg10: memref<8x8x32xf32, #tpu.memory_space<vmem>>, %arg11: memref<8x8x32xf32, #tpu.memory_space<vmem>>, %arg12: memref<8x8x32xf32, #tpu.memory_space<vmem>>, %arg13: memref<8x32xf32, #tpu.memory_space<vmem>>, %arg14: memref<8x32xf32, #tpu.memory_space<vmem>>) attributes {dimension_semantics = [#tpu.dimension_semantics<parallel>], iteration_bounds = array<i64: 1>, scalar_prefetch = 0 : i64, scratch_operands = 6 : i64, tpu.core_type = #tpu.core_type<tc>, window_params = [{transform_indices = @transform_0, window_bounds = array<i64: 8, 8, 32>}, {pipeline_mode = #tpu.pipeline_mode<synchronous>, transform_indices = @transform_1, window_bounds = array<i64: 32, 128>}, {pipeline_mode = #tpu.pipeline_mode<synchronous>, transform_indices = @transform_2, window_bounds = array<i64: 32, 128>}, {pipeline_mode = #tpu.pipeline_mode<synchronous>, transform_indices = @transform_3, window_bounds = array<i64: 1, 128>}, {pipeline_mode = #tpu.pipeline_mode<synchronous>, transform_indices = @transform_4, window_bounds = array<i64: 32, 128>}, {pipeline_mode = #tpu.pipeline_mode<synchronous>, transform_indices = @transform_5, window_bounds = array<i64: 32, 128>}, {pipeline_mode = #tpu.pipeline_mode<synchronous>, transform_indices = @transform_6, window_bounds = array<i64: 1, 128>}, {transform_indices = @transform_7, window_bounds = array<i64: 8, 8, 32>}]} {
    %0 = tpu.iota {dimensions = array<i32: 1>} : vector<1x128xi32>
    %c32_i32 = arith.constant 32 : i32
    %c0_i32 = arith.constant 0 : i32
    %1 = arith.cmpi eq, %c32_i32, %c0_i32 : i32
    %c1_i32 = arith.constant 1 : i32
    %2 = arith.select %1, %c1_i32, %c32_i32 : i32
    %3 = vector.broadcast %2 : i32 to vector<1x128xi32>
    %4 = arith.remsi %0, %3 : vector<1x128xi32>
    %c0_i32_0 = arith.constant 0 : i32
    %5 = vector.broadcast %c0_i32_0 : i32 to vector<1x128xi32>
    %6 = arith.cmpi ne, %4, %5 : vector<1x128xi32>
    %c0_i32_1 = arith.constant 0 : i32
    %7 = vector.broadcast %c0_i32_1 : i32 to vector<1x128xi32>
    %8 = arith.cmpi slt, %4, %7 : vector<1x128xi32>
    %c0_i32_2 = arith.constant 0 : i32
    %9 = arith.cmpi slt, %2, %c0_i32_2 : i32
    %10 = vector.broadcast %9 : i1 to vector<1x128xi1>
    %11 = vector.broadcast %10 : vector<1x128xi1> to vector<1x128xi1>
    %12 = arith.xori %8, %11 : vector<1x128xi1>
    %13 = arith.andi %12, %6 : vector<1x128xi1>
    %14 = vector.broadcast %2 : i32 to vector<1x128xi32>
    %15 = arith.addi %4, %14 : vector<1x128xi32>
    %16 = arith.select %13, %15, %4 : vector<1x128xi1>, vector<1x128xi32>
    %c16_i32 = arith.constant 16 : i32
    %17 = vector.broadcast %c16_i32 : i32 to vector<1x128xi32>
    %18 = arith.cmpi slt, %16, %17 : vector<1x128xi32>
    %19 = tpu.iota {dimensions = array<i32: 2>} : vector<1x1x32xi32>
    %c16_i32_3 = arith.constant 16 : i32
    %20 = vector.broadcast %c16_i32_3 : i32 to vector<1x1x32xi32>
    %21 = arith.cmpi slt, %19, %20 : vector<1x1x32xi32>
    %c0 = arith.constant 0 : index
    %c0_4 = arith.constant 0 : index
    %c0_5 = arith.constant 0 : index
    %22 = vector.load %arg1[%c0, %c0_4, %c0_5] : memref<8x8x32xf32, #tpu.memory_space<vmem>>, vector<8x8x32xf32>
    %23 = vector.shape_cast %22 : vector<8x8x32xf32> to vector<64x32xf32>
    %24 = arith.truncf %23 : vector<64x32xf32> to vector<64x32xbf16>
    %c0_6 = arith.constant 0 : index
    %c0_7 = arith.constant 0 : index
    %25 = vector.load %arg2[%c0_6, %c0_7] : memref<32x128xbf16, #tpu.memory_space<vmem>>, vector<32x128xbf16>
    %cst = arith.constant dense<0.000000e+00> : vector<64x128xf32>
    %26 = tpu.matmul %24, %25, %cst {dimension_numbers = #tpu.dot_dimension_numbers<[1], [0], [0], [1], [0, 0, 1, 1], [], []>} : vector<64x32xbf16>, vector<32x128xbf16>, vector<64x128xf32> -> vector<64x128xf32>
    %c0_8 = arith.constant 0 : index
    %c0_9 = arith.constant 0 : index
    %27 = vector.load %arg4[%c0_8, %c0_9] : memref<1x128xf32, #tpu.memory_space<vmem>>, vector<1x128xf32>
    %28 = vector.broadcast %27 : vector<1x128xf32> to vector<64x128xf32>
    %29 = arith.addf %26, %28 : vector<64x128xf32>
    %30 = vector.shape_cast %29 : vector<64x128xf32> to vector<8x8x128xf32>
    %c0_10 = arith.constant 0 : index
    %c0_11 = arith.constant 0 : index
    %c0_12 = arith.constant 0 : index
    %31 = vector.load %arg9[%c0_10, %c0_11, %c0_12] : memref<8x8x128xf32, #tpu.memory_space<vmem>>, vector<8x8x128xf32>
    tpu.vector_store %arg9[%c0_10, %c0_11, %c0_12], %30 {strides = array<i32>} : memref<8x8x128xf32, #tpu.memory_space<vmem>>, vector<8x8x128xf32>,
    %c0_13 = arith.constant 0 : index
    %c0_14 = arith.constant 0 : index
    %32 = vector.load %arg3[%c0_13, %c0_14] : memref<32x128xf32, #tpu.memory_space<vmem>>, vector<32x128xf32>
    %cst_15 = arith.constant 0.000000e+00 : f32
    %33 = vector.broadcast %cst_15 : f32 to vector<8x32xf32>
    %c0_16 = arith.constant 0 : index
    %c0_17 = arith.constant 0 : index
    %34 = vector.load %arg13[%c0_16, %c0_17] : memref<8x32xf32, #tpu.memory_space<vmem>>, vector<8x32xf32>
    tpu.vector_store %arg13[%c0_16, %c0_17], %33 {strides = array<i32>} : memref<8x32xf32, #tpu.memory_space<vmem>>, vector<8x32xf32>,
    %cst_18 = arith.constant 0.000000e+00 : f32
    %35 = vector.broadcast %cst_18 : f32 to vector<8x32xf32>
    %c0_19 = arith.constant 0 : index
    %c0_20 = arith.constant 0 : index
    %36 = vector.load %arg14[%c0_19, %c0_20] : memref<8x32xf32, #tpu.memory_space<vmem>>, vector<8x32xf32>
    tpu.vector_store %arg14[%c0_19, %c0_20], %35 {strides = array<i32>} : memref<8x32xf32, #tpu.memory_space<vmem>>, vector<8x32xf32>,
    %c0_i32_21 = arith.constant 0 : i32
    %37 = arith.index_cast %c0_i32_21 : i32 to index
    %c0_22 = arith.constant 0 : index
    %c0_23 = arith.constant 0 : index
    %38 = vector.load %arg9[%37, %c0_22, %c0_23] : memref<8x8x128xf32, #tpu.memory_space<vmem>>, vector<1x8x128xf32>
    %39 = vector.shape_cast %38 : vector<1x8x128xf32> to vector<8x128xf32>
    %c7_i32 = arith.constant 7 : i32
    %40 = arith.subi %c7_i32, %c0_i32_21 : i32
    %41 = arith.index_cast %40 : i32 to index
    %c0_24 = arith.constant 0 : index
    %c0_25 = arith.constant 0 : index
    %42 = vector.load %arg9[%41, %c0_24, %c0_25] : memref<8x8x128xf32, #tpu.memory_space<vmem>>, vector<1x8x128xf32>
    %43 = vector.shape_cast %42 : vector<1x8x128xf32> to vector<8x128xf32>
    %44 = vector.shape_cast %18 : vector<1x128xi1> to vector<1x128xi1>
    %45 = vector.broadcast %44 : vector<1x128xi1> to vector<8x128xi1>
    %46 = arith.select %45, %39, %43 : vector<8x128xi1>, vector<8x128xf32>
    %c0_26 = arith.constant 0 : index
    %c0_27 = arith.constant 0 : index
    %47 = vector.load %arg13[%c0_26, %c0_27] : memref<8x32xf32, #tpu.memory_space<vmem>>, vector<8x32xf32>
    %cst_28 = arith.constant dense<0.000000e+00> : vector<8x128xf32>
    %48 = tpu.matmul %47, %32, %cst_28 {dimension_numbers = #tpu.dot_dimension_numbers<[1], [0], [0], [1], [0, 0, 1, 1], [], []>} : vector<8x32xf32>, vector<32x128xf32>, vector<8x128xf32> -> vector<8x128xf32>
    %49 = arith.addf %46, %48 : vector<8x128xf32>
    %50 = vector.extract_strided_slice %49 {offsets = [0, 0], sizes = [8, 32], strides = [1, 1]} : vector<8x128xf32> to vector<8x32xf32>
    %51 = arith.negf %50 : vector<8x32xf32>
    %52 = math.exp %51 : vector<8x32xf32>
    %cst_29 = arith.constant 1.000000e+00 : f32
    %53 = vector.broadcast %cst_29 : f32 to vector<8x32xf32>
    %54 = arith.addf %53, %52 : vector<8x32xf32>
    %55 = arith.divf %53, %54 : vector<8x32xf32>
    %56 = vector.extract_strided_slice %49 {offsets = [0, 32], sizes = [8, 32], strides = [1, 1]} : vector<8x128xf32> to vector<8x32xf32>
    %57 = arith.negf %56 : vector<8x32xf32>
    %58 = math.exp %57 : vector<8x32xf32>
    %cst_30 = arith.constant 1.000000e+00 : f32
    %59 = vector.broadcast %cst_30 : f32 to vector<8x32xf32>
    %60 = arith.addf %59, %58 : vector<8x32xf32>
    %61 = arith.divf %59, %60 : vector<8x32xf32>
    %62 = vector.extract_strided_slice %49 {offsets = [0, 64], sizes = [8, 32], strides = [1, 1]} : vector<8x128xf32> to vector<8x32xf32>
    %63 = math.tanh %62 : vector<8x32xf32>
    %64 = vector.extract_strided_slice %49 {offsets = [0, 96], sizes = [8, 32], strides = [1, 1]} : vector<8x128xf32> to vector<8x32xf32>
    %65 = arith.negf %64 : vector<8x32xf32>
    %66 = math.exp %65 : vector<8x32xf32>
    %cst_31 = arith.constant 1.000000e+00 : f32
    %67 = vector.broadcast %cst_31 : f32 to vector<8x32xf32>
    %68 = arith.addf %67, %66 : vector<8x32xf32>
    %69 = arith.divf %67, %68 : vector<8x32xf32>
    %c0_32 = arith.constant 0 : index
    %c0_33 = arith.constant 0 : index
    %70 = vector.load %arg14[%c0_32, %c0_33] : memref<8x32xf32, #tpu.memory_space<vmem>>, vector<8x32xf32>
    %71 = arith.mulf %61, %70 : vector<8x32xf32>
    %72 = arith.mulf %55, %63 : vector<8x32xf32>
    %73 = arith.addf %71, %72 : vector<8x32xf32>
    %74 = math.tanh %73 : vector<8x32xf32>
    %75 = arith.mulf %69, %74 : vector<8x32xf32>
    %c0_34 = arith.constant 0 : index
    %c0_35 = arith.constant 0 : index
    %76 = vector.load %arg14[%c0_34, %c0_35] : memref<8x32xf32, #tpu.memory_space<vmem>>, vector<8x32xf32>
    tpu.vector_store %arg14[%c0_34, %c0_35], %73 {strides = array<i32>} : memref<8x32xf32, #tpu.memory_space<vmem>>, vector<8x32xf32>,
    %c0_36 = arith.constant 0 : index
    %c0_37 = arith.constant 0 : index
    %77 = vector.load %arg13[%c0_36, %c0_37] : memref<8x32xf32, #tpu.memory_space<vmem>>, vector<8x32xf32>
    tpu.vector_store %arg13[%c0_36, %c0_37], %75 {strides = array<i32>} : memref<8x32xf32, #tpu.memory_space<vmem>>, vector<8x32xf32>,
    %78 = arith.index_cast %c0_i32_21 : i32 to index
    %c0_38 = arith.constant 0 : index
    %c0_39 = arith.constant 0 : index
    %79 = vector.load %arg11[%78, %c0_38, %c0_39] : memref<8x8x32xf32, #tpu.memory_space<vmem>>, vector<1x8x32xf32>
    %80 = vector.shape_cast %79 : vector<1x8x32xf32> to vector<8x32xf32>
    %81 = vector.shape_cast %75 : vector<8x32xf32> to vector<1x8x32xf32>
    tpu.vector_store %arg11[%78, %c0_38, %c0_39], %81 {strides = array<i32>} : memref<8x8x32xf32, #tpu.memory_space<vmem>>, vector<1x8x32xf32>,
    %c7_i32_40 = arith.constant 7 : i32
    %82 = arith.subi %c7_i32_40, %c0_i32_21 : i32
    %83 = arith.index_cast %82 : i32 to index
    %c0_41 = arith.constant 0 : index
    %c0_42 = arith.constant 0 : index
    %84 = vector.load %arg12[%83, %c0_41, %c0_42] : memref<8x8x32xf32, #tpu.memory_space<vmem>>, vector<1x8x32xf32>
    %85 = vector.shape_cast %84 : vector<1x8x32xf32> to vector<8x32xf32>
    %86 = vector.shape_cast %75 : vector<8x32xf32> to vector<1x8x32xf32>
    tpu.vector_store %arg12[%83, %c0_41, %c0_42], %86 {strides = array<i32>} : memref<8x8x32xf32, #tpu.memory_space<vmem>>, vector<1x8x32xf32>,
    %c1_i32_43 = arith.constant 1 : i32
    %87 = arith.index_cast %c1_i32_43 : i32 to index
    %c0_44 = arith.constant 0 : index
    %c0_45 = arith.constant 0 : index
    %88 = vector.load %arg9[%87, %c0_44, %c0_45] : memref<8x8x128xf32, #tpu.memory_space<vmem>>, vector<1x8x128xf32>
    %89 = vector.shape_cast %88 : vector<1x8x128xf32> to vector<8x128xf32>
    %c7_i32_46 = arith.constant 7 : i32
    %90 = arith.subi %c7_i32_46, %c1_i32_43 : i32
    %91 = arith.index_cast %90 : i32 to index
    %c0_47 = arith.constant 0 : index
    %c0_48 = arith.constant 0 : index
    %92 = vector.load %arg9[%91, %c0_47, %c0_48] : memref<8x8x128xf32, #tpu.memory_space<vmem>>, vector<1x8x128xf32>
    %93 = vector.shape_cast %92 : vector<1x8x128xf32> to vector<8x128xf32>
    %94 = vector.shape_cast %18 : vector<1x128xi1> to vector<1x128xi1>
    %95 = vector.broadcast %94 : vector<1x128xi1> to vector<8x128xi1>
    %96 = arith.select %95, %89, %93 : vector<8x128xi1>, vector<8x128xf32>
    %c0_49 = arith.constant 0 : index
    %c0_50 = arith.constant 0 : index
    %97 = vector.load %arg13[%c0_49, %c0_50] : memref<8x32xf32, #tpu.memory_space<vmem>>, vector<8x32xf32>
    %cst_51 = arith.constant dense<0.000000e+00> : vector<8x128xf32>
    %98 = tpu.matmul %97, %32, %cst_51 {dimension_numbers = #tpu.dot_dimension_numbers<[1], [0], [0], [1], [0, 0, 1, 1], [], []>} : vector<8x32xf32>, vector<32x128xf32>, vector<8x128xf32> -> vector<8x128xf32>
    %99 = arith.addf %96, %98 : vector<8x128xf32>
    %100 = vector.extract_strided_slice %99 {offsets = [0, 0], sizes = [8, 32], strides = [1, 1]} : vector<8x128xf32> to vector<8x32xf32>
    %101 = arith.negf %100 : vector<8x32xf32>
    %102 = math.exp %101 : vector<8x32xf32>
    %cst_52 = arith.constant 1.000000e+00 : f32
    %103 = vector.broadcast %cst_52 : f32 to vector<8x32xf32>
    %104 = arith.addf %103, %102 : vector<8x32xf32>
    %105 = arith.divf %103, %104 : vector<8x32xf32>
    %106 = vector.extract_strided_slice %99 {offsets = [0, 32], sizes = [8, 32], strides = [1, 1]} : vector<8x128xf32> to vector<8x32xf32>
    %107 = arith.negf %106 : vector<8x32xf32>
    %108 = math.exp %107 : vector<8x32xf32>
    %cst_53 = arith.constant 1.000000e+00 : f32
    %109 = vector.broadcast %cst_53 : f32 to vector<8x32xf32>
    %110 = arith.addf %109, %108 : vector<8x32xf32>
    %111 = arith.divf %109, %110 : vector<8x32xf32>
    %112 = vector.extract_strided_slice %99 {offsets = [0, 64], sizes = [8, 32], strides = [1, 1]} : vector<8x128xf32> to vector<8x32xf32>
    %113 = math.tanh %112 : vector<8x32xf32>
    %114 = vector.extract_strided_slice %99 {offsets = [0, 96], sizes = [8, 32], strides = [1, 1]} : vector<8x128xf32> to vector<8x32xf32>
    %115 = arith.negf %114 : vector<8x32xf32>
    %116 = math.exp %115 : vector<8x32xf32>
    %cst_54 = arith.constant 1.000000e+00 : f32
    %117 = vector.broadcast %cst_54 : f32 to vector<8x32xf32>
    %118 = arith.addf %117, %116 : vector<8x32xf32>
    %119 = arith.divf %117, %118 : vector<8x32xf32>
    %c0_55 = arith.constant 0 : index
    %c0_56 = arith.constant 0 : index
    %120 = vector.load %arg14[%c0_55, %c0_56] : memref<8x32xf32, #tpu.memory_space<vmem>>, vector<8x32xf32>
    %121 = arith.mulf %111, %120 : vector<8x32xf32>
    %122 = arith.mulf %105, %113 : vector<8x32xf32>
    %123 = arith.addf %121, %122 : vector<8x32xf32>
    %124 = math.tanh %123 : vector<8x32xf32>
    %125 = arith.mulf %119, %124 : vector<8x32xf32>
    %c0_57 = arith.constant 0 : index
    %c0_58 = arith.constant 0 : index
    %126 = vector.load %arg14[%c0_57, %c0_58] : memref<8x32xf32, #tpu.memory_space<vmem>>, vector<8x32xf32>
    tpu.vector_store %arg14[%c0_57, %c0_58], %123 {strides = array<i32>} : memref<8x32xf32, #tpu.memory_space<vmem>>, vector<8x32xf32>,
    %c0_59 = arith.constant 0 : index
    %c0_60 = arith.constant 0 : index
    %127 = vector.load %arg13[%c0_59, %c0_60] : memref<8x32xf32, #tpu.memory_space<vmem>>, vector<8x32xf32>
    tpu.vector_store %arg13[%c0_59, %c0_60], %125 {strides = array<i32>} : memref<8x32xf32, #tpu.memory_space<vmem>>, vector<8x32xf32>,
    %128 = arith.index_cast %c1_i32_43 : i32 to index
    %c0_61 = arith.constant 0 : index
    %c0_62 = arith.constant 0 : index
    %129 = vector.load %arg11[%128, %c0_61, %c0_62] : memref<8x8x32xf32, #tpu.memory_space<vmem>>, vector<1x8x32xf32>
    %130 = vector.shape_cast %129 : vector<1x8x32xf32> to vector<8x32xf32>
    %131 = vector.shape_cast %125 : vector<8x32xf32> to vector<1x8x32xf32>
    tpu.vector_store %arg11[%128, %c0_61, %c0_62], %131 {strides = array<i32>} : memref<8x8x32xf32, #tpu.memory_space<vmem>>, vector<1x8x32xf32>,
    %c7_i32_63 = arith.constant 7 : i32
    %132 = arith.subi %c7_i32_63, %c1_i32_43 : i32
    %133 = arith.index_cast %132 : i32 to index
    %c0_64 = arith.constant 0 : index
    %c0_65 = arith.constant 0 : index
    %134 = vector.load %arg12[%133, %c0_64, %c0_65] : memref<8x8x32xf32, #tpu.memory_space<vmem>>, vector<1x8x32xf32>
    %135 = vector.shape_cast %134 : vector<1x8x32xf32> to vector<8x32xf32>
    %136 = vector.shape_cast %125 : vector<8x32xf32> to vector<1x8x32xf32>
    tpu.vector_store %arg12[%133, %c0_64, %c0_65], %136 {strides = array<i32>} : memref<8x8x32xf32, #tpu.memory_space<vmem>>, vector<1x8x32xf32>,
    %c2_i32 = arith.constant 2 : i32
    %137 = arith.index_cast %c2_i32 : i32 to index
    %c0_66 = arith.constant 0 : index
    %c0_67 = arith.constant 0 : index
    %138 = vector.load %arg9[%137, %c0_66, %c0_67] : memref<8x8x128xf32, #tpu.memory_space<vmem>>, vector<1x8x128xf32>
    %139 = vector.shape_cast %138 : vector<1x8x128xf32> to vector<8x128xf32>
    %c7_i32_68 = arith.constant 7 : i32
    %140 = arith.subi %c7_i32_68, %c2_i32 : i32
    %141 = arith.index_cast %140 : i32 to index
    %c0_69 = arith.constant 0 : index
    %c0_70 = arith.constant 0 : index
    %142 = vector.load %arg9[%141, %c0_69, %c0_70] : memref<8x8x128xf32, #tpu.memory_space<vmem>>, vector<1x8x128xf32>
    %143 = vector.shape_cast %142 : vector<1x8x128xf32> to vector<8x128xf32>
    %144 = vector.shape_cast %18 : vector<1x128xi1> to vector<1x128xi1>
    %145 = vector.broadcast %144 : vector<1x128xi1> to vector<8x128xi1>
    %146 = arith.select %145, %139, %143 : vector<8x128xi1>, vector<8x128xf32>
    %c0_71 = arith.constant 0 : index
    %c0_72 = arith.constant 0 : index
    %147 = vector.load %arg13[%c0_71, %c0_72] : memref<8x32xf32, #tpu.memory_space<vmem>>, vector<8x32xf32>
    %cst_73 = arith.constant dense<0.000000e+00> : vector<8x128xf32>
    %148 = tpu.matmul %147, %32, %cst_73 {dimension_numbers = #tpu.dot_dimension_numbers<[1], [0], [0], [1], [0, 0, 1, 1], [], []>} : vector<8x32xf32>, vector<32x128xf32>, vector<8x128xf32> -> vector<8x128xf32>
    %149 = arith.addf %146, %148 : vector<8x128xf32>
    %150 = vector.extract_strided_slice %149 {offsets = [0, 0], sizes = [8, 32], strides = [1, 1]} : vector<8x128xf32> to vector<8x32xf32>
    %151 = arith.negf %150 : vector<8x32xf32>
    %152 = math.exp %151 : vector<8x32xf32>
    %cst_74 = arith.constant 1.000000e+00 : f32
    %153 = vector.broadcast %cst_74 : f32 to vector<8x32xf32>
    %154 = arith.addf %153, %152 : vector<8x32xf32>
    %155 = arith.divf %153, %154 : vector<8x32xf32>
    %156 = vector.extract_strided_slice %149 {offsets = [0, 32], sizes = [8, 32], strides = [1, 1]} : vector<8x128xf32> to vector<8x32xf32>
    %157 = arith.negf %156 : vector<8x32xf32>
    %158 = math.exp %157 : vector<8x32xf32>
    %cst_75 = arith.constant 1.000000e+00 : f32
    %159 = vector.broadcast %cst_75 : f32 to vector<8x32xf32>
    %160 = arith.addf %159, %158 : vector<8x32xf32>
    %161 = arith.divf %159, %160 : vector<8x32xf32>
    %162 = vector.extract_strided_slice %149 {offsets = [0, 64], sizes = [8, 32], strides = [1, 1]} : vector<8x128xf32> to vector<8x32xf32>
    %163 = math.tanh %162 : vector<8x32xf32>
    %164 = vector.extract_strided_slice %149 {offsets = [0, 96], sizes = [8, 32], strides = [1, 1]} : vector<8x128xf32> to vector<8x32xf32>
    %165 = arith.negf %164 : vector<8x32xf32>
    %166 = math.exp %165 : vector<8x32xf32>
    %cst_76 = arith.constant 1.000000e+00 : f32
    %167 = vector.broadcast %cst_76 : f32 to vector<8x32xf32>
    %168 = arith.addf %167, %166 : vector<8x32xf32>
    %169 = arith.divf %167, %168 : vector<8x32xf32>
    %c0_77 = arith.constant 0 : index
    %c0_78 = arith.constant 0 : index
    %170 = vector.load %arg14[%c0_77, %c0_78] : memref<8x32xf32, #tpu.memory_space<vmem>>, vector<8x32xf32>
    %171 = arith.mulf %161, %170 : vector<8x32xf32>
    %172 = arith.mulf %155, %163 : vector<8x32xf32>
    %173 = arith.addf %171, %172 : vector<8x32xf32>
    %174 = math.tanh %173 : vector<8x32xf32>
    %175 = arith.mulf %169, %174 : vector<8x32xf32>
    %c0_79 = arith.constant 0 : index
    %c0_80 = arith.constant 0 : index
    %176 = vector.load %arg14[%c0_79, %c0_80] : memref<8x32xf32, #tpu.memory_space<vmem>>, vector<8x32xf32>
    tpu.vector_store %arg14[%c0_79, %c0_80], %173 {strides = array<i32>} : memref<8x32xf32, #tpu.memory_space<vmem>>, vector<8x32xf32>,
    %c0_81 = arith.constant 0 : index
    %c0_82 = arith.constant 0 : index
    %177 = vector.load %arg13[%c0_81, %c0_82] : memref<8x32xf32, #tpu.memory_space<vmem>>, vector<8x32xf32>
    tpu.vector_store %arg13[%c0_81, %c0_82], %175 {strides = array<i32>} : memref<8x32xf32, #tpu.memory_space<vmem>>, vector<8x32xf32>,
    %178 = arith.index_cast %c2_i32 : i32 to index
    %c0_83 = arith.constant 0 : index
    %c0_84 = arith.constant 0 : index
    %179 = vector.load %arg11[%178, %c0_83, %c0_84] : memref<8x8x32xf32, #tpu.memory_space<vmem>>, vector<1x8x32xf32>
    %180 = vector.shape_cast %179 : vector<1x8x32xf32> to vector<8x32xf32>
    %181 = vector.shape_cast %175 : vector<8x32xf32> to vector<1x8x32xf32>
    tpu.vector_store %arg11[%178, %c0_83, %c0_84], %181 {strides = array<i32>} : memref<8x8x32xf32, #tpu.memory_space<vmem>>, vector<1x8x32xf32>,
    %c7_i32_85 = arith.constant 7 : i32
    %182 = arith.subi %c7_i32_85, %c2_i32 : i32
    %183 = arith.index_cast %182 : i32 to index
    %c0_86 = arith.constant 0 : index
    %c0_87 = arith.constant 0 : index
    %184 = vector.load %arg12[%183, %c0_86, %c0_87] : memref<8x8x32xf32, #tpu.memory_space<vmem>>, vector<1x8x32xf32>
    %185 = vector.shape_cast %184 : vector<1x8x32xf32> to vector<8x32xf32>
    %186 = vector.shape_cast %175 : vector<8x32xf32> to vector<1x8x32xf32>
    tpu.vector_store %arg12[%183, %c0_86, %c0_87], %186 {strides = array<i32>} : memref<8x8x32xf32, #tpu.memory_space<vmem>>, vector<1x8x32xf32>,
    %c3_i32 = arith.constant 3 : i32
    %187 = arith.index_cast %c3_i32 : i32 to index
    %c0_88 = arith.constant 0 : index
    %c0_89 = arith.constant 0 : index
    %188 = vector.load %arg9[%187, %c0_88, %c0_89] : memref<8x8x128xf32, #tpu.memory_space<vmem>>, vector<1x8x128xf32>
    %189 = vector.shape_cast %188 : vector<1x8x128xf32> to vector<8x128xf32>
    %c7_i32_90 = arith.constant 7 : i32
    %190 = arith.subi %c7_i32_90, %c3_i32 : i32
    %191 = arith.index_cast %190 : i32 to index
    %c0_91 = arith.constant 0 : index
    %c0_92 = arith.constant 0 : index
    %192 = vector.load %arg9[%191, %c0_91, %c0_92] : memref<8x8x128xf32, #tpu.memory_space<vmem>>, vector<1x8x128xf32>
    %193 = vector.shape_cast %192 : vector<1x8x128xf32> to vector<8x128xf32>
    %194 = vector.shape_cast %18 : vector<1x128xi1> to vector<1x128xi1>
    %195 = vector.broadcast %194 : vector<1x128xi1> to vector<8x128xi1>
    %196 = arith.select %195, %189, %193 : vector<8x128xi1>, vector<8x128xf32>
    %c0_93 = arith.constant 0 : index
    %c0_94 = arith.constant 0 : index
    %197 = vector.load %arg13[%c0_93, %c0_94] : memref<8x32xf32, #tpu.memory_space<vmem>>, vector<8x32xf32>
    %cst_95 = arith.constant dense<0.000000e+00> : vector<8x128xf32>
    %198 = tpu.matmul %197, %32, %cst_95 {dimension_numbers = #tpu.dot_dimension_numbers<[1], [0], [0], [1], [0, 0, 1, 1], [], []>} : vector<8x32xf32>, vector<32x128xf32>, vector<8x128xf32> -> vector<8x128xf32>
    %199 = arith.addf %196, %198 : vector<8x128xf32>
    %200 = vector.extract_strided_slice %199 {offsets = [0, 0], sizes = [8, 32], strides = [1, 1]} : vector<8x128xf32> to vector<8x32xf32>
    %201 = arith.negf %200 : vector<8x32xf32>
    %202 = math.exp %201 : vector<8x32xf32>
    %cst_96 = arith.constant 1.000000e+00 : f32
    %203 = vector.broadcast %cst_96 : f32 to vector<8x32xf32>
    %204 = arith.addf %203, %202 : vector<8x32xf32>
    %205 = arith.divf %203, %204 : vector<8x32xf32>
    %206 = vector.extract_strided_slice %199 {offsets = [0, 32], sizes = [8, 32], strides = [1, 1]} : vector<8x128xf32> to vector<8x32xf32>
    %207 = arith.negf %206 : vector<8x32xf32>
    %208 = math.exp %207 : vector<8x32xf32>
    %cst_97 = arith.constant 1.000000e+00 : f32
    %209 = vector.broadcast %cst_97 : f32 to vector<8x32xf32>
    %210 = arith.addf %209, %208 : vector<8x32xf32>
    %211 = arith.divf %209, %210 : vector<8x32xf32>
    %212 = vector.extract_strided_slice %199 {offsets = [0, 64], sizes = [8, 32], strides = [1, 1]} : vector<8x128xf32> to vector<8x32xf32>
    %213 = math.tanh %212 : vector<8x32xf32>
    %214 = vector.extract_strided_slice %199 {offsets = [0, 96], sizes = [8, 32], strides = [1, 1]} : vector<8x128xf32> to vector<8x32xf32>
    %215 = arith.negf %214 : vector<8x32xf32>
    %216 = math.exp %215 : vector<8x32xf32>
    %cst_98 = arith.constant 1.000000e+00 : f32
    %217 = vector.broadcast %cst_98 : f32 to vector<8x32xf32>
    %218 = arith.addf %217, %216 : vector<8x32xf32>
    %219 = arith.divf %217, %218 : vector<8x32xf32>
    %c0_99 = arith.constant 0 : index
    %c0_100 = arith.constant 0 : index
    %220 = vector.load %arg14[%c0_99, %c0_100] : memref<8x32xf32, #tpu.memory_space<vmem>>, vector<8x32xf32>
    %221 = arith.mulf %211, %220 : vector<8x32xf32>
    %222 = arith.mulf %205, %213 : vector<8x32xf32>
    %223 = arith.addf %221, %222 : vector<8x32xf32>
    %224 = math.tanh %223 : vector<8x32xf32>
    %225 = arith.mulf %219, %224 : vector<8x32xf32>
    %c0_101 = arith.constant 0 : index
    %c0_102 = arith.constant 0 : index
    %226 = vector.load %arg14[%c0_101, %c0_102] : memref<8x32xf32, #tpu.memory_space<vmem>>, vector<8x32xf32>
    tpu.vector_store %arg14[%c0_101, %c0_102], %223 {strides = array<i32>} : memref<8x32xf32, #tpu.memory_space<vmem>>, vector<8x32xf32>,
    %c0_103 = arith.constant 0 : index
    %c0_104 = arith.constant 0 : index
    %227 = vector.load %arg13[%c0_103, %c0_104] : memref<8x32xf32, #tpu.memory_space<vmem>>, vector<8x32xf32>
    tpu.vector_store %arg13[%c0_103, %c0_104], %225 {strides = array<i32>} : memref<8x32xf32, #tpu.memory_space<vmem>>, vector<8x32xf32>,
    %228 = arith.index_cast %c3_i32 : i32 to index
    %c0_105 = arith.constant 0 : index
    %c0_106 = arith.constant 0 : index
    %229 = vector.load %arg11[%228, %c0_105, %c0_106] : memref<8x8x32xf32, #tpu.memory_space<vmem>>, vector<1x8x32xf32>
    %230 = vector.shape_cast %229 : vector<1x8x32xf32> to vector<8x32xf32>
    %231 = vector.shape_cast %225 : vector<8x32xf32> to vector<1x8x32xf32>
    tpu.vector_store %arg11[%228, %c0_105, %c0_106], %231 {strides = array<i32>} : memref<8x8x32xf32, #tpu.memory_space<vmem>>, vector<1x8x32xf32>,
    %c7_i32_107 = arith.constant 7 : i32
    %232 = arith.subi %c7_i32_107, %c3_i32 : i32
    %233 = arith.index_cast %232 : i32 to index
    %c0_108 = arith.constant 0 : index
    %c0_109 = arith.constant 0 : index
    %234 = vector.load %arg12[%233, %c0_108, %c0_109] : memref<8x8x32xf32, #tpu.memory_space<vmem>>, vector<1x8x32xf32>
    %235 = vector.shape_cast %234 : vector<1x8x32xf32> to vector<8x32xf32>
    %236 = vector.shape_cast %225 : vector<8x32xf32> to vector<1x8x32xf32>
    tpu.vector_store %arg12[%233, %c0_108, %c0_109], %236 {strides = array<i32>} : memref<8x8x32xf32, #tpu.memory_space<vmem>>, vector<1x8x32xf32>,
    %c4_i32 = arith.constant 4 : i32
    %237 = arith.index_cast %c4_i32 : i32 to index
    %c0_110 = arith.constant 0 : index
    %c0_111 = arith.constant 0 : index
    %238 = vector.load %arg9[%237, %c0_110, %c0_111] : memref<8x8x128xf32, #tpu.memory_space<vmem>>, vector<1x8x128xf32>
    %239 = vector.shape_cast %238 : vector<1x8x128xf32> to vector<8x128xf32>
    %c7_i32_112 = arith.constant 7 : i32
    %240 = arith.subi %c7_i32_112, %c4_i32 : i32
    %241 = arith.index_cast %240 : i32 to index
    %c0_113 = arith.constant 0 : index
    %c0_114 = arith.constant 0 : index
    %242 = vector.load %arg9[%241, %c0_113, %c0_114] : memref<8x8x128xf32, #tpu.memory_space<vmem>>, vector<1x8x128xf32>
    %243 = vector.shape_cast %242 : vector<1x8x128xf32> to vector<8x128xf32>
    %244 = vector.shape_cast %18 : vector<1x128xi1> to vector<1x128xi1>
    %245 = vector.broadcast %244 : vector<1x128xi1> to vector<8x128xi1>
    %246 = arith.select %245, %239, %243 : vector<8x128xi1>, vector<8x128xf32>
    %c0_115 = arith.constant 0 : index
    %c0_116 = arith.constant 0 : index
    %247 = vector.load %arg13[%c0_115, %c0_116] : memref<8x32xf32, #tpu.memory_space<vmem>>, vector<8x32xf32>
    %cst_117 = arith.constant dense<0.000000e+00> : vector<8x128xf32>
    %248 = tpu.matmul %247, %32, %cst_117 {dimension_numbers = #tpu.dot_dimension_numbers<[1], [0], [0], [1], [0, 0, 1, 1], [], []>} : vector<8x32xf32>, vector<32x128xf32>, vector<8x128xf32> -> vector<8x128xf32>
    %249 = arith.addf %246, %248 : vector<8x128xf32>
    %250 = vector.extract_strided_slice %249 {offsets = [0, 0], sizes = [8, 32], strides = [1, 1]} : vector<8x128xf32> to vector<8x32xf32>
    %251 = arith.negf %250 : vector<8x32xf32>
    %252 = math.exp %251 : vector<8x32xf32>
    %cst_118 = arith.constant 1.000000e+00 : f32
    %253 = vector.broadcast %cst_118 : f32 to vector<8x32xf32>
    %254 = arith.addf %253, %252 : vector<8x32xf32>
    %255 = arith.divf %253, %254 : vector<8x32xf32>
    %256 = vector.extract_strided_slice %249 {offsets = [0, 32], sizes = [8, 32], strides = [1, 1]} : vector<8x128xf32> to vector<8x32xf32>
    %257 = arith.negf %256 : vector<8x32xf32>
    %258 = math.exp %257 : vector<8x32xf32>
    %cst_119 = arith.constant 1.000000e+00 : f32
    %259 = vector.broadcast %cst_119 : f32 to vector<8x32xf32>
    %260 = arith.addf %259, %258 : vector<8x32xf32>
    %261 = arith.divf %259, %260 : vector<8x32xf32>
    %262 = vector.extract_strided_slice %249 {offsets = [0, 64], sizes = [8, 32], strides = [1, 1]} : vector<8x128xf32> to vector<8x32xf32>
    %263 = math.tanh %262 : vector<8x32xf32>
    %264 = vector.extract_strided_slice %249 {offsets = [0, 96], sizes = [8, 32], strides = [1, 1]} : vector<8x128xf32> to vector<8x32xf32>
    %265 = arith.negf %264 : vector<8x32xf32>
    %266 = math.exp %265 : vector<8x32xf32>
    %cst_120 = arith.constant 1.000000e+00 : f32
    %267 = vector.broadcast %cst_120 : f32 to vector<8x32xf32>
    %268 = arith.addf %267, %266 : vector<8x32xf32>
    %269 = arith.divf %267, %268 : vector<8x32xf32>
    %c0_121 = arith.constant 0 : index
    %c0_122 = arith.constant 0 : index
    %270 = vector.load %arg14[%c0_121, %c0_122] : memref<8x32xf32, #tpu.memory_space<vmem>>, vector<8x32xf32>
    %271 = arith.mulf %261, %270 : vector<8x32xf32>
    %272 = arith.mulf %255, %263 : vector<8x32xf32>
    %273 = arith.addf %271, %272 : vector<8x32xf32>
    %274 = math.tanh %273 : vector<8x32xf32>
    %275 = arith.mulf %269, %274 : vector<8x32xf32>
    %c0_123 = arith.constant 0 : index
    %c0_124 = arith.constant 0 : index
    %276 = vector.load %arg14[%c0_123, %c0_124] : memref<8x32xf32, #tpu.memory_space<vmem>>, vector<8x32xf32>
    tpu.vector_store %arg14[%c0_123, %c0_124], %273 {strides = array<i32>} : memref<8x32xf32, #tpu.memory_space<vmem>>, vector<8x32xf32>,
    %c0_125 = arith.constant 0 : index
    %c0_126 = arith.constant 0 : index
    %277 = vector.load %arg13[%c0_125, %c0_126] : memref<8x32xf32, #tpu.memory_space<vmem>>, vector<8x32xf32>
    tpu.vector_store %arg13[%c0_125, %c0_126], %275 {strides = array<i32>} : memref<8x32xf32, #tpu.memory_space<vmem>>, vector<8x32xf32>,
    %278 = arith.index_cast %c4_i32 : i32 to index
    %c0_127 = arith.constant 0 : index
    %c0_128 = arith.constant 0 : index
    %279 = vector.load %arg11[%278, %c0_127, %c0_128] : memref<8x8x32xf32, #tpu.memory_space<vmem>>, vector<1x8x32xf32>
    %280 = vector.shape_cast %279 : vector<1x8x32xf32> to vector<8x32xf32>
    %281 = vector.shape_cast %275 : vector<8x32xf32> to vector<1x8x32xf32>
    tpu.vector_store %arg11[%278, %c0_127, %c0_128], %281 {strides = array<i32>} : memref<8x8x32xf32, #tpu.memory_space<vmem>>, vector<1x8x32xf32>,
    %c7_i32_129 = arith.constant 7 : i32
    %282 = arith.subi %c7_i32_129, %c4_i32 : i32
    %283 = arith.index_cast %282 : i32 to index
    %c0_130 = arith.constant 0 : index
    %c0_131 = arith.constant 0 : index
    %284 = vector.load %arg12[%283, %c0_130, %c0_131] : memref<8x8x32xf32, #tpu.memory_space<vmem>>, vector<1x8x32xf32>
    %285 = vector.shape_cast %284 : vector<1x8x32xf32> to vector<8x32xf32>
    %286 = vector.shape_cast %275 : vector<8x32xf32> to vector<1x8x32xf32>
    tpu.vector_store %arg12[%283, %c0_130, %c0_131], %286 {strides = array<i32>} : memref<8x8x32xf32, #tpu.memory_space<vmem>>, vector<1x8x32xf32>,
    %c5_i32 = arith.constant 5 : i32
    %287 = arith.index_cast %c5_i32 : i32 to index
    %c0_132 = arith.constant 0 : index
    %c0_133 = arith.constant 0 : index
    %288 = vector.load %arg9[%287, %c0_132, %c0_133] : memref<8x8x128xf32, #tpu.memory_space<vmem>>, vector<1x8x128xf32>
    %289 = vector.shape_cast %288 : vector<1x8x128xf32> to vector<8x128xf32>
    %c7_i32_134 = arith.constant 7 : i32
    %290 = arith.subi %c7_i32_134, %c5_i32 : i32
    %291 = arith.index_cast %290 : i32 to index
    %c0_135 = arith.constant 0 : index
    %c0_136 = arith.constant 0 : index
    %292 = vector.load %arg9[%291, %c0_135, %c0_136] : memref<8x8x128xf32, #tpu.memory_space<vmem>>, vector<1x8x128xf32>
    %293 = vector.shape_cast %292 : vector<1x8x128xf32> to vector<8x128xf32>
    %294 = vector.shape_cast %18 : vector<1x128xi1> to vector<1x128xi1>
    %295 = vector.broadcast %294 : vector<1x128xi1> to vector<8x128xi1>
    %296 = arith.select %295, %289, %293 : vector<8x128xi1>, vector<8x128xf32>
    %c0_137 = arith.constant 0 : index
    %c0_138 = arith.constant 0 : index
    %297 = vector.load %arg13[%c0_137, %c0_138] : memref<8x32xf32, #tpu.memory_space<vmem>>, vector<8x32xf32>
    %cst_139 = arith.constant dense<0.000000e+00> : vector<8x128xf32>
    %298 = tpu.matmul %297, %32, %cst_139 {dimension_numbers = #tpu.dot_dimension_numbers<[1], [0], [0], [1], [0, 0, 1, 1], [], []>} : vector<8x32xf32>, vector<32x128xf32>, vector<8x128xf32> -> vector<8x128xf32>
    %299 = arith.addf %296, %298 : vector<8x128xf32>
    %300 = vector.extract_strided_slice %299 {offsets = [0, 0], sizes = [8, 32], strides = [1, 1]} : vector<8x128xf32> to vector<8x32xf32>
    %301 = arith.negf %300 : vector<8x32xf32>
    %302 = math.exp %301 : vector<8x32xf32>
    %cst_140 = arith.constant 1.000000e+00 : f32
    %303 = vector.broadcast %cst_140 : f32 to vector<8x32xf32>
    %304 = arith.addf %303, %302 : vector<8x32xf32>
    %305 = arith.divf %303, %304 : vector<8x32xf32>
    %306 = vector.extract_strided_slice %299 {offsets = [0, 32], sizes = [8, 32], strides = [1, 1]} : vector<8x128xf32> to vector<8x32xf32>
    %307 = arith.negf %306 : vector<8x32xf32>
    %308 = math.exp %307 : vector<8x32xf32>
    %cst_141 = arith.constant 1.000000e+00 : f32
    %309 = vector.broadcast %cst_141 : f32 to vector<8x32xf32>
    %310 = arith.addf %309, %308 : vector<8x32xf32>
    %311 = arith.divf %309, %310 : vector<8x32xf32>
    %312 = vector.extract_strided_slice %299 {offsets = [0, 64], sizes = [8, 32], strides = [1, 1]} : vector<8x128xf32> to vector<8x32xf32>
    %313 = math.tanh %312 : vector<8x32xf32>
    %314 = vector.extract_strided_slice %299 {offsets = [0, 96], sizes = [8, 32], strides = [1, 1]} : vector<8x128xf32> to vector<8x32xf32>
    %315 = arith.negf %314 : vector<8x32xf32>
    %316 = math.exp %315 : vector<8x32xf32>
    %cst_142 = arith.constant 1.000000e+00 : f32
    %317 = vector.broadcast %cst_142 : f32 to vector<8x32xf32>
    %318 = arith.addf %317, %316 : vector<8x32xf32>
    %319 = arith.divf %317, %318 : vector<8x32xf32>
    %c0_143 = arith.constant 0 : index
    %c0_144 = arith.constant 0 : index
    %320 = vector.load %arg14[%c0_143, %c0_144] : memref<8x32xf32, #tpu.memory_space<vmem>>, vector<8x32xf32>
    %321 = arith.mulf %311, %320 : vector<8x32xf32>
    %322 = arith.mulf %305, %313 : vector<8x32xf32>
    %323 = arith.addf %321, %322 : vector<8x32xf32>
    %324 = math.tanh %323 : vector<8x32xf32>
    %325 = arith.mulf %319, %324 : vector<8x32xf32>
    %c0_145 = arith.constant 0 : index
    %c0_146 = arith.constant 0 : index
    %326 = vector.load %arg14[%c0_145, %c0_146] : memref<8x32xf32, #tpu.memory_space<vmem>>, vector<8x32xf32>
    tpu.vector_store %arg14[%c0_145, %c0_146], %323 {strides = array<i32>} : memref<8x32xf32, #tpu.memory_space<vmem>>, vector<8x32xf32>,
    %c0_147 = arith.constant 0 : index
    %c0_148 = arith.constant 0 : index
    %327 = vector.load %arg13[%c0_147, %c0_148] : memref<8x32xf32, #tpu.memory_space<vmem>>, vector<8x32xf32>
    tpu.vector_store %arg13[%c0_147, %c0_148], %325 {strides = array<i32>} : memref<8x32xf32, #tpu.memory_space<vmem>>, vector<8x32xf32>,
    %328 = arith.index_cast %c5_i32 : i32 to index
    %c0_149 = arith.constant 0 : index
    %c0_150 = arith.constant 0 : index
    %329 = vector.load %arg11[%328, %c0_149, %c0_150] : memref<8x8x32xf32, #tpu.memory_space<vmem>>, vector<1x8x32xf32>
    %330 = vector.shape_cast %329 : vector<1x8x32xf32> to vector<8x32xf32>
    %331 = vector.shape_cast %325 : vector<8x32xf32> to vector<1x8x32xf32>
    tpu.vector_store %arg11[%328, %c0_149, %c0_150], %331 {strides = array<i32>} : memref<8x8x32xf32, #tpu.memory_space<vmem>>, vector<1x8x32xf32>,
    %c7_i32_151 = arith.constant 7 : i32
    %332 = arith.subi %c7_i32_151, %c5_i32 : i32
    %333 = arith.index_cast %332 : i32 to index
    %c0_152 = arith.constant 0 : index
    %c0_153 = arith.constant 0 : index
    %334 = vector.load %arg12[%333, %c0_152, %c0_153] : memref<8x8x32xf32, #tpu.memory_space<vmem>>, vector<1x8x32xf32>
    %335 = vector.shape_cast %334 : vector<1x8x32xf32> to vector<8x32xf32>
    %336 = vector.shape_cast %325 : vector<8x32xf32> to vector<1x8x32xf32>
    tpu.vector_store %arg12[%333, %c0_152, %c0_153], %336 {strides = array<i32>} : memref<8x8x32xf32, #tpu.memory_space<vmem>>, vector<1x8x32xf32>,
    %c6_i32 = arith.constant 6 : i32
    %337 = arith.index_cast %c6_i32 : i32 to index
    %c0_154 = arith.constant 0 : index
    %c0_155 = arith.constant 0 : index
    %338 = vector.load %arg9[%337, %c0_154, %c0_155] : memref<8x8x128xf32, #tpu.memory_space<vmem>>, vector<1x8x128xf32>
    %339 = vector.shape_cast %338 : vector<1x8x128xf32> to vector<8x128xf32>
    %c7_i32_156 = arith.constant 7 : i32
    %340 = arith.subi %c7_i32_156, %c6_i32 : i32
    %341 = arith.index_cast %340 : i32 to index
    %c0_157 = arith.constant 0 : index
    %c0_158 = arith.constant 0 : index
    %342 = vector.load %arg9[%341, %c0_157, %c0_158] : memref<8x8x128xf32, #tpu.memory_space<vmem>>, vector<1x8x128xf32>
    %343 = vector.shape_cast %342 : vector<1x8x128xf32> to vector<8x128xf32>
    %344 = vector.shape_cast %18 : vector<1x128xi1> to vector<1x128xi1>
    %345 = vector.broadcast %344 : vector<1x128xi1> to vector<8x128xi1>
    %346 = arith.select %345, %339, %343 : vector<8x128xi1>, vector<8x128xf32>
    %c0_159 = arith.constant 0 : index
    %c0_160 = arith.constant 0 : index
    %347 = vector.load %arg13[%c0_159, %c0_160] : memref<8x32xf32, #tpu.memory_space<vmem>>, vector<8x32xf32>
    %cst_161 = arith.constant dense<0.000000e+00> : vector<8x128xf32>
    %348 = tpu.matmul %347, %32, %cst_161 {dimension_numbers = #tpu.dot_dimension_numbers<[1], [0], [0], [1], [0, 0, 1, 1], [], []>} : vector<8x32xf32>, vector<32x128xf32>, vector<8x128xf32> -> vector<8x128xf32>
    %349 = arith.addf %346, %348 : vector<8x128xf32>
    %350 = vector.extract_strided_slice %349 {offsets = [0, 0], sizes = [8, 32], strides = [1, 1]} : vector<8x128xf32> to vector<8x32xf32>
    %351 = arith.negf %350 : vector<8x32xf32>
    %352 = math.exp %351 : vector<8x32xf32>
    %cst_162 = arith.constant 1.000000e+00 : f32
    %353 = vector.broadcast %cst_162 : f32 to vector<8x32xf32>
    %354 = arith.addf %353, %352 : vector<8x32xf32>
    %355 = arith.divf %353, %354 : vector<8x32xf32>
    %356 = vector.extract_strided_slice %349 {offsets = [0, 32], sizes = [8, 32], strides = [1, 1]} : vector<8x128xf32> to vector<8x32xf32>
    %357 = arith.negf %356 : vector<8x32xf32>
    %358 = math.exp %357 : vector<8x32xf32>
    %cst_163 = arith.constant 1.000000e+00 : f32
    %359 = vector.broadcast %cst_163 : f32 to vector<8x32xf32>
    %360 = arith.addf %359, %358 : vector<8x32xf32>
    %361 = arith.divf %359, %360 : vector<8x32xf32>
    %362 = vector.extract_strided_slice %349 {offsets = [0, 64], sizes = [8, 32], strides = [1, 1]} : vector<8x128xf32> to vector<8x32xf32>
    %363 = math.tanh %362 : vector<8x32xf32>
    %364 = vector.extract_strided_slice %349 {offsets = [0, 96], sizes = [8, 32], strides = [1, 1]} : vector<8x128xf32> to vector<8x32xf32>
    %365 = arith.negf %364 : vector<8x32xf32>
    %366 = math.exp %365 : vector<8x32xf32>
    %cst_164 = arith.constant 1.000000e+00 : f32
    %367 = vector.broadcast %cst_164 : f32 to vector<8x32xf32>
    %368 = arith.addf %367, %366 : vector<8x32xf32>
    %369 = arith.divf %367, %368 : vector<8x32xf32>
    %c0_165 = arith.constant 0 : index
    %c0_166 = arith.constant 0 : index
    %370 = vector.load %arg14[%c0_165, %c0_166] : memref<8x32xf32, #tpu.memory_space<vmem>>, vector<8x32xf32>
    %371 = arith.mulf %361, %370 : vector<8x32xf32>
    %372 = arith.mulf %355, %363 : vector<8x32xf32>
    %373 = arith.addf %371, %372 : vector<8x32xf32>
    %374 = math.tanh %373 : vector<8x32xf32>
    %375 = arith.mulf %369, %374 : vector<8x32xf32>
    %c0_167 = arith.constant 0 : index
    %c0_168 = arith.constant 0 : index
    %376 = vector.load %arg14[%c0_167, %c0_168] : memref<8x32xf32, #tpu.memory_space<vmem>>, vector<8x32xf32>
    tpu.vector_store %arg14[%c0_167, %c0_168], %373 {strides = array<i32>} : memref<8x32xf32, #tpu.memory_space<vmem>>, vector<8x32xf32>,
    %c0_169 = arith.constant 0 : index
    %c0_170 = arith.constant 0 : index
    %377 = vector.load %arg13[%c0_169, %c0_170] : memref<8x32xf32, #tpu.memory_space<vmem>>, vector<8x32xf32>
    tpu.vector_store %arg13[%c0_169, %c0_170], %375 {strides = array<i32>} : memref<8x32xf32, #tpu.memory_space<vmem>>, vector<8x32xf32>,
    %378 = arith.index_cast %c6_i32 : i32 to index
    %c0_171 = arith.constant 0 : index
    %c0_172 = arith.constant 0 : index
    %379 = vector.load %arg11[%378, %c0_171, %c0_172] : memref<8x8x32xf32, #tpu.memory_space<vmem>>, vector<1x8x32xf32>
    %380 = vector.shape_cast %379 : vector<1x8x32xf32> to vector<8x32xf32>
    %381 = vector.shape_cast %375 : vector<8x32xf32> to vector<1x8x32xf32>
    tpu.vector_store %arg11[%378, %c0_171, %c0_172], %381 {strides = array<i32>} : memref<8x8x32xf32, #tpu.memory_space<vmem>>, vector<1x8x32xf32>,
    %c7_i32_173 = arith.constant 7 : i32
    %382 = arith.subi %c7_i32_173, %c6_i32 : i32
    %383 = arith.index_cast %382 : i32 to index
    %c0_174 = arith.constant 0 : index
    %c0_175 = arith.constant 0 : index
    %384 = vector.load %arg12[%383, %c0_174, %c0_175] : memref<8x8x32xf32, #tpu.memory_space<vmem>>, vector<1x8x32xf32>
    %385 = vector.shape_cast %384 : vector<1x8x32xf32> to vector<8x32xf32>
    %386 = vector.shape_cast %375 : vector<8x32xf32> to vector<1x8x32xf32>
    tpu.vector_store %arg12[%383, %c0_174, %c0_175], %386 {strides = array<i32>} : memref<8x8x32xf32, #tpu.memory_space<vmem>>, vector<1x8x32xf32>,
    %c7_i32_176 = arith.constant 7 : i32
    %387 = arith.index_cast %c7_i32_176 : i32 to index
    %c0_177 = arith.constant 0 : index
    %c0_178 = arith.constant 0 : index
    %388 = vector.load %arg9[%387, %c0_177, %c0_178] : memref<8x8x128xf32, #tpu.memory_space<vmem>>, vector<1x8x128xf32>
    %389 = vector.shape_cast %388 : vector<1x8x128xf32> to vector<8x128xf32>
    %c7_i32_179 = arith.constant 7 : i32
    %390 = arith.subi %c7_i32_179, %c7_i32_176 : i32
    %391 = arith.index_cast %390 : i32 to index
    %c0_180 = arith.constant 0 : index
    %c0_181 = arith.constant 0 : index
    %392 = vector.load %arg9[%391, %c0_180, %c0_181] : memref<8x8x128xf32, #tpu.memory_space<vmem>>, vector<1x8x128xf32>
    %393 = vector.shape_cast %392 : vector<1x8x128xf32> to vector<8x128xf32>
    %394 = vector.shape_cast %18 : vector<1x128xi1> to vector<1x128xi1>
    %395 = vector.broadcast %394 : vector<1x128xi1> to vector<8x128xi1>
    %396 = arith.select %395, %389, %393 : vector<8x128xi1>, vector<8x128xf32>
    %c0_182 = arith.constant 0 : index
    %c0_183 = arith.constant 0 : index
    %397 = vector.load %arg13[%c0_182, %c0_183] : memref<8x32xf32, #tpu.memory_space<vmem>>, vector<8x32xf32>
    %cst_184 = arith.constant dense<0.000000e+00> : vector<8x128xf32>
    %398 = tpu.matmul %397, %32, %cst_184 {dimension_numbers = #tpu.dot_dimension_numbers<[1], [0], [0], [1], [0, 0, 1, 1], [], []>} : vector<8x32xf32>, vector<32x128xf32>, vector<8x128xf32> -> vector<8x128xf32>
    %399 = arith.addf %396, %398 : vector<8x128xf32>
    %400 = vector.extract_strided_slice %399 {offsets = [0, 0], sizes = [8, 32], strides = [1, 1]} : vector<8x128xf32> to vector<8x32xf32>
    %401 = arith.negf %400 : vector<8x32xf32>
    %402 = math.exp %401 : vector<8x32xf32>
    %cst_185 = arith.constant 1.000000e+00 : f32
    %403 = vector.broadcast %cst_185 : f32 to vector<8x32xf32>
    %404 = arith.addf %403, %402 : vector<8x32xf32>
    %405 = arith.divf %403, %404 : vector<8x32xf32>
    %406 = vector.extract_strided_slice %399 {offsets = [0, 32], sizes = [8, 32], strides = [1, 1]} : vector<8x128xf32> to vector<8x32xf32>
    %407 = arith.negf %406 : vector<8x32xf32>
    %408 = math.exp %407 : vector<8x32xf32>
    %cst_186 = arith.constant 1.000000e+00 : f32
    %409 = vector.broadcast %cst_186 : f32 to vector<8x32xf32>
    %410 = arith.addf %409, %408 : vector<8x32xf32>
    %411 = arith.divf %409, %410 : vector<8x32xf32>
    %412 = vector.extract_strided_slice %399 {offsets = [0, 64], sizes = [8, 32], strides = [1, 1]} : vector<8x128xf32> to vector<8x32xf32>
    %413 = math.tanh %412 : vector<8x32xf32>
    %414 = vector.extract_strided_slice %399 {offsets = [0, 96], sizes = [8, 32], strides = [1, 1]} : vector<8x128xf32> to vector<8x32xf32>
    %415 = arith.negf %414 : vector<8x32xf32>
    %416 = math.exp %415 : vector<8x32xf32>
    %cst_187 = arith.constant 1.000000e+00 : f32
    %417 = vector.broadcast %cst_187 : f32 to vector<8x32xf32>
    %418 = arith.addf %417, %416 : vector<8x32xf32>
    %419 = arith.divf %417, %418 : vector<8x32xf32>
    %c0_188 = arith.constant 0 : index
    %c0_189 = arith.constant 0 : index
    %420 = vector.load %arg14[%c0_188, %c0_189] : memref<8x32xf32, #tpu.memory_space<vmem>>, vector<8x32xf32>
    %421 = arith.mulf %411, %420 : vector<8x32xf32>
    %422 = arith.mulf %405, %413 : vector<8x32xf32>
    %423 = arith.addf %421, %422 : vector<8x32xf32>
    %424 = math.tanh %423 : vector<8x32xf32>
    %425 = arith.mulf %419, %424 : vector<8x32xf32>
    %c0_190 = arith.constant 0 : index
    %c0_191 = arith.constant 0 : index
    %426 = vector.load %arg14[%c0_190, %c0_191] : memref<8x32xf32, #tpu.memory_space<vmem>>, vector<8x32xf32>
    tpu.vector_store %arg14[%c0_190, %c0_191], %423 {strides = array<i32>} : memref<8x32xf32, #tpu.memory_space<vmem>>, vector<8x32xf32>,
    %c0_192 = arith.constant 0 : index
    %c0_193 = arith.constant 0 : index
    %427 = vector.load %arg13[%c0_192, %c0_193] : memref<8x32xf32, #tpu.memory_space<vmem>>, vector<8x32xf32>
    tpu.vector_store %arg13[%c0_192, %c0_193], %425 {strides = array<i32>} : memref<8x32xf32, #tpu.memory_space<vmem>>, vector<8x32xf32>,
    %428 = arith.index_cast %c7_i32_176 : i32 to index
    %c0_194 = arith.constant 0 : index
    %c0_195 = arith.constant 0 : index
    %429 = vector.load %arg11[%428, %c0_194, %c0_195] : memref<8x8x32xf32, #tpu.memory_space<vmem>>, vector<1x8x32xf32>
    %430 = vector.shape_cast %429 : vector<1x8x32xf32> to vector<8x32xf32>
    %431 = vector.shape_cast %425 : vector<8x32xf32> to vector<1x8x32xf32>
    tpu.vector_store %arg11[%428, %c0_194, %c0_195], %431 {strides = array<i32>} : memref<8x8x32xf32, #tpu.memory_space<vmem>>, vector<1x8x32xf32>,
    %c7_i32_196 = arith.constant 7 : i32
    %432 = arith.subi %c7_i32_196, %c7_i32_176 : i32
    %433 = arith.index_cast %432 : i32 to index
    %c0_197 = arith.constant 0 : index
    %c0_198 = arith.constant 0 : index
    %434 = vector.load %arg12[%433, %c0_197, %c0_198] : memref<8x8x32xf32, #tpu.memory_space<vmem>>, vector<1x8x32xf32>
    %435 = vector.shape_cast %434 : vector<1x8x32xf32> to vector<8x32xf32>
    %436 = vector.shape_cast %425 : vector<8x32xf32> to vector<1x8x32xf32>
    tpu.vector_store %arg12[%433, %c0_197, %c0_198], %436 {strides = array<i32>} : memref<8x8x32xf32, #tpu.memory_space<vmem>>, vector<1x8x32xf32>,
    %c8_i32 = arith.constant 8 : i32
    %c0_199 = arith.constant 0 : index
    %c0_200 = arith.constant 0 : index
    %c0_201 = arith.constant 0 : index
    %437 = vector.load %arg11[%c0_199, %c0_200, %c0_201] : memref<8x8x32xf32, #tpu.memory_space<vmem>>, vector<8x8x32xf32>
    %c0_202 = arith.constant 0 : index
    %c0_203 = arith.constant 0 : index
    %c0_204 = arith.constant 0 : index
    %438 = vector.load %arg12[%c0_202, %c0_203, %c0_204] : memref<8x8x32xf32, #tpu.memory_space<vmem>>, vector<8x8x32xf32>
    %439 = vector.shape_cast %21 : vector<1x1x32xi1> to vector<1x1x32xi1>
    %440 = vector.broadcast %439 : vector<1x1x32xi1> to vector<8x8x32xi1>
    %441 = arith.select %440, %437, %438 : vector<8x8x32xi1>, vector<8x8x32xf32>
    %c0_205 = arith.constant 0 : index
    %c0_206 = arith.constant 0 : index
    %c0_207 = arith.constant 0 : index
    %442 = vector.load %arg10[%c0_205, %c0_206, %c0_207] : memref<8x8x32xf32, #tpu.memory_space<vmem>>, vector<8x8x32xf32>
    tpu.vector_store %arg10[%c0_205, %c0_206, %c0_207], %441 {strides = array<i32>} : memref<8x8x32xf32, #tpu.memory_space<vmem>>, vector<8x8x32xf32>,
    %c0_208 = arith.constant 0 : index
    %c0_209 = arith.constant 0 : index
    %c0_210 = arith.constant 0 : index
    %443 = vector.load %arg10[%c0_208, %c0_209, %c0_210] : memref<8x8x32xf32, #tpu.memory_space<vmem>>, vector<8x8x32xf32>
    %444 = vector.shape_cast %443 : vector<8x8x32xf32> to vector<64x32xf32>
    %445 = arith.truncf %444 : vector<64x32xf32> to vector<64x32xbf16>
    %c0_211 = arith.constant 0 : index
    %c0_212 = arith.constant 0 : index
    %446 = vector.load %arg5[%c0_211, %c0_212] : memref<32x128xbf16, #tpu.memory_space<vmem>>, vector<32x128xbf16>
    %cst_213 = arith.constant dense<0.000000e+00> : vector<64x128xf32>
    %447 = tpu.matmul %445, %446, %cst_213 {dimension_numbers = #tpu.dot_dimension_numbers<[1], [0], [0], [1], [0, 0, 1, 1], [], []>} : vector<64x32xbf16>, vector<32x128xbf16>, vector<64x128xf32> -> vector<64x128xf32>
    %c0_214 = arith.constant 0 : index
    %c0_215 = arith.constant 0 : index
    %448 = vector.load %arg7[%c0_214, %c0_215] : memref<1x128xf32, #tpu.memory_space<vmem>>, vector<1x128xf32>
    %449 = vector.broadcast %448 : vector<1x128xf32> to vector<64x128xf32>
    %450 = arith.addf %447, %449 : vector<64x128xf32>
    %451 = vector.shape_cast %450 : vector<64x128xf32> to vector<8x8x128xf32>
    %c0_216 = arith.constant 0 : index
    %c0_217 = arith.constant 0 : index
    %c0_218 = arith.constant 0 : index
    %452 = vector.load %arg9[%c0_216, %c0_217, %c0_218] : memref<8x8x128xf32, #tpu.memory_space<vmem>>, vector<8x8x128xf32>
    tpu.vector_store %arg9[%c0_216, %c0_217, %c0_218], %451 {strides = array<i32>} : memref<8x8x128xf32, #tpu.memory_space<vmem>>, vector<8x8x128xf32>,
    %c0_219 = arith.constant 0 : index
    %c0_220 = arith.constant 0 : index
    %453 = vector.load %arg6[%c0_219, %c0_220] : memref<32x128xf32, #tpu.memory_space<vmem>>, vector<32x128xf32>
    %cst_221 = arith.constant 0.000000e+00 : f32
    %454 = vector.broadcast %cst_221 : f32 to vector<8x32xf32>
    %c0_222 = arith.constant 0 : index
    %c0_223 = arith.constant 0 : index
    %455 = vector.load %arg13[%c0_222, %c0_223] : memref<8x32xf32, #tpu.memory_space<vmem>>, vector<8x32xf32>
    tpu.vector_store %arg13[%c0_222, %c0_223], %454 {strides = array<i32>} : memref<8x32xf32, #tpu.memory_space<vmem>>, vector<8x32xf32>,
    %cst_224 = arith.constant 0.000000e+00 : f32
    %456 = vector.broadcast %cst_224 : f32 to vector<8x32xf32>
    %c0_225 = arith.constant 0 : index
    %c0_226 = arith.constant 0 : index
    %457 = vector.load %arg14[%c0_225, %c0_226] : memref<8x32xf32, #tpu.memory_space<vmem>>, vector<8x32xf32>
    tpu.vector_store %arg14[%c0_225, %c0_226], %456 {strides = array<i32>} : memref<8x32xf32, #tpu.memory_space<vmem>>, vector<8x32xf32>,
    %c0_i32_227 = arith.constant 0 : i32
    %458 = arith.index_cast %c0_i32_227 : i32 to index
    %c0_228 = arith.constant 0 : index
    %c0_229 = arith.constant 0 : index
    %459 = vector.load %arg9[%458, %c0_228, %c0_229] : memref<8x8x128xf32, #tpu.memory_space<vmem>>, vector<1x8x128xf32>
    %460 = vector.shape_cast %459 : vector<1x8x128xf32> to vector<8x128xf32>
    %c7_i32_230 = arith.constant 7 : i32
    %461 = arith.subi %c7_i32_230, %c0_i32_227 : i32
    %462 = arith.index_cast %461 : i32 to index
    %c0_231 = arith.constant 0 : index
    %c0_232 = arith.constant 0 : index
    %463 = vector.load %arg9[%462, %c0_231, %c0_232] : memref<8x8x128xf32, #tpu.memory_space<vmem>>, vector<1x8x128xf32>
    %464 = vector.shape_cast %463 : vector<1x8x128xf32> to vector<8x128xf32>
    %465 = vector.shape_cast %18 : vector<1x128xi1> to vector<1x128xi1>
    %466 = vector.broadcast %465 : vector<1x128xi1> to vector<8x128xi1>
    %467 = arith.select %466, %460, %464 : vector<8x128xi1>, vector<8x128xf32>
    %c0_233 = arith.constant 0 : index
    %c0_234 = arith.constant 0 : index
    %468 = vector.load %arg13[%c0_233, %c0_234] : memref<8x32xf32, #tpu.memory_space<vmem>>, vector<8x32xf32>
    %cst_235 = arith.constant dense<0.000000e+00> : vector<8x128xf32>
    %469 = tpu.matmul %468, %453, %cst_235 {dimension_numbers = #tpu.dot_dimension_numbers<[1], [0], [0], [1], [0, 0, 1, 1], [], []>} : vector<8x32xf32>, vector<32x128xf32>, vector<8x128xf32> -> vector<8x128xf32>
    %470 = arith.addf %467, %469 : vector<8x128xf32>
    %471 = vector.extract_strided_slice %470 {offsets = [0, 0], sizes = [8, 32], strides = [1, 1]} : vector<8x128xf32> to vector<8x32xf32>
    %472 = arith.negf %471 : vector<8x32xf32>
    %473 = math.exp %472 : vector<8x32xf32>
    %cst_236 = arith.constant 1.000000e+00 : f32
    %474 = vector.broadcast %cst_236 : f32 to vector<8x32xf32>
    %475 = arith.addf %474, %473 : vector<8x32xf32>
    %476 = arith.divf %474, %475 : vector<8x32xf32>
    %477 = vector.extract_strided_slice %470 {offsets = [0, 32], sizes = [8, 32], strides = [1, 1]} : vector<8x128xf32> to vector<8x32xf32>
    %478 = arith.negf %477 : vector<8x32xf32>
    %479 = math.exp %478 : vector<8x32xf32>
    %cst_237 = arith.constant 1.000000e+00 : f32
    %480 = vector.broadcast %cst_237 : f32 to vector<8x32xf32>
    %481 = arith.addf %480, %479 : vector<8x32xf32>
    %482 = arith.divf %480, %481 : vector<8x32xf32>
    %483 = vector.extract_strided_slice %470 {offsets = [0, 64], sizes = [8, 32], strides = [1, 1]} : vector<8x128xf32> to vector<8x32xf32>
    %484 = math.tanh %483 : vector<8x32xf32>
    %485 = vector.extract_strided_slice %470 {offsets = [0, 96], sizes = [8, 32], strides = [1, 1]} : vector<8x128xf32> to vector<8x32xf32>
    %486 = arith.negf %485 : vector<8x32xf32>
    %487 = math.exp %486 : vector<8x32xf32>
    %cst_238 = arith.constant 1.000000e+00 : f32
    %488 = vector.broadcast %cst_238 : f32 to vector<8x32xf32>
    %489 = arith.addf %488, %487 : vector<8x32xf32>
    %490 = arith.divf %488, %489 : vector<8x32xf32>
    %c0_239 = arith.constant 0 : index
    %c0_240 = arith.constant 0 : index
    %491 = vector.load %arg14[%c0_239, %c0_240] : memref<8x32xf32, #tpu.memory_space<vmem>>, vector<8x32xf32>
    %492 = arith.mulf %482, %491 : vector<8x32xf32>
    %493 = arith.mulf %476, %484 : vector<8x32xf32>
    %494 = arith.addf %492, %493 : vector<8x32xf32>
    %495 = math.tanh %494 : vector<8x32xf32>
    %496 = arith.mulf %490, %495 : vector<8x32xf32>
    %c0_241 = arith.constant 0 : index
    %c0_242 = arith.constant 0 : index
    %497 = vector.load %arg14[%c0_241, %c0_242] : memref<8x32xf32, #tpu.memory_space<vmem>>, vector<8x32xf32>
    tpu.vector_store %arg14[%c0_241, %c0_242], %494 {strides = array<i32>} : memref<8x32xf32, #tpu.memory_space<vmem>>, vector<8x32xf32>,
    %c0_243 = arith.constant 0 : index
    %c0_244 = arith.constant 0 : index
    %498 = vector.load %arg13[%c0_243, %c0_244] : memref<8x32xf32, #tpu.memory_space<vmem>>, vector<8x32xf32>
    tpu.vector_store %arg13[%c0_243, %c0_244], %496 {strides = array<i32>} : memref<8x32xf32, #tpu.memory_space<vmem>>, vector<8x32xf32>,
    %499 = arith.index_cast %c0_i32_227 : i32 to index
    %c0_245 = arith.constant 0 : index
    %c0_246 = arith.constant 0 : index
    %500 = vector.load %arg11[%499, %c0_245, %c0_246] : memref<8x8x32xf32, #tpu.memory_space<vmem>>, vector<1x8x32xf32>
    %501 = vector.shape_cast %500 : vector<1x8x32xf32> to vector<8x32xf32>
    %502 = vector.shape_cast %496 : vector<8x32xf32> to vector<1x8x32xf32>
    tpu.vector_store %arg11[%499, %c0_245, %c0_246], %502 {strides = array<i32>} : memref<8x8x32xf32, #tpu.memory_space<vmem>>, vector<1x8x32xf32>,
    %c7_i32_247 = arith.constant 7 : i32
    %503 = arith.subi %c7_i32_247, %c0_i32_227 : i32
    %504 = arith.index_cast %503 : i32 to index
    %c0_248 = arith.constant 0 : index
    %c0_249 = arith.constant 0 : index
    %505 = vector.load %arg12[%504, %c0_248, %c0_249] : memref<8x8x32xf32, #tpu.memory_space<vmem>>, vector<1x8x32xf32>
    %506 = vector.shape_cast %505 : vector<1x8x32xf32> to vector<8x32xf32>
    %507 = vector.shape_cast %496 : vector<8x32xf32> to vector<1x8x32xf32>
    tpu.vector_store %arg12[%504, %c0_248, %c0_249], %507 {strides = array<i32>} : memref<8x8x32xf32, #tpu.memory_space<vmem>>, vector<1x8x32xf32>,
    %c1_i32_250 = arith.constant 1 : i32
    %508 = arith.index_cast %c1_i32_250 : i32 to index
    %c0_251 = arith.constant 0 : index
    %c0_252 = arith.constant 0 : index
    %509 = vector.load %arg9[%508, %c0_251, %c0_252] : memref<8x8x128xf32, #tpu.memory_space<vmem>>, vector<1x8x128xf32>
    %510 = vector.shape_cast %509 : vector<1x8x128xf32> to vector<8x128xf32>
    %c7_i32_253 = arith.constant 7 : i32
    %511 = arith.subi %c7_i32_253, %c1_i32_250 : i32
    %512 = arith.index_cast %511 : i32 to index
    %c0_254 = arith.constant 0 : index
    %c0_255 = arith.constant 0 : index
    %513 = vector.load %arg9[%512, %c0_254, %c0_255] : memref<8x8x128xf32, #tpu.memory_space<vmem>>, vector<1x8x128xf32>
    %514 = vector.shape_cast %513 : vector<1x8x128xf32> to vector<8x128xf32>
    %515 = vector.shape_cast %18 : vector<1x128xi1> to vector<1x128xi1>
    %516 = vector.broadcast %515 : vector<1x128xi1> to vector<8x128xi1>
    %517 = arith.select %516, %510, %514 : vector<8x128xi1>, vector<8x128xf32>
    %c0_256 = arith.constant 0 : index
    %c0_257 = arith.constant 0 : index
    %518 = vector.load %arg13[%c0_256, %c0_257] : memref<8x32xf32, #tpu.memory_space<vmem>>, vector<8x32xf32>
    %cst_258 = arith.constant dense<0.000000e+00> : vector<8x128xf32>
    %519 = tpu.matmul %518, %453, %cst_258 {dimension_numbers = #tpu.dot_dimension_numbers<[1], [0], [0], [1], [0, 0, 1, 1], [], []>} : vector<8x32xf32>, vector<32x128xf32>, vector<8x128xf32> -> vector<8x128xf32>
    %520 = arith.addf %517, %519 : vector<8x128xf32>
    %521 = vector.extract_strided_slice %520 {offsets = [0, 0], sizes = [8, 32], strides = [1, 1]} : vector<8x128xf32> to vector<8x32xf32>
    %522 = arith.negf %521 : vector<8x32xf32>
    %523 = math.exp %522 : vector<8x32xf32>
    %cst_259 = arith.constant 1.000000e+00 : f32
    %524 = vector.broadcast %cst_259 : f32 to vector<8x32xf32>
    %525 = arith.addf %524, %523 : vector<8x32xf32>
    %526 = arith.divf %524, %525 : vector<8x32xf32>
    %527 = vector.extract_strided_slice %520 {offsets = [0, 32], sizes = [8, 32], strides = [1, 1]} : vector<8x128xf32> to vector<8x32xf32>
    %528 = arith.negf %527 : vector<8x32xf32>
    %529 = math.exp %528 : vector<8x32xf32>
    %cst_260 = arith.constant 1.000000e+00 : f32
    %530 = vector.broadcast %cst_260 : f32 to vector<8x32xf32>
    %531 = arith.addf %530, %529 : vector<8x32xf32>
    %532 = arith.divf %530, %531 : vector<8x32xf32>
    %533 = vector.extract_strided_slice %520 {offsets = [0, 64], sizes = [8, 32], strides = [1, 1]} : vector<8x128xf32> to vector<8x32xf32>
    %534 = math.tanh %533 : vector<8x32xf32>
    %535 = vector.extract_strided_slice %520 {offsets = [0, 96], sizes = [8, 32], strides = [1, 1]} : vector<8x128xf32> to vector<8x32xf32>
    %536 = arith.negf %535 : vector<8x32xf32>
    %537 = math.exp %536 : vector<8x32xf32>
    %cst_261 = arith.constant 1.000000e+00 : f32
    %538 = vector.broadcast %cst_261 : f32 to vector<8x32xf32>
    %539 = arith.addf %538, %537 : vector<8x32xf32>
    %540 = arith.divf %538, %539 : vector<8x32xf32>
    %c0_262 = arith.constant 0 : index
    %c0_263 = arith.constant 0 : index
    %541 = vector.load %arg14[%c0_262, %c0_263] : memref<8x32xf32, #tpu.memory_space<vmem>>, vector<8x32xf32>
    %542 = arith.mulf %532, %541 : vector<8x32xf32>
    %543 = arith.mulf %526, %534 : vector<8x32xf32>
    %544 = arith.addf %542, %543 : vector<8x32xf32>
    %545 = math.tanh %544 : vector<8x32xf32>
    %546 = arith.mulf %540, %545 : vector<8x32xf32>
    %c0_264 = arith.constant 0 : index
    %c0_265 = arith.constant 0 : index
    %547 = vector.load %arg14[%c0_264, %c0_265] : memref<8x32xf32, #tpu.memory_space<vmem>>, vector<8x32xf32>
    tpu.vector_store %arg14[%c0_264, %c0_265], %544 {strides = array<i32>} : memref<8x32xf32, #tpu.memory_space<vmem>>, vector<8x32xf32>,
    %c0_266 = arith.constant 0 : index
    %c0_267 = arith.constant 0 : index
    %548 = vector.load %arg13[%c0_266, %c0_267] : memref<8x32xf32, #tpu.memory_space<vmem>>, vector<8x32xf32>
    tpu.vector_store %arg13[%c0_266, %c0_267], %546 {strides = array<i32>} : memref<8x32xf32, #tpu.memory_space<vmem>>, vector<8x32xf32>,
    %549 = arith.index_cast %c1_i32_250 : i32 to index
    %c0_268 = arith.constant 0 : index
    %c0_269 = arith.constant 0 : index
    %550 = vector.load %arg11[%549, %c0_268, %c0_269] : memref<8x8x32xf32, #tpu.memory_space<vmem>>, vector<1x8x32xf32>
    %551 = vector.shape_cast %550 : vector<1x8x32xf32> to vector<8x32xf32>
    %552 = vector.shape_cast %546 : vector<8x32xf32> to vector<1x8x32xf32>
    tpu.vector_store %arg11[%549, %c0_268, %c0_269], %552 {strides = array<i32>} : memref<8x8x32xf32, #tpu.memory_space<vmem>>, vector<1x8x32xf32>,
    %c7_i32_270 = arith.constant 7 : i32
    %553 = arith.subi %c7_i32_270, %c1_i32_250 : i32
    %554 = arith.index_cast %553 : i32 to index
    %c0_271 = arith.constant 0 : index
    %c0_272 = arith.constant 0 : index
    %555 = vector.load %arg12[%554, %c0_271, %c0_272] : memref<8x8x32xf32, #tpu.memory_space<vmem>>, vector<1x8x32xf32>
    %556 = vector.shape_cast %555 : vector<1x8x32xf32> to vector<8x32xf32>
    %557 = vector.shape_cast %546 : vector<8x32xf32> to vector<1x8x32xf32>
    tpu.vector_store %arg12[%554, %c0_271, %c0_272], %557 {strides = array<i32>} : memref<8x8x32xf32, #tpu.memory_space<vmem>>, vector<1x8x32xf32>,
    %c2_i32_273 = arith.constant 2 : i32
    %558 = arith.index_cast %c2_i32_273 : i32 to index
    %c0_274 = arith.constant 0 : index
    %c0_275 = arith.constant 0 : index
    %559 = vector.load %arg9[%558, %c0_274, %c0_275] : memref<8x8x128xf32, #tpu.memory_space<vmem>>, vector<1x8x128xf32>
    %560 = vector.shape_cast %559 : vector<1x8x128xf32> to vector<8x128xf32>
    %c7_i32_276 = arith.constant 7 : i32
    %561 = arith.subi %c7_i32_276, %c2_i32_273 : i32
    %562 = arith.index_cast %561 : i32 to index
    %c0_277 = arith.constant 0 : index
    %c0_278 = arith.constant 0 : index
    %563 = vector.load %arg9[%562, %c0_277, %c0_278] : memref<8x8x128xf32, #tpu.memory_space<vmem>>, vector<1x8x128xf32>
    %564 = vector.shape_cast %563 : vector<1x8x128xf32> to vector<8x128xf32>
    %565 = vector.shape_cast %18 : vector<1x128xi1> to vector<1x128xi1>
    %566 = vector.broadcast %565 : vector<1x128xi1> to vector<8x128xi1>
    %567 = arith.select %566, %560, %564 : vector<8x128xi1>, vector<8x128xf32>
    %c0_279 = arith.constant 0 : index
    %c0_280 = arith.constant 0 : index
    %568 = vector.load %arg13[%c0_279, %c0_280] : memref<8x32xf32, #tpu.memory_space<vmem>>, vector<8x32xf32>
    %cst_281 = arith.constant dense<0.000000e+00> : vector<8x128xf32>
    %569 = tpu.matmul %568, %453, %cst_281 {dimension_numbers = #tpu.dot_dimension_numbers<[1], [0], [0], [1], [0, 0, 1, 1], [], []>} : vector<8x32xf32>, vector<32x128xf32>, vector<8x128xf32> -> vector<8x128xf32>
    %570 = arith.addf %567, %569 : vector<8x128xf32>
    %571 = vector.extract_strided_slice %570 {offsets = [0, 0], sizes = [8, 32], strides = [1, 1]} : vector<8x128xf32> to vector<8x32xf32>
    %572 = arith.negf %571 : vector<8x32xf32>
    %573 = math.exp %572 : vector<8x32xf32>
    %cst_282 = arith.constant 1.000000e+00 : f32
    %574 = vector.broadcast %cst_282 : f32 to vector<8x32xf32>
    %575 = arith.addf %574, %573 : vector<8x32xf32>
    %576 = arith.divf %574, %575 : vector<8x32xf32>
    %577 = vector.extract_strided_slice %570 {offsets = [0, 32], sizes = [8, 32], strides = [1, 1]} : vector<8x128xf32> to vector<8x32xf32>
    %578 = arith.negf %577 : vector<8x32xf32>
    %579 = math.exp %578 : vector<8x32xf32>
    %cst_283 = arith.constant 1.000000e+00 : f32
    %580 = vector.broadcast %cst_283 : f32 to vector<8x32xf32>
    %581 = arith.addf %580, %579 : vector<8x32xf32>
    %582 = arith.divf %580, %581 : vector<8x32xf32>
    %583 = vector.extract_strided_slice %570 {offsets = [0, 64], sizes = [8, 32], strides = [1, 1]} : vector<8x128xf32> to vector<8x32xf32>
    %584 = math.tanh %583 : vector<8x32xf32>
    %585 = vector.extract_strided_slice %570 {offsets = [0, 96], sizes = [8, 32], strides = [1, 1]} : vector<8x128xf32> to vector<8x32xf32>
    %586 = arith.negf %585 : vector<8x32xf32>
    %587 = math.exp %586 : vector<8x32xf32>
    %cst_284 = arith.constant 1.000000e+00 : f32
    %588 = vector.broadcast %cst_284 : f32 to vector<8x32xf32>
    %589 = arith.addf %588, %587 : vector<8x32xf32>
    %590 = arith.divf %588, %589 : vector<8x32xf32>
    %c0_285 = arith.constant 0 : index
    %c0_286 = arith.constant 0 : index
    %591 = vector.load %arg14[%c0_285, %c0_286] : memref<8x32xf32, #tpu.memory_space<vmem>>, vector<8x32xf32>
    %592 = arith.mulf %582, %591 : vector<8x32xf32>
    %593 = arith.mulf %576, %584 : vector<8x32xf32>
    %594 = arith.addf %592, %593 : vector<8x32xf32>
    %595 = math.tanh %594 : vector<8x32xf32>
    %596 = arith.mulf %590, %595 : vector<8x32xf32>
    %c0_287 = arith.constant 0 : index
    %c0_288 = arith.constant 0 : index
    %597 = vector.load %arg14[%c0_287, %c0_288] : memref<8x32xf32, #tpu.memory_space<vmem>>, vector<8x32xf32>
    tpu.vector_store %arg14[%c0_287, %c0_288], %594 {strides = array<i32>} : memref<8x32xf32, #tpu.memory_space<vmem>>, vector<8x32xf32>,
    %c0_289 = arith.constant 0 : index
    %c0_290 = arith.constant 0 : index
    %598 = vector.load %arg13[%c0_289, %c0_290] : memref<8x32xf32, #tpu.memory_space<vmem>>, vector<8x32xf32>
    tpu.vector_store %arg13[%c0_289, %c0_290], %596 {strides = array<i32>} : memref<8x32xf32, #tpu.memory_space<vmem>>, vector<8x32xf32>,
    %599 = arith.index_cast %c2_i32_273 : i32 to index
    %c0_291 = arith.constant 0 : index
    %c0_292 = arith.constant 0 : index
    %600 = vector.load %arg11[%599, %c0_291, %c0_292] : memref<8x8x32xf32, #tpu.memory_space<vmem>>, vector<1x8x32xf32>
    %601 = vector.shape_cast %600 : vector<1x8x32xf32> to vector<8x32xf32>
    %602 = vector.shape_cast %596 : vector<8x32xf32> to vector<1x8x32xf32>
    tpu.vector_store %arg11[%599, %c0_291, %c0_292], %602 {strides = array<i32>} : memref<8x8x32xf32, #tpu.memory_space<vmem>>, vector<1x8x32xf32>,
    %c7_i32_293 = arith.constant 7 : i32
    %603 = arith.subi %c7_i32_293, %c2_i32_273 : i32
    %604 = arith.index_cast %603 : i32 to index
    %c0_294 = arith.constant 0 : index
    %c0_295 = arith.constant 0 : index
    %605 = vector.load %arg12[%604, %c0_294, %c0_295] : memref<8x8x32xf32, #tpu.memory_space<vmem>>, vector<1x8x32xf32>
    %606 = vector.shape_cast %605 : vector<1x8x32xf32> to vector<8x32xf32>
    %607 = vector.shape_cast %596 : vector<8x32xf32> to vector<1x8x32xf32>
    tpu.vector_store %arg12[%604, %c0_294, %c0_295], %607 {strides = array<i32>} : memref<8x8x32xf32, #tpu.memory_space<vmem>>, vector<1x8x32xf32>,
    %c3_i32_296 = arith.constant 3 : i32
    %608 = arith.index_cast %c3_i32_296 : i32 to index
    %c0_297 = arith.constant 0 : index
    %c0_298 = arith.constant 0 : index
    %609 = vector.load %arg9[%608, %c0_297, %c0_298] : memref<8x8x128xf32, #tpu.memory_space<vmem>>, vector<1x8x128xf32>
    %610 = vector.shape_cast %609 : vector<1x8x128xf32> to vector<8x128xf32>
    %c7_i32_299 = arith.constant 7 : i32
    %611 = arith.subi %c7_i32_299, %c3_i32_296 : i32
    %612 = arith.index_cast %611 : i32 to index
    %c0_300 = arith.constant 0 : index
    %c0_301 = arith.constant 0 : index
    %613 = vector.load %arg9[%612, %c0_300, %c0_301] : memref<8x8x128xf32, #tpu.memory_space<vmem>>, vector<1x8x128xf32>
    %614 = vector.shape_cast %613 : vector<1x8x128xf32> to vector<8x128xf32>
    %615 = vector.shape_cast %18 : vector<1x128xi1> to vector<1x128xi1>
    %616 = vector.broadcast %615 : vector<1x128xi1> to vector<8x128xi1>
    %617 = arith.select %616, %610, %614 : vector<8x128xi1>, vector<8x128xf32>
    %c0_302 = arith.constant 0 : index
    %c0_303 = arith.constant 0 : index
    %618 = vector.load %arg13[%c0_302, %c0_303] : memref<8x32xf32, #tpu.memory_space<vmem>>, vector<8x32xf32>
    %cst_304 = arith.constant dense<0.000000e+00> : vector<8x128xf32>
    %619 = tpu.matmul %618, %453, %cst_304 {dimension_numbers = #tpu.dot_dimension_numbers<[1], [0], [0], [1], [0, 0, 1, 1], [], []>} : vector<8x32xf32>, vector<32x128xf32>, vector<8x128xf32> -> vector<8x128xf32>
    %620 = arith.addf %617, %619 : vector<8x128xf32>
    %621 = vector.extract_strided_slice %620 {offsets = [0, 0], sizes = [8, 32], strides = [1, 1]} : vector<8x128xf32> to vector<8x32xf32>
    %622 = arith.negf %621 : vector<8x32xf32>
    %623 = math.exp %622 : vector<8x32xf32>
    %cst_305 = arith.constant 1.000000e+00 : f32
    %624 = vector.broadcast %cst_305 : f32 to vector<8x32xf32>
    %625 = arith.addf %624, %623 : vector<8x32xf32>
    %626 = arith.divf %624, %625 : vector<8x32xf32>
    %627 = vector.extract_strided_slice %620 {offsets = [0, 32], sizes = [8, 32], strides = [1, 1]} : vector<8x128xf32> to vector<8x32xf32>
    %628 = arith.negf %627 : vector<8x32xf32>
    %629 = math.exp %628 : vector<8x32xf32>
    %cst_306 = arith.constant 1.000000e+00 : f32
    %630 = vector.broadcast %cst_306 : f32 to vector<8x32xf32>
    %631 = arith.addf %630, %629 : vector<8x32xf32>
    %632 = arith.divf %630, %631 : vector<8x32xf32>
    %633 = vector.extract_strided_slice %620 {offsets = [0, 64], sizes = [8, 32], strides = [1, 1]} : vector<8x128xf32> to vector<8x32xf32>
    %634 = math.tanh %633 : vector<8x32xf32>
    %635 = vector.extract_strided_slice %620 {offsets = [0, 96], sizes = [8, 32], strides = [1, 1]} : vector<8x128xf32> to vector<8x32xf32>
    %636 = arith.negf %635 : vector<8x32xf32>
    %637 = math.exp %636 : vector<8x32xf32>
    %cst_307 = arith.constant 1.000000e+00 : f32
    %638 = vector.broadcast %cst_307 : f32 to vector<8x32xf32>
    %639 = arith.addf %638, %637 : vector<8x32xf32>
    %640 = arith.divf %638, %639 : vector<8x32xf32>
    %c0_308 = arith.constant 0 : index
    %c0_309 = arith.constant 0 : index
    %641 = vector.load %arg14[%c0_308, %c0_309] : memref<8x32xf32, #tpu.memory_space<vmem>>, vector<8x32xf32>
    %642 = arith.mulf %632, %641 : vector<8x32xf32>
    %643 = arith.mulf %626, %634 : vector<8x32xf32>
    %644 = arith.addf %642, %643 : vector<8x32xf32>
    %645 = math.tanh %644 : vector<8x32xf32>
    %646 = arith.mulf %640, %645 : vector<8x32xf32>
    %c0_310 = arith.constant 0 : index
    %c0_311 = arith.constant 0 : index
    %647 = vector.load %arg14[%c0_310, %c0_311] : memref<8x32xf32, #tpu.memory_space<vmem>>, vector<8x32xf32>
    tpu.vector_store %arg14[%c0_310, %c0_311], %644 {strides = array<i32>} : memref<8x32xf32, #tpu.memory_space<vmem>>, vector<8x32xf32>,
    %c0_312 = arith.constant 0 : index
    %c0_313 = arith.constant 0 : index
    %648 = vector.load %arg13[%c0_312, %c0_313] : memref<8x32xf32, #tpu.memory_space<vmem>>, vector<8x32xf32>
    tpu.vector_store %arg13[%c0_312, %c0_313], %646 {strides = array<i32>} : memref<8x32xf32, #tpu.memory_space<vmem>>, vector<8x32xf32>,
    %649 = arith.index_cast %c3_i32_296 : i32 to index
    %c0_314 = arith.constant 0 : index
    %c0_315 = arith.constant 0 : index
    %650 = vector.load %arg11[%649, %c0_314, %c0_315] : memref<8x8x32xf32, #tpu.memory_space<vmem>>, vector<1x8x32xf32>
    %651 = vector.shape_cast %650 : vector<1x8x32xf32> to vector<8x32xf32>
    %652 = vector.shape_cast %646 : vector<8x32xf32> to vector<1x8x32xf32>
    tpu.vector_store %arg11[%649, %c0_314, %c0_315], %652 {strides = array<i32>} : memref<8x8x32xf32, #tpu.memory_space<vmem>>, vector<1x8x32xf32>,
    %c7_i32_316 = arith.constant 7 : i32
    %653 = arith.subi %c7_i32_316, %c3_i32_296 : i32
    %654 = arith.index_cast %653 : i32 to index
    %c0_317 = arith.constant 0 : index
    %c0_318 = arith.constant 0 : index
    %655 = vector.load %arg12[%654, %c0_317, %c0_318] : memref<8x8x32xf32, #tpu.memory_space<vmem>>, vector<1x8x32xf32>
    %656 = vector.shape_cast %655 : vector<1x8x32xf32> to vector<8x32xf32>
    %657 = vector.shape_cast %646 : vector<8x32xf32> to vector<1x8x32xf32>
    tpu.vector_store %arg12[%654, %c0_317, %c0_318], %657 {strides = array<i32>} : memref<8x8x32xf32, #tpu.memory_space<vmem>>, vector<1x8x32xf32>,
    %c4_i32_319 = arith.constant 4 : i32
    %658 = arith.index_cast %c4_i32_319 : i32 to index
    %c0_320 = arith.constant 0 : index
    %c0_321 = arith.constant 0 : index
    %659 = vector.load %arg9[%658, %c0_320, %c0_321] : memref<8x8x128xf32, #tpu.memory_space<vmem>>, vector<1x8x128xf32>
    %660 = vector.shape_cast %659 : vector<1x8x128xf32> to vector<8x128xf32>
    %c7_i32_322 = arith.constant 7 : i32
    %661 = arith.subi %c7_i32_322, %c4_i32_319 : i32
    %662 = arith.index_cast %661 : i32 to index
    %c0_323 = arith.constant 0 : index
    %c0_324 = arith.constant 0 : index
    %663 = vector.load %arg9[%662, %c0_323, %c0_324] : memref<8x8x128xf32, #tpu.memory_space<vmem>>, vector<1x8x128xf32>
    %664 = vector.shape_cast %663 : vector<1x8x128xf32> to vector<8x128xf32>
    %665 = vector.shape_cast %18 : vector<1x128xi1> to vector<1x128xi1>
    %666 = vector.broadcast %665 : vector<1x128xi1> to vector<8x128xi1>
    %667 = arith.select %666, %660, %664 : vector<8x128xi1>, vector<8x128xf32>
    %c0_325 = arith.constant 0 : index
    %c0_326 = arith.constant 0 : index
    %668 = vector.load %arg13[%c0_325, %c0_326] : memref<8x32xf32, #tpu.memory_space<vmem>>, vector<8x32xf32>
    %cst_327 = arith.constant dense<0.000000e+00> : vector<8x128xf32>
    %669 = tpu.matmul %668, %453, %cst_327 {dimension_numbers = #tpu.dot_dimension_numbers<[1], [0], [0], [1], [0, 0, 1, 1], [], []>} : vector<8x32xf32>, vector<32x128xf32>, vector<8x128xf32> -> vector<8x128xf32>
    %670 = arith.addf %667, %669 : vector<8x128xf32>
    %671 = vector.extract_strided_slice %670 {offsets = [0, 0], sizes = [8, 32], strides = [1, 1]} : vector<8x128xf32> to vector<8x32xf32>
    %672 = arith.negf %671 : vector<8x32xf32>
    %673 = math.exp %672 : vector<8x32xf32>
    %cst_328 = arith.constant 1.000000e+00 : f32
    %674 = vector.broadcast %cst_328 : f32 to vector<8x32xf32>
    %675 = arith.addf %674, %673 : vector<8x32xf32>
    %676 = arith.divf %674, %675 : vector<8x32xf32>
    %677 = vector.extract_strided_slice %670 {offsets = [0, 32], sizes = [8, 32], strides = [1, 1]} : vector<8x128xf32> to vector<8x32xf32>
    %678 = arith.negf %677 : vector<8x32xf32>
    %679 = math.exp %678 : vector<8x32xf32>
    %cst_329 = arith.constant 1.000000e+00 : f32
    %680 = vector.broadcast %cst_329 : f32 to vector<8x32xf32>
    %681 = arith.addf %680, %679 : vector<8x32xf32>
    %682 = arith.divf %680, %681 : vector<8x32xf32>
    %683 = vector.extract_strided_slice %670 {offsets = [0, 64], sizes = [8, 32], strides = [1, 1]} : vector<8x128xf32> to vector<8x32xf32>
    %684 = math.tanh %683 : vector<8x32xf32>
    %685 = vector.extract_strided_slice %670 {offsets = [0, 96], sizes = [8, 32], strides = [1, 1]} : vector<8x128xf32> to vector<8x32xf32>
    %686 = arith.negf %685 : vector<8x32xf32>
    %687 = math.exp %686 : vector<8x32xf32>
    %cst_330 = arith.constant 1.000000e+00 : f32
    %688 = vector.broadcast %cst_330 : f32 to vector<8x32xf32>
    %689 = arith.addf %688, %687 : vector<8x32xf32>
    %690 = arith.divf %688, %689 : vector<8x32xf32>
    %c0_331 = arith.constant 0 : index
    %c0_332 = arith.constant 0 : index
    %691 = vector.load %arg14[%c0_331, %c0_332] : memref<8x32xf32, #tpu.memory_space<vmem>>, vector<8x32xf32>
    %692 = arith.mulf %682, %691 : vector<8x32xf32>
    %693 = arith.mulf %676, %684 : vector<8x32xf32>
    %694 = arith.addf %692, %693 : vector<8x32xf32>
    %695 = math.tanh %694 : vector<8x32xf32>
    %696 = arith.mulf %690, %695 : vector<8x32xf32>
    %c0_333 = arith.constant 0 : index
    %c0_334 = arith.constant 0 : index
    %697 = vector.load %arg14[%c0_333, %c0_334] : memref<8x32xf32, #tpu.memory_space<vmem>>, vector<8x32xf32>
    tpu.vector_store %arg14[%c0_333, %c0_334], %694 {strides = array<i32>} : memref<8x32xf32, #tpu.memory_space<vmem>>, vector<8x32xf32>,
    %c0_335 = arith.constant 0 : index
    %c0_336 = arith.constant 0 : index
    %698 = vector.load %arg13[%c0_335, %c0_336] : memref<8x32xf32, #tpu.memory_space<vmem>>, vector<8x32xf32>
    tpu.vector_store %arg13[%c0_335, %c0_336], %696 {strides = array<i32>} : memref<8x32xf32, #tpu.memory_space<vmem>>, vector<8x32xf32>,
    %699 = arith.index_cast %c4_i32_319 : i32 to index
    %c0_337 = arith.constant 0 : index
    %c0_338 = arith.constant 0 : index
    %700 = vector.load %arg11[%699, %c0_337, %c0_338] : memref<8x8x32xf32, #tpu.memory_space<vmem>>, vector<1x8x32xf32>
    %701 = vector.shape_cast %700 : vector<1x8x32xf32> to vector<8x32xf32>
    %702 = vector.shape_cast %696 : vector<8x32xf32> to vector<1x8x32xf32>
    tpu.vector_store %arg11[%699, %c0_337, %c0_338], %702 {strides = array<i32>} : memref<8x8x32xf32, #tpu.memory_space<vmem>>, vector<1x8x32xf32>,
    %c7_i32_339 = arith.constant 7 : i32
    %703 = arith.subi %c7_i32_339, %c4_i32_319 : i32
    %704 = arith.index_cast %703 : i32 to index
    %c0_340 = arith.constant 0 : index
    %c0_341 = arith.constant 0 : index
    %705 = vector.load %arg12[%704, %c0_340, %c0_341] : memref<8x8x32xf32, #tpu.memory_space<vmem>>, vector<1x8x32xf32>
    %706 = vector.shape_cast %705 : vector<1x8x32xf32> to vector<8x32xf32>
    %707 = vector.shape_cast %696 : vector<8x32xf32> to vector<1x8x32xf32>
    tpu.vector_store %arg12[%704, %c0_340, %c0_341], %707 {strides = array<i32>} : memref<8x8x32xf32, #tpu.memory_space<vmem>>, vector<1x8x32xf32>,
    %c5_i32_342 = arith.constant 5 : i32
    %708 = arith.index_cast %c5_i32_342 : i32 to index
    %c0_343 = arith.constant 0 : index
    %c0_344 = arith.constant 0 : index
    %709 = vector.load %arg9[%708, %c0_343, %c0_344] : memref<8x8x128xf32, #tpu.memory_space<vmem>>, vector<1x8x128xf32>
    %710 = vector.shape_cast %709 : vector<1x8x128xf32> to vector<8x128xf32>
    %c7_i32_345 = arith.constant 7 : i32
    %711 = arith.subi %c7_i32_345, %c5_i32_342 : i32
    %712 = arith.index_cast %711 : i32 to index
    %c0_346 = arith.constant 0 : index
    %c0_347 = arith.constant 0 : index
    %713 = vector.load %arg9[%712, %c0_346, %c0_347] : memref<8x8x128xf32, #tpu.memory_space<vmem>>, vector<1x8x128xf32>
    %714 = vector.shape_cast %713 : vector<1x8x128xf32> to vector<8x128xf32>
    %715 = vector.shape_cast %18 : vector<1x128xi1> to vector<1x128xi1>
    %716 = vector.broadcast %715 : vector<1x128xi1> to vector<8x128xi1>
    %717 = arith.select %716, %710, %714 : vector<8x128xi1>, vector<8x128xf32>
    %c0_348 = arith.constant 0 : index
    %c0_349 = arith.constant 0 : index
    %718 = vector.load %arg13[%c0_348, %c0_349] : memref<8x32xf32, #tpu.memory_space<vmem>>, vector<8x32xf32>
    %cst_350 = arith.constant dense<0.000000e+00> : vector<8x128xf32>
    %719 = tpu.matmul %718, %453, %cst_350 {dimension_numbers = #tpu.dot_dimension_numbers<[1], [0], [0], [1], [0, 0, 1, 1], [], []>} : vector<8x32xf32>, vector<32x128xf32>, vector<8x128xf32> -> vector<8x128xf32>
    %720 = arith.addf %717, %719 : vector<8x128xf32>
    %721 = vector.extract_strided_slice %720 {offsets = [0, 0], sizes = [8, 32], strides = [1, 1]} : vector<8x128xf32> to vector<8x32xf32>
    %722 = arith.negf %721 : vector<8x32xf32>
    %723 = math.exp %722 : vector<8x32xf32>
    %cst_351 = arith.constant 1.000000e+00 : f32
    %724 = vector.broadcast %cst_351 : f32 to vector<8x32xf32>
    %725 = arith.addf %724, %723 : vector<8x32xf32>
    %726 = arith.divf %724, %725 : vector<8x32xf32>
    %727 = vector.extract_strided_slice %720 {offsets = [0, 32], sizes = [8, 32], strides = [1, 1]} : vector<8x128xf32> to vector<8x32xf32>
    %728 = arith.negf %727 : vector<8x32xf32>
    %729 = math.exp %728 : vector<8x32xf32>
    %cst_352 = arith.constant 1.000000e+00 : f32
    %730 = vector.broadcast %cst_352 : f32 to vector<8x32xf32>
    %731 = arith.addf %730, %729 : vector<8x32xf32>
    %732 = arith.divf %730, %731 : vector<8x32xf32>
    %733 = vector.extract_strided_slice %720 {offsets = [0, 64], sizes = [8, 32], strides = [1, 1]} : vector<8x128xf32> to vector<8x32xf32>
    %734 = math.tanh %733 : vector<8x32xf32>
    %735 = vector.extract_strided_slice %720 {offsets = [0, 96], sizes = [8, 32], strides = [1, 1]} : vector<8x128xf32> to vector<8x32xf32>
    %736 = arith.negf %735 : vector<8x32xf32>
    %737 = math.exp %736 : vector<8x32xf32>
    %cst_353 = arith.constant 1.000000e+00 : f32
    %738 = vector.broadcast %cst_353 : f32 to vector<8x32xf32>
    %739 = arith.addf %738, %737 : vector<8x32xf32>
    %740 = arith.divf %738, %739 : vector<8x32xf32>
    %c0_354 = arith.constant 0 : index
    %c0_355 = arith.constant 0 : index
    %741 = vector.load %arg14[%c0_354, %c0_355] : memref<8x32xf32, #tpu.memory_space<vmem>>, vector<8x32xf32>
    %742 = arith.mulf %732, %741 : vector<8x32xf32>
    %743 = arith.mulf %726, %734 : vector<8x32xf32>
    %744 = arith.addf %742, %743 : vector<8x32xf32>
    %745 = math.tanh %744 : vector<8x32xf32>
    %746 = arith.mulf %740, %745 : vector<8x32xf32>
    %c0_356 = arith.constant 0 : index
    %c0_357 = arith.constant 0 : index
    %747 = vector.load %arg14[%c0_356, %c0_357] : memref<8x32xf32, #tpu.memory_space<vmem>>, vector<8x32xf32>
    tpu.vector_store %arg14[%c0_356, %c0_357], %744 {strides = array<i32>} : memref<8x32xf32, #tpu.memory_space<vmem>>, vector<8x32xf32>,
    %c0_358 = arith.constant 0 : index
    %c0_359 = arith.constant 0 : index
    %748 = vector.load %arg13[%c0_358, %c0_359] : memref<8x32xf32, #tpu.memory_space<vmem>>, vector<8x32xf32>
    tpu.vector_store %arg13[%c0_358, %c0_359], %746 {strides = array<i32>} : memref<8x32xf32, #tpu.memory_space<vmem>>, vector<8x32xf32>,
    %749 = arith.index_cast %c5_i32_342 : i32 to index
    %c0_360 = arith.constant 0 : index
    %c0_361 = arith.constant 0 : index
    %750 = vector.load %arg11[%749, %c0_360, %c0_361] : memref<8x8x32xf32, #tpu.memory_space<vmem>>, vector<1x8x32xf32>
    %751 = vector.shape_cast %750 : vector<1x8x32xf32> to vector<8x32xf32>
    %752 = vector.shape_cast %746 : vector<8x32xf32> to vector<1x8x32xf32>
    tpu.vector_store %arg11[%749, %c0_360, %c0_361], %752 {strides = array<i32>} : memref<8x8x32xf32, #tpu.memory_space<vmem>>, vector<1x8x32xf32>,
    %c7_i32_362 = arith.constant 7 : i32
    %753 = arith.subi %c7_i32_362, %c5_i32_342 : i32
    %754 = arith.index_cast %753 : i32 to index
    %c0_363 = arith.constant 0 : index
    %c0_364 = arith.constant 0 : index
    %755 = vector.load %arg12[%754, %c0_363, %c0_364] : memref<8x8x32xf32, #tpu.memory_space<vmem>>, vector<1x8x32xf32>
    %756 = vector.shape_cast %755 : vector<1x8x32xf32> to vector<8x32xf32>
    %757 = vector.shape_cast %746 : vector<8x32xf32> to vector<1x8x32xf32>
    tpu.vector_store %arg12[%754, %c0_363, %c0_364], %757 {strides = array<i32>} : memref<8x8x32xf32, #tpu.memory_space<vmem>>, vector<1x8x32xf32>,
    %c6_i32_365 = arith.constant 6 : i32
    %758 = arith.index_cast %c6_i32_365 : i32 to index
    %c0_366 = arith.constant 0 : index
    %c0_367 = arith.constant 0 : index
    %759 = vector.load %arg9[%758, %c0_366, %c0_367] : memref<8x8x128xf32, #tpu.memory_space<vmem>>, vector<1x8x128xf32>
    %760 = vector.shape_cast %759 : vector<1x8x128xf32> to vector<8x128xf32>
    %c7_i32_368 = arith.constant 7 : i32
    %761 = arith.subi %c7_i32_368, %c6_i32_365 : i32
    %762 = arith.index_cast %761 : i32 to index
    %c0_369 = arith.constant 0 : index
    %c0_370 = arith.constant 0 : index
    %763 = vector.load %arg9[%762, %c0_369, %c0_370] : memref<8x8x128xf32, #tpu.memory_space<vmem>>, vector<1x8x128xf32>
    %764 = vector.shape_cast %763 : vector<1x8x128xf32> to vector<8x128xf32>
    %765 = vector.shape_cast %18 : vector<1x128xi1> to vector<1x128xi1>
    %766 = vector.broadcast %765 : vector<1x128xi1> to vector<8x128xi1>
    %767 = arith.select %766, %760, %764 : vector<8x128xi1>, vector<8x128xf32>
    %c0_371 = arith.constant 0 : index
    %c0_372 = arith.constant 0 : index
    %768 = vector.load %arg13[%c0_371, %c0_372] : memref<8x32xf32, #tpu.memory_space<vmem>>, vector<8x32xf32>
    %cst_373 = arith.constant dense<0.000000e+00> : vector<8x128xf32>
    %769 = tpu.matmul %768, %453, %cst_373 {dimension_numbers = #tpu.dot_dimension_numbers<[1], [0], [0], [1], [0, 0, 1, 1], [], []>} : vector<8x32xf32>, vector<32x128xf32>, vector<8x128xf32> -> vector<8x128xf32>
    %770 = arith.addf %767, %769 : vector<8x128xf32>
    %771 = vector.extract_strided_slice %770 {offsets = [0, 0], sizes = [8, 32], strides = [1, 1]} : vector<8x128xf32> to vector<8x32xf32>
    %772 = arith.negf %771 : vector<8x32xf32>
    %773 = math.exp %772 : vector<8x32xf32>
    %cst_374 = arith.constant 1.000000e+00 : f32
    %774 = vector.broadcast %cst_374 : f32 to vector<8x32xf32>
    %775 = arith.addf %774, %773 : vector<8x32xf32>
    %776 = arith.divf %774, %775 : vector<8x32xf32>
    %777 = vector.extract_strided_slice %770 {offsets = [0, 32], sizes = [8, 32], strides = [1, 1]} : vector<8x128xf32> to vector<8x32xf32>
    %778 = arith.negf %777 : vector<8x32xf32>
    %779 = math.exp %778 : vector<8x32xf32>
    %cst_375 = arith.constant 1.000000e+00 : f32
    %780 = vector.broadcast %cst_375 : f32 to vector<8x32xf32>
    %781 = arith.addf %780, %779 : vector<8x32xf32>
    %782 = arith.divf %780, %781 : vector<8x32xf32>
    %783 = vector.extract_strided_slice %770 {offsets = [0, 64], sizes = [8, 32], strides = [1, 1]} : vector<8x128xf32> to vector<8x32xf32>
    %784 = math.tanh %783 : vector<8x32xf32>
    %785 = vector.extract_strided_slice %770 {offsets = [0, 96], sizes = [8, 32], strides = [1, 1]} : vector<8x128xf32> to vector<8x32xf32>
    %786 = arith.negf %785 : vector<8x32xf32>
    %787 = math.exp %786 : vector<8x32xf32>
    %cst_376 = arith.constant 1.000000e+00 : f32
    %788 = vector.broadcast %cst_376 : f32 to vector<8x32xf32>
    %789 = arith.addf %788, %787 : vector<8x32xf32>
    %790 = arith.divf %788, %789 : vector<8x32xf32>
    %c0_377 = arith.constant 0 : index
    %c0_378 = arith.constant 0 : index
    %791 = vector.load %arg14[%c0_377, %c0_378] : memref<8x32xf32, #tpu.memory_space<vmem>>, vector<8x32xf32>
    %792 = arith.mulf %782, %791 : vector<8x32xf32>
    %793 = arith.mulf %776, %784 : vector<8x32xf32>
    %794 = arith.addf %792, %793 : vector<8x32xf32>
    %795 = math.tanh %794 : vector<8x32xf32>
    %796 = arith.mulf %790, %795 : vector<8x32xf32>
    %c0_379 = arith.constant 0 : index
    %c0_380 = arith.constant 0 : index
    %797 = vector.load %arg14[%c0_379, %c0_380] : memref<8x32xf32, #tpu.memory_space<vmem>>, vector<8x32xf32>
    tpu.vector_store %arg14[%c0_379, %c0_380], %794 {strides = array<i32>} : memref<8x32xf32, #tpu.memory_space<vmem>>, vector<8x32xf32>,
    %c0_381 = arith.constant 0 : index
    %c0_382 = arith.constant 0 : index
    %798 = vector.load %arg13[%c0_381, %c0_382] : memref<8x32xf32, #tpu.memory_space<vmem>>, vector<8x32xf32>
    tpu.vector_store %arg13[%c0_381, %c0_382], %796 {strides = array<i32>} : memref<8x32xf32, #tpu.memory_space<vmem>>, vector<8x32xf32>,
    %799 = arith.index_cast %c6_i32_365 : i32 to index
    %c0_383 = arith.constant 0 : index
    %c0_384 = arith.constant 0 : index
    %800 = vector.load %arg11[%799, %c0_383, %c0_384] : memref<8x8x32xf32, #tpu.memory_space<vmem>>, vector<1x8x32xf32>
    %801 = vector.shape_cast %800 : vector<1x8x32xf32> to vector<8x32xf32>
    %802 = vector.shape_cast %796 : vector<8x32xf32> to vector<1x8x32xf32>
    tpu.vector_store %arg11[%799, %c0_383, %c0_384], %802 {strides = array<i32>} : memref<8x8x32xf32, #tpu.memory_space<vmem>>, vector<1x8x32xf32>,
    %c7_i32_385 = arith.constant 7 : i32
    %803 = arith.subi %c7_i32_385, %c6_i32_365 : i32
    %804 = arith.index_cast %803 : i32 to index
    %c0_386 = arith.constant 0 : index
    %c0_387 = arith.constant 0 : index
    %805 = vector.load %arg12[%804, %c0_386, %c0_387] : memref<8x8x32xf32, #tpu.memory_space<vmem>>, vector<1x8x32xf32>
    %806 = vector.shape_cast %805 : vector<1x8x32xf32> to vector<8x32xf32>
    %807 = vector.shape_cast %796 : vector<8x32xf32> to vector<1x8x32xf32>
    tpu.vector_store %arg12[%804, %c0_386, %c0_387], %807 {strides = array<i32>} : memref<8x8x32xf32, #tpu.memory_space<vmem>>, vector<1x8x32xf32>,
    %c7_i32_388 = arith.constant 7 : i32
    %808 = arith.index_cast %c7_i32_388 : i32 to index
    %c0_389 = arith.constant 0 : index
    %c0_390 = arith.constant 0 : index
    %809 = vector.load %arg9[%808, %c0_389, %c0_390] : memref<8x8x128xf32, #tpu.memory_space<vmem>>, vector<1x8x128xf32>
    %810 = vector.shape_cast %809 : vector<1x8x128xf32> to vector<8x128xf32>
    %c7_i32_391 = arith.constant 7 : i32
    %811 = arith.subi %c7_i32_391, %c7_i32_388 : i32
    %812 = arith.index_cast %811 : i32 to index
    %c0_392 = arith.constant 0 : index
    %c0_393 = arith.constant 0 : index
    %813 = vector.load %arg9[%812, %c0_392, %c0_393] : memref<8x8x128xf32, #tpu.memory_space<vmem>>, vector<1x8x128xf32>
    %814 = vector.shape_cast %813 : vector<1x8x128xf32> to vector<8x128xf32>
    %815 = vector.shape_cast %18 : vector<1x128xi1> to vector<1x128xi1>
    %816 = vector.broadcast %815 : vector<1x128xi1> to vector<8x128xi1>
    %817 = arith.select %816, %810, %814 : vector<8x128xi1>, vector<8x128xf32>
    %c0_394 = arith.constant 0 : index
    %c0_395 = arith.constant 0 : index
    %818 = vector.load %arg13[%c0_394, %c0_395] : memref<8x32xf32, #tpu.memory_space<vmem>>, vector<8x32xf32>
    %cst_396 = arith.constant dense<0.000000e+00> : vector<8x128xf32>
    %819 = tpu.matmul %818, %453, %cst_396 {dimension_numbers = #tpu.dot_dimension_numbers<[1], [0], [0], [1], [0, 0, 1, 1], [], []>} : vector<8x32xf32>, vector<32x128xf32>, vector<8x128xf32> -> vector<8x128xf32>
    %820 = arith.addf %817, %819 : vector<8x128xf32>
    %821 = vector.extract_strided_slice %820 {offsets = [0, 0], sizes = [8, 32], strides = [1, 1]} : vector<8x128xf32> to vector<8x32xf32>
    %822 = arith.negf %821 : vector<8x32xf32>
    %823 = math.exp %822 : vector<8x32xf32>
    %cst_397 = arith.constant 1.000000e+00 : f32
    %824 = vector.broadcast %cst_397 : f32 to vector<8x32xf32>
    %825 = arith.addf %824, %823 : vector<8x32xf32>
    %826 = arith.divf %824, %825 : vector<8x32xf32>
    %827 = vector.extract_strided_slice %820 {offsets = [0, 32], sizes = [8, 32], strides = [1, 1]} : vector<8x128xf32> to vector<8x32xf32>
    %828 = arith.negf %827 : vector<8x32xf32>
    %829 = math.exp %828 : vector<8x32xf32>
    %cst_398 = arith.constant 1.000000e+00 : f32
    %830 = vector.broadcast %cst_398 : f32 to vector<8x32xf32>
    %831 = arith.addf %830, %829 : vector<8x32xf32>
    %832 = arith.divf %830, %831 : vector<8x32xf32>
    %833 = vector.extract_strided_slice %820 {offsets = [0, 64], sizes = [8, 32], strides = [1, 1]} : vector<8x128xf32> to vector<8x32xf32>
    %834 = math.tanh %833 : vector<8x32xf32>
    %835 = vector.extract_strided_slice %820 {offsets = [0, 96], sizes = [8, 32], strides = [1, 1]} : vector<8x128xf32> to vector<8x32xf32>
    %836 = arith.negf %835 : vector<8x32xf32>
    %837 = math.exp %836 : vector<8x32xf32>
    %cst_399 = arith.constant 1.000000e+00 : f32
    %838 = vector.broadcast %cst_399 : f32 to vector<8x32xf32>
    %839 = arith.addf %838, %837 : vector<8x32xf32>
    %840 = arith.divf %838, %839 : vector<8x32xf32>
    %c0_400 = arith.constant 0 : index
    %c0_401 = arith.constant 0 : index
    %841 = vector.load %arg14[%c0_400, %c0_401] : memref<8x32xf32, #tpu.memory_space<vmem>>, vector<8x32xf32>
    %842 = arith.mulf %832, %841 : vector<8x32xf32>
    %843 = arith.mulf %826, %834 : vector<8x32xf32>
    %844 = arith.addf %842, %843 : vector<8x32xf32>
    %845 = math.tanh %844 : vector<8x32xf32>
    %846 = arith.mulf %840, %845 : vector<8x32xf32>
    %c0_402 = arith.constant 0 : index
    %c0_403 = arith.constant 0 : index
    %847 = vector.load %arg14[%c0_402, %c0_403] : memref<8x32xf32, #tpu.memory_space<vmem>>, vector<8x32xf32>
    tpu.vector_store %arg14[%c0_402, %c0_403], %844 {strides = array<i32>} : memref<8x32xf32, #tpu.memory_space<vmem>>, vector<8x32xf32>,
    %c0_404 = arith.constant 0 : index
    %c0_405 = arith.constant 0 : index
    %848 = vector.load %arg13[%c0_404, %c0_405] : memref<8x32xf32, #tpu.memory_space<vmem>>, vector<8x32xf32>
    tpu.vector_store %arg13[%c0_404, %c0_405], %846 {strides = array<i32>} : memref<8x32xf32, #tpu.memory_space<vmem>>, vector<8x32xf32>,
    %849 = arith.index_cast %c7_i32_388 : i32 to index
    %c0_406 = arith.constant 0 : index
    %c0_407 = arith.constant 0 : index
    %850 = vector.load %arg11[%849, %c0_406, %c0_407] : memref<8x8x32xf32, #tpu.memory_space<vmem>>, vector<1x8x32xf32>
    %851 = vector.shape_cast %850 : vector<1x8x32xf32> to vector<8x32xf32>
    %852 = vector.shape_cast %846 : vector<8x32xf32> to vector<1x8x32xf32>
    tpu.vector_store %arg11[%849, %c0_406, %c0_407], %852 {strides = array<i32>} : memref<8x8x32xf32, #tpu.memory_space<vmem>>, vector<1x8x32xf32>,
    %c7_i32_408 = arith.constant 7 : i32
    %853 = arith.subi %c7_i32_408, %c7_i32_388 : i32
    %854 = arith.index_cast %853 : i32 to index
    %c0_409 = arith.constant 0 : index
    %c0_410 = arith.constant 0 : index
    %855 = vector.load %arg12[%854, %c0_409, %c0_410] : memref<8x8x32xf32, #tpu.memory_space<vmem>>, vector<1x8x32xf32>
    %856 = vector.shape_cast %855 : vector<1x8x32xf32> to vector<8x32xf32>
    %857 = vector.shape_cast %846 : vector<8x32xf32> to vector<1x8x32xf32>
    tpu.vector_store %arg12[%854, %c0_409, %c0_410], %857 {strides = array<i32>} : memref<8x8x32xf32, #tpu.memory_space<vmem>>, vector<1x8x32xf32>,
    %c8_i32_411 = arith.constant 8 : i32
    %c0_412 = arith.constant 0 : index
    %c0_413 = arith.constant 0 : index
    %c0_414 = arith.constant 0 : index
    %858 = vector.load %arg11[%c0_412, %c0_413, %c0_414] : memref<8x8x32xf32, #tpu.memory_space<vmem>>, vector<8x8x32xf32>
    %c0_415 = arith.constant 0 : index
    %c0_416 = arith.constant 0 : index
    %c0_417 = arith.constant 0 : index
    %859 = vector.load %arg12[%c0_415, %c0_416, %c0_417] : memref<8x8x32xf32, #tpu.memory_space<vmem>>, vector<8x8x32xf32>
    %860 = vector.shape_cast %21 : vector<1x1x32xi1> to vector<1x1x32xi1>
    %861 = vector.broadcast %860 : vector<1x1x32xi1> to vector<8x8x32xi1>
    %862 = arith.select %861, %858, %859 : vector<8x8x32xi1>, vector<8x8x32xf32>
    %c0_418 = arith.constant 0 : index
    %c0_419 = arith.constant 0 : index
    %c0_420 = arith.constant 0 : index
    %863 = vector.load %arg8[%c0_418, %c0_419, %c0_420] : memref<8x8x32xf32, #tpu.memory_space<vmem>>, vector<8x8x32xf32>
    tpu.vector_store %arg8[%c0_418, %c0_419, %c0_420], %862 {strides = array<i32>} : memref<8x8x32xf32, #tpu.memory_space<vmem>>, vector<8x8x32xf32>,
    return
  }
  func.func @transform_0(%arg0: i32) -> (i32, i32, i32) {
    %c0_i32 = arith.constant 0 : i32
    %c0_i32_0 = arith.constant 0 : i32
    %c0_i32_1 = arith.constant 0 : i32
    return %c0_i32, %arg0, %c0_i32_0 : i32, i32, i32
  }
  func.func @transform_1(%arg0: i32) -> (i32, i32) {
    %c0_i32 = arith.constant 0 : i32
    %c0_i32_0 = arith.constant 0 : i32
    %c0_i32_1 = arith.constant 0 : i32
    return %c0_i32, %c0_i32_0 : i32, i32
  }
  func.func @transform_2(%arg0: i32) -> (i32, i32) {
    %c0_i32 = arith.constant 0 : i32
    %c0_i32_0 = arith.constant 0 : i32
    %c0_i32_1 = arith.constant 0 : i32
    return %c0_i32, %c0_i32_0 : i32, i32
  }
  func.func @transform_3(%arg0: i32) -> (i32, i32) {
    %c0_i32 = arith.constant 0 : i32
    %c0_i32_0 = arith.constant 0 : i32
    %c0_i32_1 = arith.constant 0 : i32
    return %c0_i32, %c0_i32_0 : i32, i32
  }
  func.func @transform_4(%arg0: i32) -> (i32, i32) {
    %c0_i32 = arith.constant 0 : i32
    %c0_i32_0 = arith.constant 0 : i32
    %c0_i32_1 = arith.constant 0 : i32
    return %c0_i32, %c0_i32_0 : i32, i32
  }
  func.func @transform_5(%arg0: i32) -> (i32, i32) {
    %c0_i32 = arith.constant 0 : i32
    %c0_i32_0 = arith.constant 0 : i32
    %c0_i32_1 = arith.constant 0 : i32
    return %c0_i32, %c0_i32_0 : i32, i32
  }
  func.func @transform_6(%arg0: i32) -> (i32, i32) {
    %c0_i32 = arith.constant 0 : i32
    %c0_i32_0 = arith.constant 0 : i32
    %c0_i32_1 = arith.constant 0 : i32
    return %c0_i32, %c0_i32_0 : i32, i32
  }
  func.func @transform_7(%arg0: i32) -> (i32, i32, i32) {
    %c0_i32 = arith.constant 0 : i32
    %c0_i32_0 = arith.constant 0 : i32
    %c0_i32_1 = arith.constant 0 : i32
    return %c0_i32, %arg0, %c0_i32_0 : i32, i32, i32
  }
}

module attributes {stable_mosaic.version = 11 : i64} {
  func.func @_cls_crf_kernel(%arg0: i32, %arg1: memref<8x8x32xf32, #tpu.memory_space<vmem>>, %arg2: memref<32x8xbf16, #tpu.memory_space<vmem>>, %arg3: memref<1x8xf32, #tpu.memory_space<vmem>>, %arg4: memref<8x1xi32, #tpu.memory_space<vmem>>, %arg5: memref<8x8x1xi32, #tpu.memory_space<vmem>>, %arg6: memref<1x8xf32, #tpu.memory_space<vmem>>, %arg7: memref<1x8xf32, #tpu.memory_space<vmem>>, %arg8: memref<8x8xf32, #tpu.memory_space<vmem>>, %arg9: memref<8x8xf32, #tpu.memory_space<vmem>>, %arg10: memref<8x8xf32, #tpu.memory_space<vmem>>, %arg11: memref<8x8x8xi32, #tpu.memory_space<vmem>>, %arg12: memref<8x1xf32, #tpu.memory_space<vmem>>, %arg13: memref<8x1xf32, #tpu.memory_space<vmem>>, %arg14: memref<8x8x8xf32, #tpu.memory_space<vmem>>, %arg15: memref<8x8xf32, #tpu.memory_space<vmem>>, %arg16: memref<8x8xf32, #tpu.memory_space<vmem>>) attributes {dimension_semantics = [#tpu.dimension_semantics<parallel>], iteration_bounds = array<i64: 1>, scalar_prefetch = 0 : i64, scratch_operands = 3 : i64, tpu.core_type = #tpu.core_type<tc>, window_params = [{transform_indices = @transform_0, window_bounds = array<i64: 8, 8, 32>}, {pipeline_mode = #tpu.pipeline_mode<synchronous>, transform_indices = @transform_1, window_bounds = array<i64: 32, 8>}, {pipeline_mode = #tpu.pipeline_mode<synchronous>, transform_indices = @transform_2, window_bounds = array<i64: 1, 8>}, {transform_indices = @transform_3, window_bounds = array<i64: 8, 1>}, {transform_indices = @transform_4, window_bounds = array<i64: 8, 8, 1>}, {pipeline_mode = #tpu.pipeline_mode<synchronous>, transform_indices = @transform_5, window_bounds = array<i64: 1, 8>}, {pipeline_mode = #tpu.pipeline_mode<synchronous>, transform_indices = @transform_6, window_bounds = array<i64: 1, 8>}, {pipeline_mode = #tpu.pipeline_mode<synchronous>, transform_indices = @transform_7, window_bounds = array<i64: 8, 8>}, {pipeline_mode = #tpu.pipeline_mode<synchronous>, transform_indices = @transform_8, window_bounds = array<i64: 8, 8>}, {transform_indices = @transform_9, window_bounds = array<i64: 8, 8>}, {transform_indices = @transform_10, window_bounds = array<i64: 8, 8, 8>}, {transform_indices = @transform_11, window_bounds = array<i64: 8, 1>}, {transform_indices = @transform_12, window_bounds = array<i64: 8, 1>}]} {
    %c0 = arith.constant 0 : index
    %c0_0 = arith.constant 0 : index
    %c0_1 = arith.constant 0 : index
    %0 = vector.load %arg1[%c0, %c0_0, %c0_1] : memref<8x8x32xf32, #tpu.memory_space<vmem>>, vector<8x8x32xf32>
    %1 = vector.shape_cast %0 : vector<8x8x32xf32> to vector<64x32xf32>
    %2 = arith.truncf %1 : vector<64x32xf32> to vector<64x32xbf16>
    %c0_2 = arith.constant 0 : index
    %c0_3 = arith.constant 0 : index
    %3 = vector.load %arg2[%c0_2, %c0_3] : memref<32x8xbf16, #tpu.memory_space<vmem>>, vector<32x8xbf16>
    %cst = arith.constant dense<0.000000e+00> : vector<64x8xf32>
    %4 = tpu.matmul %2, %3, %cst {dimension_numbers = #tpu.dot_dimension_numbers<[1], [0], [0], [1], [0, 0, 1, 1], [], []>} : vector<64x32xbf16>, vector<32x8xbf16>, vector<64x8xf32> -> vector<64x8xf32>
    %c0_4 = arith.constant 0 : index
    %c0_5 = arith.constant 0 : index
    %5 = vector.load %arg3[%c0_4, %c0_5] : memref<1x8xf32, #tpu.memory_space<vmem>>, vector<1x8xf32>
    %6 = vector.broadcast %5 : vector<1x8xf32> to vector<64x8xf32>
    %7 = arith.addf %4, %6 : vector<64x8xf32>
    %8 = vector.shape_cast %7 : vector<64x8xf32> to vector<8x8x8xf32>
    %c0_6 = arith.constant 0 : index
    %c0_7 = arith.constant 0 : index
    %c0_8 = arith.constant 0 : index
    %9 = vector.load %arg14[%c0_6, %c0_7, %c0_8] : memref<8x8x8xf32, #tpu.memory_space<vmem>>, vector<8x8x8xf32>
    tpu.vector_store %arg14[%c0_6, %c0_7, %c0_8], %8 {strides = array<i32>} : memref<8x8x8xf32, #tpu.memory_space<vmem>>, vector<8x8x8xf32>,
    %c0_9 = arith.constant 0 : index
    %c0_10 = arith.constant 0 : index
    %10 = vector.load %arg9[%c0_9, %c0_10] : memref<8x8xf32, #tpu.memory_space<vmem>>, vector<8x8xf32>
    %c0_11 = arith.constant 0 : index
    %c0_12 = arith.constant 0 : index
    %11 = vector.load %arg8[%c0_11, %c0_12] : memref<8x8xf32, #tpu.memory_space<vmem>>, vector<8x8xf32>
    %c0_13 = arith.constant 0 : index
    %c0_14 = arith.constant 0 : index
    %12 = vector.load %arg7[%c0_13, %c0_14] : memref<1x8xf32, #tpu.memory_space<vmem>>, vector<1x8xf32>
    %c0_15 = arith.constant 0 : index
    %c0_16 = arith.constant 0 : index
    %13 = vector.load %arg6[%c0_15, %c0_16] : memref<1x8xf32, #tpu.memory_space<vmem>>, vector<1x8xf32>
    %c0_17 = arith.constant 0 : index
    %c0_18 = arith.constant 0 : index
    %14 = vector.load %arg4[%c0_17, %c0_18] : memref<8x1xi32, #tpu.memory_space<vmem>>, vector<8x1xi32>
    %15 = tpu.iota {dimensions = array<i32: 2>} : vector<8x8x8xi32>
    %16 = tpu.iota {dimensions = array<i32: 1>} : vector<8x8xi32>
    %c0_19 = arith.constant 0 : index
    %c0_20 = arith.constant 0 : index
    %c0_21 = arith.constant 0 : index
    %17 = vector.load %arg14[%c0_19, %c0_20, %c0_21] : memref<8x8x8xf32, #tpu.memory_space<vmem>>, vector<1x8x8xf32>
    %18 = vector.shape_cast %17 : vector<1x8x8xf32> to vector<8x8xf32>
    %19 = vector.broadcast %13 : vector<1x8xf32> to vector<8x8xf32>
    %20 = arith.addf %19, %18 : vector<8x8xf32>
    %c0_22 = arith.constant 0 : index
    %c0_23 = arith.constant 0 : index
    %21 = vector.load %arg15[%c0_22, %c0_23] : memref<8x8xf32, #tpu.memory_space<vmem>>, vector<8x8xf32>
    tpu.vector_store %arg15[%c0_22, %c0_23], %20 {strides = array<i32>} : memref<8x8xf32, #tpu.memory_space<vmem>>, vector<8x8xf32>,
    %c0_24 = arith.constant 0 : index
    %c0_25 = arith.constant 0 : index
    %22 = vector.load %arg16[%c0_24, %c0_25] : memref<8x8xf32, #tpu.memory_space<vmem>>, vector<8x8xf32>
    tpu.vector_store %arg16[%c0_24, %c0_25], %20 {strides = array<i32>} : memref<8x8xf32, #tpu.memory_space<vmem>>, vector<8x8xf32>,
    %c0_i32 = arith.constant 0 : i32
    %23 = vector.broadcast %c0_i32 : i32 to vector<8x8xi32>
    %c0_26 = arith.constant 0 : index
    %c0_27 = arith.constant 0 : index
    %c0_28 = arith.constant 0 : index
    %24 = vector.load %arg11[%c0_26, %c0_27, %c0_28] : memref<8x8x8xi32, #tpu.memory_space<vmem>>, vector<1x8x8xi32>
    %25 = vector.shape_cast %24 : vector<1x8x8xi32> to vector<8x8xi32>
    %26 = vector.shape_cast %23 : vector<8x8xi32> to vector<1x8x8xi32>
    tpu.vector_store %arg11[%c0_26, %c0_27, %c0_28], %26 {strides = array<i32>} : memref<8x8x8xi32, #tpu.memory_space<vmem>>, vector<1x8x8xi32>,
    %c0_29 = arith.constant 0 : index
    %c0_30 = arith.constant 0 : index
    %c0_31 = arith.constant 0 : index
    %27 = vector.load %arg5[%c0_29, %c0_30, %c0_31] : memref<8x8x1xi32, #tpu.memory_space<vmem>>, vector<1x8x1xi32>
    %28 = vector.shape_cast %27 : vector<1x8x1xi32> to vector<8x1xi32>
    %29 = vector.broadcast %28 : vector<8x1xi32> to vector<8x8xi32>
    %30 = arith.cmpi eq, %16, %29 : vector<8x8xi32>
    %31 = arith.extui %30 : vector<8x8xi1> to vector<8x8xi32>
    %32 = arith.sitofp %31 : vector<8x8xi32> to vector<8x8xf32>
    %33 = arith.mulf %20, %32 : vector<8x8xf32>
    %cst_32 = arith.constant dense<0.000000e+00> : vector<8xf32>
    %34 = vector.multi_reduction <add>, %33, %cst_32 [1] : vector<8x8xf32> to vector<8xf32>
    %35 = vector.shape_cast %34 : vector<8xf32> to vector<8x1xf32>
    %c1_i32 = arith.constant 1 : i32
    %36 = arith.index_cast %c1_i32 : i32 to index
    %c0_33 = arith.constant 0 : index
    %c0_34 = arith.constant 0 : index
    %37 = vector.load %arg14[%36, %c0_33, %c0_34] : memref<8x8x8xf32, #tpu.memory_space<vmem>>, vector<1x8x8xf32>
    %38 = vector.shape_cast %37 : vector<1x8x8xf32> to vector<8x8xf32>
    %39 = vector.broadcast %c1_i32 : i32 to vector<8x1xi32>
    %40 = arith.cmpi slt, %39, %14 : vector<8x1xi32>
    %c0_35 = arith.constant 0 : index
    %c0_36 = arith.constant 0 : index
    %41 = vector.load %arg15[%c0_35, %c0_36] : memref<8x8xf32, #tpu.memory_space<vmem>>, vector<8x8xf32>
    %42 = vector.shape_cast %41 : vector<8x8xf32> to vector<8x1x8xf32>
    %43 = vector.shape_cast %10 : vector<8x8xf32> to vector<1x8x8xf32>
    %44 = vector.broadcast %42 : vector<8x1x8xf32> to vector<8x8x8xf32>
    %45 = vector.broadcast %43 : vector<1x8x8xf32> to vector<8x8x8xf32>
    %46 = arith.addf %44, %45 : vector<8x8x8xf32>
    %cst_37 = arith.constant dense<0xFF800000> : vector<8x8xf32>
    %47 = vector.multi_reduction <maximumf>, %46, %cst_37 [2] : vector<8x8x8xf32> to vector<8x8xf32>
    %48 = vector.shape_cast %47 : vector<8x8xf32> to vector<8x8x1xf32>
    %49 = vector.broadcast %48 : vector<8x8x1xf32> to vector<8x8x8xf32>
    %50 = arith.cmpf oge, %46, %49 : vector<8x8x8xf32>
    %c8_i32 = arith.constant 8 : i32
    %51 = vector.broadcast %c8_i32 : i32 to vector<8x8x8xi32>
    %52 = arith.select %50, %15, %51 : vector<8x8x8xi1>, vector<8x8x8xi32>
    %cst_38 = arith.constant dense<2147483647> : vector<8x8xi32>
    %53 = vector.multi_reduction <minsi>, %52, %cst_38 [2] : vector<8x8x8xi32> to vector<8x8xi32>
    %54 = arith.addf %47, %38 : vector<8x8xf32>
    %c0_39 = arith.constant 0 : index
    %c0_40 = arith.constant 0 : index
    %55 = vector.load %arg15[%c0_39, %c0_40] : memref<8x8xf32, #tpu.memory_space<vmem>>, vector<8x8xf32>
    %56 = vector.shape_cast %40 : vector<8x1xi1> to vector<8x1xi1>
    %57 = vector.broadcast %56 : vector<8x1xi1> to vector<8x8xi1>
    %58 = arith.select %57, %54, %55 : vector<8x8xi1>, vector<8x8xf32>
    %c0_41 = arith.constant 0 : index
    %c0_42 = arith.constant 0 : index
    %59 = vector.load %arg15[%c0_41, %c0_42] : memref<8x8xf32, #tpu.memory_space<vmem>>, vector<8x8xf32>
    tpu.vector_store %arg15[%c0_41, %c0_42], %58 {strides = array<i32>} : memref<8x8xf32, #tpu.memory_space<vmem>>, vector<8x8xf32>,
    %60 = arith.index_cast %c1_i32 : i32 to index
    %c0_43 = arith.constant 0 : index
    %c0_44 = arith.constant 0 : index
    %61 = vector.load %arg11[%60, %c0_43, %c0_44] : memref<8x8x8xi32, #tpu.memory_space<vmem>>, vector<1x8x8xi32>
    %62 = vector.shape_cast %61 : vector<1x8x8xi32> to vector<8x8xi32>
    %63 = vector.shape_cast %53 : vector<8x8xi32> to vector<1x8x8xi32>
    tpu.vector_store %arg11[%60, %c0_43, %c0_44], %63 {strides = array<i32>} : memref<8x8x8xi32, #tpu.memory_space<vmem>>, vector<1x8x8xi32>,
    %c0_45 = arith.constant 0 : index
    %c0_46 = arith.constant 0 : index
    %64 = vector.load %arg16[%c0_45, %c0_46] : memref<8x8xf32, #tpu.memory_space<vmem>>, vector<8x8xf32>
    %65 = vector.shape_cast %64 : vector<8x8xf32> to vector<8x1x8xf32>
    %66 = vector.shape_cast %10 : vector<8x8xf32> to vector<1x8x8xf32>
    %67 = vector.broadcast %65 : vector<8x1x8xf32> to vector<8x8x8xf32>
    %68 = vector.broadcast %66 : vector<1x8x8xf32> to vector<8x8x8xf32>
    %69 = arith.addf %67, %68 : vector<8x8x8xf32>
    %70 = vector.shape_cast %38 : vector<8x8xf32> to vector<8x8x1xf32>
    %71 = vector.broadcast %70 : vector<8x8x1xf32> to vector<8x8x8xf32>
    %72 = arith.addf %69, %71 : vector<8x8x8xf32>
    %cst_47 = arith.constant dense<0xFF800000> : vector<8x8xf32>
    %73 = vector.multi_reduction <maximumf>, %72, %cst_47 [2] : vector<8x8x8xf32> to vector<8x8xf32>
    %74 = vector.shape_cast %73 : vector<8x8xf32> to vector<8x8x1xf32>
    %75 = vector.broadcast %74 : vector<8x8x1xf32> to vector<8x8x8xf32>
    %76 = arith.subf %72, %75 : vector<8x8x8xf32>
    %77 = math.exp %76 : vector<8x8x8xf32>
    %cst_48 = arith.constant dense<0.000000e+00> : vector<8x8xf32>
    %78 = vector.multi_reduction <add>, %77, %cst_48 [2] : vector<8x8x8xf32> to vector<8x8xf32>
    %79 = math.log %78 : vector<8x8xf32>
    %80 = arith.addf %73, %79 : vector<8x8xf32>
    %c0_49 = arith.constant 0 : index
    %c0_50 = arith.constant 0 : index
    %81 = vector.load %arg16[%c0_49, %c0_50] : memref<8x8xf32, #tpu.memory_space<vmem>>, vector<8x8xf32>
    %82 = vector.shape_cast %40 : vector<8x1xi1> to vector<8x1xi1>
    %83 = vector.broadcast %82 : vector<8x1xi1> to vector<8x8xi1>
    %84 = arith.select %83, %80, %81 : vector<8x8xi1>, vector<8x8xf32>
    %c0_51 = arith.constant 0 : index
    %c0_52 = arith.constant 0 : index
    %85 = vector.load %arg16[%c0_51, %c0_52] : memref<8x8xf32, #tpu.memory_space<vmem>>, vector<8x8xf32>
    tpu.vector_store %arg16[%c0_51, %c0_52], %84 {strides = array<i32>} : memref<8x8xf32, #tpu.memory_space<vmem>>, vector<8x8xf32>,
    %86 = arith.index_cast %c1_i32 : i32 to index
    %c0_53 = arith.constant 0 : index
    %c0_54 = arith.constant 0 : index
    %87 = vector.load %arg5[%86, %c0_53, %c0_54] : memref<8x8x1xi32, #tpu.memory_space<vmem>>, vector<1x8x1xi32>
    %88 = vector.shape_cast %87 : vector<1x8x1xi32> to vector<8x1xi32>
    %89 = vector.broadcast %88 : vector<8x1xi32> to vector<8x8xi32>
    %90 = arith.cmpi eq, %16, %89 : vector<8x8xi32>
    %91 = arith.extui %90 : vector<8x8xi1> to vector<8x8xi32>
    %92 = arith.sitofp %91 : vector<8x8xi32> to vector<8x8xf32>
    %93 = vector.shape_cast %11 : vector<8x8xf32> to vector<1x8x8xf32>
    %94 = vector.shape_cast %92 : vector<8x8xf32> to vector<8x1x8xf32>
    %95 = vector.broadcast %93 : vector<1x8x8xf32> to vector<8x8x8xf32>
    %96 = vector.broadcast %94 : vector<8x1x8xf32> to vector<8x8x8xf32>
    %97 = arith.mulf %95, %96 : vector<8x8x8xf32>
    %cst_55 = arith.constant dense<0.000000e+00> : vector<8x8xf32>
    %98 = vector.multi_reduction <add>, %97, %cst_55 [2] : vector<8x8x8xf32> to vector<8x8xf32>
    %99 = arith.mulf %98, %32 : vector<8x8xf32>
    %cst_56 = arith.constant dense<0.000000e+00> : vector<8xf32>
    %100 = vector.multi_reduction <add>, %99, %cst_56 [1] : vector<8x8xf32> to vector<8xf32>
    %101 = vector.shape_cast %100 : vector<8xf32> to vector<8x1xf32>
    %102 = arith.mulf %38, %92 : vector<8x8xf32>
    %cst_57 = arith.constant dense<0.000000e+00> : vector<8xf32>
    %103 = vector.multi_reduction <add>, %102, %cst_57 [1] : vector<8x8xf32> to vector<8xf32>
    %104 = vector.shape_cast %103 : vector<8xf32> to vector<8x1xf32>
    %105 = arith.addf %101, %104 : vector<8x1xf32>
    %106 = arith.extui %40 : vector<8x1xi1> to vector<8x1xi32>
    %107 = arith.sitofp %106 : vector<8x1xi32> to vector<8x1xf32>
    %108 = arith.mulf %105, %107 : vector<8x1xf32>
    %109 = arith.addf %35, %108 : vector<8x1xf32>
    %110 = vector.shape_cast %40 : vector<8x1xi1> to vector<8x1xi1>
    %111 = vector.broadcast %110 : vector<8x1xi1> to vector<8x8xi1>
    %112 = arith.select %111, %92, %32 : vector<8x8xi1>, vector<8x8xf32>
    %c2_i32 = arith.constant 2 : i32
    %113 = arith.index_cast %c2_i32 : i32 to index
    %c0_58 = arith.constant 0 : index
    %c0_59 = arith.constant 0 : index
    %114 = vector.load %arg14[%113, %c0_58, %c0_59] : memref<8x8x8xf32, #tpu.memory_space<vmem>>, vector<1x8x8xf32>
    %115 = vector.shape_cast %114 : vector<1x8x8xf32> to vector<8x8xf32>
    %116 = vector.broadcast %c2_i32 : i32 to vector<8x1xi32>
    %117 = arith.cmpi slt, %116, %14 : vector<8x1xi32>
    %c0_60 = arith.constant 0 : index
    %c0_61 = arith.constant 0 : index
    %118 = vector.load %arg15[%c0_60, %c0_61] : memref<8x8xf32, #tpu.memory_space<vmem>>, vector<8x8xf32>
    %119 = vector.shape_cast %118 : vector<8x8xf32> to vector<8x1x8xf32>
    %120 = vector.shape_cast %10 : vector<8x8xf32> to vector<1x8x8xf32>
    %121 = vector.broadcast %119 : vector<8x1x8xf32> to vector<8x8x8xf32>
    %122 = vector.broadcast %120 : vector<1x8x8xf32> to vector<8x8x8xf32>
    %123 = arith.addf %121, %122 : vector<8x8x8xf32>
    %cst_62 = arith.constant dense<0xFF800000> : vector<8x8xf32>
    %124 = vector.multi_reduction <maximumf>, %123, %cst_62 [2] : vector<8x8x8xf32> to vector<8x8xf32>
    %125 = vector.shape_cast %124 : vector<8x8xf32> to vector<8x8x1xf32>
    %126 = vector.broadcast %125 : vector<8x8x1xf32> to vector<8x8x8xf32>
    %127 = arith.cmpf oge, %123, %126 : vector<8x8x8xf32>
    %c8_i32_63 = arith.constant 8 : i32
    %128 = vector.broadcast %c8_i32_63 : i32 to vector<8x8x8xi32>
    %129 = arith.select %127, %15, %128 : vector<8x8x8xi1>, vector<8x8x8xi32>
    %cst_64 = arith.constant dense<2147483647> : vector<8x8xi32>
    %130 = vector.multi_reduction <minsi>, %129, %cst_64 [2] : vector<8x8x8xi32> to vector<8x8xi32>
    %131 = arith.addf %124, %115 : vector<8x8xf32>
    %c0_65 = arith.constant 0 : index
    %c0_66 = arith.constant 0 : index
    %132 = vector.load %arg15[%c0_65, %c0_66] : memref<8x8xf32, #tpu.memory_space<vmem>>, vector<8x8xf32>
    %133 = vector.shape_cast %117 : vector<8x1xi1> to vector<8x1xi1>
    %134 = vector.broadcast %133 : vector<8x1xi1> to vector<8x8xi1>
    %135 = arith.select %134, %131, %132 : vector<8x8xi1>, vector<8x8xf32>
    %c0_67 = arith.constant 0 : index
    %c0_68 = arith.constant 0 : index
    %136 = vector.load %arg15[%c0_67, %c0_68] : memref<8x8xf32, #tpu.memory_space<vmem>>, vector<8x8xf32>
    tpu.vector_store %arg15[%c0_67, %c0_68], %135 {strides = array<i32>} : memref<8x8xf32, #tpu.memory_space<vmem>>, vector<8x8xf32>,
    %137 = arith.index_cast %c2_i32 : i32 to index
    %c0_69 = arith.constant 0 : index
    %c0_70 = arith.constant 0 : index
    %138 = vector.load %arg11[%137, %c0_69, %c0_70] : memref<8x8x8xi32, #tpu.memory_space<vmem>>, vector<1x8x8xi32>
    %139 = vector.shape_cast %138 : vector<1x8x8xi32> to vector<8x8xi32>
    %140 = vector.shape_cast %130 : vector<8x8xi32> to vector<1x8x8xi32>
    tpu.vector_store %arg11[%137, %c0_69, %c0_70], %140 {strides = array<i32>} : memref<8x8x8xi32, #tpu.memory_space<vmem>>, vector<1x8x8xi32>,
    %c0_71 = arith.constant 0 : index
    %c0_72 = arith.constant 0 : index
    %141 = vector.load %arg16[%c0_71, %c0_72] : memref<8x8xf32, #tpu.memory_space<vmem>>, vector<8x8xf32>
    %142 = vector.shape_cast %141 : vector<8x8xf32> to vector<8x1x8xf32>
    %143 = vector.shape_cast %10 : vector<8x8xf32> to vector<1x8x8xf32>
    %144 = vector.broadcast %142 : vector<8x1x8xf32> to vector<8x8x8xf32>
    %145 = vector.broadcast %143 : vector<1x8x8xf32> to vector<8x8x8xf32>
    %146 = arith.addf %144, %145 : vector<8x8x8xf32>
    %147 = vector.shape_cast %115 : vector<8x8xf32> to vector<8x8x1xf32>
    %148 = vector.broadcast %147 : vector<8x8x1xf32> to vector<8x8x8xf32>
    %149 = arith.addf %146, %148 : vector<8x8x8xf32>
    %cst_73 = arith.constant dense<0xFF800000> : vector<8x8xf32>
    %150 = vector.multi_reduction <maximumf>, %149, %cst_73 [2] : vector<8x8x8xf32> to vector<8x8xf32>
    %151 = vector.shape_cast %150 : vector<8x8xf32> to vector<8x8x1xf32>
    %152 = vector.broadcast %151 : vector<8x8x1xf32> to vector<8x8x8xf32>
    %153 = arith.subf %149, %152 : vector<8x8x8xf32>
    %154 = math.exp %153 : vector<8x8x8xf32>
    %cst_74 = arith.constant dense<0.000000e+00> : vector<8x8xf32>
    %155 = vector.multi_reduction <add>, %154, %cst_74 [2] : vector<8x8x8xf32> to vector<8x8xf32>
    %156 = math.log %155 : vector<8x8xf32>
    %157 = arith.addf %150, %156 : vector<8x8xf32>
    %c0_75 = arith.constant 0 : index
    %c0_76 = arith.constant 0 : index
    %158 = vector.load %arg16[%c0_75, %c0_76] : memref<8x8xf32, #tpu.memory_space<vmem>>, vector<8x8xf32>
    %159 = vector.shape_cast %117 : vector<8x1xi1> to vector<8x1xi1>
    %160 = vector.broadcast %159 : vector<8x1xi1> to vector<8x8xi1>
    %161 = arith.select %160, %157, %158 : vector<8x8xi1>, vector<8x8xf32>
    %c0_77 = arith.constant 0 : index
    %c0_78 = arith.constant 0 : index
    %162 = vector.load %arg16[%c0_77, %c0_78] : memref<8x8xf32, #tpu.memory_space<vmem>>, vector<8x8xf32>
    tpu.vector_store %arg16[%c0_77, %c0_78], %161 {strides = array<i32>} : memref<8x8xf32, #tpu.memory_space<vmem>>, vector<8x8xf32>,
    %163 = arith.index_cast %c2_i32 : i32 to index
    %c0_79 = arith.constant 0 : index
    %c0_80 = arith.constant 0 : index
    %164 = vector.load %arg5[%163, %c0_79, %c0_80] : memref<8x8x1xi32, #tpu.memory_space<vmem>>, vector<1x8x1xi32>
    %165 = vector.shape_cast %164 : vector<1x8x1xi32> to vector<8x1xi32>
    %166 = vector.broadcast %165 : vector<8x1xi32> to vector<8x8xi32>
    %167 = arith.cmpi eq, %16, %166 : vector<8x8xi32>
    %168 = arith.extui %167 : vector<8x8xi1> to vector<8x8xi32>
    %169 = arith.sitofp %168 : vector<8x8xi32> to vector<8x8xf32>
    %170 = vector.shape_cast %11 : vector<8x8xf32> to vector<1x8x8xf32>
    %171 = vector.shape_cast %169 : vector<8x8xf32> to vector<8x1x8xf32>
    %172 = vector.broadcast %170 : vector<1x8x8xf32> to vector<8x8x8xf32>
    %173 = vector.broadcast %171 : vector<8x1x8xf32> to vector<8x8x8xf32>
    %174 = arith.mulf %172, %173 : vector<8x8x8xf32>
    %cst_81 = arith.constant dense<0.000000e+00> : vector<8x8xf32>
    %175 = vector.multi_reduction <add>, %174, %cst_81 [2] : vector<8x8x8xf32> to vector<8x8xf32>
    %176 = arith.mulf %175, %112 : vector<8x8xf32>
    %cst_82 = arith.constant dense<0.000000e+00> : vector<8xf32>
    %177 = vector.multi_reduction <add>, %176, %cst_82 [1] : vector<8x8xf32> to vector<8xf32>
    %178 = vector.shape_cast %177 : vector<8xf32> to vector<8x1xf32>
    %179 = arith.mulf %115, %169 : vector<8x8xf32>
    %cst_83 = arith.constant dense<0.000000e+00> : vector<8xf32>
    %180 = vector.multi_reduction <add>, %179, %cst_83 [1] : vector<8x8xf32> to vector<8xf32>
    %181 = vector.shape_cast %180 : vector<8xf32> to vector<8x1xf32>
    %182 = arith.addf %178, %181 : vector<8x1xf32>
    %183 = arith.extui %117 : vector<8x1xi1> to vector<8x1xi32>
    %184 = arith.sitofp %183 : vector<8x1xi32> to vector<8x1xf32>
    %185 = arith.mulf %182, %184 : vector<8x1xf32>
    %186 = arith.addf %109, %185 : vector<8x1xf32>
    %187 = vector.shape_cast %117 : vector<8x1xi1> to vector<8x1xi1>
    %188 = vector.broadcast %187 : vector<8x1xi1> to vector<8x8xi1>
    %189 = arith.select %188, %169, %112 : vector<8x8xi1>, vector<8x8xf32>
    %c3_i32 = arith.constant 3 : i32
    %190 = arith.index_cast %c3_i32 : i32 to index
    %c0_84 = arith.constant 0 : index
    %c0_85 = arith.constant 0 : index
    %191 = vector.load %arg14[%190, %c0_84, %c0_85] : memref<8x8x8xf32, #tpu.memory_space<vmem>>, vector<1x8x8xf32>
    %192 = vector.shape_cast %191 : vector<1x8x8xf32> to vector<8x8xf32>
    %193 = vector.broadcast %c3_i32 : i32 to vector<8x1xi32>
    %194 = arith.cmpi slt, %193, %14 : vector<8x1xi32>
    %c0_86 = arith.constant 0 : index
    %c0_87 = arith.constant 0 : index
    %195 = vector.load %arg15[%c0_86, %c0_87] : memref<8x8xf32, #tpu.memory_space<vmem>>, vector<8x8xf32>
    %196 = vector.shape_cast %195 : vector<8x8xf32> to vector<8x1x8xf32>
    %197 = vector.shape_cast %10 : vector<8x8xf32> to vector<1x8x8xf32>
    %198 = vector.broadcast %196 : vector<8x1x8xf32> to vector<8x8x8xf32>
    %199 = vector.broadcast %197 : vector<1x8x8xf32> to vector<8x8x8xf32>
    %200 = arith.addf %198, %199 : vector<8x8x8xf32>
    %cst_88 = arith.constant dense<0xFF800000> : vector<8x8xf32>
    %201 = vector.multi_reduction <maximumf>, %200, %cst_88 [2] : vector<8x8x8xf32> to vector<8x8xf32>
    %202 = vector.shape_cast %201 : vector<8x8xf32> to vector<8x8x1xf32>
    %203 = vector.broadcast %202 : vector<8x8x1xf32> to vector<8x8x8xf32>
    %204 = arith.cmpf oge, %200, %203 : vector<8x8x8xf32>
    %c8_i32_89 = arith.constant 8 : i32
    %205 = vector.broadcast %c8_i32_89 : i32 to vector<8x8x8xi32>
    %206 = arith.select %204, %15, %205 : vector<8x8x8xi1>, vector<8x8x8xi32>
    %cst_90 = arith.constant dense<2147483647> : vector<8x8xi32>
    %207 = vector.multi_reduction <minsi>, %206, %cst_90 [2] : vector<8x8x8xi32> to vector<8x8xi32>
    %208 = arith.addf %201, %192 : vector<8x8xf32>
    %c0_91 = arith.constant 0 : index
    %c0_92 = arith.constant 0 : index
    %209 = vector.load %arg15[%c0_91, %c0_92] : memref<8x8xf32, #tpu.memory_space<vmem>>, vector<8x8xf32>
    %210 = vector.shape_cast %194 : vector<8x1xi1> to vector<8x1xi1>
    %211 = vector.broadcast %210 : vector<8x1xi1> to vector<8x8xi1>
    %212 = arith.select %211, %208, %209 : vector<8x8xi1>, vector<8x8xf32>
    %c0_93 = arith.constant 0 : index
    %c0_94 = arith.constant 0 : index
    %213 = vector.load %arg15[%c0_93, %c0_94] : memref<8x8xf32, #tpu.memory_space<vmem>>, vector<8x8xf32>
    tpu.vector_store %arg15[%c0_93, %c0_94], %212 {strides = array<i32>} : memref<8x8xf32, #tpu.memory_space<vmem>>, vector<8x8xf32>,
    %214 = arith.index_cast %c3_i32 : i32 to index
    %c0_95 = arith.constant 0 : index
    %c0_96 = arith.constant 0 : index
    %215 = vector.load %arg11[%214, %c0_95, %c0_96] : memref<8x8x8xi32, #tpu.memory_space<vmem>>, vector<1x8x8xi32>
    %216 = vector.shape_cast %215 : vector<1x8x8xi32> to vector<8x8xi32>
    %217 = vector.shape_cast %207 : vector<8x8xi32> to vector<1x8x8xi32>
    tpu.vector_store %arg11[%214, %c0_95, %c0_96], %217 {strides = array<i32>} : memref<8x8x8xi32, #tpu.memory_space<vmem>>, vector<1x8x8xi32>,
    %c0_97 = arith.constant 0 : index
    %c0_98 = arith.constant 0 : index
    %218 = vector.load %arg16[%c0_97, %c0_98] : memref<8x8xf32, #tpu.memory_space<vmem>>, vector<8x8xf32>
    %219 = vector.shape_cast %218 : vector<8x8xf32> to vector<8x1x8xf32>
    %220 = vector.shape_cast %10 : vector<8x8xf32> to vector<1x8x8xf32>
    %221 = vector.broadcast %219 : vector<8x1x8xf32> to vector<8x8x8xf32>
    %222 = vector.broadcast %220 : vector<1x8x8xf32> to vector<8x8x8xf32>
    %223 = arith.addf %221, %222 : vector<8x8x8xf32>
    %224 = vector.shape_cast %192 : vector<8x8xf32> to vector<8x8x1xf32>
    %225 = vector.broadcast %224 : vector<8x8x1xf32> to vector<8x8x8xf32>
    %226 = arith.addf %223, %225 : vector<8x8x8xf32>
    %cst_99 = arith.constant dense<0xFF800000> : vector<8x8xf32>
    %227 = vector.multi_reduction <maximumf>, %226, %cst_99 [2] : vector<8x8x8xf32> to vector<8x8xf32>
    %228 = vector.shape_cast %227 : vector<8x8xf32> to vector<8x8x1xf32>
    %229 = vector.broadcast %228 : vector<8x8x1xf32> to vector<8x8x8xf32>
    %230 = arith.subf %226, %229 : vector<8x8x8xf32>
    %231 = math.exp %230 : vector<8x8x8xf32>
    %cst_100 = arith.constant dense<0.000000e+00> : vector<8x8xf32>
    %232 = vector.multi_reduction <add>, %231, %cst_100 [2] : vector<8x8x8xf32> to vector<8x8xf32>
    %233 = math.log %232 : vector<8x8xf32>
    %234 = arith.addf %227, %233 : vector<8x8xf32>
    %c0_101 = arith.constant 0 : index
    %c0_102 = arith.constant 0 : index
    %235 = vector.load %arg16[%c0_101, %c0_102] : memref<8x8xf32, #tpu.memory_space<vmem>>, vector<8x8xf32>
    %236 = vector.shape_cast %194 : vector<8x1xi1> to vector<8x1xi1>
    %237 = vector.broadcast %236 : vector<8x1xi1> to vector<8x8xi1>
    %238 = arith.select %237, %234, %235 : vector<8x8xi1>, vector<8x8xf32>
    %c0_103 = arith.constant 0 : index
    %c0_104 = arith.constant 0 : index
    %239 = vector.load %arg16[%c0_103, %c0_104] : memref<8x8xf32, #tpu.memory_space<vmem>>, vector<8x8xf32>
    tpu.vector_store %arg16[%c0_103, %c0_104], %238 {strides = array<i32>} : memref<8x8xf32, #tpu.memory_space<vmem>>, vector<8x8xf32>,
    %240 = arith.index_cast %c3_i32 : i32 to index
    %c0_105 = arith.constant 0 : index
    %c0_106 = arith.constant 0 : index
    %241 = vector.load %arg5[%240, %c0_105, %c0_106] : memref<8x8x1xi32, #tpu.memory_space<vmem>>, vector<1x8x1xi32>
    %242 = vector.shape_cast %241 : vector<1x8x1xi32> to vector<8x1xi32>
    %243 = vector.broadcast %242 : vector<8x1xi32> to vector<8x8xi32>
    %244 = arith.cmpi eq, %16, %243 : vector<8x8xi32>
    %245 = arith.extui %244 : vector<8x8xi1> to vector<8x8xi32>
    %246 = arith.sitofp %245 : vector<8x8xi32> to vector<8x8xf32>
    %247 = vector.shape_cast %11 : vector<8x8xf32> to vector<1x8x8xf32>
    %248 = vector.shape_cast %246 : vector<8x8xf32> to vector<8x1x8xf32>
    %249 = vector.broadcast %247 : vector<1x8x8xf32> to vector<8x8x8xf32>
    %250 = vector.broadcast %248 : vector<8x1x8xf32> to vector<8x8x8xf32>
    %251 = arith.mulf %249, %250 : vector<8x8x8xf32>
    %cst_107 = arith.constant dense<0.000000e+00> : vector<8x8xf32>
    %252 = vector.multi_reduction <add>, %251, %cst_107 [2] : vector<8x8x8xf32> to vector<8x8xf32>
    %253 = arith.mulf %252, %189 : vector<8x8xf32>
    %cst_108 = arith.constant dense<0.000000e+00> : vector<8xf32>
    %254 = vector.multi_reduction <add>, %253, %cst_108 [1] : vector<8x8xf32> to vector<8xf32>
    %255 = vector.shape_cast %254 : vector<8xf32> to vector<8x1xf32>
    %256 = arith.mulf %192, %246 : vector<8x8xf32>
    %cst_109 = arith.constant dense<0.000000e+00> : vector<8xf32>
    %257 = vector.multi_reduction <add>, %256, %cst_109 [1] : vector<8x8xf32> to vector<8xf32>
    %258 = vector.shape_cast %257 : vector<8xf32> to vector<8x1xf32>
    %259 = arith.addf %255, %258 : vector<8x1xf32>
    %260 = arith.extui %194 : vector<8x1xi1> to vector<8x1xi32>
    %261 = arith.sitofp %260 : vector<8x1xi32> to vector<8x1xf32>
    %262 = arith.mulf %259, %261 : vector<8x1xf32>
    %263 = arith.addf %186, %262 : vector<8x1xf32>
    %264 = vector.shape_cast %194 : vector<8x1xi1> to vector<8x1xi1>
    %265 = vector.broadcast %264 : vector<8x1xi1> to vector<8x8xi1>
    %266 = arith.select %265, %246, %189 : vector<8x8xi1>, vector<8x8xf32>
    %c4_i32 = arith.constant 4 : i32
    %267 = arith.index_cast %c4_i32 : i32 to index
    %c0_110 = arith.constant 0 : index
    %c0_111 = arith.constant 0 : index
    %268 = vector.load %arg14[%267, %c0_110, %c0_111] : memref<8x8x8xf32, #tpu.memory_space<vmem>>, vector<1x8x8xf32>
    %269 = vector.shape_cast %268 : vector<1x8x8xf32> to vector<8x8xf32>
    %270 = vector.broadcast %c4_i32 : i32 to vector<8x1xi32>
    %271 = arith.cmpi slt, %270, %14 : vector<8x1xi32>
    %c0_112 = arith.constant 0 : index
    %c0_113 = arith.constant 0 : index
    %272 = vector.load %arg15[%c0_112, %c0_113] : memref<8x8xf32, #tpu.memory_space<vmem>>, vector<8x8xf32>
    %273 = vector.shape_cast %272 : vector<8x8xf32> to vector<8x1x8xf32>
    %274 = vector.shape_cast %10 : vector<8x8xf32> to vector<1x8x8xf32>
    %275 = vector.broadcast %273 : vector<8x1x8xf32> to vector<8x8x8xf32>
    %276 = vector.broadcast %274 : vector<1x8x8xf32> to vector<8x8x8xf32>
    %277 = arith.addf %275, %276 : vector<8x8x8xf32>
    %cst_114 = arith.constant dense<0xFF800000> : vector<8x8xf32>
    %278 = vector.multi_reduction <maximumf>, %277, %cst_114 [2] : vector<8x8x8xf32> to vector<8x8xf32>
    %279 = vector.shape_cast %278 : vector<8x8xf32> to vector<8x8x1xf32>
    %280 = vector.broadcast %279 : vector<8x8x1xf32> to vector<8x8x8xf32>
    %281 = arith.cmpf oge, %277, %280 : vector<8x8x8xf32>
    %c8_i32_115 = arith.constant 8 : i32
    %282 = vector.broadcast %c8_i32_115 : i32 to vector<8x8x8xi32>
    %283 = arith.select %281, %15, %282 : vector<8x8x8xi1>, vector<8x8x8xi32>
    %cst_116 = arith.constant dense<2147483647> : vector<8x8xi32>
    %284 = vector.multi_reduction <minsi>, %283, %cst_116 [2] : vector<8x8x8xi32> to vector<8x8xi32>
    %285 = arith.addf %278, %269 : vector<8x8xf32>
    %c0_117 = arith.constant 0 : index
    %c0_118 = arith.constant 0 : index
    %286 = vector.load %arg15[%c0_117, %c0_118] : memref<8x8xf32, #tpu.memory_space<vmem>>, vector<8x8xf32>
    %287 = vector.shape_cast %271 : vector<8x1xi1> to vector<8x1xi1>
    %288 = vector.broadcast %287 : vector<8x1xi1> to vector<8x8xi1>
    %289 = arith.select %288, %285, %286 : vector<8x8xi1>, vector<8x8xf32>
    %c0_119 = arith.constant 0 : index
    %c0_120 = arith.constant 0 : index
    %290 = vector.load %arg15[%c0_119, %c0_120] : memref<8x8xf32, #tpu.memory_space<vmem>>, vector<8x8xf32>
    tpu.vector_store %arg15[%c0_119, %c0_120], %289 {strides = array<i32>} : memref<8x8xf32, #tpu.memory_space<vmem>>, vector<8x8xf32>,
    %291 = arith.index_cast %c4_i32 : i32 to index
    %c0_121 = arith.constant 0 : index
    %c0_122 = arith.constant 0 : index
    %292 = vector.load %arg11[%291, %c0_121, %c0_122] : memref<8x8x8xi32, #tpu.memory_space<vmem>>, vector<1x8x8xi32>
    %293 = vector.shape_cast %292 : vector<1x8x8xi32> to vector<8x8xi32>
    %294 = vector.shape_cast %284 : vector<8x8xi32> to vector<1x8x8xi32>
    tpu.vector_store %arg11[%291, %c0_121, %c0_122], %294 {strides = array<i32>} : memref<8x8x8xi32, #tpu.memory_space<vmem>>, vector<1x8x8xi32>,
    %c0_123 = arith.constant 0 : index
    %c0_124 = arith.constant 0 : index
    %295 = vector.load %arg16[%c0_123, %c0_124] : memref<8x8xf32, #tpu.memory_space<vmem>>, vector<8x8xf32>
    %296 = vector.shape_cast %295 : vector<8x8xf32> to vector<8x1x8xf32>
    %297 = vector.shape_cast %10 : vector<8x8xf32> to vector<1x8x8xf32>
    %298 = vector.broadcast %296 : vector<8x1x8xf32> to vector<8x8x8xf32>
    %299 = vector.broadcast %297 : vector<1x8x8xf32> to vector<8x8x8xf32>
    %300 = arith.addf %298, %299 : vector<8x8x8xf32>
    %301 = vector.shape_cast %269 : vector<8x8xf32> to vector<8x8x1xf32>
    %302 = vector.broadcast %301 : vector<8x8x1xf32> to vector<8x8x8xf32>
    %303 = arith.addf %300, %302 : vector<8x8x8xf32>
    %cst_125 = arith.constant dense<0xFF800000> : vector<8x8xf32>
    %304 = vector.multi_reduction <maximumf>, %303, %cst_125 [2] : vector<8x8x8xf32> to vector<8x8xf32>
    %305 = vector.shape_cast %304 : vector<8x8xf32> to vector<8x8x1xf32>
    %306 = vector.broadcast %305 : vector<8x8x1xf32> to vector<8x8x8xf32>
    %307 = arith.subf %303, %306 : vector<8x8x8xf32>
    %308 = math.exp %307 : vector<8x8x8xf32>
    %cst_126 = arith.constant dense<0.000000e+00> : vector<8x8xf32>
    %309 = vector.multi_reduction <add>, %308, %cst_126 [2] : vector<8x8x8xf32> to vector<8x8xf32>
    %310 = math.log %309 : vector<8x8xf32>
    %311 = arith.addf %304, %310 : vector<8x8xf32>
    %c0_127 = arith.constant 0 : index
    %c0_128 = arith.constant 0 : index
    %312 = vector.load %arg16[%c0_127, %c0_128] : memref<8x8xf32, #tpu.memory_space<vmem>>, vector<8x8xf32>
    %313 = vector.shape_cast %271 : vector<8x1xi1> to vector<8x1xi1>
    %314 = vector.broadcast %313 : vector<8x1xi1> to vector<8x8xi1>
    %315 = arith.select %314, %311, %312 : vector<8x8xi1>, vector<8x8xf32>
    %c0_129 = arith.constant 0 : index
    %c0_130 = arith.constant 0 : index
    %316 = vector.load %arg16[%c0_129, %c0_130] : memref<8x8xf32, #tpu.memory_space<vmem>>, vector<8x8xf32>
    tpu.vector_store %arg16[%c0_129, %c0_130], %315 {strides = array<i32>} : memref<8x8xf32, #tpu.memory_space<vmem>>, vector<8x8xf32>,
    %317 = arith.index_cast %c4_i32 : i32 to index
    %c0_131 = arith.constant 0 : index
    %c0_132 = arith.constant 0 : index
    %318 = vector.load %arg5[%317, %c0_131, %c0_132] : memref<8x8x1xi32, #tpu.memory_space<vmem>>, vector<1x8x1xi32>
    %319 = vector.shape_cast %318 : vector<1x8x1xi32> to vector<8x1xi32>
    %320 = vector.broadcast %319 : vector<8x1xi32> to vector<8x8xi32>
    %321 = arith.cmpi eq, %16, %320 : vector<8x8xi32>
    %322 = arith.extui %321 : vector<8x8xi1> to vector<8x8xi32>
    %323 = arith.sitofp %322 : vector<8x8xi32> to vector<8x8xf32>
    %324 = vector.shape_cast %11 : vector<8x8xf32> to vector<1x8x8xf32>
    %325 = vector.shape_cast %323 : vector<8x8xf32> to vector<8x1x8xf32>
    %326 = vector.broadcast %324 : vector<1x8x8xf32> to vector<8x8x8xf32>
    %327 = vector.broadcast %325 : vector<8x1x8xf32> to vector<8x8x8xf32>
    %328 = arith.mulf %326, %327 : vector<8x8x8xf32>
    %cst_133 = arith.constant dense<0.000000e+00> : vector<8x8xf32>
    %329 = vector.multi_reduction <add>, %328, %cst_133 [2] : vector<8x8x8xf32> to vector<8x8xf32>
    %330 = arith.mulf %329, %266 : vector<8x8xf32>
    %cst_134 = arith.constant dense<0.000000e+00> : vector<8xf32>
    %331 = vector.multi_reduction <add>, %330, %cst_134 [1] : vector<8x8xf32> to vector<8xf32>
    %332 = vector.shape_cast %331 : vector<8xf32> to vector<8x1xf32>
    %333 = arith.mulf %269, %323 : vector<8x8xf32>
    %cst_135 = arith.constant dense<0.000000e+00> : vector<8xf32>
    %334 = vector.multi_reduction <add>, %333, %cst_135 [1] : vector<8x8xf32> to vector<8xf32>
    %335 = vector.shape_cast %334 : vector<8xf32> to vector<8x1xf32>
    %336 = arith.addf %332, %335 : vector<8x1xf32>
    %337 = arith.extui %271 : vector<8x1xi1> to vector<8x1xi32>
    %338 = arith.sitofp %337 : vector<8x1xi32> to vector<8x1xf32>
    %339 = arith.mulf %336, %338 : vector<8x1xf32>
    %340 = arith.addf %263, %339 : vector<8x1xf32>
    %341 = vector.shape_cast %271 : vector<8x1xi1> to vector<8x1xi1>
    %342 = vector.broadcast %341 : vector<8x1xi1> to vector<8x8xi1>
    %343 = arith.select %342, %323, %266 : vector<8x8xi1>, vector<8x8xf32>
    %c5_i32 = arith.constant 5 : i32
    %344 = arith.index_cast %c5_i32 : i32 to index
    %c0_136 = arith.constant 0 : index
    %c0_137 = arith.constant 0 : index
    %345 = vector.load %arg14[%344, %c0_136, %c0_137] : memref<8x8x8xf32, #tpu.memory_space<vmem>>, vector<1x8x8xf32>
    %346 = vector.shape_cast %345 : vector<1x8x8xf32> to vector<8x8xf32>
    %347 = vector.broadcast %c5_i32 : i32 to vector<8x1xi32>
    %348 = arith.cmpi slt, %347, %14 : vector<8x1xi32>
    %c0_138 = arith.constant 0 : index
    %c0_139 = arith.constant 0 : index
    %349 = vector.load %arg15[%c0_138, %c0_139] : memref<8x8xf32, #tpu.memory_space<vmem>>, vector<8x8xf32>
    %350 = vector.shape_cast %349 : vector<8x8xf32> to vector<8x1x8xf32>
    %351 = vector.shape_cast %10 : vector<8x8xf32> to vector<1x8x8xf32>
    %352 = vector.broadcast %350 : vector<8x1x8xf32> to vector<8x8x8xf32>
    %353 = vector.broadcast %351 : vector<1x8x8xf32> to vector<8x8x8xf32>
    %354 = arith.addf %352, %353 : vector<8x8x8xf32>
    %cst_140 = arith.constant dense<0xFF800000> : vector<8x8xf32>
    %355 = vector.multi_reduction <maximumf>, %354, %cst_140 [2] : vector<8x8x8xf32> to vector<8x8xf32>
    %356 = vector.shape_cast %355 : vector<8x8xf32> to vector<8x8x1xf32>
    %357 = vector.broadcast %356 : vector<8x8x1xf32> to vector<8x8x8xf32>
    %358 = arith.cmpf oge, %354, %357 : vector<8x8x8xf32>
    %c8_i32_141 = arith.constant 8 : i32
    %359 = vector.broadcast %c8_i32_141 : i32 to vector<8x8x8xi32>
    %360 = arith.select %358, %15, %359 : vector<8x8x8xi1>, vector<8x8x8xi32>
    %cst_142 = arith.constant dense<2147483647> : vector<8x8xi32>
    %361 = vector.multi_reduction <minsi>, %360, %cst_142 [2] : vector<8x8x8xi32> to vector<8x8xi32>
    %362 = arith.addf %355, %346 : vector<8x8xf32>
    %c0_143 = arith.constant 0 : index
    %c0_144 = arith.constant 0 : index
    %363 = vector.load %arg15[%c0_143, %c0_144] : memref<8x8xf32, #tpu.memory_space<vmem>>, vector<8x8xf32>
    %364 = vector.shape_cast %348 : vector<8x1xi1> to vector<8x1xi1>
    %365 = vector.broadcast %364 : vector<8x1xi1> to vector<8x8xi1>
    %366 = arith.select %365, %362, %363 : vector<8x8xi1>, vector<8x8xf32>
    %c0_145 = arith.constant 0 : index
    %c0_146 = arith.constant 0 : index
    %367 = vector.load %arg15[%c0_145, %c0_146] : memref<8x8xf32, #tpu.memory_space<vmem>>, vector<8x8xf32>
    tpu.vector_store %arg15[%c0_145, %c0_146], %366 {strides = array<i32>} : memref<8x8xf32, #tpu.memory_space<vmem>>, vector<8x8xf32>,
    %368 = arith.index_cast %c5_i32 : i32 to index
    %c0_147 = arith.constant 0 : index
    %c0_148 = arith.constant 0 : index
    %369 = vector.load %arg11[%368, %c0_147, %c0_148] : memref<8x8x8xi32, #tpu.memory_space<vmem>>, vector<1x8x8xi32>
    %370 = vector.shape_cast %369 : vector<1x8x8xi32> to vector<8x8xi32>
    %371 = vector.shape_cast %361 : vector<8x8xi32> to vector<1x8x8xi32>
    tpu.vector_store %arg11[%368, %c0_147, %c0_148], %371 {strides = array<i32>} : memref<8x8x8xi32, #tpu.memory_space<vmem>>, vector<1x8x8xi32>,
    %c0_149 = arith.constant 0 : index
    %c0_150 = arith.constant 0 : index
    %372 = vector.load %arg16[%c0_149, %c0_150] : memref<8x8xf32, #tpu.memory_space<vmem>>, vector<8x8xf32>
    %373 = vector.shape_cast %372 : vector<8x8xf32> to vector<8x1x8xf32>
    %374 = vector.shape_cast %10 : vector<8x8xf32> to vector<1x8x8xf32>
    %375 = vector.broadcast %373 : vector<8x1x8xf32> to vector<8x8x8xf32>
    %376 = vector.broadcast %374 : vector<1x8x8xf32> to vector<8x8x8xf32>
    %377 = arith.addf %375, %376 : vector<8x8x8xf32>
    %378 = vector.shape_cast %346 : vector<8x8xf32> to vector<8x8x1xf32>
    %379 = vector.broadcast %378 : vector<8x8x1xf32> to vector<8x8x8xf32>
    %380 = arith.addf %377, %379 : vector<8x8x8xf32>
    %cst_151 = arith.constant dense<0xFF800000> : vector<8x8xf32>
    %381 = vector.multi_reduction <maximumf>, %380, %cst_151 [2] : vector<8x8x8xf32> to vector<8x8xf32>
    %382 = vector.shape_cast %381 : vector<8x8xf32> to vector<8x8x1xf32>
    %383 = vector.broadcast %382 : vector<8x8x1xf32> to vector<8x8x8xf32>
    %384 = arith.subf %380, %383 : vector<8x8x8xf32>
    %385 = math.exp %384 : vector<8x8x8xf32>
    %cst_152 = arith.constant dense<0.000000e+00> : vector<8x8xf32>
    %386 = vector.multi_reduction <add>, %385, %cst_152 [2] : vector<8x8x8xf32> to vector<8x8xf32>
    %387 = math.log %386 : vector<8x8xf32>
    %388 = arith.addf %381, %387 : vector<8x8xf32>
    %c0_153 = arith.constant 0 : index
    %c0_154 = arith.constant 0 : index
    %389 = vector.load %arg16[%c0_153, %c0_154] : memref<8x8xf32, #tpu.memory_space<vmem>>, vector<8x8xf32>
    %390 = vector.shape_cast %348 : vector<8x1xi1> to vector<8x1xi1>
    %391 = vector.broadcast %390 : vector<8x1xi1> to vector<8x8xi1>
    %392 = arith.select %391, %388, %389 : vector<8x8xi1>, vector<8x8xf32>
    %c0_155 = arith.constant 0 : index
    %c0_156 = arith.constant 0 : index
    %393 = vector.load %arg16[%c0_155, %c0_156] : memref<8x8xf32, #tpu.memory_space<vmem>>, vector<8x8xf32>
    tpu.vector_store %arg16[%c0_155, %c0_156], %392 {strides = array<i32>} : memref<8x8xf32, #tpu.memory_space<vmem>>, vector<8x8xf32>,
    %394 = arith.index_cast %c5_i32 : i32 to index
    %c0_157 = arith.constant 0 : index
    %c0_158 = arith.constant 0 : index
    %395 = vector.load %arg5[%394, %c0_157, %c0_158] : memref<8x8x1xi32, #tpu.memory_space<vmem>>, vector<1x8x1xi32>
    %396 = vector.shape_cast %395 : vector<1x8x1xi32> to vector<8x1xi32>
    %397 = vector.broadcast %396 : vector<8x1xi32> to vector<8x8xi32>
    %398 = arith.cmpi eq, %16, %397 : vector<8x8xi32>
    %399 = arith.extui %398 : vector<8x8xi1> to vector<8x8xi32>
    %400 = arith.sitofp %399 : vector<8x8xi32> to vector<8x8xf32>
    %401 = vector.shape_cast %11 : vector<8x8xf32> to vector<1x8x8xf32>
    %402 = vector.shape_cast %400 : vector<8x8xf32> to vector<8x1x8xf32>
    %403 = vector.broadcast %401 : vector<1x8x8xf32> to vector<8x8x8xf32>
    %404 = vector.broadcast %402 : vector<8x1x8xf32> to vector<8x8x8xf32>
    %405 = arith.mulf %403, %404 : vector<8x8x8xf32>
    %cst_159 = arith.constant dense<0.000000e+00> : vector<8x8xf32>
    %406 = vector.multi_reduction <add>, %405, %cst_159 [2] : vector<8x8x8xf32> to vector<8x8xf32>
    %407 = arith.mulf %406, %343 : vector<8x8xf32>
    %cst_160 = arith.constant dense<0.000000e+00> : vector<8xf32>
    %408 = vector.multi_reduction <add>, %407, %cst_160 [1] : vector<8x8xf32> to vector<8xf32>
    %409 = vector.shape_cast %408 : vector<8xf32> to vector<8x1xf32>
    %410 = arith.mulf %346, %400 : vector<8x8xf32>
    %cst_161 = arith.constant dense<0.000000e+00> : vector<8xf32>
    %411 = vector.multi_reduction <add>, %410, %cst_161 [1] : vector<8x8xf32> to vector<8xf32>
    %412 = vector.shape_cast %411 : vector<8xf32> to vector<8x1xf32>
    %413 = arith.addf %409, %412 : vector<8x1xf32>
    %414 = arith.extui %348 : vector<8x1xi1> to vector<8x1xi32>
    %415 = arith.sitofp %414 : vector<8x1xi32> to vector<8x1xf32>
    %416 = arith.mulf %413, %415 : vector<8x1xf32>
    %417 = arith.addf %340, %416 : vector<8x1xf32>
    %418 = vector.shape_cast %348 : vector<8x1xi1> to vector<8x1xi1>
    %419 = vector.broadcast %418 : vector<8x1xi1> to vector<8x8xi1>
    %420 = arith.select %419, %400, %343 : vector<8x8xi1>, vector<8x8xf32>
    %c6_i32 = arith.constant 6 : i32
    %421 = arith.index_cast %c6_i32 : i32 to index
    %c0_162 = arith.constant 0 : index
    %c0_163 = arith.constant 0 : index
    %422 = vector.load %arg14[%421, %c0_162, %c0_163] : memref<8x8x8xf32, #tpu.memory_space<vmem>>, vector<1x8x8xf32>
    %423 = vector.shape_cast %422 : vector<1x8x8xf32> to vector<8x8xf32>
    %424 = vector.broadcast %c6_i32 : i32 to vector<8x1xi32>
    %425 = arith.cmpi slt, %424, %14 : vector<8x1xi32>
    %c0_164 = arith.constant 0 : index
    %c0_165 = arith.constant 0 : index
    %426 = vector.load %arg15[%c0_164, %c0_165] : memref<8x8xf32, #tpu.memory_space<vmem>>, vector<8x8xf32>
    %427 = vector.shape_cast %426 : vector<8x8xf32> to vector<8x1x8xf32>
    %428 = vector.shape_cast %10 : vector<8x8xf32> to vector<1x8x8xf32>
    %429 = vector.broadcast %427 : vector<8x1x8xf32> to vector<8x8x8xf32>
    %430 = vector.broadcast %428 : vector<1x8x8xf32> to vector<8x8x8xf32>
    %431 = arith.addf %429, %430 : vector<8x8x8xf32>
    %cst_166 = arith.constant dense<0xFF800000> : vector<8x8xf32>
    %432 = vector.multi_reduction <maximumf>, %431, %cst_166 [2] : vector<8x8x8xf32> to vector<8x8xf32>
    %433 = vector.shape_cast %432 : vector<8x8xf32> to vector<8x8x1xf32>
    %434 = vector.broadcast %433 : vector<8x8x1xf32> to vector<8x8x8xf32>
    %435 = arith.cmpf oge, %431, %434 : vector<8x8x8xf32>
    %c8_i32_167 = arith.constant 8 : i32
    %436 = vector.broadcast %c8_i32_167 : i32 to vector<8x8x8xi32>
    %437 = arith.select %435, %15, %436 : vector<8x8x8xi1>, vector<8x8x8xi32>
    %cst_168 = arith.constant dense<2147483647> : vector<8x8xi32>
    %438 = vector.multi_reduction <minsi>, %437, %cst_168 [2] : vector<8x8x8xi32> to vector<8x8xi32>
    %439 = arith.addf %432, %423 : vector<8x8xf32>
    %c0_169 = arith.constant 0 : index
    %c0_170 = arith.constant 0 : index
    %440 = vector.load %arg15[%c0_169, %c0_170] : memref<8x8xf32, #tpu.memory_space<vmem>>, vector<8x8xf32>
    %441 = vector.shape_cast %425 : vector<8x1xi1> to vector<8x1xi1>
    %442 = vector.broadcast %441 : vector<8x1xi1> to vector<8x8xi1>
    %443 = arith.select %442, %439, %440 : vector<8x8xi1>, vector<8x8xf32>
    %c0_171 = arith.constant 0 : index
    %c0_172 = arith.constant 0 : index
    %444 = vector.load %arg15[%c0_171, %c0_172] : memref<8x8xf32, #tpu.memory_space<vmem>>, vector<8x8xf32>
    tpu.vector_store %arg15[%c0_171, %c0_172], %443 {strides = array<i32>} : memref<8x8xf32, #tpu.memory_space<vmem>>, vector<8x8xf32>,
    %445 = arith.index_cast %c6_i32 : i32 to index
    %c0_173 = arith.constant 0 : index
    %c0_174 = arith.constant 0 : index
    %446 = vector.load %arg11[%445, %c0_173, %c0_174] : memref<8x8x8xi32, #tpu.memory_space<vmem>>, vector<1x8x8xi32>
    %447 = vector.shape_cast %446 : vector<1x8x8xi32> to vector<8x8xi32>
    %448 = vector.shape_cast %438 : vector<8x8xi32> to vector<1x8x8xi32>
    tpu.vector_store %arg11[%445, %c0_173, %c0_174], %448 {strides = array<i32>} : memref<8x8x8xi32, #tpu.memory_space<vmem>>, vector<1x8x8xi32>,
    %c0_175 = arith.constant 0 : index
    %c0_176 = arith.constant 0 : index
    %449 = vector.load %arg16[%c0_175, %c0_176] : memref<8x8xf32, #tpu.memory_space<vmem>>, vector<8x8xf32>
    %450 = vector.shape_cast %449 : vector<8x8xf32> to vector<8x1x8xf32>
    %451 = vector.shape_cast %10 : vector<8x8xf32> to vector<1x8x8xf32>
    %452 = vector.broadcast %450 : vector<8x1x8xf32> to vector<8x8x8xf32>
    %453 = vector.broadcast %451 : vector<1x8x8xf32> to vector<8x8x8xf32>
    %454 = arith.addf %452, %453 : vector<8x8x8xf32>
    %455 = vector.shape_cast %423 : vector<8x8xf32> to vector<8x8x1xf32>
    %456 = vector.broadcast %455 : vector<8x8x1xf32> to vector<8x8x8xf32>
    %457 = arith.addf %454, %456 : vector<8x8x8xf32>
    %cst_177 = arith.constant dense<0xFF800000> : vector<8x8xf32>
    %458 = vector.multi_reduction <maximumf>, %457, %cst_177 [2] : vector<8x8x8xf32> to vector<8x8xf32>
    %459 = vector.shape_cast %458 : vector<8x8xf32> to vector<8x8x1xf32>
    %460 = vector.broadcast %459 : vector<8x8x1xf32> to vector<8x8x8xf32>
    %461 = arith.subf %457, %460 : vector<8x8x8xf32>
    %462 = math.exp %461 : vector<8x8x8xf32>
    %cst_178 = arith.constant dense<0.000000e+00> : vector<8x8xf32>
    %463 = vector.multi_reduction <add>, %462, %cst_178 [2] : vector<8x8x8xf32> to vector<8x8xf32>
    %464 = math.log %463 : vector<8x8xf32>
    %465 = arith.addf %458, %464 : vector<8x8xf32>
    %c0_179 = arith.constant 0 : index
    %c0_180 = arith.constant 0 : index
    %466 = vector.load %arg16[%c0_179, %c0_180] : memref<8x8xf32, #tpu.memory_space<vmem>>, vector<8x8xf32>
    %467 = vector.shape_cast %425 : vector<8x1xi1> to vector<8x1xi1>
    %468 = vector.broadcast %467 : vector<8x1xi1> to vector<8x8xi1>
    %469 = arith.select %468, %465, %466 : vector<8x8xi1>, vector<8x8xf32>
    %c0_181 = arith.constant 0 : index
    %c0_182 = arith.constant 0 : index
    %470 = vector.load %arg16[%c0_181, %c0_182] : memref<8x8xf32, #tpu.memory_space<vmem>>, vector<8x8xf32>
    tpu.vector_store %arg16[%c0_181, %c0_182], %469 {strides = array<i32>} : memref<8x8xf32, #tpu.memory_space<vmem>>, vector<8x8xf32>,
    %471 = arith.index_cast %c6_i32 : i32 to index
    %c0_183 = arith.constant 0 : index
    %c0_184 = arith.constant 0 : index
    %472 = vector.load %arg5[%471, %c0_183, %c0_184] : memref<8x8x1xi32, #tpu.memory_space<vmem>>, vector<1x8x1xi32>
    %473 = vector.shape_cast %472 : vector<1x8x1xi32> to vector<8x1xi32>
    %474 = vector.broadcast %473 : vector<8x1xi32> to vector<8x8xi32>
    %475 = arith.cmpi eq, %16, %474 : vector<8x8xi32>
    %476 = arith.extui %475 : vector<8x8xi1> to vector<8x8xi32>
    %477 = arith.sitofp %476 : vector<8x8xi32> to vector<8x8xf32>
    %478 = vector.shape_cast %11 : vector<8x8xf32> to vector<1x8x8xf32>
    %479 = vector.shape_cast %477 : vector<8x8xf32> to vector<8x1x8xf32>
    %480 = vector.broadcast %478 : vector<1x8x8xf32> to vector<8x8x8xf32>
    %481 = vector.broadcast %479 : vector<8x1x8xf32> to vector<8x8x8xf32>
    %482 = arith.mulf %480, %481 : vector<8x8x8xf32>
    %cst_185 = arith.constant dense<0.000000e+00> : vector<8x8xf32>
    %483 = vector.multi_reduction <add>, %482, %cst_185 [2] : vector<8x8x8xf32> to vector<8x8xf32>
    %484 = arith.mulf %483, %420 : vector<8x8xf32>
    %cst_186 = arith.constant dense<0.000000e+00> : vector<8xf32>
    %485 = vector.multi_reduction <add>, %484, %cst_186 [1] : vector<8x8xf32> to vector<8xf32>
    %486 = vector.shape_cast %485 : vector<8xf32> to vector<8x1xf32>
    %487 = arith.mulf %423, %477 : vector<8x8xf32>
    %cst_187 = arith.constant dense<0.000000e+00> : vector<8xf32>
    %488 = vector.multi_reduction <add>, %487, %cst_187 [1] : vector<8x8xf32> to vector<8xf32>
    %489 = vector.shape_cast %488 : vector<8xf32> to vector<8x1xf32>
    %490 = arith.addf %486, %489 : vector<8x1xf32>
    %491 = arith.extui %425 : vector<8x1xi1> to vector<8x1xi32>
    %492 = arith.sitofp %491 : vector<8x1xi32> to vector<8x1xf32>
    %493 = arith.mulf %490, %492 : vector<8x1xf32>
    %494 = arith.addf %417, %493 : vector<8x1xf32>
    %495 = vector.shape_cast %425 : vector<8x1xi1> to vector<8x1xi1>
    %496 = vector.broadcast %495 : vector<8x1xi1> to vector<8x8xi1>
    %497 = arith.select %496, %477, %420 : vector<8x8xi1>, vector<8x8xf32>
    %c7_i32 = arith.constant 7 : i32
    %498 = arith.index_cast %c7_i32 : i32 to index
    %c0_188 = arith.constant 0 : index
    %c0_189 = arith.constant 0 : index
    %499 = vector.load %arg14[%498, %c0_188, %c0_189] : memref<8x8x8xf32, #tpu.memory_space<vmem>>, vector<1x8x8xf32>
    %500 = vector.shape_cast %499 : vector<1x8x8xf32> to vector<8x8xf32>
    %501 = vector.broadcast %c7_i32 : i32 to vector<8x1xi32>
    %502 = arith.cmpi slt, %501, %14 : vector<8x1xi32>
    %c0_190 = arith.constant 0 : index
    %c0_191 = arith.constant 0 : index
    %503 = vector.load %arg15[%c0_190, %c0_191] : memref<8x8xf32, #tpu.memory_space<vmem>>, vector<8x8xf32>
    %504 = vector.shape_cast %503 : vector<8x8xf32> to vector<8x1x8xf32>
    %505 = vector.shape_cast %10 : vector<8x8xf32> to vector<1x8x8xf32>
    %506 = vector.broadcast %504 : vector<8x1x8xf32> to vector<8x8x8xf32>
    %507 = vector.broadcast %505 : vector<1x8x8xf32> to vector<8x8x8xf32>
    %508 = arith.addf %506, %507 : vector<8x8x8xf32>
    %cst_192 = arith.constant dense<0xFF800000> : vector<8x8xf32>
    %509 = vector.multi_reduction <maximumf>, %508, %cst_192 [2] : vector<8x8x8xf32> to vector<8x8xf32>
    %510 = vector.shape_cast %509 : vector<8x8xf32> to vector<8x8x1xf32>
    %511 = vector.broadcast %510 : vector<8x8x1xf32> to vector<8x8x8xf32>
    %512 = arith.cmpf oge, %508, %511 : vector<8x8x8xf32>
    %c8_i32_193 = arith.constant 8 : i32
    %513 = vector.broadcast %c8_i32_193 : i32 to vector<8x8x8xi32>
    %514 = arith.select %512, %15, %513 : vector<8x8x8xi1>, vector<8x8x8xi32>
    %cst_194 = arith.constant dense<2147483647> : vector<8x8xi32>
    %515 = vector.multi_reduction <minsi>, %514, %cst_194 [2] : vector<8x8x8xi32> to vector<8x8xi32>
    %516 = arith.addf %509, %500 : vector<8x8xf32>
    %c0_195 = arith.constant 0 : index
    %c0_196 = arith.constant 0 : index
    %517 = vector.load %arg15[%c0_195, %c0_196] : memref<8x8xf32, #tpu.memory_space<vmem>>, vector<8x8xf32>
    %518 = vector.shape_cast %502 : vector<8x1xi1> to vector<8x1xi1>
    %519 = vector.broadcast %518 : vector<8x1xi1> to vector<8x8xi1>
    %520 = arith.select %519, %516, %517 : vector<8x8xi1>, vector<8x8xf32>
    %c0_197 = arith.constant 0 : index
    %c0_198 = arith.constant 0 : index
    %521 = vector.load %arg15[%c0_197, %c0_198] : memref<8x8xf32, #tpu.memory_space<vmem>>, vector<8x8xf32>
    tpu.vector_store %arg15[%c0_197, %c0_198], %520 {strides = array<i32>} : memref<8x8xf32, #tpu.memory_space<vmem>>, vector<8x8xf32>,
    %522 = arith.index_cast %c7_i32 : i32 to index
    %c0_199 = arith.constant 0 : index
    %c0_200 = arith.constant 0 : index
    %523 = vector.load %arg11[%522, %c0_199, %c0_200] : memref<8x8x8xi32, #tpu.memory_space<vmem>>, vector<1x8x8xi32>
    %524 = vector.shape_cast %523 : vector<1x8x8xi32> to vector<8x8xi32>
    %525 = vector.shape_cast %515 : vector<8x8xi32> to vector<1x8x8xi32>
    tpu.vector_store %arg11[%522, %c0_199, %c0_200], %525 {strides = array<i32>} : memref<8x8x8xi32, #tpu.memory_space<vmem>>, vector<1x8x8xi32>,
    %c0_201 = arith.constant 0 : index
    %c0_202 = arith.constant 0 : index
    %526 = vector.load %arg16[%c0_201, %c0_202] : memref<8x8xf32, #tpu.memory_space<vmem>>, vector<8x8xf32>
    %527 = vector.shape_cast %526 : vector<8x8xf32> to vector<8x1x8xf32>
    %528 = vector.shape_cast %10 : vector<8x8xf32> to vector<1x8x8xf32>
    %529 = vector.broadcast %527 : vector<8x1x8xf32> to vector<8x8x8xf32>
    %530 = vector.broadcast %528 : vector<1x8x8xf32> to vector<8x8x8xf32>
    %531 = arith.addf %529, %530 : vector<8x8x8xf32>
    %532 = vector.shape_cast %500 : vector<8x8xf32> to vector<8x8x1xf32>
    %533 = vector.broadcast %532 : vector<8x8x1xf32> to vector<8x8x8xf32>
    %534 = arith.addf %531, %533 : vector<8x8x8xf32>
    %cst_203 = arith.constant dense<0xFF800000> : vector<8x8xf32>
    %535 = vector.multi_reduction <maximumf>, %534, %cst_203 [2] : vector<8x8x8xf32> to vector<8x8xf32>
    %536 = vector.shape_cast %535 : vector<8x8xf32> to vector<8x8x1xf32>
    %537 = vector.broadcast %536 : vector<8x8x1xf32> to vector<8x8x8xf32>
    %538 = arith.subf %534, %537 : vector<8x8x8xf32>
    %539 = math.exp %538 : vector<8x8x8xf32>
    %cst_204 = arith.constant dense<0.000000e+00> : vector<8x8xf32>
    %540 = vector.multi_reduction <add>, %539, %cst_204 [2] : vector<8x8x8xf32> to vector<8x8xf32>
    %541 = math.log %540 : vector<8x8xf32>
    %542 = arith.addf %535, %541 : vector<8x8xf32>
    %c0_205 = arith.constant 0 : index
    %c0_206 = arith.constant 0 : index
    %543 = vector.load %arg16[%c0_205, %c0_206] : memref<8x8xf32, #tpu.memory_space<vmem>>, vector<8x8xf32>
    %544 = vector.shape_cast %502 : vector<8x1xi1> to vector<8x1xi1>
    %545 = vector.broadcast %544 : vector<8x1xi1> to vector<8x8xi1>
    %546 = arith.select %545, %542, %543 : vector<8x8xi1>, vector<8x8xf32>
    %c0_207 = arith.constant 0 : index
    %c0_208 = arith.constant 0 : index
    %547 = vector.load %arg16[%c0_207, %c0_208] : memref<8x8xf32, #tpu.memory_space<vmem>>, vector<8x8xf32>
    tpu.vector_store %arg16[%c0_207, %c0_208], %546 {strides = array<i32>} : memref<8x8xf32, #tpu.memory_space<vmem>>, vector<8x8xf32>,
    %548 = arith.index_cast %c7_i32 : i32 to index
    %c0_209 = arith.constant 0 : index
    %c0_210 = arith.constant 0 : index
    %549 = vector.load %arg5[%548, %c0_209, %c0_210] : memref<8x8x1xi32, #tpu.memory_space<vmem>>, vector<1x8x1xi32>
    %550 = vector.shape_cast %549 : vector<1x8x1xi32> to vector<8x1xi32>
    %551 = vector.broadcast %550 : vector<8x1xi32> to vector<8x8xi32>
    %552 = arith.cmpi eq, %16, %551 : vector<8x8xi32>
    %553 = arith.extui %552 : vector<8x8xi1> to vector<8x8xi32>
    %554 = arith.sitofp %553 : vector<8x8xi32> to vector<8x8xf32>
    %555 = vector.shape_cast %11 : vector<8x8xf32> to vector<1x8x8xf32>
    %556 = vector.shape_cast %554 : vector<8x8xf32> to vector<8x1x8xf32>
    %557 = vector.broadcast %555 : vector<1x8x8xf32> to vector<8x8x8xf32>
    %558 = vector.broadcast %556 : vector<8x1x8xf32> to vector<8x8x8xf32>
    %559 = arith.mulf %557, %558 : vector<8x8x8xf32>
    %cst_211 = arith.constant dense<0.000000e+00> : vector<8x8xf32>
    %560 = vector.multi_reduction <add>, %559, %cst_211 [2] : vector<8x8x8xf32> to vector<8x8xf32>
    %561 = arith.mulf %560, %497 : vector<8x8xf32>
    %cst_212 = arith.constant dense<0.000000e+00> : vector<8xf32>
    %562 = vector.multi_reduction <add>, %561, %cst_212 [1] : vector<8x8xf32> to vector<8xf32>
    %563 = vector.shape_cast %562 : vector<8xf32> to vector<8x1xf32>
    %564 = arith.mulf %500, %554 : vector<8x8xf32>
    %cst_213 = arith.constant dense<0.000000e+00> : vector<8xf32>
    %565 = vector.multi_reduction <add>, %564, %cst_213 [1] : vector<8x8xf32> to vector<8xf32>
    %566 = vector.shape_cast %565 : vector<8xf32> to vector<8x1xf32>
    %567 = arith.addf %563, %566 : vector<8x1xf32>
    %568 = arith.extui %502 : vector<8x1xi1> to vector<8x1xi32>
    %569 = arith.sitofp %568 : vector<8x1xi32> to vector<8x1xf32>
    %570 = arith.mulf %567, %569 : vector<8x1xf32>
    %571 = arith.addf %494, %570 : vector<8x1xf32>
    %572 = vector.shape_cast %502 : vector<8x1xi1> to vector<8x1xi1>
    %573 = vector.broadcast %572 : vector<8x1xi1> to vector<8x8xi1>
    %574 = arith.select %573, %554, %497 : vector<8x8xi1>, vector<8x8xf32>
    %c7_i32_214 = arith.constant 7 : i32
    %c0_215 = arith.constant 0 : index
    %c0_216 = arith.constant 0 : index
    %575 = vector.load %arg15[%c0_215, %c0_216] : memref<8x8xf32, #tpu.memory_space<vmem>>, vector<8x8xf32>
    %576 = vector.broadcast %12 : vector<1x8xf32> to vector<8x8xf32>
    %577 = arith.addf %575, %576 : vector<8x8xf32>
    %c0_217 = arith.constant 0 : index
    %c0_218 = arith.constant 0 : index
    %578 = vector.load %arg10[%c0_217, %c0_218] : memref<8x8xf32, #tpu.memory_space<vmem>>, vector<8x8xf32>
    tpu.vector_store %arg10[%c0_217, %c0_218], %577 {strides = array<i32>} : memref<8x8xf32, #tpu.memory_space<vmem>>, vector<8x8xf32>,
    %c0_219 = arith.constant 0 : index
    %c0_220 = arith.constant 0 : index
    %579 = vector.load %arg16[%c0_219, %c0_220] : memref<8x8xf32, #tpu.memory_space<vmem>>, vector<8x8xf32>
    %580 = vector.broadcast %12 : vector<1x8xf32> to vector<8x8xf32>
    %581 = arith.addf %579, %580 : vector<8x8xf32>
    %cst_221 = arith.constant dense<0xFF800000> : vector<8xf32>
    %582 = vector.multi_reduction <maximumf>, %581, %cst_221 [1] : vector<8x8xf32> to vector<8xf32>
    %583 = vector.shape_cast %582 : vector<8xf32> to vector<8x1xf32>
    %584 = vector.broadcast %583 : vector<8x1xf32> to vector<8x8xf32>
    %585 = arith.subf %581, %584 : vector<8x8xf32>
    %586 = math.exp %585 : vector<8x8xf32>
    %cst_222 = arith.constant dense<0.000000e+00> : vector<8xf32>
    %587 = vector.multi_reduction <add>, %586, %cst_222 [1] : vector<8x8xf32> to vector<8xf32>
    %588 = vector.shape_cast %587 : vector<8xf32> to vector<8x1xf32>
    %589 = math.log %588 : vector<8x1xf32>
    %590 = arith.addf %583, %589 : vector<8x1xf32>
    %c0_223 = arith.constant 0 : index
    %c0_224 = arith.constant 0 : index
    %591 = vector.load %arg12[%c0_223, %c0_224] : memref<8x1xf32, #tpu.memory_space<vmem>>, vector<8x1xf32>
    tpu.vector_store %arg12[%c0_223, %c0_224], %590 {strides = array<i32>} : memref<8x1xf32, #tpu.memory_space<vmem>>, vector<8x1xf32>,
    %592 = vector.broadcast %12 : vector<1x8xf32> to vector<8x8xf32>
    %593 = arith.mulf %592, %574 : vector<8x8xf32>
    %cst_225 = arith.constant dense<0.000000e+00> : vector<8xf32>
    %594 = vector.multi_reduction <add>, %593, %cst_225 [1] : vector<8x8xf32> to vector<8xf32>
    %595 = vector.shape_cast %594 : vector<8xf32> to vector<8x1xf32>
    %596 = arith.addf %571, %595 : vector<8x1xf32>
    %c0_226 = arith.constant 0 : index
    %c0_227 = arith.constant 0 : index
    %597 = vector.load %arg13[%c0_226, %c0_227] : memref<8x1xf32, #tpu.memory_space<vmem>>, vector<8x1xf32>
    tpu.vector_store %arg13[%c0_226, %c0_227], %596 {strides = array<i32>} : memref<8x1xf32, #tpu.memory_space<vmem>>, vector<8x1xf32>,
    return
  }
  func.func @transform_0(%arg0: i32) -> (i32, i32, i32) {
    %c0_i32 = arith.constant 0 : i32
    %c0_i32_0 = arith.constant 0 : i32
    %c0_i32_1 = arith.constant 0 : i32
    return %c0_i32, %arg0, %c0_i32_0 : i32, i32, i32
  }
  func.func @transform_1(%arg0: i32) -> (i32, i32) {
    %c0_i32 = arith.constant 0 : i32
    %c0_i32_0 = arith.constant 0 : i32
    %c0_i32_1 = arith.constant 0 : i32
    return %c0_i32, %c0_i32_0 : i32, i32
  }
  func.func @transform_2(%arg0: i32) -> (i32, i32) {
    %c0_i32 = arith.constant 0 : i32
    %c0_i32_0 = arith.constant 0 : i32
    %c0_i32_1 = arith.constant 0 : i32
    return %c0_i32, %c0_i32_0 : i32, i32
  }
  func.func @transform_3(%arg0: i32) -> (i32, i32) {
    %c0_i32 = arith.constant 0 : i32
    %c0_i32_0 = arith.constant 0 : i32
    return %arg0, %c0_i32 : i32, i32
  }
  func.func @transform_4(%arg0: i32) -> (i32, i32, i32) {
    %c0_i32 = arith.constant 0 : i32
    %c0_i32_0 = arith.constant 0 : i32
    %c0_i32_1 = arith.constant 0 : i32
    return %c0_i32, %arg0, %c0_i32_0 : i32, i32, i32
  }
  func.func @transform_5(%arg0: i32) -> (i32, i32) {
    %c0_i32 = arith.constant 0 : i32
    %c0_i32_0 = arith.constant 0 : i32
    %c0_i32_1 = arith.constant 0 : i32
    return %c0_i32, %c0_i32_0 : i32, i32
  }
  func.func @transform_6(%arg0: i32) -> (i32, i32) {
    %c0_i32 = arith.constant 0 : i32
    %c0_i32_0 = arith.constant 0 : i32
    %c0_i32_1 = arith.constant 0 : i32
    return %c0_i32, %c0_i32_0 : i32, i32
  }
  func.func @transform_7(%arg0: i32) -> (i32, i32) {
    %c0_i32 = arith.constant 0 : i32
    %c0_i32_0 = arith.constant 0 : i32
    %c0_i32_1 = arith.constant 0 : i32
    return %c0_i32, %c0_i32_0 : i32, i32
  }
  func.func @transform_8(%arg0: i32) -> (i32, i32) {
    %c0_i32 = arith.constant 0 : i32
    %c0_i32_0 = arith.constant 0 : i32
    %c0_i32_1 = arith.constant 0 : i32
    return %c0_i32, %c0_i32_0 : i32, i32
  }
  func.func @transform_9(%arg0: i32) -> (i32, i32) {
    %c0_i32 = arith.constant 0 : i32
    %c0_i32_0 = arith.constant 0 : i32
    return %arg0, %c0_i32 : i32, i32
  }
  func.func @transform_10(%arg0: i32) -> (i32, i32, i32) {
    %c0_i32 = arith.constant 0 : i32
    %c0_i32_0 = arith.constant 0 : i32
    %c0_i32_1 = arith.constant 0 : i32
    return %c0_i32, %arg0, %c0_i32_0 : i32, i32, i32
  }
  func.func @transform_11(%arg0: i32) -> (i32, i32) {
    %c0_i32 = arith.constant 0 : i32
    %c0_i32_0 = arith.constant 0 : i32
    return %arg0, %c0_i32 : i32, i32
  }
  func.func @transform_12(%arg0: i32) -> (i32, i32) {
    %c0_i32 = arith.constant 0 : i32
    %c0_i32_0 = arith.constant 0 : i32
    return %arg0, %c0_i32 : i32, i32
  }
}

</mosaic_0001>

<llo_original>
// kernel: ner_forward.2
$region0: #{ner_forward.2}
  #allocation0 [shape = 'u32[]', space=smem, size = 0x4, offset = 0x4, fixed_abs, tag = 'smem constant byte address 0x4 - core index']
  #allocation1 [shape = 'u32[72,128]{1,0:T(1,128)}', space=vmem, size = 0x9000, scoped, tag = 'internal scratch']
  #allocation2 [shape = 'f32[8,8,128]{2,1,0:T(8,128)}', space=vmem, size = 0x8000, scoped, tag = 'scratch operand']
  #allocation3 [shape = 'f32[8,8,32]{2,1,0:T(8,128)}', space=vmem, size = 0x8000, scoped, tag = 'scratch operand']
  #allocation4 [shape = 'f32[8,8,32]{2,1,0:T(8,128)}', space=vmem, size = 0x8000, scoped, tag = 'scratch operand']
  #allocation5 [shape = 'f32[8,8,32]{2,1,0:T(8,128)}', space=vmem, size = 0x8000, scoped, tag = 'scratch operand']
  #allocation6 [shape = 'f32[8,32]{1,0:T(8,128)}', space=vmem, size = 0x1000, scoped, tag = 'scratch operand']
  #allocation7 [shape = 'f32[8,32]{1,0:T(8,128)}', space=vmem, size = 0x1000, scoped, tag = 'scratch operand']
  %s0 = inlined_call_operand.vmem [shape: f32[8,8,32], index: 0, kind: input, shape index: {}]
  %s1 = inlined_call_operand.vmem [shape: bf16[32,128], index: 1, kind: input, shape index: {}]
  %s2 = inlined_call_operand.vmem [shape: f32[32,128], index: 2, kind: input, shape index: {}]
  %s3 = inlined_call_operand.vmem [shape: f32[1,128], index: 3, kind: input, shape index: {}]
  %s4 = inlined_call_operand.vmem [shape: bf16[32,128], index: 4, kind: input, shape index: {}]
  %s5 = inlined_call_operand.vmem [shape: f32[32,128], index: 5, kind: input, shape index: {}]
  %s6 = inlined_call_operand.vmem [shape: f32[1,128], index: 6, kind: input, shape index: {}]
  %s7 = inlined_call_operand.vmem [shape: f32[8,8,32], index: 7, kind: output, shape index: {}]
  %s8 = sld [smem:[#allocation0]]
  $region38: #{ner_forward.2} parent=0
    _
  %s10 = ssub.s32 1, %s8
  %s11 = scalar_select 0, %s10, %s8
  // Predicated region
  $region2: #{ner_forward.2} parent=0 // pred_check
    _
  $region3: #{ner_forward.2} parent=0 // pred_check_branch
    %13 = sbr.rel (0) target = $region5
  $region4: #{ner_forward.2} parent=0 // pred_region
    _
  $region5: #{ner_forward.2} parent=0 // pred_fallthru
    _
  // Predicated region
  $region6: #{ner_forward.2} parent=0 // pred_check
    _
  $region7: #{ner_forward.2} parent=0 // pred_check_branch
    %15 = sbr.rel (0) target = $region9
  $region8: #{ner_forward.2} parent=0 // pred_region
    _
  $region9: #{ner_forward.2} parent=0 // pred_fallthru
    _
  // Predicated region
  $region10: #{ner_forward.2} parent=0 // pred_check
    _
  $region11: #{ner_forward.2} parent=0 // pred_check_branch
    %17 = sbr.rel (0) target = $region13
  $region12: #{ner_forward.2} parent=0 // pred_region
    _
  $region13: #{ner_forward.2} parent=0 // pred_fallthru
    _
  // Predicated region
  $region14: #{ner_forward.2} parent=0 // pred_check
    _
  $region15: #{ner_forward.2} parent=0 // pred_check_branch
    %19 = sbr.rel (0) target = $region17
  $region16: #{ner_forward.2} parent=0 // pred_region
    _
  $region17: #{ner_forward.2} parent=0 // pred_fallthru
    _
  // Predicated region
  $region18: #{ner_forward.2} parent=0 // pred_check
    _
  $region19: #{ner_forward.2} parent=0 // pred_check_branch
    %21 = sbr.rel (0) target = $region21
  $region20: #{ner_forward.2} parent=0 // pred_region
    _
  $region21: #{ner_forward.2} parent=0 // pred_fallthru
    _
  // Predicated region
  $region22: #{ner_forward.2} parent=0 // pred_check
    _
  $region23: #{ner_forward.2} parent=0 // pred_check_branch
    %23 = sbr.rel (0) target = $region25
  $region24: #{ner_forward.2} parent=0 // pred_region
    _
  $region25: #{ner_forward.2} parent=0 // pred_fallthru
    _
  // Predicated region
  $region26: #{ner_forward.2} parent=0 // pred_check
    _
  $region27: #{ner_forward.2} parent=0 // pred_check_branch
    %25 = sbr.rel (0) target = $region29
  $region28: #{ner_forward.2} parent=0 // pred_region
    _
  $region29: #{ner_forward.2} parent=0 // pred_fallthru
    _
  %v27 = vlaneseq
  %v28 = vand.u32 %v27, 127
  %vm29 = vcmp.lt.s32.totalorder %v28, 0
  %v30 = vsub.s32 0, %v28
  %v31 = vsel %vm29, %v30, %v28
  %v32 = vshrl.u32 %v31, 5
  %v33 = vand.u32 %v31, 31
  %v34 = vsub.s32 0, %v33
  %v35 = vsel %vm29, %v34, %v33
  %vm36 = vcmp.ne.s32.totalorder %v35, 0
  %vm37 = vcmp.lt.s32.totalorder %v35, 0
  %vm38 = vmand %vm37, %vm36
  %v39 = vadd.s32 %v35, 32
  %v40 = vsel %vm38, %v39, %v35
  %vm41 = vcmp.lt.s32.totalorder %v40, 16
  %vm42 = vcmp.lt.s32.totalorder %v28, 16
  %v43 = vld [vmem:[%s0] sm:$0xff]
  %v44 = vld [vmem:[%s0 + $0x8] sm:$0xff]
  %v45 = vld [vmem:[%s0 + $0x10] sm:$0xff]
  %v46 = vld [vmem:[%s0 + $0x18] sm:$0xff]
  %v47 = vld [vmem:[%s0 + $0x20] sm:$0xff]
  %v48 = vld [vmem:[%s0 + $0x28] sm:$0xff]
  %v49 = vld [vmem:[%s0 + $0x30] sm:$0xff]
  %v50 = vld [vmem:[%s0 + $0x38] sm:$0xff]
  %v51 = vpack.c.bf16 %v44, %v43
  %v52 = vpack.c.bf16 %v46, %v45
  %v53 = vpack.c.bf16 %v48, %v47
  %v54 = vpack.c.bf16 %v50, %v49
  %v55 = vld [vmem:[%s1] sm:$0xf]
  %v56 = vld [vmem:[%s1 + $0x4] sm:$0xf]
  %v57 = vld [vmem:[%s1 + $0x8] sm:$0xf]
  %v58 = vld [vmem:[%s1 + $0xc] sm:$0xf]
  %v59 = vld [vmem:[%s3] sm:$0x1]
  %v61 = vperm.slane %v59, 0
  %v67 = vunpack.c.l.b16 %v55
  %v68 = vunpack.c.l.b16 %v56
  %v69 = vunpack.c.l.b16 %v57
  %v70 = vunpack.c.l.b16 %v58
  %v71 = vpack.c.b16 %v68, %v67
  %v72 = vpack.c.b16 %v70, %v69
  %vm75 = vcmask 261120
  %v77 = vsel %vm75, %v51, 0
  %v80 = vsel %vm75, %v52, 0
  %v83 = vsel %vm75, %v53, 0
  %v86 = vsel %vm75, %v54, 0
  %88 = vmatpush.bf16.msra.mxu0 0
  %89 = vmatpush.bf16.msra.mxu0 0
  %90 = vmatpush.bf16.msra.mxu0 0
  %91 = vmatpush.bf16.msra.mxu0 0
  %92 = vmatpush.bf16.msra.mxu0 0
  %93 = vmatpush.bf16.msra.mxu0 0
  %94 = vmatpush.bf16.msra.mxu0 %v72
  %95 = vmatpush.bf16.msra.mxu0 %v71
  %96 = vmatmul.bf16.gmra.mxu0 %v77
  %v97 = vpop.f32.mrf.mxu0
  %v98 = vadd.f32 %v61, %v97
  %v99 = vpop.f32.mrf.mxu0
  %v100 = vadd.f32 %v61, %v99
  %101 = vmatmul.bf16.gmra.mxu0 %v80
  %v102 = vpop.f32.mrf.mxu0
  %v103 = vadd.f32 %v61, %v102
  %v104 = vpop.f32.mrf.mxu0
  %v105 = vadd.f32 %v61, %v104
  %106 = vmatmul.bf16.gmra.mxu0 %v83
  %v107 = vpop.f32.mrf.mxu0
  %v108 = vadd.f32 %v61, %v107
  %v109 = vpop.f32.mrf.mxu0
  %v110 = vadd.f32 %v61, %v109
  %111 = vmatmul.bf16.gmra.mxu0 %v86
  %v112 = vpop.f32.mrf.mxu0
  %v113 = vadd.f32 %v61, %v112
  %v114 = vpop.f32.mrf.mxu0
  %v115 = vadd.f32 %v61, %v114
  %116 = vdwg.mxu0
  %117 = vst [vmem:[#allocation2] sm:$0xff] %v98
  %118 = vst [vmem:[#allocation2 + $0x8] sm:$0xff] %v100
  %119 = vst [vmem:[#allocation2 + $0x10] sm:$0xff] %v103
  %120 = vst [vmem:[#allocation2 + $0x18] sm:$0xff] %v105
  %121 = vst [vmem:[#allocation2 + $0x20] sm:$0xff] %v108
  %122 = vst [vmem:[#allocation2 + $0x28] sm:$0xff] %v110
  %123 = vst [vmem:[#allocation2 + $0x30] sm:$0xff] %v113
  %124 = vst [vmem:[#allocation2 + $0x38] sm:$0xff] %v115
  %v125 = vld [vmem:[%s2] sm:$0xff]
  %v126 = vld [vmem:[%s2 + $0x8] sm:$0xff]
  %v127 = vld [vmem:[%s2 + $0x10] sm:$0xff]
  %v128 = vld [vmem:[%s2 + $0x18] sm:$0xff]
  %129 = vst.msk [vmem:[#allocation6] sm:$0xff] %vm75, 0.0
  %130 = vst.msk [vmem:[#allocation7] sm:$0xff] %vm75, 0.0
  %v131 = vld [vmem:[#allocation2] sm:$0xff]
  %s132 = scalar_lea.vmem [#allocation2], 56
  %v133 = vld [vmem:[%s132] sm:$0xff]
  %v134 = vsel %vm41, 1, 0
  %vm135 = vcmp.eq.s32.totalorder %v134, 1
  %v136 = vsel %vm135, %v131, %v133
  %v137 = vld [vmem:[#allocation6] sm:$0xff]
  %v139 = vsel %vm75, %v137, 0
  %141 = vmatpush.msra.mxu0 0.0
  %142 = vmatpush.msra.mxu0 0.0
  %143 = vmatpush.msra.mxu0 0.0
  %144 = vmatpush.msra.mxu0 0.0
  %145 = vmatpush.msra.mxu0 0.0
  %146 = vmatpush.msra.mxu0 0.0
  %147 = vmatpush.msra.mxu0 0.0
  %148 = vmatpush.msra.mxu0 0.0
  %149 = vmatpush.msra.mxu0 0.0
  %150 = vmatpush.msra.mxu0 0.0
  %151 = vmatpush.msra.mxu0 0.0
  %152 = vmatpush.msra.mxu0 0.0
  %153 = vmatpush.msra.mxu0 %v128
  %154 = vmatpush.msra.mxu0 %v127
  %155 = vmatpush.msra.mxu0 %v126
  %156 = vmatpush.msra.mxu0 %v125
  %157 = vmatmul.f32.gmra.mxu0 %v139
  %v158 = vpop.f32.mrf.mxu0
  %v159 = vadd.f32 0.0, %v158
  %160 = vdwg.mxu0
  %v161 = vadd.f32 %v136, %v159
  %v162 = vxor.u32 %v161, 2147483648
  %v163 = vmul.f32 %v162, 1.442695
  %v164 = vpow.pop %v163
  %v165 = vadd.f32 %v164, 1.0
  %v166 = vrcp.pop %v165
  %v167 = vmul.f32 %v165, %v166
  %v168 = vsub.f32 1.0, %v167
  %v169 = vmul.f32 %v166, %v168
  %v170 = vadd.f32 %v166, %v169
  %vm171 = vweird.f32 %v165
  %vm172 = vweird.f32 %v166
  %vm173 = vmor %vm171, %vm172
  %v174 = vsel %vm173, %v166, %v170
  %v175 = vand.u32 2147483647, %v165
  %vm176 = vcmp.eq.f32.partialorder %v175, 8.507059e+37
  %v177 = vand.u32 %v165, 2147483648
  %v178 = vor.u32 1.1754944e-38, %v177
  %v179 = vsel %vm176, %v178, %v174
  %v180 = vmul.f32 1.0, %v179
  %v181 = vtanh.pop %v161
  %v182 = vld [vmem:[#allocation7] sm:$0xff]
  %184 = vrot.lane.b32.xlu0 %v182, 32
  %v185 = vpop.permute.xlu0 %184
  %v187 = vmul.f32 %v180, %v185
  %189 = vrot.lane.b32.xlu0 %v181, 64
  %v190 = vpop.permute.xlu0 %189
  %v192 = vmul.f32 %v180, %v190
  %194 = vrot.lane.b32.xlu0 %v192, 32
  %v195 = vpop.permute.xlu0 %194
  %v197 = vadd.f32 %v187, %v195
  %v198 = vtanh.pop %v197
  %200 = vrot.lane.b32.xlu0 %v198, 64
  %v201 = vpop.permute.xlu0 %200
  %v203 = vmul.f32 %v180, %v201
  %205 = vrot.lane.b32.xlu0 %v197, 96
  %v206 = vpop.permute.xlu0 %205
  %208 = vst.msk [vmem:[#allocation7] sm:$0xff] %vm75, %v206
  %210 = vrot.lane.b32.xlu0 %v203, 32
  %v211 = vpop.permute.xlu0 %210
  %213 = vst.msk [vmem:[#allocation6] sm:$0xff] %vm75, %v211
  %214 = vst.msk [vmem:[#allocation4] sm:$0xff] %vm75, %v211
  %s215 = scalar_lea.vmem [#allocation5], 56
  %216 = vst.msk [vmem:[%s215] sm:$0xff] %vm75, %v211
  %s217 = scalar_lea.vmem [#allocation2], 8
  %v218 = vld [vmem:[%s217] sm:$0xff]
  %s219 = scalar_lea.vmem [#allocation2], 48
  %v220 = vld [vmem:[%s219] sm:$0xff]
  %v221 = vsel %vm135, %v218, %v220
  %v222 = vld [vmem:[#allocation6] sm:$0xff]
  %v224 = vsel %vm75, %v222, 0
  %226 = vmatpush.msra.mxu0 0.0
  %227 = vmatpush.msra.mxu0 0.0
  %228 = vmatpush.msra.mxu0 0.0
  %229 = vmatpush.msra.mxu0 0.0
  %230 = vmatpush.msra.mxu0 0.0
  %231 = vmatpush.msra.mxu0 0.0
  %232 = vmatpush.msra.mxu0 0.0
  %233 = vmatpush.msra.mxu0 0.0
  %234 = vmatpush.msra.mxu0 0.0
  %235 = vmatpush.msra.mxu0 0.0
  %236 = vmatpush.msra.mxu0 0.0
  %237 = vmatpush.msra.mxu0 0.0
  %238 = vmatpush.msra.mxu0 %v128
  %239 = vmatpush.msra.mxu0 %v127
  %240 = vmatpush.msra.mxu0 %v126
  %241 = vmatpush.msra.mxu0 %v125
  %242 = vmatmul.f32.gmra.mxu0 %v224
  %v243 = vpop.f32.mrf.mxu0
  %v244 = vadd.f32 0.0, %v243
  %245 = vdwg.mxu0
  %v246 = vadd.f32 %v221, %v244
  %v247 = vxor.u32 %v246, 2147483648
  %v248 = vmul.f32 %v247, 1.442695
  %v249 = vpow.pop %v248
  %v250 = vadd.f32 %v249, 1.0
  %v251 = vrcp.pop %v250
  %v252 = vmul.f32 %v250, %v251
  %v253 = vsub.f32 1.0, %v252
  %v254 = vmul.f32 %v251, %v253
  %v255 = vadd.f32 %v251, %v254
  %vm256 = vweird.f32 %v250
  %vm257 = vweird.f32 %v251
  %vm258 = vmor %vm256, %vm257
  %v259 = vsel %vm258, %v251, %v255
  %v260 = vand.u32 2147483647, %v250
  %vm261 = vcmp.eq.f32.partialorder %v260, 8.507059e+37
  %v262 = vand.u32 %v250, 2147483648
  %v263 = vor.u32 1.1754944e-38, %v262
  %v264 = vsel %vm261, %v263, %v259
  %v265 = vmul.f32 1.0, %v264
  %v266 = vtanh.pop %v246
  %v267 = vld [vmem:[#allocation7] sm:$0xff]
  %269 = vrot.lane.b32.xlu0 %v267, 32
  %v270 = vpop.permute.xlu0 %269
  %v272 = vmul.f32 %v265, %v270
  %274 = vrot.lane.b32.xlu0 %v266, 64
  %v275 = vpop.permute.xlu0 %274
  %v277 = vmul.f32 %v265, %v275
  %279 = vrot.lane.b32.xlu0 %v277, 32
  %v280 = vpop.permute.xlu0 %279
  %v282 = vadd.f32 %v272, %v280
  %v283 = vtanh.pop %v282
  %285 = vrot.lane.b32.xlu0 %v283, 64
  %v286 = vpop.permute.xlu0 %285
  %v288 = vmul.f32 %v265, %v286
  %290 = vrot.lane.b32.xlu0 %v282, 96
  %v291 = vpop.permute.xlu0 %290
  %293 = vst.msk [vmem:[#allocation7] sm:$0xff] %vm75, %v291
  %295 = vrot.lane.b32.xlu0 %v288, 32
  %v296 = vpop.permute.xlu0 %295
  %298 = vst.msk [vmem:[#allocation6] sm:$0xff] %vm75, %v296
  %s299 = scalar_lea.vmem [#allocation4], 8
  %300 = vst.msk [vmem:[%s299] sm:$0xff] %vm75, %v296
  %s301 = scalar_lea.vmem [#allocation5], 48
  %302 = vst.msk [vmem:[%s301] sm:$0xff] %vm75, %v296
  %s303 = scalar_lea.vmem [#allocation2], 16
  %v304 = vld [vmem:[%s303] sm:$0xff]
  %s305 = scalar_lea.vmem [#allocation2], 40
  %v306 = vld [vmem:[%s305] sm:$0xff]
  %v307 = vsel %vm135, %v304, %v306
  %v308 = vld [vmem:[#allocation6] sm:$0xff]
  %v310 = vsel %vm75, %v308, 0
  %312 = vmatpush.msra.mxu0 0.0
  %313 = vmatpush.msra.mxu0 0.0
  %314 = vmatpush.msra.mxu0 0.0
  %315 = vmatpush.msra.mxu0 0.0
  %316 = vmatpush.msra.mxu0 0.0
  %317 = vmatpush.msra.mxu0 0.0
  %318 = vmatpush.msra.mxu0 0.0
  %319 = vmatpush.msra.mxu0 0.0
  %320 = vmatpush.msra.mxu0 0.0
  %321 = vmatpush.msra.mxu0 0.0
  %322 = vmatpush.msra.mxu0 0.0
  %323 = vmatpush.msra.mxu0 0.0
  %324 = vmatpush.msra.mxu0 %v128
  %325 = vmatpush.msra.mxu0 %v127
  %326 = vmatpush.msra.mxu0 %v126
  %327 = vmatpush.msra.mxu0 %v125
  %328 = vmatmul.f32.gmra.mxu0 %v310
  %v329 = vpop.f32.mrf.mxu0
  %v330 = vadd.f32 0.0, %v329
  %331 = vdwg.mxu0
  %v332 = vadd.f32 %v307, %v330
  %v333 = vxor.u32 %v332, 2147483648
  %v334 = vmul.f32 %v333, 1.442695
  %v335 = vpow.pop %v334
  %v336 = vadd.f32 %v335, 1.0
  %v337 = vrcp.pop %v336
  %v338 = vmul.f32 %v336, %v337
  %v339 = vsub.f32 1.0, %v338
  %v340 = vmul.f32 %v337, %v339
  %v341 = vadd.f32 %v337, %v340
  %vm342 = vweird.f32 %v336
  %vm343 = vweird.f32 %v337
  %vm344 = vmor %vm342, %vm343
  %v345 = vsel %vm344, %v337, %v341
  %v346 = vand.u32 2147483647, %v336
  %vm347 = vcmp.eq.f32.partialorder %v346, 8.507059e+37
  %v348 = vand.u32 %v336, 2147483648
  %v349 = vor.u32 1.1754944e-38, %v348
  %v350 = vsel %vm347, %v349, %v345
  %v351 = vmul.f32 1.0, %v350
  %v352 = vtanh.pop %v332
  %v353 = vld [vmem:[#allocation7] sm:$0xff]
  %355 = vrot.lane.b32.xlu0 %v353, 32
  %v356 = vpop.permute.xlu0 %355
  %v358 = vmul.f32 %v351, %v356
  %360 = vrot.lane.b32.xlu0 %v352, 64
  %v361 = vpop.permute.xlu0 %360
  %v363 = vmul.f32 %v351, %v361
  %365 = vrot.lane.b32.xlu0 %v363, 32
  %v366 = vpop.permute.xlu0 %365
  %v368 = vadd.f32 %v358, %v366
  %v369 = vtanh.pop %v368
  %371 = vrot.lane.b32.xlu0 %v369, 64
  %v372 = vpop.permute.xlu0 %371
  %v374 = vmul.f32 %v351, %v372
  %376 = vrot.lane.b32.xlu0 %v368, 96
  %v377 = vpop.permute.xlu0 %376
  %379 = vst.msk [vmem:[#allocation7] sm:$0xff] %vm75, %v377
  %381 = vrot.lane.b32.xlu0 %v374, 32
  %v382 = vpop.permute.xlu0 %381
  %384 = vst.msk [vmem:[#allocation6] sm:$0xff] %vm75, %v382
  %s385 = scalar_lea.vmem [#allocation4], 16
  %386 = vst.msk [vmem:[%s385] sm:$0xff] %vm75, %v382
  %s387 = scalar_lea.vmem [#allocation5], 40
  %388 = vst.msk [vmem:[%s387] sm:$0xff] %vm75, %v382
  %s389 = scalar_lea.vmem [#allocation2], 24
  %v390 = vld [vmem:[%s389] sm:$0xff]
  %s391 = scalar_lea.vmem [#allocation2], 32
  %v392 = vld [vmem:[%s391] sm:$0xff]
  %v393 = vsel %vm135, %v390, %v392
  %v394 = vld [vmem:[#allocation6] sm:$0xff]
  %v396 = vsel %vm75, %v394, 0
  %398 = vmatpush.msra.mxu0 0.0
  %399 = vmatpush.msra.mxu0 0.0
  %400 = vmatpush.msra.mxu0 0.0
  %401 = vmatpush.msra.mxu0 0.0
  %402 = vmatpush.msra.mxu0 0.0
  %403 = vmatpush.msra.mxu0 0.0
  %404 = vmatpush.msra.mxu0 0.0
  %405 = vmatpush.msra.mxu0 0.0
  %406 = vmatpush.msra.mxu0 0.0
  %407 = vmatpush.msra.mxu0 0.0
  %408 = vmatpush.msra.mxu0 0.0
  %409 = vmatpush.msra.mxu0 0.0
  %410 = vmatpush.msra.mxu0 %v128
  %411 = vmatpush.msra.mxu0 %v127
  %412 = vmatpush.msra.mxu0 %v126
  %413 = vmatpush.msra.mxu0 %v125
  %414 = vmatmul.f32.gmra.mxu0 %v396
  %v415 = vpop.f32.mrf.mxu0
  %v416 = vadd.f32 0.0, %v415
  %417 = vdwg.mxu0
  %v418 = vadd.f32 %v393, %v416
  %v419 = vxor.u32 %v418, 2147483648
  %v420 = vmul.f32 %v419, 1.442695
  %v421 = vpow.pop %v420
  %v422 = vadd.f32 %v421, 1.0
  %v423 = vrcp.pop %v422
  %v424 = vmul.f32 %v422, %v423
  %v425 = vsub.f32 1.0, %v424
  %v426 = vmul.f32 %v423, %v425
  %v427 = vadd.f32 %v423, %v426
  %vm428 = vweird.f32 %v422
  %vm429 = vweird.f32 %v423
  %vm430 = vmor %vm428, %vm429
  %v431 = vsel %vm430, %v423, %v427
  %v432 = vand.u32 2147483647, %v422
  %vm433 = vcmp.eq.f32.partialorder %v432, 8.507059e+37
  %v434 = vand.u32 %v422, 2147483648
  %v435 = vor.u32 1.1754944e-38, %v434
  %v436 = vsel %vm433, %v435, %v431
  %v437 = vmul.f32 1.0, %v436
  %v438 = vtanh.pop %v418
  %v439 = vld [vmem:[#allocation7] sm:$0xff]
  %441 = vrot.lane.b32.xlu0 %v439, 32
  %v442 = vpop.permute.xlu0 %441
  %v444 = vmul.f32 %v437, %v442
  %446 = vrot.lane.b32.xlu0 %v438, 64
  %v447 = vpop.permute.xlu0 %446
  %v449 = vmul.f32 %v437, %v447
  %451 = vrot.lane.b32.xlu0 %v449, 32
  %v452 = vpop.permute.xlu0 %451
  %v454 = vadd.f32 %v444, %v452
  %v455 = vtanh.pop %v454
  %457 = vrot.lane.b32.xlu0 %v455, 64
  %v458 = vpop.permute.xlu0 %457
  %v460 = vmul.f32 %v437, %v458
  %462 = vrot.lane.b32.xlu0 %v454, 96
  %v463 = vpop.permute.xlu0 %462
  %465 = vst.msk [vmem:[#allocation7] sm:$0xff] %vm75, %v463
  %467 = vrot.lane.b32.xlu0 %v460, 32
  %v468 = vpop.permute.xlu0 %467
  %470 = vst.msk [vmem:[#allocation6] sm:$0xff] %vm75, %v468
  %s471 = scalar_lea.vmem [#allocation4], 24
  %472 = vst.msk [vmem:[%s471] sm:$0xff] %vm75, %v468
  %s473 = scalar_lea.vmem [#allocation5], 32
  %474 = vst.msk [vmem:[%s473] sm:$0xff] %vm75, %v468
  %v475 = vld [vmem:[%s391] sm:$0xff]
  %v476 = vld [vmem:[%s389] sm:$0xff]
  %v477 = vsel %vm135, %v475, %v476
  %v478 = vld [vmem:[#allocation6] sm:$0xff]
  %v480 = vsel %vm75, %v478, 0
  %482 = vmatpush.msra.mxu0 0.0
  %483 = vmatpush.msra.mxu0 0.0
  %484 = vmatpush.msra.mxu0 0.0
  %485 = vmatpush.msra.mxu0 0.0
  %486 = vmatpush.msra.mxu0 0.0
  %487 = vmatpush.msra.mxu0 0.0
  %488 = vmatpush.msra.mxu0 0.0
  %489 = vmatpush.msra.mxu0 0.0
  %490 = vmatpush.msra.mxu0 0.0
  %491 = vmatpush.msra.mxu0 0.0
  %492 = vmatpush.msra.mxu0 0.0
  %493 = vmatpush.msra.mxu0 0.0
  %494 = vmatpush.msra.mxu0 %v128
  %495 = vmatpush.msra.mxu0 %v127
  %496 = vmatpush.msra.mxu0 %v126
  %497 = vmatpush.msra.mxu0 %v125
  %498 = vmatmul.f32.gmra.mxu0 %v480
  %v499 = vpop.f32.mrf.mxu0
  %v500 = vadd.f32 0.0, %v499
  %501 = vdwg.mxu0
  %v502 = vadd.f32 %v477, %v500
  %v503 = vxor.u32 %v502, 2147483648
  %v504 = vmul.f32 %v503, 1.442695
  %v505 = vpow.pop %v504
  %v506 = vadd.f32 %v505, 1.0
  %v507 = vrcp.pop %v506
  %v508 = vmul.f32 %v506, %v507
  %v509 = vsub.f32 1.0, %v508
  %v510 = vmul.f32 %v507, %v509
  %v511 = vadd.f32 %v507, %v510
  %vm512 = vweird.f32 %v506
  %vm513 = vweird.f32 %v507
  %vm514 = vmor %vm512, %vm513
  %v515 = vsel %vm514, %v507, %v511
  %v516 = vand.u32 2147483647, %v506
  %vm517 = vcmp.eq.f32.partialorder %v516, 8.507059e+37
  %v518 = vand.u32 %v506, 2147483648
  %v519 = vor.u32 1.1754944e-38, %v518
  %v520 = vsel %vm517, %v519, %v515
  %v521 = vmul.f32 1.0, %v520
  %v522 = vtanh.pop %v502
  %v523 = vld [vmem:[#allocation7] sm:$0xff]
  %525 = vrot.lane.b32.xlu0 %v523, 32
  %v526 = vpop.permute.xlu0 %525
  %v528 = vmul.f32 %v521, %v526
  %530 = vrot.lane.b32.xlu0 %v522, 64
  %v531 = vpop.permute.xlu0 %530
  %v533 = vmul.f32 %v521, %v531
  %535 = vrot.lane.b32.xlu0 %v533, 32
  %v536 = vpop.permute.xlu0 %535
  %v538 = vadd.f32 %v528, %v536
  %v539 = vtanh.pop %v538
  %541 = vrot.lane.b32.xlu0 %v539, 64
  %v542 = vpop.permute.xlu0 %541
  %v544 = vmul.f32 %v521, %v542
  %546 = vrot.lane.b32.xlu0 %v538, 96
  %v547 = vpop.permute.xlu0 %546
  %549 = vst.msk [vmem:[#allocation7] sm:$0xff] %vm75, %v547
  %551 = vrot.lane.b32.xlu0 %v544, 32
  %v552 = vpop.permute.xlu0 %551
  %554 = vst.msk [vmem:[#allocation6] sm:$0xff] %vm75, %v552
  %s555 = scalar_lea.vmem [#allocation4], 32
  %556 = vst.msk [vmem:[%s555] sm:$0xff] %vm75, %v552
  %s557 = scalar_lea.vmem [#allocation5], 24
  %558 = vst.msk [vmem:[%s557] sm:$0xff] %vm75, %v552
  %v559 = vld [vmem:[%s305] sm:$0xff]
  %v560 = vld [vmem:[%s303] sm:$0xff]
  %v561 = vsel %vm135, %v559, %v560
  %v562 = vld [vmem:[#allocation6] sm:$0xff]
  %v564 = vsel %vm75, %v562, 0
  %566 = vmatpush.msra.mxu0 0.0
  %567 = vmatpush.msra.mxu0 0.0
  %568 = vmatpush.msra.mxu0 0.0
  %569 = vmatpush.msra.mxu0 0.0
  %570 = vmatpush.msra.mxu0 0.0
  %571 = vmatpush.msra.mxu0 0.0
  %572 = vmatpush.msra.mxu0 0.0
  %573 = vmatpush.msra.mxu0 0.0
  %574 = vmatpush.msra.mxu0 0.0
  %575 = vmatpush.msra.mxu0 0.0
  %576 = vmatpush.msra.mxu0 0.0
  %577 = vmatpush.msra.mxu0 0.0
  %578 = vmatpush.msra.mxu0 %v128
  %579 = vmatpush.msra.mxu0 %v127
  %580 = vmatpush.msra.mxu0 %v126
  %581 = vmatpush.msra.mxu0 %v125
  %582 = vmatmul.f32.gmra.mxu0 %v564
  %v583 = vpop.f32.mrf.mxu0
  %v584 = vadd.f32 0.0, %v583
  %585 = vdwg.mxu0
  %v586 = vadd.f32 %v561, %v584
  %v587 = vxor.u32 %v586, 2147483648
  %v588 = vmul.f32 %v587, 1.442695
  %v589 = vpow.pop %v588
  %v590 = vadd.f32 %v589, 1.0
  %v591 = vrcp.pop %v590
  %v592 = vmul.f32 %v590, %v591
  %v593 = vsub.f32 1.0, %v592
  %v594 = vmul.f32 %v591, %v593
  %v595 = vadd.f32 %v591, %v594
  %vm596 = vweird.f32 %v590
  %vm597 = vweird.f32 %v591
  %vm598 = vmor %vm596, %vm597
  %v599 = vsel %vm598, %v591, %v595
  %v600 = vand.u32 2147483647, %v590
  %vm601 = vcmp.eq.f32.partialorder %v600, 8.507059e+37
  %v602 = vand.u32 %v590, 2147483648
  %v603 = vor.u32 1.1754944e-38, %v602
  %v604 = vsel %vm601, %v603, %v599
  %v605 = vmul.f32 1.0, %v604
  %v606 = vtanh.pop %v586
  %v607 = vld [vmem:[#allocation7] sm:$0xff]
  %609 = vrot.lane.b32.xlu0 %v607, 32
  %v610 = vpop.permute.xlu0 %609
  %v612 = vmul.f32 %v605, %v610
  %614 = vrot.lane.b32.xlu0 %v606, 64
  %v615 = vpop.permute.xlu0 %614
  %v617 = vmul.f32 %v605, %v615
  %619 = vrot.lane.b32.xlu0 %v617, 32
  %v620 = vpop.permute.xlu0 %619
  %v622 = vadd.f32 %v612, %v620
  %v623 = vtanh.pop %v622
  %625 = vrot.lane.b32.xlu0 %v623, 64
  %v626 = vpop.permute.xlu0 %625
  %v628 = vmul.f32 %v605, %v626
  %630 = vrot.lane.b32.xlu0 %v622, 96
  %v631 = vpop.permute.xlu0 %630
  %633 = vst.msk [vmem:[#allocation7] sm:$0xff] %vm75, %v631
  %635 = vrot.lane.b32.xlu0 %v628, 32
  %v636 = vpop.permute.xlu0 %635
  %638 = vst.msk [vmem:[#allocation6] sm:$0xff] %vm75, %v636
  %s639 = scalar_lea.vmem [#allocation4], 40
  %640 = vst.msk [vmem:[%s639] sm:$0xff] %vm75, %v636
  %s641 = scalar_lea.vmem [#allocation5], 16
  %642 = vst.msk [vmem:[%s641] sm:$0xff] %vm75, %v636
  %v643 = vld [vmem:[%s219] sm:$0xff]
  %v644 = vld [vmem:[%s217] sm:$0xff]
  %v645 = vsel %vm135, %v643, %v644
  %v646 = vld [vmem:[#allocation6] sm:$0xff]
  %v648 = vsel %vm75, %v646, 0
  %650 = vmatpush.msra.mxu0 0.0
  %651 = vmatpush.msra.mxu0 0.0
  %652 = vmatpush.msra.mxu0 0.0
  %653 = vmatpush.msra.mxu0 0.0
  %654 = vmatpush.msra.mxu0 0.0
  %655 = vmatpush.msra.mxu0 0.0
  %656 = vmatpush.msra.mxu0 0.0
  %657 = vmatpush.msra.mxu0 0.0
  %658 = vmatpush.msra.mxu0 0.0
  %659 = vmatpush.msra.mxu0 0.0
  %660 = vmatpush.msra.mxu0 0.0
  %661 = vmatpush.msra.mxu0 0.0
  %662 = vmatpush.msra.mxu0 %v128
  %663 = vmatpush.msra.mxu0 %v127
  %664 = vmatpush.msra.mxu0 %v126
  %665 = vmatpush.msra.mxu0 %v125
  %666 = vmatmul.f32.gmra.mxu0 %v648
  %v667 = vpop.f32.mrf.mxu0
  %v668 = vadd.f32 0.0, %v667
  %669 = vdwg.mxu0
  %v670 = vadd.f32 %v645, %v668
  %v671 = vxor.u32 %v670, 2147483648
  %v672 = vmul.f32 %v671, 1.442695
  %v673 = vpow.pop %v672
  %v674 = vadd.f32 %v673, 1.0
  %v675 = vrcp.pop %v674
  %v676 = vmul.f32 %v674, %v675
  %v677 = vsub.f32 1.0, %v676
  %v678 = vmul.f32 %v675, %v677
  %v679 = vadd.f32 %v675, %v678
  %vm680 = vweird.f32 %v674
  %vm681 = vweird.f32 %v675
  %vm682 = vmor %vm680, %vm681
  %v683 = vsel %vm682, %v675, %v679
  %v684 = vand.u32 2147483647, %v674
  %vm685 = vcmp.eq.f32.partialorder %v684, 8.507059e+37
  %v686 = vand.u32 %v674, 2147483648
  %v687 = vor.u32 1.1754944e-38, %v686
  %v688 = vsel %vm685, %v687, %v683
  %v689 = vmul.f32 1.0, %v688
  %v690 = vtanh.pop %v670
  %v691 = vld [vmem:[#allocation7] sm:$0xff]
  %693 = vrot.lane.b32.xlu0 %v691, 32
  %v694 = vpop.permute.xlu0 %693
  %v696 = vmul.f32 %v689, %v694
  %698 = vrot.lane.b32.xlu0 %v690, 64
  %v699 = vpop.permute.xlu0 %698
  %v701 = vmul.f32 %v689, %v699
  %703 = vrot.lane.b32.xlu0 %v701, 32
  %v704 = vpop.permute.xlu0 %703
  %v706 = vadd.f32 %v696, %v704
  %v707 = vtanh.pop %v706
  %709 = vrot.lane.b32.xlu0 %v707, 64
  %v710 = vpop.permute.xlu0 %709
  %v712 = vmul.f32 %v689, %v710
  %714 = vrot.lane.b32.xlu0 %v706, 96
  %v715 = vpop.permute.xlu0 %714
  %717 = vst.msk [vmem:[#allocation7] sm:$0xff] %vm75, %v715
  %719 = vrot.lane.b32.xlu0 %v712, 32
  %v720 = vpop.permute.xlu0 %719
  %722 = vst.msk [vmem:[#allocation6] sm:$0xff] %vm75, %v720
  %s723 = scalar_lea.vmem [#allocation4], 48
  %724 = vst.msk [vmem:[%s723] sm:$0xff] %vm75, %v720
  %s725 = scalar_lea.vmem [#allocation5], 8
  %726 = vst.msk [vmem:[%s725] sm:$0xff] %vm75, %v720
  %v727 = vld [vmem:[%s132] sm:$0xff]
  %v728 = vld [vmem:[#allocation2] sm:$0xff]
  %v729 = vsel %vm135, %v727, %v728
  %v730 = vld [vmem:[#allocation6] sm:$0xff]
  %v732 = vsel %vm75, %v730, 0
  %734 = vmatpush.msra.mxu0 0.0
  %735 = vmatpush.msra.mxu0 0.0
  %736 = vmatpush.msra.mxu0 0.0
  %737 = vmatpush.msra.mxu0 0.0
  %738 = vmatpush.msra.mxu0 0.0
  %739 = vmatpush.msra.mxu0 0.0
  %740 = vmatpush.msra.mxu0 0.0
  %741 = vmatpush.msra.mxu0 0.0
  %742 = vmatpush.msra.mxu0 0.0
  %743 = vmatpush.msra.mxu0 0.0
  %744 = vmatpush.msra.mxu0 0.0
  %745 = vmatpush.msra.mxu0 0.0
  %746 = vmatpush.msra.mxu0 %v128
  %747 = vmatpush.msra.mxu0 %v127
  %748 = vmatpush.msra.mxu0 %v126
  %749 = vmatpush.msra.mxu0 %v125
  %750 = vmatmul.f32.gmra.mxu0 %v732
  %v751 = vpop.f32.mrf.mxu0
  %v752 = vadd.f32 0.0, %v751
  %753 = vdwg.mxu0
  %v754 = vadd.f32 %v729, %v752
  %v755 = vxor.u32 %v754, 2147483648
  %v756 = vmul.f32 %v755, 1.442695
  %v757 = vpow.pop %v756
  %v758 = vadd.f32 %v757, 1.0
  %v759 = vrcp.pop %v758
  %v760 = vmul.f32 %v758, %v759
  %v761 = vsub.f32 1.0, %v760
  %v762 = vmul.f32 %v759, %v761
  %v763 = vadd.f32 %v759, %v762
  %vm764 = vweird.f32 %v758
  %vm765 = vweird.f32 %v759
  %vm766 = vmor %vm764, %vm765
  %v767 = vsel %vm766, %v759, %v763
  %v768 = vand.u32 2147483647, %v758
  %vm769 = vcmp.eq.f32.partialorder %v768, 8.507059e+37
  %v770 = vand.u32 %v758, 2147483648
  %v771 = vor.u32 1.1754944e-38, %v770
  %v772 = vsel %vm769, %v771, %v767
  %v773 = vmul.f32 1.0, %v772
  %v774 = vtanh.pop %v754
  %v775 = vld [vmem:[#allocation7] sm:$0xff]
  %777 = vrot.lane.b32.xlu0 %v775, 32
  %v778 = vpop.permute.xlu0 %777
  %v780 = vmul.f32 %v773, %v778
  %782 = vrot.lane.b32.xlu0 %v774, 64
  %v783 = vpop.permute.xlu0 %782
  %v785 = vmul.f32 %v773, %v783
  %787 = vrot.lane.b32.xlu0 %v785, 32
  %v788 = vpop.permute.xlu0 %787
  %v790 = vadd.f32 %v780, %v788
  %v791 = vtanh.pop %v790
  %793 = vrot.lane.b32.xlu0 %v791, 64
  %v794 = vpop.permute.xlu0 %793
  %v796 = vmul.f32 %v773, %v794
  %798 = vrot.lane.b32.xlu0 %v790, 96
  %v799 = vpop.permute.xlu0 %798
  %801 = vst.msk [vmem:[#allocation7] sm:$0xff] %vm75, %v799
  %803 = vrot.lane.b32.xlu0 %v796, 32
  %v804 = vpop.permute.xlu0 %803
  %806 = vst.msk [vmem:[#allocation6] sm:$0xff] %vm75, %v804
  %s807 = scalar_lea.vmem [#allocation4], 56
  %808 = vst.msk [vmem:[%s807] sm:$0xff] %vm75, %v804
  %809 = vst.msk [vmem:[#allocation5] sm:$0xff] %vm75, %v804
  %v810 = vld [vmem:[#allocation4] sm:$0xff]
  %v811 = vld [vmem:[#allocation4 + $0x8] sm:$0xff]
  %v812 = vld [vmem:[#allocation4 + $0x10] sm:$0xff]
  %v813 = vld [vmem:[#allocation4 + $0x18] sm:$0xff]
  %v814 = vld [vmem:[#allocation4 + $0x20] sm:$0xff]
  %v815 = vld [vmem:[#allocation4 + $0x28] sm:$0xff]
  %v816 = vld [vmem:[#allocation4 + $0x30] sm:$0xff]
  %v817 = vld [vmem:[#allocation4 + $0x38] sm:$0xff]
  %v818 = vld [vmem:[#allocation5] sm:$0xff]
  %v819 = vld [vmem:[#allocation5 + $0x8] sm:$0xff]
  %v820 = vld [vmem:[#allocation5 + $0x10] sm:$0xff]
  %v821 = vld [vmem:[#allocation5 + $0x18] sm:$0xff]
  %v822 = vld [vmem:[#allocation5 + $0x20] sm:$0xff]
  %v823 = vld [vmem:[#allocation5 + $0x28] sm:$0xff]
  %v824 = vld [vmem:[#allocation5 + $0x30] sm:$0xff]
  %v825 = vld [vmem:[#allocation5 + $0x38] sm:$0xff]
  %v826 = vsel %vm42, 1, 0
  %vm827 = vcmp.eq.s32.totalorder %v826, 1
  %v828 = vsel %vm827, %v810, %v818
  %v829 = vsel %vm827, %v811, %v819
  %v830 = vsel %vm827, %v812, %v820
  %v831 = vsel %vm827, %v813, %v821
  %v832 = vsel %vm827, %v814, %v822
  %v833 = vsel %vm827, %v815, %v823
  %v834 = vsel %vm827, %v816, %v824
  %v835 = vsel %vm827, %v817, %v825
  %836 = vst.msk [vmem:[#allocation3] sm:$0xff] %vm75, %v828
  %837 = vst.msk [vmem:[#allocation3 + $0x8] sm:$0xff] %vm75, %v829
  %838 = vst.msk [vmem:[#allocation3 + $0x10] sm:$0xff] %vm75, %v830
  %839 = vst.msk [vmem:[#allocation3 + $0x18] sm:$0xff] %vm75, %v831
  %840 = vst.msk [vmem:[#allocation3 + $0x20] sm:$0xff] %vm75, %v832
  %841 = vst.msk [vmem:[#allocation3 + $0x28] sm:$0xff] %vm75, %v833
  %842 = vst.msk [vmem:[#allocation3 + $0x30] sm:$0xff] %vm75, %v834
  %843 = vst.msk [vmem:[#allocation3 + $0x38] sm:$0xff] %vm75, %v835
  %v844 = vld [vmem:[#allocation3] sm:$0xff]
  %v845 = vld [vmem:[#allocation3 + $0x8] sm:$0xff]
  %v846 = vld [vmem:[#allocation3 + $0x10] sm:$0xff]
  %v847 = vld [vmem:[#allocation3 + $0x18] sm:$0xff]
  %v848 = vld [vmem:[#allocation3 + $0x20] sm:$0xff]
  %v849 = vld [vmem:[#allocation3 + $0x28] sm:$0xff]
  %v850 = vld [vmem:[#allocation3 + $0x30] sm:$0xff]
  %v851 = vld [vmem:[#allocation3 + $0x38] sm:$0xff]
  %v852 = vpack.c.bf16 %v845, %v844
  %v853 = vpack.c.bf16 %v847, %v846
  %v854 = vpack.c.bf16 %v849, %v848
  %v855 = vpack.c.bf16 %v851, %v850
  %v856 = vld [vmem:[%s4] sm:$0xf]
  %v857 = vld [vmem:[%s4 + $0x4] sm:$0xf]
  %v858 = vld [vmem:[%s4 + $0x8] sm:$0xf]
  %v859 = vld [vmem:[%s4 + $0xc] sm:$0xf]
  %v860 = vld [vmem:[%s6] sm:$0x1]
  %v862 = vperm.slane %v860, 0
  %v868 = vunpack.c.l.b16 %v856
  %v869 = vunpack.c.l.b16 %v857
  %v870 = vunpack.c.l.b16 %v858
  %v871 = vunpack.c.l.b16 %v859
  %v872 = vpack.c.b16 %v869, %v868
  %v873 = vpack.c.b16 %v871, %v870
  %v877 = vsel %vm75, %v852, 0
  %v880 = vsel %vm75, %v853, 0
  %v883 = vsel %vm75, %v854, 0
  %v886 = vsel %vm75, %v855, 0
  %888 = vmatpush.bf16.msra.mxu0 0
  %889 = vmatpush.bf16.msra.mxu0 0
  %890 = vmatpush.bf16.msra.mxu0 0
  %891 = vmatpush.bf16.msra.mxu0 0
  %892 = vmatpush.bf16.msra.mxu0 0
  %893 = vmatpush.bf16.msra.mxu0 0
  %894 = vmatpush.bf16.msra.mxu0 %v873
  %895 = vmatpush.bf16.msra.mxu0 %v872
  %896 = vmatmul.bf16.gmra.mxu0 %v877
  %v897 = vpop.f32.mrf.mxu0
  %v898 = vadd.f32 %v862, %v897
  %v899 = vpop.f32.mrf.mxu0
  %v900 = vadd.f32 %v862, %v899
  %901 = vmatmul.bf16.gmra.mxu0 %v880
  %v902 = vpop.f32.mrf.mxu0
  %v903 = vadd.f32 %v862, %v902
  %v904 = vpop.f32.mrf.mxu0
  %v905 = vadd.f32 %v862, %v904
  %906 = vmatmul.bf16.gmra.mxu0 %v883
  %v907 = vpop.f32.mrf.mxu0
  %v908 = vadd.f32 %v862, %v907
  %v909 = vpop.f32.mrf.mxu0
  %v910 = vadd.f32 %v862, %v909
  %911 = vmatmul.bf16.gmra.mxu0 %v886
  %v912 = vpop.f32.mrf.mxu0
  %v913 = vadd.f32 %v862, %v912
  %v914 = vpop.f32.mrf.mxu0
  %v915 = vadd.f32 %v862, %v914
  %916 = vdwg.mxu0
  %917 = vst [vmem:[#allocation2] sm:$0xff] %v898
  %918 = vst [vmem:[#allocation2 + $0x8] sm:$0xff] %v900
  %919 = vst [vmem:[#allocation2 + $0x10] sm:$0xff] %v903
  %920 = vst [vmem:[#allocation2 + $0x18] sm:$0xff] %v905
  %921 = vst [vmem:[#allocation2 + $0x20] sm:$0xff] %v908
  %922 = vst [vmem:[#allocation2 + $0x28] sm:$0xff] %v910
  %923 = vst [vmem:[#allocation2 + $0x30] sm:$0xff] %v913
  %924 = vst [vmem:[#allocation2 + $0x38] sm:$0xff] %v915
  %v925 = vld [vmem:[%s5] sm:$0xff]
  %v926 = vld [vmem:[%s5 + $0x8] sm:$0xff]
  %v927 = vld [vmem:[%s5 + $0x10] sm:$0xff]
  %v928 = vld [vmem:[%s5 + $0x18] sm:$0xff]
  %929 = vst.msk [vmem:[#allocation6] sm:$0xff] %vm75, 0.0
  %930 = vst.msk [vmem:[#allocation7] sm:$0xff] %vm75, 0.0
  %v931 = vld [vmem:[#allocation2] sm:$0xff]
  %v932 = vld [vmem:[%s132] sm:$0xff]
  %v933 = vsel %vm135, %v931, %v932
  %v934 = vld [vmem:[#allocation6] sm:$0xff]
  %v936 = vsel %vm75, %v934, 0
  %938 = vmatpush.msra.mxu0 0.0
  %939 = vmatpush.msra.mxu0 0.0
  %940 = vmatpush.msra.mxu0 0.0
  %941 = vmatpush.msra.mxu0 0.0
  %942 = vmatpush.msra.mxu0 0.0
  %943 = vmatpush.msra.mxu0 0.0
  %944 = vmatpush.msra.mxu0 0.0
  %945 = vmatpush.msra.mxu0 0.0
  %946 = vmatpush.msra.mxu0 0.0
  %947 = vmatpush.msra.mxu0 0.0
  %948 = vmatpush.msra.mxu0 0.0
  %949 = vmatpush.msra.mxu0 0.0
  %950 = vmatpush.msra.mxu0 %v928
  %951 = vmatpush.msra.mxu0 %v927
  %952 = vmatpush.msra.mxu0 %v926
  %953 = vmatpush.msra.mxu0 %v925
  %954 = vmatmul.f32.gmra.mxu0 %v936
  %v955 = vpop.f32.mrf.mxu0
  %v956 = vadd.f32 0.0, %v955
  %957 = vdwg.mxu0
  %v958 = vadd.f32 %v933, %v956
  %v959 = vxor.u32 %v958, 2147483648
  %v960 = vmul.f32 %v959, 1.442695
  %v961 = vpow.pop %v960
  %v962 = vadd.f32 %v961, 1.0
  %v963 = vrcp.pop %v962
  %v964 = vmul.f32 %v962, %v963
  %v965 = vsub.f32 1.0, %v964
  %v966 = vmul.f32 %v963, %v965
  %v967 = vadd.f32 %v963, %v966
  %vm968 = vweird.f32 %v962
  %vm969 = vweird.f32 %v963
  %vm970 = vmor %vm968, %vm969
  %v971 = vsel %vm970, %v963, %v967
  %v972 = vand.u32 2147483647, %v962
  %vm973 = vcmp.eq.f32.partialorder %v972, 8.507059e+37
  %v974 = vand.u32 %v962, 2147483648
  %v975 = vor.u32 1.1754944e-38, %v974
  %v976 = vsel %vm973, %v975, %v971
  %v977 = vmul.f32 1.0, %v976
  %v978 = vtanh.pop %v958
  %v979 = vld [vmem:[#allocation7] sm:$0xff]
  %981 = vrot.lane.b32.xlu0 %v979, 32
  %v982 = vpop.permute.xlu0 %981
  %v984 = vmul.f32 %v977, %v982
  %986 = vrot.lane.b32.xlu0 %v978, 64
  %v987 = vpop.permute.xlu0 %986
  %v989 = vmul.f32 %v977, %v987
  %991 = vrot.lane.b32.xlu0 %v989, 32
  %v992 = vpop.permute.xlu0 %991
  %v994 = vadd.f32 %v984, %v992
  %v995 = vtanh.pop %v994
  %997 = vrot.lane.b32.xlu0 %v995, 64
  %v998 = vpop.permute.xlu0 %997
  %v1000 = vmul.f32 %v977, %v998
  %1002 = vrot.lane.b32.xlu0 %v994, 96
  %v1003 = vpop.permute.xlu0 %1002
  %1005 = vst.msk [vmem:[#allocation7] sm:$0xff] %vm75, %v1003
  %1007 = vrot.lane.b32.xlu0 %v1000, 32
  %v1008 = vpop.permute.xlu0 %1007
  %1010 = vst.msk [vmem:[#allocation6] sm:$0xff] %vm75, %v1008
  %1011 = vst.msk [vmem:[#allocation4] sm:$0xff] %vm75, %v1008
  %1012 = vst.msk [vmem:[%s215] sm:$0xff] %vm75, %v1008
  %v1013 = vld [vmem:[%s217] sm:$0xff]
  %v1014 = vld [vmem:[%s219] sm:$0xff]
  %v1015 = vsel %vm135, %v1013, %v1014
  %v1016 = vld [vmem:[#allocation6] sm:$0xff]
  %v1018 = vsel %vm75, %v1016, 0
  %1020 = vmatpush.msra.mxu0 0.0
  %1021 = vmatpush.msra.mxu0 0.0
  %1022 = vmatpush.msra.mxu0 0.0
  %1023 = vmatpush.msra.mxu0 0.0
  %1024 = vmatpush.msra.mxu0 0.0
  %1025 = vmatpush.msra.mxu0 0.0
  %1026 = vmatpush.msra.mxu0 0.0
  %1027 = vmatpush.msra.mxu0 0.0
  %1028 = vmatpush.msra.mxu0 0.0
  %1029 = vmatpush.msra.mxu0 0.0
  %1030 = vmatpush.msra.mxu0 0.0
  %1031 = vmatpush.msra.mxu0 0.0
  %1032 = vmatpush.msra.mxu0 %v928
  %1033 = vmatpush.msra.mxu0 %v927
  %1034 = vmatpush.msra.mxu0 %v926
  %1035 = vmatpush.msra.mxu0 %v925
  %1036 = vmatmul.f32.gmra.mxu0 %v1018
  %v1037 = vpop.f32.mrf.mxu0
  %v1038 = vadd.f32 0.0, %v1037
  %1039 = vdwg.mxu0
  %v1040 = vadd.f32 %v1015, %v1038
  %v1041 = vxor.u32 %v1040, 2147483648
  %v1042 = vmul.f32 %v1041, 1.442695
  %v1043 = vpow.pop %v1042
  %v1044 = vadd.f32 %v1043, 1.0
  %v1045 = vrcp.pop %v1044
  %v1046 = vmul.f32 %v1044, %v1045
  %v1047 = vsub.f32 1.0, %v1046
  %v1048 = vmul.f32 %v1045, %v1047
  %v1049 = vadd.f32 %v1045, %v1048
  %vm1050 = vweird.f32 %v1044
  %vm1051 = vweird.f32 %v1045
  %vm1052 = vmor %vm1050, %vm1051
  %v1053 = vsel %vm1052, %v1045, %v1049
  %v1054 = vand.u32 2147483647, %v1044
  %vm1055 = vcmp.eq.f32.partialorder %v1054, 8.507059e+37
  %v1056 = vand.u32 %v1044, 2147483648
  %v1057 = vor.u32 1.1754944e-38, %v1056
  %v1058 = vsel %vm1055, %v1057, %v1053
  %v1059 = vmul.f32 1.0, %v1058
  %v1060 = vtanh.pop %v1040
  %v1061 = vld [vmem:[#allocation7] sm:$0xff]
  %1063 = vrot.lane.b32.xlu0 %v1061, 32
  %v1064 = vpop.permute.xlu0 %1063
  %v1066 = vmul.f32 %v1059, %v1064
  %1068 = vrot.lane.b32.xlu0 %v1060, 64
  %v1069 = vpop.permute.xlu0 %1068
  %v1071 = vmul.f32 %v1059, %v1069
  %1073 = vrot.lane.b32.xlu0 %v1071, 32
  %v1074 = vpop.permute.xlu0 %1073
  %v1076 = vadd.f32 %v1066, %v1074
  %v1077 = vtanh.pop %v1076
  %1079 = vrot.lane.b32.xlu0 %v1077, 64
  %v1080 = vpop.permute.xlu0 %1079
  %v1082 = vmul.f32 %v1059, %v1080
  %1084 = vrot.lane.b32.xlu0 %v1076, 96
  %v1085 = vpop.permute.xlu0 %1084
  %1087 = vst.msk [vmem:[#allocation7] sm:$0xff] %vm75, %v1085
  %1089 = vrot.lane.b32.xlu0 %v1082, 32
  %v1090 = vpop.permute.xlu0 %1089
  %1092 = vst.msk [vmem:[#allocation6] sm:$0xff] %vm75, %v1090
  %1093 = vst.msk [vmem:[%s299] sm:$0xff] %vm75, %v1090
  %1094 = vst.msk [vmem:[%s301] sm:$0xff] %vm75, %v1090
  %v1095 = vld [vmem:[%s303] sm:$0xff]
  %v1096 = vld [vmem:[%s305] sm:$0xff]
  %v1097 = vsel %vm135, %v1095, %v1096
  %v1098 = vld [vmem:[#allocation6] sm:$0xff]
  %v1100 = vsel %vm75, %v1098, 0
  %1102 = vmatpush.msra.mxu0 0.0
  %1103 = vmatpush.msra.mxu0 0.0
  %1104 = vmatpush.msra.mxu0 0.0
  %1105 = vmatpush.msra.mxu0 0.0
  %1106 = vmatpush.msra.mxu0 0.0
  %1107 = vmatpush.msra.mxu0 0.0
  %1108 = vmatpush.msra.mxu0 0.0
  %1109 = vmatpush.msra.mxu0 0.0
  %1110 = vmatpush.msra.mxu0 0.0
  %1111 = vmatpush.msra.mxu0 0.0
  %1112 = vmatpush.msra.mxu0 0.0
  %1113 = vmatpush.msra.mxu0 0.0
  %1114 = vmatpush.msra.mxu0 %v928
  %1115 = vmatpush.msra.mxu0 %v927
  %1116 = vmatpush.msra.mxu0 %v926
  %1117 = vmatpush.msra.mxu0 %v925
  %1118 = vmatmul.f32.gmra.mxu0 %v1100
  %v1119 = vpop.f32.mrf.mxu0
  %v1120 = vadd.f32 0.0, %v1119
  %1121 = vdwg.mxu0
  %v1122 = vadd.f32 %v1097, %v1120
  %v1123 = vxor.u32 %v1122, 2147483648
  %v1124 = vmul.f32 %v1123, 1.442695
  %v1125 = vpow.pop %v1124
  %v1126 = vadd.f32 %v1125, 1.0
  %v1127 = vrcp.pop %v1126
  %v1128 = vmul.f32 %v1126, %v1127
  %v1129 = vsub.f32 1.0, %v1128
  %v1130 = vmul.f32 %v1127, %v1129
  %v1131 = vadd.f32 %v1127, %v1130
  %vm1132 = vweird.f32 %v1126
  %vm1133 = vweird.f32 %v1127
  %vm1134 = vmor %vm1132, %vm1133
  %v1135 = vsel %vm1134, %v1127, %v1131
  %v1136 = vand.u32 2147483647, %v1126
  %vm1137 = vcmp.eq.f32.partialorder %v1136, 8.507059e+37
  %v1138 = vand.u32 %v1126, 2147483648
  %v1139 = vor.u32 1.1754944e-38, %v1138
  %v1140 = vsel %vm1137, %v1139, %v1135
  %v1141 = vmul.f32 1.0, %v1140
  %v1142 = vtanh.pop %v1122
  %v1143 = vld [vmem:[#allocation7] sm:$0xff]
  %1145 = vrot.lane.b32.xlu0 %v1143, 32
  %v1146 = vpop.permute.xlu0 %1145
  %v1148 = vmul.f32 %v1141, %v1146
  %1150 = vrot.lane.b32.xlu0 %v1142, 64
  %v1151 = vpop.permute.xlu0 %1150
  %v1153 = vmul.f32 %v1141, %v1151
  %1155 = vrot.lane.b32.xlu0 %v1153, 32
  %v1156 = vpop.permute.xlu0 %1155
  %v1158 = vadd.f32 %v1148, %v1156
  %v1159 = vtanh.pop %v1158
  %1161 = vrot.lane.b32.xlu0 %v1159, 64
  %v1162 = vpop.permute.xlu0 %1161
  %v1164 = vmul.f32 %v1141, %v1162
  %1166 = vrot.lane.b32.xlu0 %v1158, 96
  %v1167 = vpop.permute.xlu0 %1166
  %1169 = vst.msk [vmem:[#allocation7] sm:$0xff] %vm75, %v1167
  %1171 = vrot.lane.b32.xlu0 %v1164, 32
  %v1172 = vpop.permute.xlu0 %1171
  %1174 = vst.msk [vmem:[#allocation6] sm:$0xff] %vm75, %v1172
  %1175 = vst.msk [vmem:[%s385] sm:$0xff] %vm75, %v1172
  %1176 = vst.msk [vmem:[%s387] sm:$0xff] %vm75, %v1172
  %v1177 = vld [vmem:[%s389] sm:$0xff]
  %v1178 = vld [vmem:[%s391] sm:$0xff]
  %v1179 = vsel %vm135, %v1177, %v1178
  %v1180 = vld [vmem:[#allocation6] sm:$0xff]
  %v1182 = vsel %vm75, %v1180, 0
  %1184 = vmatpush.msra.mxu0 0.0
  %1185 = vmatpush.msra.mxu0 0.0
  %1186 = vmatpush.msra.mxu0 0.0
  %1187 = vmatpush.msra.mxu0 0.0
  %1188 = vmatpush.msra.mxu0 0.0
  %1189 = vmatpush.msra.mxu0 0.0
  %1190 = vmatpush.msra.mxu0 0.0
  %1191 = vmatpush.msra.mxu0 0.0
  %1192 = vmatpush.msra.mxu0 0.0
  %1193 = vmatpush.msra.mxu0 0.0
  %1194 = vmatpush.msra.mxu0 0.0
  %1195 = vmatpush.msra.mxu0 0.0
  %1196 = vmatpush.msra.mxu0 %v928
  %1197 = vmatpush.msra.mxu0 %v927
  %1198 = vmatpush.msra.mxu0 %v926
  %1199 = vmatpush.msra.mxu0 %v925
  %1200 = vmatmul.f32.gmra.mxu0 %v1182
  %v1201 = vpop.f32.mrf.mxu0
  %v1202 = vadd.f32 0.0, %v1201
  %1203 = vdwg.mxu0
  %v1204 = vadd.f32 %v1179, %v1202
  %v1205 = vxor.u32 %v1204, 2147483648
  %v1206 = vmul.f32 %v1205, 1.442695
  %v1207 = vpow.pop %v1206
  %v1208 = vadd.f32 %v1207, 1.0
  %v1209 = vrcp.pop %v1208
  %v1210 = vmul.f32 %v1208, %v1209
  %v1211 = vsub.f32 1.0, %v1210
  %v1212 = vmul.f32 %v1209, %v1211
  %v1213 = vadd.f32 %v1209, %v1212
  %vm1214 = vweird.f32 %v1208
  %vm1215 = vweird.f32 %v1209
  %vm1216 = vmor %vm1214, %vm1215
  %v1217 = vsel %vm1216, %v1209, %v1213
  %v1218 = vand.u32 2147483647, %v1208
  %vm1219 = vcmp.eq.f32.partialorder %v1218, 8.507059e+37
  %v1220 = vand.u32 %v1208, 2147483648
  %v1221 = vor.u32 1.1754944e-38, %v1220
  %v1222 = vsel %vm1219, %v1221, %v1217
  %v1223 = vmul.f32 1.0, %v1222
  %v1224 = vtanh.pop %v1204
  %v1225 = vld [vmem:[#allocation7] sm:$0xff]
  %1227 = vrot.lane.b32.xlu0 %v1225, 32
  %v1228 = vpop.permute.xlu0 %1227
  %v1230 = vmul.f32 %v1223, %v1228
  %1232 = vrot.lane.b32.xlu0 %v1224, 64
  %v1233 = vpop.permute.xlu0 %1232
  %v1235 = vmul.f32 %v1223, %v1233
  %1237 = vrot.lane.b32.xlu0 %v1235, 32
  %v1238 = vpop.permute.xlu0 %1237
  %v1240 = vadd.f32 %v1230, %v1238
  %v1241 = vtanh.pop %v1240
  %1243 = vrot.lane.b32.xlu0 %v1241, 64
  %v1244 = vpop.permute.xlu0 %1243
  %v1246 = vmul.f32 %v1223, %v1244
  %1248 = vrot.lane.b32.xlu0 %v1240, 96
  %v1249 = vpop.permute.xlu0 %1248
  %1251 = vst.msk [vmem:[#allocation7] sm:$0xff] %vm75, %v1249
  %1253 = vrot.lane.b32.xlu0 %v1246, 32
  %v1254 = vpop.permute.xlu0 %1253
  %1256 = vst.msk [vmem:[#allocation6] sm:$0xff] %vm75, %v1254
  %1257 = vst.msk [vmem:[%s471] sm:$0xff] %vm75, %v1254
  %1258 = vst.msk [vmem:[%s473] sm:$0xff] %vm75, %v1254
  %v1259 = vld [vmem:[%s391] sm:$0xff]
  %v1260 = vld [vmem:[%s389] sm:$0xff]
  %v1261 = vsel %vm135, %v1259, %v1260
  %v1262 = vld [vmem:[#allocation6] sm:$0xff]
  %v1264 = vsel %vm75, %v1262, 0
  %1266 = vmatpush.msra.mxu0 0.0
  %1267 = vmatpush.msra.mxu0 0.0
  %1268 = vmatpush.msra.mxu0 0.0
  %1269 = vmatpush.msra.mxu0 0.0
  %1270 = vmatpush.msra.mxu0 0.0
  %1271 = vmatpush.msra.mxu0 0.0
  %1272 = vmatpush.msra.mxu0 0.0
  %1273 = vmatpush.msra.mxu0 0.0
  %1274 = vmatpush.msra.mxu0 0.0
  %1275 = vmatpush.msra.mxu0 0.0
  %1276 = vmatpush.msra.mxu0 0.0
  %1277 = vmatpush.msra.mxu0 0.0
  %1278 = vmatpush.msra.mxu0 %v928
  %1279 = vmatpush.msra.mxu0 %v927
  %1280 = vmatpush.msra.mxu0 %v926
  %1281 = vmatpush.msra.mxu0 %v925
  %1282 = vmatmul.f32.gmra.mxu0 %v1264
  %v1283 = vpop.f32.mrf.mxu0
  %v1284 = vadd.f32 0.0, %v1283
  %1285 = vdwg.mxu0
  %v1286 = vadd.f32 %v1261, %v1284
  %v1287 = vxor.u32 %v1286, 2147483648
  %v1288 = vmul.f32 %v1287, 1.442695
  %v1289 = vpow.pop %v1288
  %v1290 = vadd.f32 %v1289, 1.0
  %v1291 = vrcp.pop %v1290
  %v1292 = vmul.f32 %v1290, %v1291
  %v1293 = vsub.f32 1.0, %v1292
  %v1294 = vmul.f32 %v1291, %v1293
  %v1295 = vadd.f32 %v1291, %v1294
  %vm1296 = vweird.f32 %v1290
  %vm1297 = vweird.f32 %v1291
  %vm1298 = vmor %vm1296, %vm1297
  %v1299 = vsel %vm1298, %v1291, %v1295
  %v1300 = vand.u32 2147483647, %v1290
  %vm1301 = vcmp.eq.f32.partialorder %v1300, 8.507059e+37
  %v1302 = vand.u32 %v1290, 2147483648
  %v1303 = vor.u32 1.1754944e-38, %v1302
  %v1304 = vsel %vm1301, %v1303, %v1299
  %v1305 = vmul.f32 1.0, %v1304
  %v1306 = vtanh.pop %v1286
  %v1307 = vld [vmem:[#allocation7] sm:$0xff]
  %1309 = vrot.lane.b32.xlu0 %v1307, 32
  %v1310 = vpop.permute.xlu0 %1309
  %v1312 = vmul.f32 %v1305, %v1310
  %1314 = vrot.lane.b32.xlu0 %v1306, 64
  %v1315 = vpop.permute.xlu0 %1314
  %v1317 = vmul.f32 %v1305, %v1315
  %1319 = vrot.lane.b32.xlu0 %v1317, 32
  %v1320 = vpop.permute.xlu0 %1319
  %v1322 = vadd.f32 %v1312, %v1320
  %v1323 = vtanh.pop %v1322
  %1325 = vrot.lane.b32.xlu0 %v1323, 64
  %v1326 = vpop.permute.xlu0 %1325
  %v1328 = vmul.f32 %v1305, %v1326
  %1330 = vrot.lane.b32.xlu0 %v1322, 96
  %v1331 = vpop.permute.xlu0 %1330
  %1333 = vst.msk [vmem:[#allocation7] sm:$0xff] %vm75, %v1331
  %1335 = vrot.lane.b32.xlu0 %v1328, 32
  %v1336 = vpop.permute.xlu0 %1335
  %1338 = vst.msk [vmem:[#allocation6] sm:$0xff] %vm75, %v1336
  %1339 = vst.msk [vmem:[%s555] sm:$0xff] %vm75, %v1336
  %1340 = vst.msk [vmem:[%s557] sm:$0xff] %vm75, %v1336
  %v1341 = vld [vmem:[%s305] sm:$0xff]
  %v1342 = vld [vmem:[%s303] sm:$0xff]
  %v1343 = vsel %vm135, %v1341, %v1342
  %v1344 = vld [vmem:[#allocation6] sm:$0xff]
  %v1346 = vsel %vm75, %v1344, 0
  %1348 = vmatpush.msra.mxu0 0.0
  %1349 = vmatpush.msra.mxu0 0.0
  %1350 = vmatpush.msra.mxu0 0.0
  %1351 = vmatpush.msra.mxu0 0.0
  %1352 = vmatpush.msra.mxu0 0.0
  %1353 = vmatpush.msra.mxu0 0.0
  %1354 = vmatpush.msra.mxu0 0.0
  %1355 = vmatpush.msra.mxu0 0.0
  %1356 = vmatpush.msra.mxu0 0.0
  %1357 = vmatpush.msra.mxu0 0.0
  %1358 = vmatpush.msra.mxu0 0.0
  %1359 = vmatpush.msra.mxu0 0.0
  %1360 = vmatpush.msra.mxu0 %v928
  %1361 = vmatpush.msra.mxu0 %v927
  %1362 = vmatpush.msra.mxu0 %v926
  %1363 = vmatpush.msra.mxu0 %v925
  %1364 = vmatmul.f32.gmra.mxu0 %v1346
  %v1365 = vpop.f32.mrf.mxu0
  %v1366 = vadd.f32 0.0, %v1365
  %1367 = vdwg.mxu0
  %v1368 = vadd.f32 %v1343, %v1366
  %v1369 = vxor.u32 %v1368, 2147483648
  %v1370 = vmul.f32 %v1369, 1.442695
  %v1371 = vpow.pop %v1370
  %v1372 = vadd.f32 %v1371, 1.0
  %v1373 = vrcp.pop %v1372
  %v1374 = vmul.f32 %v1372, %v1373
  %v1375 = vsub.f32 1.0, %v1374
  %v1376 = vmul.f32 %v1373, %v1375
  %v1377 = vadd.f32 %v1373, %v1376
  %vm1378 = vweird.f32 %v1372
  %vm1379 = vweird.f32 %v1373
  %vm1380 = vmor %vm1378, %vm1379
  %v1381 = vsel %vm1380, %v1373, %v1377
  %v1382 = vand.u32 2147483647, %v1372
  %vm1383 = vcmp.eq.f32.partialorder %v1382, 8.507059e+37
  %v1384 = vand.u32 %v1372, 2147483648
  %v1385 = vor.u32 1.1754944e-38, %v1384
  %v1386 = vsel %vm1383, %v1385, %v1381
  %v1387 = vmul.f32 1.0, %v1386
  %v1388 = vtanh.pop %v1368
  %v1389 = vld [vmem:[#allocation7] sm:$0xff]
  %1391 = vrot.lane.b32.xlu0 %v1389, 32
  %v1392 = vpop.permute.xlu0 %1391
  %v1394 = vmul.f32 %v1387, %v1392
  %1396 = vrot.lane.b32.xlu0 %v1388, 64
  %v1397 = vpop.permute.xlu0 %1396
  %v1399 = vmul.f32 %v1387, %v1397
  %1401 = vrot.lane.b32.xlu0 %v1399, 32
  %v1402 = vpop.permute.xlu0 %1401
  %v1404 = vadd.f32 %v1394, %v1402
  %v1405 = vtanh.pop %v1404
  %1407 = vrot.lane.b32.xlu0 %v1405, 64
  %v1408 = vpop.permute.xlu0 %1407
  %v1410 = vmul.f32 %v1387, %v1408
  %1412 = vrot.lane.b32.xlu0 %v1404, 96
  %v1413 = vpop.permute.xlu0 %1412
  %1415 = vst.msk [vmem:[#allocation7] sm:$0xff] %vm75, %v1413
  %1417 = vrot.lane.b32.xlu0 %v1410, 32
  %v1418 = vpop.permute.xlu0 %1417
  %1420 = vst.msk [vmem:[#allocation6] sm:$0xff] %vm75, %v1418
  %1421 = vst.msk [vmem:[%s639] sm:$0xff] %vm75, %v1418
  %1422 = vst.msk [vmem:[%s641] sm:$0xff] %vm75, %v1418
  %v1423 = vld [vmem:[%s219] sm:$0xff]
  %v1424 = vld [vmem:[%s217] sm:$0xff]
  %v1425 = vsel %vm135, %v1423, %v1424
  %v1426 = vld [vmem:[#allocation6] sm:$0xff]
  %v1428 = vsel %vm75, %v1426, 0
  %1430 = vmatpush.msra.mxu0 0.0
  %1431 = vmatpush.msra.mxu0 0.0
  %1432 = vmatpush.msra.mxu0 0.0
  %1433 = vmatpush.msra.mxu0 0.0
  %1434 = vmatpush.msra.mxu0 0.0
  %1435 = vmatpush.msra.mxu0 0.0
  %1436 = vmatpush.msra.mxu0 0.0
  %1437 = vmatpush.msra.mxu0 0.0
  %1438 = vmatpush.msra.mxu0 0.0
  %1439 = vmatpush.msra.mxu0 0.0
  %1440 = vmatpush.msra.mxu0 0.0
  %1441 = vmatpush.msra.mxu0 0.0
  %1442 = vmatpush.msra.mxu0 %v928
  %1443 = vmatpush.msra.mxu0 %v927
  %1444 = vmatpush.msra.mxu0 %v926
  %1445 = vmatpush.msra.mxu0 %v925
  %1446 = vmatmul.f32.gmra.mxu0 %v1428
  %v1447 = vpop.f32.mrf.mxu0
  %v1448 = vadd.f32 0.0, %v1447
  %1449 = vdwg.mxu0
  %v1450 = vadd.f32 %v1425, %v1448
  %v1451 = vxor.u32 %v1450, 2147483648
  %v1452 = vmul.f32 %v1451, 1.442695
  %v1453 = vpow.pop %v1452
  %v1454 = vadd.f32 %v1453, 1.0
  %v1455 = vrcp.pop %v1454
  %v1456 = vmul.f32 %v1454, %v1455
  %v1457 = vsub.f32 1.0, %v1456
  %v1458 = vmul.f32 %v1455, %v1457
  %v1459 = vadd.f32 %v1455, %v1458
  %vm1460 = vweird.f32 %v1454
  %vm1461 = vweird.f32 %v1455
  %vm1462 = vmor %vm1460, %vm1461
  %v1463 = vsel %vm1462, %v1455, %v1459
  %v1464 = vand.u32 2147483647, %v1454
  %vm1465 = vcmp.eq.f32.partialorder %v1464, 8.507059e+37
  %v1466 = vand.u32 %v1454, 2147483648
  %v1467 = vor.u32 1.1754944e-38, %v1466
  %v1468 = vsel %vm1465, %v1467, %v1463
  %v1469 = vmul.f32 1.0, %v1468
  %v1470 = vtanh.pop %v1450
  %v1471 = vld [vmem:[#allocation7] sm:$0xff]
  %1473 = vrot.lane.b32.xlu0 %v1471, 32
  %v1474 = vpop.permute.xlu0 %1473
  %v1476 = vmul.f32 %v1469, %v1474
  %1478 = vrot.lane.b32.xlu0 %v1470, 64
  %v1479 = vpop.permute.xlu0 %1478
  %v1481 = vmul.f32 %v1469, %v1479
  %1483 = vrot.lane.b32.xlu0 %v1481, 32
  %v1484 = vpop.permute.xlu0 %1483
  %v1486 = vadd.f32 %v1476, %v1484
  %v1487 = vtanh.pop %v1486
  %1489 = vrot.lane.b32.xlu0 %v1487, 64
  %v1490 = vpop.permute.xlu0 %1489
  %v1492 = vmul.f32 %v1469, %v1490
  %1494 = vrot.lane.b32.xlu0 %v1486, 96
  %v1495 = vpop.permute.xlu0 %1494
  %1497 = vst.msk [vmem:[#allocation7] sm:$0xff] %vm75, %v1495
  %1499 = vrot.lane.b32.xlu0 %v1492, 32
  %v1500 = vpop.permute.xlu0 %1499
  %1502 = vst.msk [vmem:[#allocation6] sm:$0xff] %vm75, %v1500
  %1503 = vst.msk [vmem:[%s723] sm:$0xff] %vm75, %v1500
  %1504 = vst.msk [vmem:[%s725] sm:$0xff] %vm75, %v1500
  %v1505 = vld [vmem:[%s132] sm:$0xff]
  %v1506 = vld [vmem:[#allocation2] sm:$0xff]
  %v1507 = vsel %vm135, %v1505, %v1506
  %v1508 = vld [vmem:[#allocation6] sm:$0xff]
  %v1510 = vsel %vm75, %v1508, 0
  %1512 = vmatpush.msra.mxu0 0.0
  %1513 = vmatpush.msra.mxu0 0.0
  %1514 = vmatpush.msra.mxu0 0.0
  %1515 = vmatpush.msra.mxu0 0.0
  %1516 = vmatpush.msra.mxu0 0.0
  %1517 = vmatpush.msra.mxu0 0.0
  %1518 = vmatpush.msra.mxu0 0.0
  %1519 = vmatpush.msra.mxu0 0.0
  %1520 = vmatpush.msra.mxu0 0.0
  %1521 = vmatpush.msra.mxu0 0.0
  %1522 = vmatpush.msra.mxu0 0.0
  %1523 = vmatpush.msra.mxu0 0.0
  %1524 = vmatpush.msra.mxu0 %v928
  %1525 = vmatpush.msra.mxu0 %v927
  %1526 = vmatpush.msra.mxu0 %v926
  %1527 = vmatpush.msra.mxu0 %v925
  %1528 = vmatmul.f32.gmra.mxu0 %v1510
  %v1529 = vpop.f32.mrf.mxu0
  %v1530 = vadd.f32 0.0, %v1529
  %1531 = vdwg.mxu0
  %v1532 = vadd.f32 %v1507, %v1530
  %v1533 = vxor.u32 %v1532, 2147483648
  %v1534 = vmul.f32 %v1533, 1.442695
  %v1535 = vpow.pop %v1534
  %v1536 = vadd.f32 %v1535, 1.0
  %v1537 = vrcp.pop %v1536
  %v1538 = vmul.f32 %v1536, %v1537
  %v1539 = vsub.f32 1.0, %v1538
  %v1540 = vmul.f32 %v1537, %v1539
  %v1541 = vadd.f32 %v1537, %v1540
  %vm1542 = vweird.f32 %v1536
  %vm1543 = vweird.f32 %v1537
  %vm1544 = vmor %vm1542, %vm1543
  %v1545 = vsel %vm1544, %v1537, %v1541
  %v1546 = vand.u32 2147483647, %v1536
  %vm1547 = vcmp.eq.f32.partialorder %v1546, 8.507059e+37
  %v1548 = vand.u32 %v1536, 2147483648
  %v1549 = vor.u32 1.1754944e-38, %v1548
  %v1550 = vsel %vm1547, %v1549, %v1545
  %v1551 = vmul.f32 1.0, %v1550
  %v1552 = vtanh.pop %v1532
  %v1553 = vld [vmem:[#allocation7] sm:$0xff]
  %1555 = vrot.lane.b32.xlu0 %v1553, 32
  %v1556 = vpop.permute.xlu0 %1555
  %v1558 = vmul.f32 %v1551, %v1556
  %1560 = vrot.lane.b32.xlu0 %v1552, 64
  %v1561 = vpop.permute.xlu0 %1560
  %v1563 = vmul.f32 %v1551, %v1561
  %1565 = vrot.lane.b32.xlu0 %v1563, 32
  %v1566 = vpop.permute.xlu0 %1565
  %v1568 = vadd.f32 %v1558, %v1566
  %v1569 = vtanh.pop %v1568
  %1571 = vrot.lane.b32.xlu0 %v1569, 64
  %v1572 = vpop.permute.xlu0 %1571
  %v1574 = vmul.f32 %v1551, %v1572
  %1576 = vrot.lane.b32.xlu0 %v1568, 96
  %v1577 = vpop.permute.xlu0 %1576
  %1579 = vst.msk [vmem:[#allocation7] sm:$0xff] %vm75, %v1577
  %1581 = vrot.lane.b32.xlu0 %v1574, 32
  %v1582 = vpop.permute.xlu0 %1581
  %1584 = vst.msk [vmem:[#allocation6] sm:$0xff] %vm75, %v1582
  %1585 = vst.msk [vmem:[%s807] sm:$0xff] %vm75, %v1582
  %1586 = vst.msk [vmem:[#allocation5] sm:$0xff] %vm75, %v1582
  %v1587 = vld [vmem:[#allocation4] sm:$0xff]
  %v1588 = vld [vmem:[#allocation4 + $0x8] sm:$0xff]
  %v1589 = vld [vmem:[#allocation4 + $0x10] sm:$0xff]
  %v1590 = vld [vmem:[#allocation4 + $0x18] sm:$0xff]
  %v1591 = vld [vmem:[#allocation4 + $0x20] sm:$0xff]
  %v1592 = vld [vmem:[#allocation4 + $0x28] sm:$0xff]
  %v1593 = vld [vmem:[#allocation4 + $0x30] sm:$0xff]
  %v1594 = vld [vmem:[#allocation4 + $0x38] sm:$0xff]
  %v1595 = vld [vmem:[#allocation5] sm:$0xff]
  %v1596 = vld [vmem:[#allocation5 + $0x8] sm:$0xff]
  %v1597 = vld [vmem:[#allocation5 + $0x10] sm:$0xff]
  %v1598 = vld [vmem:[#allocation5 + $0x18] sm:$0xff]
  %v1599 = vld [vmem:[#allocation5 + $0x20] sm:$0xff]
  %v1600 = vld [vmem:[#allocation5 + $0x28] sm:$0xff]
  %v1601 = vld [vmem:[#allocation5 + $0x30] sm:$0xff]
  %v1602 = vld [vmem:[#allocation5 + $0x38] sm:$0xff]
  %v1603 = vsel %vm827, %v1587, %v1595
  %v1604 = vsel %vm827, %v1588, %v1596
  %v1605 = vsel %vm827, %v1589, %v1597
  %v1606 = vsel %vm827, %v1590, %v1598
  %v1607 = vsel %vm827, %v1591, %v1599
  %v1608 = vsel %vm827, %v1592, %v1600
  %v1609 = vsel %vm827, %v1593, %v1601
  %v1610 = vsel %vm827, %v1594, %v1602
  %1611 = vst.msk [vmem:[%s7] sm:$0xff] %vm75, %v1603
  %1612 = vst.msk [vmem:[%s7 + $0x8] sm:$0xff] %vm75, %v1604
  %1613 = vst.msk [vmem:[%s7 + $0x10] sm:$0xff] %vm75, %v1605
  %1614 = vst.msk [vmem:[%s7 + $0x18] sm:$0xff] %vm75, %v1606
  %1615 = vst.msk [vmem:[%s7 + $0x20] sm:$0xff] %vm75, %v1607
  %1616 = vst.msk [vmem:[%s7 + $0x28] sm:$0xff] %vm75, %v1608
  %1617 = vst.msk [vmem:[%s7 + $0x30] sm:$0xff] %vm75, %v1609
  %1618 = vst.msk [vmem:[%s7 + $0x38] sm:$0xff] %vm75, %v1610
  // Predicated region
  $region30: #{ner_forward.2} parent=0 // pred_check
    _
  $region31: #{ner_forward.2} parent=0 // pred_check_branch
    %1620 = sbr.rel (0) target = $region33
  $region32: #{ner_forward.2} parent=0 // pred_region
    _
  $region33: #{ner_forward.2} parent=0 // pred_fallthru
    _
  // Predicated region
  $region34: #{ner_forward.2} parent=0 // pred_check
    _
  $region35: #{ner_forward.2} parent=0 // pred_check_branch
    %1622 = sbr.rel (0) target = $region37
  $region36: #{ner_forward.2} parent=0 // pred_region
    _
  $region37: #{ner_forward.2} parent=0 // pred_fallthru
    _

// kernel: ner_forward.3
$region0: #{ner_forward.3}
  #allocation0 [shape = 'u32[]', space=smem, size = 0x4, offset = 0x4, fixed_abs, tag = 'smem constant byte address 0x4 - core index']
  #allocation1 [shape = 'u32[72,128]{1,0:T(1,128)}', space=vmem, size = 0x9000, scoped, tag = 'internal scratch']
  #allocation2 [shape = 'f32[8,8,8]{2,1,0:T(8,128)}', space=vmem, size = 0x8000, scoped, tag = 'scratch operand']
  #allocation3 [shape = 'f32[8,8]{1,0:T(8,128)}', space=vmem, size = 0x1000, scoped, tag = 'scratch operand']
  #allocation4 [shape = 'f32[8,8]{1,0:T(8,128)}', space=vmem, size = 0x1000, scoped, tag = 'scratch operand']
  %s0 = inlined_call_operand.vmem [shape: f32[8,8,32], index: 0, kind: input, shape index: {}]
  %s1 = inlined_call_operand.vmem [shape: bf16[32,8], index: 1, kind: input, shape index: {}]
  %s2 = inlined_call_operand.vmem [shape: f32[1,8], index: 2, kind: input, shape index: {}]
  %s3 = inlined_call_operand.vmem [shape: s32[8,1], index: 3, kind: input, shape index: {}]
  %s4 = inlined_call_operand.vmem [shape: s32[8,8,1], index: 4, kind: input, shape index: {}]
  %s5 = inlined_call_operand.vmem [shape: f32[1,8], index: 5, kind: input, shape index: {}]
  %s6 = inlined_call_operand.vmem [shape: f32[1,8], index: 6, kind: input, shape index: {}]
  %s7 = inlined_call_operand.vmem [shape: f32[8,8], index: 7, kind: input, shape index: {}]
  %s8 = inlined_call_operand.vmem [shape: f32[8,8], index: 8, kind: input, shape index: {}]
  %s9 = inlined_call_operand.vmem [shape: f32[8,8], index: 9, kind: output, shape index: {0}]
  %s10 = inlined_call_operand.vmem [shape: s32[8,8,8], index: 10, kind: output, shape index: {1}]
  %s11 = inlined_call_operand.vmem [shape: f32[8,1], index: 11, kind: output, shape index: {2}]
  %s12 = inlined_call_operand.vmem [shape: f32[8,1], index: 12, kind: output, shape index: {3}]
  %13 = xla_tuple %s9, %s10, %s11, %s12
  %s14 = sld [smem:[#allocation0]]
  $region70: #{ner_forward.3} parent=0
    _
  %s16 = ssub.s32 1, %s14
  %s17 = scalar_select 0, %s16, %s14
  // Predicated region
  $region2: #{ner_forward.3} parent=0 // pred_check
    _
  $region3: #{ner_forward.3} parent=0 // pred_check_branch
    %19 = sbr.rel (0) target = $region5
  $region4: #{ner_forward.3} parent=0 // pred_region
    _
  $region5: #{ner_forward.3} parent=0 // pred_fallthru
    _
  // Predicated region
  $region6: #{ner_forward.3} parent=0 // pred_check
    _
  $region7: #{ner_forward.3} parent=0 // pred_check_branch
    %21 = sbr.rel (0) target = $region9
  $region8: #{ner_forward.3} parent=0 // pred_region
    _
  $region9: #{ner_forward.3} parent=0 // pred_fallthru
    _
  // Predicated region
  $region10: #{ner_forward.3} parent=0 // pred_check
    _
  $region11: #{ner_forward.3} parent=0 // pred_check_branch
    %23 = sbr.rel (0) target = $region13
  $region12: #{ner_forward.3} parent=0 // pred_region
    _
  $region13: #{ner_forward.3} parent=0 // pred_fallthru
    _
  // Predicated region
  $region14: #{ner_forward.3} parent=0 // pred_check
    _
  $region15: #{ner_forward.3} parent=0 // pred_check_branch
    %25 = sbr.rel (0) target = $region17
  $region16: #{ner_forward.3} parent=0 // pred_region
    _
  $region17: #{ner_forward.3} parent=0 // pred_fallthru
    _
  // Predicated region
  $region18: #{ner_forward.3} parent=0 // pred_check
    _
  $region19: #{ner_forward.3} parent=0 // pred_check_branch
    %27 = sbr.rel (0) target = $region21
  $region20: #{ner_forward.3} parent=0 // pred_region
    _
  $region21: #{ner_forward.3} parent=0 // pred_fallthru
    _
  // Predicated region
  $region22: #{ner_forward.3} parent=0 // pred_check
    _
  $region23: #{ner_forward.3} parent=0 // pred_check_branch
    %29 = sbr.rel (0) target = $region25
  $region24: #{ner_forward.3} parent=0 // pred_region
    _
  $region25: #{ner_forward.3} parent=0 // pred_fallthru
    _
  // Predicated region
  $region26: #{ner_forward.3} parent=0 // pred_check
    _
  $region27: #{ner_forward.3} parent=0 // pred_check_branch
    %31 = sbr.rel (0) target = $region29
  $region28: #{ner_forward.3} parent=0 // pred_region
    _
  $region29: #{ner_forward.3} parent=0 // pred_fallthru
    _
  // Predicated region
  $region30: #{ner_forward.3} parent=0 // pred_check
    _
  $region31: #{ner_forward.3} parent=0 // pred_check_branch
    %33 = sbr.rel (0) target = $region33
  $region32: #{ner_forward.3} parent=0 // pred_region
    _
  $region33: #{ner_forward.3} parent=0 // pred_fallthru
    _
  // Predicated region
  $region34: #{ner_forward.3} parent=0 // pred_check
    _
  $region35: #{ner_forward.3} parent=0 // pred_check_branch
    %35 = sbr.rel (0) target = $region37
  $region36: #{ner_forward.3} parent=0 // pred_region
    _
  $region37: #{ner_forward.3} parent=0 // pred_fallthru
    _
  %v37 = vld [vmem:[%s0] sm:$0xff]
  %v38 = vld [vmem:[%s0 + $0x8] sm:$0xff]
  %v39 = vld [vmem:[%s0 + $0x10] sm:$0xff]
  %v40 = vld [vmem:[%s0 + $0x18] sm:$0xff]
  %v41 = vld [vmem:[%s0 + $0x20] sm:$0xff]
  %v42 = vld [vmem:[%s0 + $0x28] sm:$0xff]
  %v43 = vld [vmem:[%s0 + $0x30] sm:$0xff]
  %v44 = vld [vmem:[%s0 + $0x38] sm:$0xff]
  %v45 = vpack.c.bf16 %v38, %v37
  %v46 = vpack.c.bf16 %v40, %v39
  %v47 = vpack.c.bf16 %v42, %v41
  %v48 = vpack.c.bf16 %v44, %v43
  %v49 = vld [vmem:[%s1] sm:$0xf]
  %v50 = vld [vmem:[%s1 + $0x4] sm:$0xf]
  %v51 = vld [vmem:[%s1 + $0x8] sm:$0xf]
  %v52 = vld [vmem:[%s1 + $0xc] sm:$0xf]
  %v53 = vld [vmem:[%s2] sm:$0x1]
  %v55 = vperm.slane %v53, 0
  %v61 = vunpack.c.l.b16 %v49
  %v62 = vunpack.c.l.b16 %v50
  %v63 = vunpack.c.l.b16 %v51
  %v64 = vunpack.c.l.b16 %v52
  %v65 = vpack.c.b16 %v62, %v61
  %v66 = vpack.c.b16 %v64, %v63
  %vm69 = vcmask 261120
  %v71 = vsel %vm69, %v45, 0
  %v74 = vsel %vm69, %v46, 0
  %v77 = vsel %vm69, %v47, 0
  %v80 = vsel %vm69, %v48, 0
  %82 = vmatpush.bf16.msra.mxu0 0
  %83 = vmatpush.bf16.msra.mxu0 0
  %84 = vmatpush.bf16.msra.mxu0 0
  %85 = vmatpush.bf16.msra.mxu0 0
  %86 = vmatpush.bf16.msra.mxu0 0
  %87 = vmatpush.bf16.msra.mxu0 0
  %88 = vmatpush.bf16.msra.mxu0 %v66
  %89 = vmatpush.bf16.msra.mxu0 %v65
  %90 = vmatmul.bf16.gmra.mxu0 %v71
  %v91 = vpop.f32.mrf.mxu0
  %v92 = vadd.f32 %v55, %v91
  %v93 = vpop.f32.mrf.mxu0
  %v94 = vadd.f32 %v55, %v93
  %95 = vmatmul.bf16.gmra.mxu0 %v74
  %v96 = vpop.f32.mrf.mxu0
  %v97 = vadd.f32 %v55, %v96
  %v98 = vpop.f32.mrf.mxu0
  %v99 = vadd.f32 %v55, %v98
  %100 = vmatmul.bf16.gmra.mxu0 %v77
  %v101 = vpop.f32.mrf.mxu0
  %v102 = vadd.f32 %v55, %v101
  %v103 = vpop.f32.mrf.mxu0
  %v104 = vadd.f32 %v55, %v103
  %105 = vmatmul.bf16.gmra.mxu0 %v80
  %v106 = vpop.f32.mrf.mxu0
  %v107 = vadd.f32 %v55, %v106
  %v108 = vpop.f32.mrf.mxu0
  %v109 = vadd.f32 %v55, %v108
  %110 = vdwg.mxu0
  %vm111 = vcmask 64512
  %112 = vst.msk [vmem:[#allocation2] sm:$0xff] %vm111, %v92
  %113 = vst.msk [vmem:[#allocation2 + $0x8] sm:$0xff] %vm111, %v94
  %114 = vst.msk [vmem:[#allocation2 + $0x10] sm:$0xff] %vm111, %v97
  %115 = vst.msk [vmem:[#allocation2 + $0x18] sm:$0xff] %vm111, %v99
  %116 = vst.msk [vmem:[#allocation2 + $0x20] sm:$0xff] %vm111, %v102
  %117 = vst.msk [vmem:[#allocation2 + $0x28] sm:$0xff] %vm111, %v104
  %118 = vst.msk [vmem:[#allocation2 + $0x30] sm:$0xff] %vm111, %v107
  %119 = vst.msk [vmem:[#allocation2 + $0x38] sm:$0xff] %vm111, %v109
  %v120 = vld [vmem:[%s8] sm:$0xff]
  %v121 = vld [vmem:[%s7] sm:$0xff]
  %v122 = vld [vmem:[%s6] sm:$0x1]
  %v123 = vld [vmem:[%s5] sm:$0x1]
  %v124 = vld [vmem:[%s3] sm:$0xff]
  %v125 = vlaneseq
  %v126 = vand.u32 %v125, 127
  %v127 = vld [vmem:[#allocation2] sm:$0xff]
  %v129 = vperm.slane %v123, 0
  %v131 = vadd.f32 %v129, %v127
  %132 = vst.msk [vmem:[#allocation3] sm:$0xff] %vm111, %v131
  %133 = vst.msk [vmem:[#allocation4] sm:$0xff] %vm111, %v131
  %134 = vst.msk [vmem:[%s10] sm:$0xff] %vm111, 0
  %v135 = vld [vmem:[%s4] sm:$0xff]
  %136 = vset.pattern.permute.xlu0 0
  %137 = vperm.xlu0 %136, %v135
  %v138 = vpop.permute.xlu0 %137
  %vm139 = vcmp.eq.s32.totalorder %v126, %v138
  %v140 = vsel %vm139, 1, 0
  %v141 = vcvt.s32.f32 %v140
  %v142 = vmul.f32 %v131, %v141
  %v143 = vsel %vm111, %v142, 0.0
  %144 = vadd.xlane.f32.xlu0 %v143
  %v145 = vpop.xlane.xlu0 %144
  %s146 = scalar_lea.vmem [#allocation2], 8
  %v147 = vld [vmem:[%s146] sm:$0xff]
  %vm148 = vcmp.gt.s32.totalorder %v124, 1
  %v149 = vld [vmem:[#allocation3] sm:$0xff]
  %v151 = vrot.slane %v149, 1
  %v152 = vrot.slane %v149, 2
  %v153 = vrot.slane %v149, 3
  %v154 = vrot.slane %v149, 4
  %v155 = vrot.slane %v149, 5
  %v156 = vrot.slane %v149, 6
  %v157 = vrot.slane %v149, 7
  %v158 = vperm.slane %v149, 0
  %v159 = vperm.slane %v151, 0
  %v160 = vperm.slane %v152, 0
  %v161 = vperm.slane %v153, 0
  %v162 = vperm.slane %v154, 0
  %v163 = vperm.slane %v155, 0
  %v164 = vperm.slane %v156, 0
  %v165 = vperm.slane %v157, 0
  %v174 = vadd.f32 %v158, %v120
  %v175 = vadd.f32 %v159, %v120
  %v176 = vadd.f32 %v160, %v120
  %v177 = vadd.f32 %v161, %v120
  %v178 = vadd.f32 %v162, %v120
  %v179 = vadd.f32 %v163, %v120
  %v180 = vadd.f32 %v164, %v120
  %v181 = vadd.f32 %v165, %v120
  %v182 = vsel %vm111, %v174, -inf
  %183 = vmax.xlane.f32.xlu0 %v182
  %v184 = vpop.xlane.xlu0 %183
  %v185 = vsel %vm111, %v175, -inf
  %186 = vmax.xlane.f32.xlu0 %v185
  %v187 = vpop.xlane.xlu0 %186
  %v188 = vsel %vm111, %v176, -inf
  %189 = vmax.xlane.f32.xlu0 %v188
  %v190 = vpop.xlane.xlu0 %189
  %v191 = vsel %vm111, %v177, -inf
  %192 = vmax.xlane.f32.xlu0 %v191
  %v193 = vpop.xlane.xlu0 %192
  %v194 = vsel %vm111, %v178, -inf
  %195 = vmax.xlane.f32.xlu0 %v194
  %v196 = vpop.xlane.xlu0 %195
  %v197 = vsel %vm111, %v179, -inf
  %198 = vmax.xlane.f32.xlu0 %v197
  %v199 = vpop.xlane.xlu0 %198
  %v200 = vsel %vm111, %v180, -inf
  %201 = vmax.xlane.f32.xlu0 %v200
  %v202 = vpop.xlane.xlu0 %201
  %v203 = vsel %vm111, %v181, -inf
  %204 = vmax.xlane.f32.xlu0 %v203
  %v205 = vpop.xlane.xlu0 %204
  %vm206 = vcmp.ge.f32.partialorder %v174, %v184
  %vm207 = vcmp.ge.f32.partialorder %v175, %v187
  %vm208 = vcmp.ge.f32.partialorder %v176, %v190
  %vm209 = vcmp.ge.f32.partialorder %v177, %v193
  %vm210 = vcmp.ge.f32.partialorder %v178, %v196
  %vm211 = vcmp.ge.f32.partialorder %v179, %v199
  %vm212 = vcmp.ge.f32.partialorder %v180, %v202
  %vm213 = vcmp.ge.f32.partialorder %v181, %v205
  %v214 = vsel %vm206, %v126, 8
  %v215 = vsel %vm207, %v126, 8
  %v216 = vsel %vm208, %v126, 8
  %v217 = vsel %vm209, %v126, 8
  %v218 = vsel %vm210, %v126, 8
  %v219 = vsel %vm211, %v126, 8
  %v220 = vsel %vm212, %v126, 8
  %v221 = vsel %vm213, %v126, 8
  %v222 = vsel %vm111, %v214, 2147483647
  %v223 = vand.u32 %v222, 65535
  %v224 = vshra.s32 %v222, 16
  %v225 = vcvt.s32.f32 %v223
  %v226 = vcvt.s32.f32 %v224
  %227 = vmin.xlane.f32.xlu0 %v226
  %v228 = vpop.xlane.xlu0 %227
  %vm229 = vcmp.eq.f32.partialorder %v226, %v228
  %v230 = vsel %vm229, %v225, inf
  %231 = vmin.xlane.f32.xlu0 %v230
  %v232 = vpop.xlane.xlu0 %231
  %v233 = vcvt.f32.s32 %v232
  %v234 = vcvt.f32.s32 %v228
  %v235 = vshll.u32 %v234, 16
  %v236 = vadd.s32 %v235, %v233
  %v237 = vsel %vm111, %v215, 2147483647
  %v238 = vand.u32 %v237, 65535
  %v239 = vshra.s32 %v237, 16
  %v240 = vcvt.s32.f32 %v238
  %v241 = vcvt.s32.f32 %v239
  %242 = vmin.xlane.f32.xlu0 %v241
  %v243 = vpop.xlane.xlu0 %242
  %vm244 = vcmp.eq.f32.partialorder %v241, %v243
  %v245 = vsel %vm244, %v240, inf
  %246 = vmin.xlane.f32.xlu0 %v245
  %v247 = vpop.xlane.xlu0 %246
  %v248 = vcvt.f32.s32 %v247
  %v249 = vcvt.f32.s32 %v243
  %v250 = vshll.u32 %v249, 16
  %v251 = vadd.s32 %v250, %v248
  %v252 = vsel %vm111, %v216, 2147483647
  %v253 = vand.u32 %v252, 65535
  %v254 = vshra.s32 %v252, 16
  %v255 = vcvt.s32.f32 %v253
  %v256 = vcvt.s32.f32 %v254
  %257 = vmin.xlane.f32.xlu0 %v256
  %v258 = vpop.xlane.xlu0 %257
  %vm259 = vcmp.eq.f32.partialorder %v256, %v258
  %v260 = vsel %vm259, %v255, inf
  %261 = vmin.xlane.f32.xlu0 %v260
  %v262 = vpop.xlane.xlu0 %261
  %v263 = vcvt.f32.s32 %v262
  %v264 = vcvt.f32.s32 %v258
  %v265 = vshll.u32 %v264, 16
  %v266 = vadd.s32 %v265, %v263
  %v267 = vsel %vm111, %v217, 2147483647
  %v268 = vand.u32 %v267, 65535
  %v269 = vshra.s32 %v267, 16
  %v270 = vcvt.s32.f32 %v268
  %v271 = vcvt.s32.f32 %v269
  %272 = vmin.xlane.f32.xlu0 %v271
  %v273 = vpop.xlane.xlu0 %272
  %vm274 = vcmp.eq.f32.partialorder %v271, %v273
  %v275 = vsel %vm274, %v270, inf
  %276 = vmin.xlane.f32.xlu0 %v275
  %v277 = vpop.xlane.xlu0 %276
  %v278 = vcvt.f32.s32 %v277
  %v279 = vcvt.f32.s32 %v273
  %v280 = vshll.u32 %v279, 16
  %v281 = vadd.s32 %v280, %v278
  %v282 = vsel %vm111, %v218, 2147483647
  %v283 = vand.u32 %v282, 65535
  %v284 = vshra.s32 %v282, 16
  %v285 = vcvt.s32.f32 %v283
  %v286 = vcvt.s32.f32 %v284
  %287 = vmin.xlane.f32.xlu0 %v286
  %v288 = vpop.xlane.xlu0 %287
  %vm289 = vcmp.eq.f32.partialorder %v286, %v288
  %v290 = vsel %vm289, %v285, inf
  %291 = vmin.xlane.f32.xlu0 %v290
  %v292 = vpop.xlane.xlu0 %291
  %v293 = vcvt.f32.s32 %v292
  %v294 = vcvt.f32.s32 %v288
  %v295 = vshll.u32 %v294, 16
  %v296 = vadd.s32 %v295, %v293
  %v297 = vsel %vm111, %v219, 2147483647
  %v298 = vand.u32 %v297, 65535
  %v299 = vshra.s32 %v297, 16
  %v300 = vcvt.s32.f32 %v298
  %v301 = vcvt.s32.f32 %v299
  %302 = vmin.xlane.f32.xlu0 %v301
  %v303 = vpop.xlane.xlu0 %302
  %vm304 = vcmp.eq.f32.partialorder %v301, %v303
  %v305 = vsel %vm304, %v300, inf
  %306 = vmin.xlane.f32.xlu0 %v305
  %v307 = vpop.xlane.xlu0 %306
  %v308 = vcvt.f32.s32 %v307
  %v309 = vcvt.f32.s32 %v303
  %v310 = vshll.u32 %v309, 16
  %v311 = vadd.s32 %v310, %v308
  %v312 = vsel %vm111, %v220, 2147483647
  %v313 = vand.u32 %v312, 65535
  %v314 = vshra.s32 %v312, 16
  %v315 = vcvt.s32.f32 %v313
  %v316 = vcvt.s32.f32 %v314
  %317 = vmin.xlane.f32.xlu0 %v316
  %v318 = vpop.xlane.xlu0 %317
  %vm319 = vcmp.eq.f32.partialorder %v316, %v318
  %v320 = vsel %vm319, %v315, inf
  %321 = vmin.xlane.f32.xlu0 %v320
  %v322 = vpop.xlane.xlu0 %321
  %v323 = vcvt.f32.s32 %v322
  %v324 = vcvt.f32.s32 %v318
  %v325 = vshll.u32 %v324, 16
  %v326 = vadd.s32 %v325, %v323
  %v327 = vsel %vm111, %v221, 2147483647
  %v328 = vand.u32 %v327, 65535
  %v329 = vshra.s32 %v327, 16
  %v330 = vcvt.s32.f32 %v328
  %v331 = vcvt.s32.f32 %v329
  %332 = vmin.xlane.f32.xlu0 %v331
  %v333 = vpop.xlane.xlu0 %332
  %vm334 = vcmp.eq.f32.partialorder %v331, %v333
  %v335 = vsel %vm334, %v330, inf
  %336 = vmin.xlane.f32.xlu0 %v335
  %v337 = vpop.xlane.xlu0 %336
  %v338 = vcvt.f32.s32 %v337
  %v339 = vcvt.f32.s32 %v333
  %v340 = vshll.u32 %v339, 16
  %v341 = vadd.s32 %v340, %v338
  %v343 = vperm.slane %v147, 0
  %v344 = vlaneseq
  %v345 = vshrl.u32 %v344, 7
  %347 = vset.pattern.permute.xlu0 %v345
  %348 = vperm.xlu0 %347, %v343
  %v349 = vpop.permute.xlu0 %348
  %v350 = vperm.slane %v147, 1
  %v351 = vlaneseq
  %v352 = vshrl.u32 %v351, 7
  %354 = vset.pattern.permute.xlu0 %v352
  %355 = vperm.xlu0 %354, %v350
  %v356 = vpop.permute.xlu0 %355
  %v357 = vperm.slane %v147, 2
  %v358 = vlaneseq
  %v359 = vshrl.u32 %v358, 7
  %361 = vset.pattern.permute.xlu0 %v359
  %362 = vperm.xlu0 %361, %v357
  %v363 = vpop.permute.xlu0 %362
  %v364 = vperm.slane %v147, 3
  %v365 = vlaneseq
  %v366 = vshrl.u32 %v365, 7
  %368 = vset.pattern.permute.xlu0 %v366
  %369 = vperm.xlu0 %368, %v364
  %v370 = vpop.permute.xlu0 %369
  %v371 = vperm.slane %v147, 4
  %v372 = vlaneseq
  %v373 = vshrl.u32 %v372, 7
  %375 = vset.pattern.permute.xlu0 %v373
  %376 = vperm.xlu0 %375, %v371
  %v377 = vpop.permute.xlu0 %376
  %v378 = vperm.slane %v147, 5
  %v379 = vlaneseq
  %v380 = vshrl.u32 %v379, 7
  %382 = vset.pattern.permute.xlu0 %v380
  %383 = vperm.xlu0 %382, %v378
  %v384 = vpop.permute.xlu0 %383
  %v385 = vperm.slane %v147, 6
  %v386 = vlaneseq
  %v387 = vshrl.u32 %v386, 7
  %389 = vset.pattern.permute.xlu0 %v387
  %390 = vperm.xlu0 %389, %v385
  %v391 = vpop.permute.xlu0 %390
  %v392 = vperm.slane %v147, 7
  %v393 = vlaneseq
  %v394 = vshrl.u32 %v393, 7
  %396 = vset.pattern.permute.xlu0 %v394
  %397 = vperm.xlu0 %396, %v392
  %v398 = vpop.permute.xlu0 %397
  %v407 = vadd.f32 %v184, %v349
  %v408 = vadd.f32 %v187, %v356
  %v409 = vadd.f32 %v190, %v363
  %v410 = vadd.f32 %v193, %v370
  %v411 = vadd.f32 %v196, %v377
  %v412 = vadd.f32 %v199, %v384
  %v413 = vadd.f32 %v202, %v391
  %v414 = vadd.f32 %v205, %v398
  %v415 = vsel %vm148, 1, 0
  %416 = vset.pattern.permute.xlu0 0
  %417 = vperm.xlu0 %416, %v415
  %v418 = vpop.permute.xlu0 %417
  %vm419 = vcmp.eq.s32.totalorder %v418, 1
  %428 = vset.pattern.permute.xlu0 0
  %429 = vperm.xlu0 %428, %v407
  %v430 = vpop.permute.xlu0 %429
  %431 = vset.pattern.permute.xlu0 0
  %432 = vperm.xlu0 %431, %v408
  %v433 = vpop.permute.xlu0 %432
  %434 = vset.pattern.permute.xlu0 0
  %435 = vperm.xlu0 %434, %v409
  %v436 = vpop.permute.xlu0 %435
  %437 = vset.pattern.permute.xlu0 0
  %438 = vperm.xlu0 %437, %v410
  %v439 = vpop.permute.xlu0 %438
  %440 = vset.pattern.permute.xlu0 0
  %441 = vperm.xlu0 %440, %v411
  %v442 = vpop.permute.xlu0 %441
  %443 = vset.pattern.permute.xlu0 0
  %444 = vperm.xlu0 %443, %v412
  %v445 = vpop.permute.xlu0 %444
  %446 = vset.pattern.permute.xlu0 0
  %447 = vperm.xlu0 %446, %v413
  %v448 = vpop.permute.xlu0 %447
  %449 = vset.pattern.permute.xlu0 0
  %450 = vperm.xlu0 %449, %v414
  %v451 = vpop.permute.xlu0 %450
  %v452 = vperm.slane %v430, %v126
  %v453 = vperm.slane %v433, %v126
  %v454 = vperm.slane %v436, %v126
  %v455 = vperm.slane %v439, %v126
  %v456 = vperm.slane %v442, %v126
  %v457 = vperm.slane %v445, %v126
  %v458 = vperm.slane %v448, %v126
  %v459 = vperm.slane %v451, %v126
  %vm460 = vcmask 1041409
  %v461 = vsel %vm460, %v453, %v452
  %vm462 = vcmask 1042434
  %v463 = vsel %vm462, %v454, %v461
  %vm464 = vcmask 1043459
  %v465 = vsel %vm464, %v455, %v463
  %vm466 = vcmask 1044484
  %v467 = vsel %vm466, %v456, %v465
  %vm468 = vcmask 1045509
  %v469 = vsel %vm468, %v457, %v467
  %vm470 = vcmask 1046534
  %v471 = vsel %vm470, %v458, %v469
  %vm472 = vcmask 1047559
  %v473 = vsel %vm472, %v459, %v471
  %v475 = vsel %vm419, %v473, %v149
  %476 = vst.msk [vmem:[#allocation3] sm:$0xff] %vm111, %v475
  %v477 = vperm.slane %v236, %v126
  %v478 = vperm.slane %v251, %v126
  %v479 = vperm.slane %v266, %v126
  %v480 = vperm.slane %v281, %v126
  %v481 = vperm.slane %v296, %v126
  %v482 = vperm.slane %v311, %v126
  %v483 = vperm.slane %v326, %v126
  %v484 = vperm.slane %v341, %v126
  %v485 = vsel %vm460, %v478, %v477
  %v486 = vsel %vm462, %v479, %v485
  %v487 = vsel %vm464, %v480, %v486
  %v488 = vsel %vm466, %v481, %v487
  %v489 = vsel %vm468, %v482, %v488
  %v490 = vsel %vm470, %v483, %v489
  %v491 = vsel %vm472, %v484, %v490
  %s492 = scalar_lea.vmem %s10, 8
  %493 = vst.msk [vmem:[%s492] sm:$0xff] %vm111, %v491
  %v494 = vld [vmem:[#allocation4] sm:$0xff]
  %v496 = vrot.slane %v494, 1
  %v497 = vrot.slane %v494, 2
  %v498 = vrot.slane %v494, 3
  %v499 = vrot.slane %v494, 4
  %v500 = vrot.slane %v494, 5
  %v501 = vrot.slane %v494, 6
  %v502 = vrot.slane %v494, 7
  %v503 = vperm.slane %v494, 0
  %v504 = vperm.slane %v496, 0
  %v505 = vperm.slane %v497, 0
  %v506 = vperm.slane %v498, 0
  %v507 = vperm.slane %v499, 0
  %v508 = vperm.slane %v500, 0
  %v509 = vperm.slane %v501, 0
  %v510 = vperm.slane %v502, 0
  %v519 = vadd.f32 %v503, %v120
  %v520 = vadd.f32 %v504, %v120
  %v521 = vadd.f32 %v505, %v120
  %v522 = vadd.f32 %v506, %v120
  %v523 = vadd.f32 %v507, %v120
  %v524 = vadd.f32 %v508, %v120
  %v525 = vadd.f32 %v509, %v120
  %v526 = vadd.f32 %v510, %v120
  %v527 = vperm.slane %v147, 0
  %v528 = vlaneseq
  %v529 = vshrl.u32 %v528, 7
  %531 = vset.pattern.permute.xlu0 %v529
  %532 = vperm.xlu0 %531, %v527
  %v533 = vpop.permute.xlu0 %532
  %v534 = vperm.slane %v147, 1
  %v535 = vlaneseq
  %v536 = vshrl.u32 %v535, 7
  %538 = vset.pattern.permute.xlu0 %v536
  %539 = vperm.xlu0 %538, %v534
  %v540 = vpop.permute.xlu0 %539
  %v541 = vperm.slane %v147, 2
  %v542 = vlaneseq
  %v543 = vshrl.u32 %v542, 7
  %545 = vset.pattern.permute.xlu0 %v543
  %546 = vperm.xlu0 %545, %v541
  %v547 = vpop.permute.xlu0 %546
  %v548 = vperm.slane %v147, 3
  %v549 = vlaneseq
  %v550 = vshrl.u32 %v549, 7
  %552 = vset.pattern.permute.xlu0 %v550
  %553 = vperm.xlu0 %552, %v548
  %v554 = vpop.permute.xlu0 %553
  %v555 = vperm.slane %v147, 4
  %v556 = vlaneseq
  %v557 = vshrl.u32 %v556, 7
  %559 = vset.pattern.permute.xlu0 %v557
  %560 = vperm.xlu0 %559, %v555
  %v561 = vpop.permute.xlu0 %560
  %v562 = vperm.slane %v147, 5
  %v563 = vlaneseq
  %v564 = vshrl.u32 %v563, 7
  %566 = vset.pattern.permute.xlu0 %v564
  %567 = vperm.xlu0 %566, %v562
  %v568 = vpop.permute.xlu0 %567
  %v569 = vperm.slane %v147, 6
  %v570 = vlaneseq
  %v571 = vshrl.u32 %v570, 7
  %573 = vset.pattern.permute.xlu0 %v571
  %574 = vperm.xlu0 %573, %v569
  %v575 = vpop.permute.xlu0 %574
  %v576 = vperm.slane %v147, 7
  %v577 = vlaneseq
  %v578 = vshrl.u32 %v577, 7
  %580 = vset.pattern.permute.xlu0 %v578
  %581 = vperm.xlu0 %580, %v576
  %v582 = vpop.permute.xlu0 %581
  %v583 = vadd.f32 %v519, %v533
  %v584 = vadd.f32 %v520, %v540
  %v585 = vadd.f32 %v521, %v547
  %v586 = vadd.f32 %v522, %v554
  %v587 = vadd.f32 %v523, %v561
  %v588 = vadd.f32 %v524, %v568
  %v589 = vadd.f32 %v525, %v575
  %v590 = vadd.f32 %v526, %v582
  %v591 = vsel %vm111, %v583, -inf
  %592 = vmax.xlane.f32.xlu0 %v591
  %v593 = vpop.xlane.xlu0 %592
  %v594 = vsel %vm111, %v584, -inf
  %595 = vmax.xlane.f32.xlu0 %v594
  %v596 = vpop.xlane.xlu0 %595
  %v597 = vsel %vm111, %v585, -inf
  %598 = vmax.xlane.f32.xlu0 %v597
  %v599 = vpop.xlane.xlu0 %598
  %v600 = vsel %vm111, %v586, -inf
  %601 = vmax.xlane.f32.xlu0 %v600
  %v602 = vpop.xlane.xlu0 %601
  %v603 = vsel %vm111, %v587, -inf
  %604 = vmax.xlane.f32.xlu0 %v603
  %v605 = vpop.xlane.xlu0 %604
  %v606 = vsel %vm111, %v588, -inf
  %607 = vmax.xlane.f32.xlu0 %v606
  %v608 = vpop.xlane.xlu0 %607
  %v609 = vsel %vm111, %v589, -inf
  %610 = vmax.xlane.f32.xlu0 %v609
  %v611 = vpop.xlane.xlu0 %610
  %v612 = vsel %vm111, %v590, -inf
  %613 = vmax.xlane.f32.xlu0 %v612
  %v614 = vpop.xlane.xlu0 %613
  %v615 = vsub.f32 %v583, %v593
  %v616 = vsub.f32 %v584, %v596
  %v617 = vsub.f32 %v585, %v599
  %v618 = vsub.f32 %v586, %v602
  %v619 = vsub.f32 %v587, %v605
  %v620 = vsub.f32 %v588, %v608
  %v621 = vsub.f32 %v589, %v611
  %v622 = vsub.f32 %v590, %v614
  %v623 = vmul.f32 %v615, 1.442695
  %v624 = vpow.pop %v623
  %v625 = vmul.f32 %v616, 1.442695
  %v626 = vpow.pop %v625
  %v627 = vmul.f32 %v617, 1.442695
  %v628 = vpow.pop %v627
  %v629 = vmul.f32 %v618, 1.442695
  %v630 = vpow.pop %v629
  %v631 = vmul.f32 %v619, 1.442695
  %v632 = vpow.pop %v631
  %v633 = vmul.f32 %v620, 1.442695
  %v634 = vpow.pop %v633
  %v635 = vmul.f32 %v621, 1.442695
  %v636 = vpow.pop %v635
  %v637 = vmul.f32 %v622, 1.442695
  %v638 = vpow.pop %v637
  %v639 = vsel %vm111, %v624, 0.0
  %640 = vadd.xlane.f32.xlu0 %v639
  %v641 = vpop.xlane.xlu0 %640
  %v642 = vsel %vm111, %v626, 0.0
  %643 = vadd.xlane.f32.xlu0 %v642
  %v644 = vpop.xlane.xlu0 %643
  %v645 = vsel %vm111, %v628, 0.0
  %646 = vadd.xlane.f32.xlu0 %v645
  %v647 = vpop.xlane.xlu0 %646
  %v648 = vsel %vm111, %v630, 0.0
  %649 = vadd.xlane.f32.xlu0 %v648
  %v650 = vpop.xlane.xlu0 %649
  %v651 = vsel %vm111, %v632, 0.0
  %652 = vadd.xlane.f32.xlu0 %v651
  %v653 = vpop.xlane.xlu0 %652
  %v654 = vsel %vm111, %v634, 0.0
  %655 = vadd.xlane.f32.xlu0 %v654
  %v656 = vpop.xlane.xlu0 %655
  %v657 = vsel %vm111, %v636, 0.0
  %658 = vadd.xlane.f32.xlu0 %v657
  %v659 = vpop.xlane.xlu0 %658
  %v660 = vsel %vm111, %v638, 0.0
  %661 = vadd.xlane.f32.xlu0 %v660
  %v662 = vpop.xlane.xlu0 %661
  %v663 = vlog2.pop %v641
  %v664 = vmul.f32 %v663, 0.6931472
  %v665 = vlog2.pop %v644
  %v666 = vmul.f32 %v665, 0.6931472
  %v667 = vlog2.pop %v647
  %v668 = vmul.f32 %v667, 0.6931472
  %v669 = vlog2.pop %v650
  %v670 = vmul.f32 %v669, 0.6931472
  %v671 = vlog2.pop %v653
  %v672 = vmul.f32 %v671, 0.6931472
  %v673 = vlog2.pop %v656
  %v674 = vmul.f32 %v673, 0.6931472
  %v675 = vlog2.pop %v659
  %v676 = vmul.f32 %v675, 0.6931472
  %v677 = vlog2.pop %v662
  %v678 = vmul.f32 %v677, 0.6931472
  %v679 = vadd.f32 %v593, %v664
  %v680 = vadd.f32 %v596, %v666
  %v681 = vadd.f32 %v599, %v668
  %v682 = vadd.f32 %v602, %v670
  %v683 = vadd.f32 %v605, %v672
  %v684 = vadd.f32 %v608, %v674
  %v685 = vadd.f32 %v611, %v676
  %v686 = vadd.f32 %v614, %v678
  %v695 = vperm.slane %v679, %v126
  %v696 = vperm.slane %v680, %v126
  %v697 = vperm.slane %v681, %v126
  %v698 = vperm.slane %v682, %v126
  %v699 = vperm.slane %v683, %v126
  %v700 = vperm.slane %v684, %v126
  %v701 = vperm.slane %v685, %v126
  %v702 = vperm.slane %v686, %v126
  %v703 = vsel %vm460, %v696, %v695
  %v704 = vsel %vm462, %v697, %v703
  %v705 = vsel %vm464, %v698, %v704
  %v706 = vsel %vm466, %v699, %v705
  %v707 = vsel %vm468, %v700, %v706
  %v708 = vsel %vm470, %v701, %v707
  %v709 = vsel %vm472, %v702, %v708
  %v711 = vsel %vm419, %v709, %v494
  %712 = vst.msk [vmem:[#allocation4] sm:$0xff] %vm111, %v711
  %s713 = scalar_lea.vmem %s4, 8
  %v714 = vld [vmem:[%s713] sm:$0xff]
  %715 = vset.pattern.permute.xlu0 0
  %716 = vperm.xlu0 %715, %v714
  %v717 = vpop.permute.xlu0 %716
  %vm718 = vcmp.eq.s32.totalorder %v126, %v717
  %v719 = vsel %vm718, 1, 0
  %v720 = vcvt.s32.f32 %v719
  %v722 = vrot.slane %v720, 1
  %v723 = vrot.slane %v720, 2
  %v724 = vrot.slane %v720, 3
  %v725 = vrot.slane %v720, 4
  %v726 = vrot.slane %v720, 5
  %v727 = vrot.slane %v720, 6
  %v728 = vrot.slane %v720, 7
  %v729 = vperm.slane %v720, 0
  %v730 = vperm.slane %v722, 0
  %v731 = vperm.slane %v723, 0
  %v732 = vperm.slane %v724, 0
  %v733 = vperm.slane %v725, 0
  %v734 = vperm.slane %v726, 0
  %v735 = vperm.slane %v727, 0
  %v736 = vperm.slane %v728, 0
  %v745 = vmul.f32 %v121, %v729
  %v746 = vmul.f32 %v121, %v730
  %v747 = vmul.f32 %v121, %v731
  %v748 = vmul.f32 %v121, %v732
  %v749 = vmul.f32 %v121, %v733
  %v750 = vmul.f32 %v121, %v734
  %v751 = vmul.f32 %v121, %v735
  %v752 = vmul.f32 %v121, %v736
  %v753 = vsel %vm111, %v745, 0.0
  %754 = vadd.xlane.f32.xlu0 %v753
  %v755 = vpop.xlane.xlu0 %754
  %v756 = vsel %vm111, %v746, 0.0
  %757 = vadd.xlane.f32.xlu0 %v756
  %v758 = vpop.xlane.xlu0 %757
  %v759 = vsel %vm111, %v747, 0.0
  %760 = vadd.xlane.f32.xlu0 %v759
  %v761 = vpop.xlane.xlu0 %760
  %v762 = vsel %vm111, %v748, 0.0
  %763 = vadd.xlane.f32.xlu0 %v762
  %v764 = vpop.xlane.xlu0 %763
  %v765 = vsel %vm111, %v749, 0.0
  %766 = vadd.xlane.f32.xlu0 %v765
  %v767 = vpop.xlane.xlu0 %766
  %v768 = vsel %vm111, %v750, 0.0
  %769 = vadd.xlane.f32.xlu0 %v768
  %v770 = vpop.xlane.xlu0 %769
  %v771 = vsel %vm111, %v751, 0.0
  %772 = vadd.xlane.f32.xlu0 %v771
  %v773 = vpop.xlane.xlu0 %772
  %v774 = vsel %vm111, %v752, 0.0
  %775 = vadd.xlane.f32.xlu0 %v774
  %v776 = vpop.xlane.xlu0 %775
  %v778 = vperm.slane %v141, 0
  %v779 = vlaneseq
  %v780 = vshrl.u32 %v779, 7
  %782 = vset.pattern.permute.xlu0 %v780
  %783 = vperm.xlu0 %782, %v778
  %v784 = vpop.permute.xlu0 %783
  %v785 = vperm.slane %v141, 1
  %v786 = vlaneseq
  %v787 = vshrl.u32 %v786, 7
  %789 = vset.pattern.permute.xlu0 %v787
  %790 = vperm.xlu0 %789, %v785
  %v791 = vpop.permute.xlu0 %790
  %v792 = vperm.slane %v141, 2
  %v793 = vlaneseq
  %v794 = vshrl.u32 %v793, 7
  %796 = vset.pattern.permute.xlu0 %v794
  %797 = vperm.xlu0 %796, %v792
  %v798 = vpop.permute.xlu0 %797
  %v799 = vperm.slane %v141, 3
  %v800 = vlaneseq
  %v801 = vshrl.u32 %v800, 7
  %803 = vset.pattern.permute.xlu0 %v801
  %804 = vperm.xlu0 %803, %v799
  %v805 = vpop.permute.xlu0 %804
  %v806 = vperm.slane %v141, 4
  %v807 = vlaneseq
  %v808 = vshrl.u32 %v807, 7
  %810 = vset.pattern.permute.xlu0 %v808
  %811 = vperm.xlu0 %810, %v806
  %v812 = vpop.permute.xlu0 %811
  %v813 = vperm.slane %v141, 5
  %v814 = vlaneseq
  %v815 = vshrl.u32 %v814, 7
  %817 = vset.pattern.permute.xlu0 %v815
  %818 = vperm.xlu0 %817, %v813
  %v819 = vpop.permute.xlu0 %818
  %v820 = vperm.slane %v141, 6
  %v821 = vlaneseq
  %v822 = vshrl.u32 %v821, 7
  %824 = vset.pattern.permute.xlu0 %v822
  %825 = vperm.xlu0 %824, %v820
  %v826 = vpop.permute.xlu0 %825
  %v827 = vperm.slane %v141, 7
  %v828 = vlaneseq
  %v829 = vshrl.u32 %v828, 7
  %831 = vset.pattern.permute.xlu0 %v829
  %832 = vperm.xlu0 %831, %v827
  %v833 = vpop.permute.xlu0 %832
  %v842 = vmul.f32 %v755, %v784
  %v843 = vmul.f32 %v758, %v791
  %v844 = vmul.f32 %v761, %v798
  %v845 = vmul.f32 %v764, %v805
  %v846 = vmul.f32 %v767, %v812
  %v847 = vmul.f32 %v770, %v819
  %v848 = vmul.f32 %v773, %v826
  %v849 = vmul.f32 %v776, %v833
  %858 = vset.pattern.permute.xlu0 0
  %859 = vperm.xlu0 %858, %v842
  %v860 = vpop.permute.xlu0 %859
  %861 = vset.pattern.permute.xlu0 0
  %862 = vperm.xlu0 %861, %v843
  %v863 = vpop.permute.xlu0 %862
  %864 = vset.pattern.permute.xlu0 0
  %865 = vperm.xlu0 %864, %v844
  %v866 = vpop.permute.xlu0 %865
  %867 = vset.pattern.permute.xlu0 0
  %868 = vperm.xlu0 %867, %v845
  %v869 = vpop.permute.xlu0 %868
  %870 = vset.pattern.permute.xlu0 0
  %871 = vperm.xlu0 %870, %v846
  %v872 = vpop.permute.xlu0 %871
  %873 = vset.pattern.permute.xlu0 0
  %874 = vperm.xlu0 %873, %v847
  %v875 = vpop.permute.xlu0 %874
  %876 = vset.pattern.permute.xlu0 0
  %877 = vperm.xlu0 %876, %v848
  %v878 = vpop.permute.xlu0 %877
  %879 = vset.pattern.permute.xlu0 0
  %880 = vperm.xlu0 %879, %v849
  %v881 = vpop.permute.xlu0 %880
  %v882 = vperm.slane %v860, %v126
  %v883 = vperm.slane %v863, %v126
  %v884 = vperm.slane %v866, %v126
  %v885 = vperm.slane %v869, %v126
  %v886 = vperm.slane %v872, %v126
  %v887 = vperm.slane %v875, %v126
  %v888 = vperm.slane %v878, %v126
  %v889 = vperm.slane %v881, %v126
  %v890 = vsel %vm460, %v883, %v882
  %v891 = vsel %vm462, %v884, %v890
  %v892 = vsel %vm464, %v885, %v891
  %v893 = vsel %vm466, %v886, %v892
  %v894 = vsel %vm468, %v887, %v893
  %v895 = vsel %vm470, %v888, %v894
  %v896 = vsel %vm472, %v889, %v895
  %v898 = vsel %vm111, %v896, 0.0
  %899 = vadd.xlane.f32.xlu0 %v898
  %v900 = vpop.xlane.xlu0 %899
  %v901 = vmul.f32 %v147, %v720
  %v902 = vsel %vm111, %v901, 0.0
  %903 = vadd.xlane.f32.xlu0 %v902
  %v904 = vpop.xlane.xlu0 %903
  %v905 = vadd.f32 %v900, %v904
  %v906 = vcvt.s32.f32 %v415
  %v907 = vmul.f32 %v905, %v906
  %v908 = vadd.f32 %v145, %v907
  %v909 = vsel %vm419, %v720, %v141
  %s910 = scalar_lea.vmem [#allocation2], 16
  %v911 = vld [vmem:[%s910] sm:$0xff]
  %vm912 = vcmp.gt.s32.totalorder %v124, 2
  %v913 = vld [vmem:[#allocation3] sm:$0xff]
  %v915 = vrot.slane %v913, 1
  %v916 = vrot.slane %v913, 2
  %v917 = vrot.slane %v913, 3
  %v918 = vrot.slane %v913, 4
  %v919 = vrot.slane %v913, 5
  %v920 = vrot.slane %v913, 6
  %v921 = vrot.slane %v913, 7
  %v922 = vperm.slane %v913, 0
  %v923 = vperm.slane %v915, 0
  %v924 = vperm.slane %v916, 0
  %v925 = vperm.slane %v917, 0
  %v926 = vperm.slane %v918, 0
  %v927 = vperm.slane %v919, 0
  %v928 = vperm.slane %v920, 0
  %v929 = vperm.slane %v921, 0
  %v938 = vadd.f32 %v922, %v120
  %v939 = vadd.f32 %v923, %v120
  %v940 = vadd.f32 %v924, %v120
  %v941 = vadd.f32 %v925, %v120
  %v942 = vadd.f32 %v926, %v120
  %v943 = vadd.f32 %v927, %v120
  %v944 = vadd.f32 %v928, %v120
  %v945 = vadd.f32 %v929, %v120
  %v946 = vsel %vm111, %v938, -inf
  %947 = vmax.xlane.f32.xlu0 %v946
  %v948 = vpop.xlane.xlu0 %947
  %v949 = vsel %vm111, %v939, -inf
  %950 = vmax.xlane.f32.xlu0 %v949
  %v951 = vpop.xlane.xlu0 %950
  %v952 = vsel %vm111, %v940, -inf
  %953 = vmax.xlane.f32.xlu0 %v952
  %v954 = vpop.xlane.xlu0 %953
  %v955 = vsel %vm111, %v941, -inf
  %956 = vmax.xlane.f32.xlu0 %v955
  %v957 = vpop.xlane.xlu0 %956
  %v958 = vsel %vm111, %v942, -inf
  %959 = vmax.xlane.f32.xlu0 %v958
  %v960 = vpop.xlane.xlu0 %959
  %v961 = vsel %vm111, %v943, -inf
  %962 = vmax.xlane.f32.xlu0 %v961
  %v963 = vpop.xlane.xlu0 %962
  %v964 = vsel %vm111, %v944, -inf
  %965 = vmax.xlane.f32.xlu0 %v964
  %v966 = vpop.xlane.xlu0 %965
  %v967 = vsel %vm111, %v945, -inf
  %968 = vmax.xlane.f32.xlu0 %v967
  %v969 = vpop.xlane.xlu0 %968
  %vm970 = vcmp.ge.f32.partialorder %v938, %v948
  %vm971 = vcmp.ge.f32.partialorder %v939, %v951
  %vm972 = vcmp.ge.f32.partialorder %v940, %v954
  %vm973 = vcmp.ge.f32.partialorder %v941, %v957
  %vm974 = vcmp.ge.f32.partialorder %v942, %v960
  %vm975 = vcmp.ge.f32.partialorder %v943, %v963
  %vm976 = vcmp.ge.f32.partialorder %v944, %v966
  %vm977 = vcmp.ge.f32.partialorder %v945, %v969
  %v978 = vsel %vm970, %v126, 8
  %v979 = vsel %vm971, %v126, 8
  %v980 = vsel %vm972, %v126, 8
  %v981 = vsel %vm973, %v126, 8
  %v982 = vsel %vm974, %v126, 8
  %v983 = vsel %vm975, %v126, 8
  %v984 = vsel %vm976, %v126, 8
  %v985 = vsel %vm977, %v126, 8
  %v986 = vsel %vm111, %v978, 2147483647
  %v987 = vand.u32 %v986, 65535
  %v988 = vshra.s32 %v986, 16
  %v989 = vcvt.s32.f32 %v987
  %v990 = vcvt.s32.f32 %v988
  %991 = vmin.xlane.f32.xlu0 %v990
  %v992 = vpop.xlane.xlu0 %991
  %vm993 = vcmp.eq.f32.partialorder %v990, %v992
  %v994 = vsel %vm993, %v989, inf
  %995 = vmin.xlane.f32.xlu0 %v994
  %v996 = vpop.xlane.xlu0 %995
  %v997 = vcvt.f32.s32 %v996
  %v998 = vcvt.f32.s32 %v992
  %v999 = vshll.u32 %v998, 16
  %v1000 = vadd.s32 %v999, %v997
  %v1001 = vsel %vm111, %v979, 2147483647
  %v1002 = vand.u32 %v1001, 65535
  %v1003 = vshra.s32 %v1001, 16
  %v1004 = vcvt.s32.f32 %v1002
  %v1005 = vcvt.s32.f32 %v1003
  %1006 = vmin.xlane.f32.xlu0 %v1005
  %v1007 = vpop.xlane.xlu0 %1006
  %vm1008 = vcmp.eq.f32.partialorder %v1005, %v1007
  %v1009 = vsel %vm1008, %v1004, inf
  %1010 = vmin.xlane.f32.xlu0 %v1009
  %v1011 = vpop.xlane.xlu0 %1010
  %v1012 = vcvt.f32.s32 %v1011
  %v1013 = vcvt.f32.s32 %v1007
  %v1014 = vshll.u32 %v1013, 16
  %v1015 = vadd.s32 %v1014, %v1012
  %v1016 = vsel %vm111, %v980, 2147483647
  %v1017 = vand.u32 %v1016, 65535
  %v1018 = vshra.s32 %v1016, 16
  %v1019 = vcvt.s32.f32 %v1017
  %v1020 = vcvt.s32.f32 %v1018
  %1021 = vmin.xlane.f32.xlu0 %v1020
  %v1022 = vpop.xlane.xlu0 %1021
  %vm1023 = vcmp.eq.f32.partialorder %v1020, %v1022
  %v1024 = vsel %vm1023, %v1019, inf
  %1025 = vmin.xlane.f32.xlu0 %v1024
  %v1026 = vpop.xlane.xlu0 %1025
  %v1027 = vcvt.f32.s32 %v1026
  %v1028 = vcvt.f32.s32 %v1022
  %v1029 = vshll.u32 %v1028, 16
  %v1030 = vadd.s32 %v1029, %v1027
  %v1031 = vsel %vm111, %v981, 2147483647
  %v1032 = vand.u32 %v1031, 65535
  %v1033 = vshra.s32 %v1031, 16
  %v1034 = vcvt.s32.f32 %v1032
  %v1035 = vcvt.s32.f32 %v1033
  %1036 = vmin.xlane.f32.xlu0 %v1035
  %v1037 = vpop.xlane.xlu0 %1036
  %vm1038 = vcmp.eq.f32.partialorder %v1035, %v1037
  %v1039 = vsel %vm1038, %v1034, inf
  %1040 = vmin.xlane.f32.xlu0 %v1039
  %v1041 = vpop.xlane.xlu0 %1040
  %v1042 = vcvt.f32.s32 %v1041
  %v1043 = vcvt.f32.s32 %v1037
  %v1044 = vshll.u32 %v1043, 16
  %v1045 = vadd.s32 %v1044, %v1042
  %v1046 = vsel %vm111, %v982, 2147483647
  %v1047 = vand.u32 %v1046, 65535
  %v1048 = vshra.s32 %v1046, 16
  %v1049 = vcvt.s32.f32 %v1047
  %v1050 = vcvt.s32.f32 %v1048
  %1051 = vmin.xlane.f32.xlu0 %v1050
  %v1052 = vpop.xlane.xlu0 %1051
  %vm1053 = vcmp.eq.f32.partialorder %v1050, %v1052
  %v1054 = vsel %vm1053, %v1049, inf
  %1055 = vmin.xlane.f32.xlu0 %v1054
  %v1056 = vpop.xlane.xlu0 %1055
  %v1057 = vcvt.f32.s32 %v1056
  %v1058 = vcvt.f32.s32 %v1052
  %v1059 = vshll.u32 %v1058, 16
  %v1060 = vadd.s32 %v1059, %v1057
  %v1061 = vsel %vm111, %v983, 2147483647
  %v1062 = vand.u32 %v1061, 65535
  %v1063 = vshra.s32 %v1061, 16
  %v1064 = vcvt.s32.f32 %v1062
  %v1065 = vcvt.s32.f32 %v1063
  %1066 = vmin.xlane.f32.xlu0 %v1065
  %v1067 = vpop.xlane.xlu0 %1066
  %vm1068 = vcmp.eq.f32.partialorder %v1065, %v1067
  %v1069 = vsel %vm1068, %v1064, inf
  %1070 = vmin.xlane.f32.xlu0 %v1069
  %v1071 = vpop.xlane.xlu0 %1070
  %v1072 = vcvt.f32.s32 %v1071
  %v1073 = vcvt.f32.s32 %v1067
  %v1074 = vshll.u32 %v1073, 16
  %v1075 = vadd.s32 %v1074, %v1072
  %v1076 = vsel %vm111, %v984, 2147483647
  %v1077 = vand.u32 %v1076, 65535
  %v1078 = vshra.s32 %v1076, 16
  %v1079 = vcvt.s32.f32 %v1077
  %v1080 = vcvt.s32.f32 %v1078
  %1081 = vmin.xlane.f32.xlu0 %v1080
  %v1082 = vpop.xlane.xlu0 %1081
  %vm1083 = vcmp.eq.f32.partialorder %v1080, %v1082
  %v1084 = vsel %vm1083, %v1079, inf
  %1085 = vmin.xlane.f32.xlu0 %v1084
  %v1086 = vpop.xlane.xlu0 %1085
  %v1087 = vcvt.f32.s32 %v1086
  %v1088 = vcvt.f32.s32 %v1082
  %v1089 = vshll.u32 %v1088, 16
  %v1090 = vadd.s32 %v1089, %v1087
  %v1091 = vsel %vm111, %v985, 2147483647
  %v1092 = vand.u32 %v1091, 65535
  %v1093 = vshra.s32 %v1091, 16
  %v1094 = vcvt.s32.f32 %v1092
  %v1095 = vcvt.s32.f32 %v1093
  %1096 = vmin.xlane.f32.xlu0 %v1095
  %v1097 = vpop.xlane.xlu0 %1096
  %vm1098 = vcmp.eq.f32.partialorder %v1095, %v1097
  %v1099 = vsel %vm1098, %v1094, inf
  %1100 = vmin.xlane.f32.xlu0 %v1099
  %v1101 = vpop.xlane.xlu0 %1100
  %v1102 = vcvt.f32.s32 %v1101
  %v1103 = vcvt.f32.s32 %v1097
  %v1104 = vshll.u32 %v1103, 16
  %v1105 = vadd.s32 %v1104, %v1102
  %v1107 = vperm.slane %v911, 0
  %v1108 = vlaneseq
  %v1109 = vshrl.u32 %v1108, 7
  %1111 = vset.pattern.permute.xlu0 %v1109
  %1112 = vperm.xlu0 %1111, %v1107
  %v1113 = vpop.permute.xlu0 %1112
  %v1114 = vperm.slane %v911, 1
  %v1115 = vlaneseq
  %v1116 = vshrl.u32 %v1115, 7
  %1118 = vset.pattern.permute.xlu0 %v1116
  %1119 = vperm.xlu0 %1118, %v1114
  %v1120 = vpop.permute.xlu0 %1119
  %v1121 = vperm.slane %v911, 2
  %v1122 = vlaneseq
  %v1123 = vshrl.u32 %v1122, 7
  %1125 = vset.pattern.permute.xlu0 %v1123
  %1126 = vperm.xlu0 %1125, %v1121
  %v1127 = vpop.permute.xlu0 %1126
  %v1128 = vperm.slane %v911, 3
  %v1129 = vlaneseq
  %v1130 = vshrl.u32 %v1129, 7
  %1132 = vset.pattern.permute.xlu0 %v1130
  %1133 = vperm.xlu0 %1132, %v1128
  %v1134 = vpop.permute.xlu0 %1133
  %v1135 = vperm.slane %v911, 4
  %v1136 = vlaneseq
  %v1137 = vshrl.u32 %v1136, 7
  %1139 = vset.pattern.permute.xlu0 %v1137
  %1140 = vperm.xlu0 %1139, %v1135
  %v1141 = vpop.permute.xlu0 %1140
  %v1142 = vperm.slane %v911, 5
  %v1143 = vlaneseq
  %v1144 = vshrl.u32 %v1143, 7
  %1146 = vset.pattern.permute.xlu0 %v1144
  %1147 = vperm.xlu0 %1146, %v1142
  %v1148 = vpop.permute.xlu0 %1147
  %v1149 = vperm.slane %v911, 6
  %v1150 = vlaneseq
  %v1151 = vshrl.u32 %v1150, 7
  %1153 = vset.pattern.permute.xlu0 %v1151
  %1154 = vperm.xlu0 %1153, %v1149
  %v1155 = vpop.permute.xlu0 %1154
  %v1156 = vperm.slane %v911, 7
  %v1157 = vlaneseq
  %v1158 = vshrl.u32 %v1157, 7
  %1160 = vset.pattern.permute.xlu0 %v1158
  %1161 = vperm.xlu0 %1160, %v1156
  %v1162 = vpop.permute.xlu0 %1161
  %v1171 = vadd.f32 %v948, %v1113
  %v1172 = vadd.f32 %v951, %v1120
  %v1173 = vadd.f32 %v954, %v1127
  %v1174 = vadd.f32 %v957, %v1134
  %v1175 = vadd.f32 %v960, %v1141
  %v1176 = vadd.f32 %v963, %v1148
  %v1177 = vadd.f32 %v966, %v1155
  %v1178 = vadd.f32 %v969, %v1162
  %v1179 = vsel %vm912, 1, 0
  %1180 = vset.pattern.permute.xlu0 0
  %1181 = vperm.xlu0 %1180, %v1179
  %v1182 = vpop.permute.xlu0 %1181
  %vm1183 = vcmp.eq.s32.totalorder %v1182, 1
  %1192 = vset.pattern.permute.xlu0 0
  %1193 = vperm.xlu0 %1192, %v1171
  %v1194 = vpop.permute.xlu0 %1193
  %1195 = vset.pattern.permute.xlu0 0
  %1196 = vperm.xlu0 %1195, %v1172
  %v1197 = vpop.permute.xlu0 %1196
  %1198 = vset.pattern.permute.xlu0 0
  %1199 = vperm.xlu0 %1198, %v1173
  %v1200 = vpop.permute.xlu0 %1199
  %1201 = vset.pattern.permute.xlu0 0
  %1202 = vperm.xlu0 %1201, %v1174
  %v1203 = vpop.permute.xlu0 %1202
  %1204 = vset.pattern.permute.xlu0 0
  %1205 = vperm.xlu0 %1204, %v1175
  %v1206 = vpop.permute.xlu0 %1205
  %1207 = vset.pattern.permute.xlu0 0
  %1208 = vperm.xlu0 %1207, %v1176
  %v1209 = vpop.permute.xlu0 %1208
  %1210 = vset.pattern.permute.xlu0 0
  %1211 = vperm.xlu0 %1210, %v1177
  %v1212 = vpop.permute.xlu0 %1211
  %1213 = vset.pattern.permute.xlu0 0
  %1214 = vperm.xlu0 %1213, %v1178
  %v1215 = vpop.permute.xlu0 %1214
  %v1216 = vperm.slane %v1194, %v126
  %v1217 = vperm.slane %v1197, %v126
  %v1218 = vperm.slane %v1200, %v126
  %v1219 = vperm.slane %v1203, %v126
  %v1220 = vperm.slane %v1206, %v126
  %v1221 = vperm.slane %v1209, %v126
  %v1222 = vperm.slane %v1212, %v126
  %v1223 = vperm.slane %v1215, %v126
  %v1224 = vsel %vm460, %v1217, %v1216
  %v1225 = vsel %vm462, %v1218, %v1224
  %v1226 = vsel %vm464, %v1219, %v1225
  %v1227 = vsel %vm466, %v1220, %v1226
  %v1228 = vsel %vm468, %v1221, %v1227
  %v1229 = vsel %vm470, %v1222, %v1228
  %v1230 = vsel %vm472, %v1223, %v1229
  %v1232 = vsel %vm1183, %v1230, %v913
  %1233 = vst.msk [vmem:[#allocation3] sm:$0xff] %vm111, %v1232
  %v1234 = vperm.slane %v1000, %v126
  %v1235 = vperm.slane %v1015, %v126
  %v1236 = vperm.slane %v1030, %v126
  %v1237 = vperm.slane %v1045, %v126
  %v1238 = vperm.slane %v1060, %v126
  %v1239 = vperm.slane %v1075, %v126
  %v1240 = vperm.slane %v1090, %v126
  %v1241 = vperm.slane %v1105, %v126
  %v1242 = vsel %vm460, %v1235, %v1234
  %v1243 = vsel %vm462, %v1236, %v1242
  %v1244 = vsel %vm464, %v1237, %v1243
  %v1245 = vsel %vm466, %v1238, %v1244
  %v1246 = vsel %vm468, %v1239, %v1245
  %v1247 = vsel %vm470, %v1240, %v1246
  %v1248 = vsel %vm472, %v1241, %v1247
  %s1249 = scalar_lea.vmem %s10, 16
  %1250 = vst.msk [vmem:[%s1249] sm:$0xff] %vm111, %v1248
  %v1251 = vld [vmem:[#allocation4] sm:$0xff]
  %v1253 = vrot.slane %v1251, 1
  %v1254 = vrot.slane %v1251, 2
  %v1255 = vrot.slane %v1251, 3
  %v1256 = vrot.slane %v1251, 4
  %v1257 = vrot.slane %v1251, 5
  %v1258 = vrot.slane %v1251, 6
  %v1259 = vrot.slane %v1251, 7
  %v1260 = vperm.slane %v1251, 0
  %v1261 = vperm.slane %v1253, 0
  %v1262 = vperm.slane %v1254, 0
  %v1263 = vperm.slane %v1255, 0
  %v1264 = vperm.slane %v1256, 0
  %v1265 = vperm.slane %v1257, 0
  %v1266 = vperm.slane %v1258, 0
  %v1267 = vperm.slane %v1259, 0
  %v1276 = vadd.f32 %v1260, %v120
  %v1277 = vadd.f32 %v1261, %v120
  %v1278 = vadd.f32 %v1262, %v120
  %v1279 = vadd.f32 %v1263, %v120
  %v1280 = vadd.f32 %v1264, %v120
  %v1281 = vadd.f32 %v1265, %v120
  %v1282 = vadd.f32 %v1266, %v120
  %v1283 = vadd.f32 %v1267, %v120
  %v1284 = vperm.slane %v911, 0
  %v1285 = vlaneseq
  %v1286 = vshrl.u32 %v1285, 7
  %1288 = vset.pattern.permute.xlu0 %v1286
  %1289 = vperm.xlu0 %1288, %v1284
  %v1290 = vpop.permute.xlu0 %1289
  %v1291 = vperm.slane %v911, 1
  %v1292 = vlaneseq
  %v1293 = vshrl.u32 %v1292, 7
  %1295 = vset.pattern.permute.xlu0 %v1293
  %1296 = vperm.xlu0 %1295, %v1291
  %v1297 = vpop.permute.xlu0 %1296
  %v1298 = vperm.slane %v911, 2
  %v1299 = vlaneseq
  %v1300 = vshrl.u32 %v1299, 7
  %1302 = vset.pattern.permute.xlu0 %v1300
  %1303 = vperm.xlu0 %1302, %v1298
  %v1304 = vpop.permute.xlu0 %1303
  %v1305 = vperm.slane %v911, 3
  %v1306 = vlaneseq
  %v1307 = vshrl.u32 %v1306, 7
  %1309 = vset.pattern.permute.xlu0 %v1307
  %1310 = vperm.xlu0 %1309, %v1305
  %v1311 = vpop.permute.xlu0 %1310
  %v1312 = vperm.slane %v911, 4
  %v1313 = vlaneseq
  %v1314 = vshrl.u32 %v1313, 7
  %1316 = vset.pattern.permute.xlu0 %v1314
  %1317 = vperm.xlu0 %1316, %v1312
  %v1318 = vpop.permute.xlu0 %1317
  %v1319 = vperm.slane %v911, 5
  %v1320 = vlaneseq
  %v1321 = vshrl.u32 %v1320, 7
  %1323 = vset.pattern.permute.xlu0 %v1321
  %1324 = vperm.xlu0 %1323, %v1319
  %v1325 = vpop.permute.xlu0 %1324
  %v1326 = vperm.slane %v911, 6
  %v1327 = vlaneseq
  %v1328 = vshrl.u32 %v1327, 7
  %1330 = vset.pattern.permute.xlu0 %v1328
  %1331 = vperm.xlu0 %1330, %v1326
  %v1332 = vpop.permute.xlu0 %1331
  %v1333 = vperm.slane %v911, 7
  %v1334 = vlaneseq
  %v1335 = vshrl.u32 %v1334, 7
  %1337 = vset.pattern.permute.xlu0 %v1335
  %1338 = vperm.xlu0 %1337, %v1333
  %v1339 = vpop.permute.xlu0 %1338
  %v1340 = vadd.f32 %v1276, %v1290
  %v1341 = vadd.f32 %v1277, %v1297
  %v1342 = vadd.f32 %v1278, %v1304
  %v1343 = vadd.f32 %v1279, %v1311
  %v1344 = vadd.f32 %v1280, %v1318
  %v1345 = vadd.f32 %v1281, %v1325
  %v1346 = vadd.f32 %v1282, %v1332
  %v1347 = vadd.f32 %v1283, %v1339
  %v1348 = vsel %vm111, %v1340, -inf
  %1349 = vmax.xlane.f32.xlu0 %v1348
  %v1350 = vpop.xlane.xlu0 %1349
  %v1351 = vsel %vm111, %v1341, -inf
  %1352 = vmax.xlane.f32.xlu0 %v1351
  %v1353 = vpop.xlane.xlu0 %1352
  %v1354 = vsel %vm111, %v1342, -inf
  %1355 = vmax.xlane.f32.xlu0 %v1354
  %v1356 = vpop.xlane.xlu0 %1355
  %v1357 = vsel %vm111, %v1343, -inf
  %1358 = vmax.xlane.f32.xlu0 %v1357
  %v1359 = vpop.xlane.xlu0 %1358
  %v1360 = vsel %vm111, %v1344, -inf
  %1361 = vmax.xlane.f32.xlu0 %v1360
  %v1362 = vpop.xlane.xlu0 %1361
  %v1363 = vsel %vm111, %v1345, -inf
  %1364 = vmax.xlane.f32.xlu0 %v1363
  %v1365 = vpop.xlane.xlu0 %1364
  %v1366 = vsel %vm111, %v1346, -inf
  %1367 = vmax.xlane.f32.xlu0 %v1366
  %v1368 = vpop.xlane.xlu0 %1367
  %v1369 = vsel %vm111, %v1347, -inf
  %1370 = vmax.xlane.f32.xlu0 %v1369
  %v1371 = vpop.xlane.xlu0 %1370
  %v1372 = vsub.f32 %v1340, %v1350
  %v1373 = vsub.f32 %v1341, %v1353
  %v1374 = vsub.f32 %v1342, %v1356
  %v1375 = vsub.f32 %v1343, %v1359
  %v1376 = vsub.f32 %v1344, %v1362
  %v1377 = vsub.f32 %v1345, %v1365
  %v1378 = vsub.f32 %v1346, %v1368
  %v1379 = vsub.f32 %v1347, %v1371
  %v1380 = vmul.f32 %v1372, 1.442695
  %v1381 = vpow.pop %v1380
  %v1382 = vmul.f32 %v1373, 1.442695
  %v1383 = vpow.pop %v1382
  %v1384 = vmul.f32 %v1374, 1.442695
  %v1385 = vpow.pop %v1384
  %v1386 = vmul.f32 %v1375, 1.442695
  %v1387 = vpow.pop %v1386
  %v1388 = vmul.f32 %v1376, 1.442695
  %v1389 = vpow.pop %v1388
  %v1390 = vmul.f32 %v1377, 1.442695
  %v1391 = vpow.pop %v1390
  %v1392 = vmul.f32 %v1378, 1.442695
  %v1393 = vpow.pop %v1392
  %v1394 = vmul.f32 %v1379, 1.442695
  %v1395 = vpow.pop %v1394
  %v1396 = vsel %vm111, %v1381, 0.0
  %1397 = vadd.xlane.f32.xlu0 %v1396
  %v1398 = vpop.xlane.xlu0 %1397
  %v1399 = vsel %vm111, %v1383, 0.0
  %1400 = vadd.xlane.f32.xlu0 %v1399
  %v1401 = vpop.xlane.xlu0 %1400
  %v1402 = vsel %vm111, %v1385, 0.0
  %1403 = vadd.xlane.f32.xlu0 %v1402
  %v1404 = vpop.xlane.xlu0 %1403
  %v1405 = vsel %vm111, %v1387, 0.0
  %1406 = vadd.xlane.f32.xlu0 %v1405
  %v1407 = vpop.xlane.xlu0 %1406
  %v1408 = vsel %vm111, %v1389, 0.0
  %1409 = vadd.xlane.f32.xlu0 %v1408
  %v1410 = vpop.xlane.xlu0 %1409
  %v1411 = vsel %vm111, %v1391, 0.0
  %1412 = vadd.xlane.f32.xlu0 %v1411
  %v1413 = vpop.xlane.xlu0 %1412
  %v1414 = vsel %vm111, %v1393, 0.0
  %1415 = vadd.xlane.f32.xlu0 %v1414
  %v1416 = vpop.xlane.xlu0 %1415
  %v1417 = vsel %vm111, %v1395, 0.0
  %1418 = vadd.xlane.f32.xlu0 %v1417
  %v1419 = vpop.xlane.xlu0 %1418
  %v1420 = vlog2.pop %v1398
  %v1421 = vmul.f32 %v1420, 0.6931472
  %v1422 = vlog2.pop %v1401
  %v1423 = vmul.f32 %v1422, 0.6931472
  %v1424 = vlog2.pop %v1404
  %v1425 = vmul.f32 %v1424, 0.6931472
  %v1426 = vlog2.pop %v1407
  %v1427 = vmul.f32 %v1426, 0.6931472
  %v1428 = vlog2.pop %v1410
  %v1429 = vmul.f32 %v1428, 0.6931472
  %v1430 = vlog2.pop %v1413
  %v1431 = vmul.f32 %v1430, 0.6931472
  %v1432 = vlog2.pop %v1416
  %v1433 = vmul.f32 %v1432, 0.6931472
  %v1434 = vlog2.pop %v1419
  %v1435 = vmul.f32 %v1434, 0.6931472
  %v1436 = vadd.f32 %v1350, %v1421
  %v1437 = vadd.f32 %v1353, %v1423
  %v1438 = vadd.f32 %v1356, %v1425
  %v1439 = vadd.f32 %v1359, %v1427
  %v1440 = vadd.f32 %v1362, %v1429
  %v1441 = vadd.f32 %v1365, %v1431
  %v1442 = vadd.f32 %v1368, %v1433
  %v1443 = vadd.f32 %v1371, %v1435
  %v1452 = vperm.slane %v1436, %v126
  %v1453 = vperm.slane %v1437, %v126
  %v1454 = vperm.slane %v1438, %v126
  %v1455 = vperm.slane %v1439, %v126
  %v1456 = vperm.slane %v1440, %v126
  %v1457 = vperm.slane %v1441, %v126
  %v1458 = vperm.slane %v1442, %v126
  %v1459 = vperm.slane %v1443, %v126
  %v1460 = vsel %vm460, %v1453, %v1452
  %v1461 = vsel %vm462, %v1454, %v1460
  %v1462 = vsel %vm464, %v1455, %v1461
  %v1463 = vsel %vm466, %v1456, %v1462
  %v1464 = vsel %vm468, %v1457, %v1463
  %v1465 = vsel %vm470, %v1458, %v1464
  %v1466 = vsel %vm472, %v1459, %v1465
  %v1468 = vsel %vm1183, %v1466, %v1251
  %1469 = vst.msk [vmem:[#allocation4] sm:$0xff] %vm111, %v1468
  %s1470 = scalar_lea.vmem %s4, 16
  %v1471 = vld [vmem:[%s1470] sm:$0xff]
  %1472 = vset.pattern.permute.xlu0 0
  %1473 = vperm.xlu0 %1472, %v1471
  %v1474 = vpop.permute.xlu0 %1473
  %vm1475 = vcmp.eq.s32.totalorder %v126, %v1474
  %v1476 = vsel %vm1475, 1, 0
  %v1477 = vcvt.s32.f32 %v1476
  %v1479 = vrot.slane %v1477, 1
  %v1480 = vrot.slane %v1477, 2
  %v1481 = vrot.slane %v1477, 3
  %v1482 = vrot.slane %v1477, 4
  %v1483 = vrot.slane %v1477, 5
  %v1484 = vrot.slane %v1477, 6
  %v1485 = vrot.slane %v1477, 7
  %v1486 = vperm.slane %v1477, 0
  %v1487 = vperm.slane %v1479, 0
  %v1488 = vperm.slane %v1480, 0
  %v1489 = vperm.slane %v1481, 0
  %v1490 = vperm.slane %v1482, 0
  %v1491 = vperm.slane %v1483, 0
  %v1492 = vperm.slane %v1484, 0
  %v1493 = vperm.slane %v1485, 0
  %v1502 = vmul.f32 %v121, %v1486
  %v1503 = vmul.f32 %v121, %v1487
  %v1504 = vmul.f32 %v121, %v1488
  %v1505 = vmul.f32 %v121, %v1489
  %v1506 = vmul.f32 %v121, %v1490
  %v1507 = vmul.f32 %v121, %v1491
  %v1508 = vmul.f32 %v121, %v1492
  %v1509 = vmul.f32 %v121, %v1493
  %v1510 = vsel %vm111, %v1502, 0.0
  %1511 = vadd.xlane.f32.xlu0 %v1510
  %v1512 = vpop.xlane.xlu0 %1511
  %v1513 = vsel %vm111, %v1503, 0.0
  %1514 = vadd.xlane.f32.xlu0 %v1513
  %v1515 = vpop.xlane.xlu0 %1514
  %v1516 = vsel %vm111, %v1504, 0.0
  %1517 = vadd.xlane.f32.xlu0 %v1516
  %v1518 = vpop.xlane.xlu0 %1517
  %v1519 = vsel %vm111, %v1505, 0.0
  %1520 = vadd.xlane.f32.xlu0 %v1519
  %v1521 = vpop.xlane.xlu0 %1520
  %v1522 = vsel %vm111, %v1506, 0.0
  %1523 = vadd.xlane.f32.xlu0 %v1522
  %v1524 = vpop.xlane.xlu0 %1523
  %v1525 = vsel %vm111, %v1507, 0.0
  %1526 = vadd.xlane.f32.xlu0 %v1525
  %v1527 = vpop.xlane.xlu0 %1526
  %v1528 = vsel %vm111, %v1508, 0.0
  %1529 = vadd.xlane.f32.xlu0 %v1528
  %v1530 = vpop.xlane.xlu0 %1529
  %v1531 = vsel %vm111, %v1509, 0.0
  %1532 = vadd.xlane.f32.xlu0 %v1531
  %v1533 = vpop.xlane.xlu0 %1532
  %v1535 = vperm.slane %v909, 0
  %v1536 = vlaneseq
  %v1537 = vshrl.u32 %v1536, 7
  %1539 = vset.pattern.permute.xlu0 %v1537
  %1540 = vperm.xlu0 %1539, %v1535
  %v1541 = vpop.permute.xlu0 %1540
  %v1542 = vperm.slane %v909, 1
  %v1543 = vlaneseq
  %v1544 = vshrl.u32 %v1543, 7
  %1546 = vset.pattern.permute.xlu0 %v1544
  %1547 = vperm.xlu0 %1546, %v1542
  %v1548 = vpop.permute.xlu0 %1547
  %v1549 = vperm.slane %v909, 2
  %v1550 = vlaneseq
  %v1551 = vshrl.u32 %v1550, 7
  %1553 = vset.pattern.permute.xlu0 %v1551
  %1554 = vperm.xlu0 %1553, %v1549
  %v1555 = vpop.permute.xlu0 %1554
  %v1556 = vperm.slane %v909, 3
  %v1557 = vlaneseq
  %v1558 = vshrl.u32 %v1557, 7
  %1560 = vset.pattern.permute.xlu0 %v1558
  %1561 = vperm.xlu0 %1560, %v1556
  %v1562 = vpop.permute.xlu0 %1561
  %v1563 = vperm.slane %v909, 4
  %v1564 = vlaneseq
  %v1565 = vshrl.u32 %v1564, 7
  %1567 = vset.pattern.permute.xlu0 %v1565
  %1568 = vperm.xlu0 %1567, %v1563
  %v1569 = vpop.permute.xlu0 %1568
  %v1570 = vperm.slane %v909, 5
  %v1571 = vlaneseq
  %v1572 = vshrl.u32 %v1571, 7
  %1574 = vset.pattern.permute.xlu0 %v1572
  %1575 = vperm.xlu0 %1574, %v1570
  %v1576 = vpop.permute.xlu0 %1575
  %v1577 = vperm.slane %v909, 6
  %v1578 = vlaneseq
  %v1579 = vshrl.u32 %v1578, 7
  %1581 = vset.pattern.permute.xlu0 %v1579
  %1582 = vperm.xlu0 %1581, %v1577
  %v1583 = vpop.permute.xlu0 %1582
  %v1584 = vperm.slane %v909, 7
  %v1585 = vlaneseq
  %v1586 = vshrl.u32 %v1585, 7
  %1588 = vset.pattern.permute.xlu0 %v1586
  %1589 = vperm.xlu0 %1588, %v1584
  %v1590 = vpop.permute.xlu0 %1589
  %v1599 = vmul.f32 %v1512, %v1541
  %v1600 = vmul.f32 %v1515, %v1548
  %v1601 = vmul.f32 %v1518, %v1555
  %v1602 = vmul.f32 %v1521, %v1562
  %v1603 = vmul.f32 %v1524, %v1569
  %v1604 = vmul.f32 %v1527, %v1576
  %v1605 = vmul.f32 %v1530, %v1583
  %v1606 = vmul.f32 %v1533, %v1590
  %1615 = vset.pattern.permute.xlu0 0
  %1616 = vperm.xlu0 %1615, %v1599
  %v1617 = vpop.permute.xlu0 %1616
  %1618 = vset.pattern.permute.xlu0 0
  %1619 = vperm.xlu0 %1618, %v1600
  %v1620 = vpop.permute.xlu0 %1619
  %1621 = vset.pattern.permute.xlu0 0
  %1622 = vperm.xlu0 %1621, %v1601
  %v1623 = vpop.permute.xlu0 %1622
  %1624 = vset.pattern.permute.xlu0 0
  %1625 = vperm.xlu0 %1624, %v1602
  %v1626 = vpop.permute.xlu0 %1625
  %1627 = vset.pattern.permute.xlu0 0
  %1628 = vperm.xlu0 %1627, %v1603
  %v1629 = vpop.permute.xlu0 %1628
  %1630 = vset.pattern.permute.xlu0 0
  %1631 = vperm.xlu0 %1630, %v1604
  %v1632 = vpop.permute.xlu0 %1631
  %1633 = vset.pattern.permute.xlu0 0
  %1634 = vperm.xlu0 %1633, %v1605
  %v1635 = vpop.permute.xlu0 %1634
  %1636 = vset.pattern.permute.xlu0 0
  %1637 = vperm.xlu0 %1636, %v1606
  %v1638 = vpop.permute.xlu0 %1637
  %v1639 = vperm.slane %v1617, %v126
  %v1640 = vperm.slane %v1620, %v126
  %v1641 = vperm.slane %v1623, %v126
  %v1642 = vperm.slane %v1626, %v126
  %v1643 = vperm.slane %v1629, %v126
  %v1644 = vperm.slane %v1632, %v126
  %v1645 = vperm.slane %v1635, %v126
  %v1646 = vperm.slane %v1638, %v126
  %v1647 = vsel %vm460, %v1640, %v1639
  %v1648 = vsel %vm462, %v1641, %v1647
  %v1649 = vsel %vm464, %v1642, %v1648
  %v1650 = vsel %vm466, %v1643, %v1649
  %v1651 = vsel %vm468, %v1644, %v1650
  %v1652 = vsel %vm470, %v1645, %v1651
  %v1653 = vsel %vm472, %v1646, %v1652
  %v1655 = vsel %vm111, %v1653, 0.0
  %1656 = vadd.xlane.f32.xlu0 %v1655
  %v1657 = vpop.xlane.xlu0 %1656
  %v1658 = vmul.f32 %v911, %v1477
  %v1659 = vsel %vm111, %v1658, 0.0
  %1660 = vadd.xlane.f32.xlu0 %v1659
  %v1661 = vpop.xlane.xlu0 %1660
  %v1662 = vadd.f32 %v1657, %v1661
  %v1663 = vcvt.s32.f32 %v1179
  %v1664 = vmul.f32 %v1662, %v1663
  %v1665 = vadd.f32 %v908, %v1664
  %v1666 = vsel %vm1183, %v1477, %v909
  %s1667 = scalar_lea.vmem [#allocation2], 24
  %v1668 = vld [vmem:[%s1667] sm:$0xff]
  %vm1669 = vcmp.gt.s32.totalorder %v124, 3
  %v1670 = vld [vmem:[#allocation3] sm:$0xff]
  %v1672 = vrot.slane %v1670, 1
  %v1673 = vrot.slane %v1670, 2
  %v1674 = vrot.slane %v1670, 3
  %v1675 = vrot.slane %v1670, 4
  %v1676 = vrot.slane %v1670, 5
  %v1677 = vrot.slane %v1670, 6
  %v1678 = vrot.slane %v1670, 7
  %v1679 = vperm.slane %v1670, 0
  %v1680 = vperm.slane %v1672, 0
  %v1681 = vperm.slane %v1673, 0
  %v1682 = vperm.slane %v1674, 0
  %v1683 = vperm.slane %v1675, 0
  %v1684 = vperm.slane %v1676, 0
  %v1685 = vperm.slane %v1677, 0
  %v1686 = vperm.slane %v1678, 0
  %v1695 = vadd.f32 %v1679, %v120
  %v1696 = vadd.f32 %v1680, %v120
  %v1697 = vadd.f32 %v1681, %v120
  %v1698 = vadd.f32 %v1682, %v120
  %v1699 = vadd.f32 %v1683, %v120
  %v1700 = vadd.f32 %v1684, %v120
  %v1701 = vadd.f32 %v1685, %v120
  %v1702 = vadd.f32 %v1686, %v120
  %v1703 = vsel %vm111, %v1695, -inf
  %1704 = vmax.xlane.f32.xlu0 %v1703
  %v1705 = vpop.xlane.xlu0 %1704
  %v1706 = vsel %vm111, %v1696, -inf
  %1707 = vmax.xlane.f32.xlu0 %v1706
  %v1708 = vpop.xlane.xlu0 %1707
  %v1709 = vsel %vm111, %v1697, -inf
  %1710 = vmax.xlane.f32.xlu0 %v1709
  %v1711 = vpop.xlane.xlu0 %1710
  %v1712 = vsel %vm111, %v1698, -inf
  %1713 = vmax.xlane.f32.xlu0 %v1712
  %v1714 = vpop.xlane.xlu0 %1713
  %v1715 = vsel %vm111, %v1699, -inf
  %1716 = vmax.xlane.f32.xlu0 %v1715
  %v1717 = vpop.xlane.xlu0 %1716
  %v1718 = vsel %vm111, %v1700, -inf
  %1719 = vmax.xlane.f32.xlu0 %v1718
  %v1720 = vpop.xlane.xlu0 %1719
  %v1721 = vsel %vm111, %v1701, -inf
  %1722 = vmax.xlane.f32.xlu0 %v1721
  %v1723 = vpop.xlane.xlu0 %1722
  %v1724 = vsel %vm111, %v1702, -inf
  %1725 = vmax.xlane.f32.xlu0 %v1724
  %v1726 = vpop.xlane.xlu0 %1725
  %vm1727 = vcmp.ge.f32.partialorder %v1695, %v1705
  %vm1728 = vcmp.ge.f32.partialorder %v1696, %v1708
  %vm1729 = vcmp.ge.f32.partialorder %v1697, %v1711
  %vm1730 = vcmp.ge.f32.partialorder %v1698, %v1714
  %vm1731 = vcmp.ge.f32.partialorder %v1699, %v1717
  %vm1732 = vcmp.ge.f32.partialorder %v1700, %v1720
  %vm1733 = vcmp.ge.f32.partialorder %v1701, %v1723
  %vm1734 = vcmp.ge.f32.partialorder %v1702, %v1726
  %v1735 = vsel %vm1727, %v126, 8
  %v1736 = vsel %vm1728, %v126, 8
  %v1737 = vsel %vm1729, %v126, 8
  %v1738 = vsel %vm1730, %v126, 8
  %v1739 = vsel %vm1731, %v126, 8
  %v1740 = vsel %vm1732, %v126, 8
  %v1741 = vsel %vm1733, %v126, 8
  %v1742 = vsel %vm1734, %v126, 8
  %v1743 = vsel %vm111, %v1735, 2147483647
  %v1744 = vand.u32 %v1743, 65535
  %v1745 = vshra.s32 %v1743, 16
  %v1746 = vcvt.s32.f32 %v1744
  %v1747 = vcvt.s32.f32 %v1745
  %1748 = vmin.xlane.f32.xlu0 %v1747
  %v1749 = vpop.xlane.xlu0 %1748
  %vm1750 = vcmp.eq.f32.partialorder %v1747, %v1749
  %v1751 = vsel %vm1750, %v1746, inf
  %1752 = vmin.xlane.f32.xlu0 %v1751
  %v1753 = vpop.xlane.xlu0 %1752
  %v1754 = vcvt.f32.s32 %v1753
  %v1755 = vcvt.f32.s32 %v1749
  %v1756 = vshll.u32 %v1755, 16
  %v1757 = vadd.s32 %v1756, %v1754
  %v1758 = vsel %vm111, %v1736, 2147483647
  %v1759 = vand.u32 %v1758, 65535
  %v1760 = vshra.s32 %v1758, 16
  %v1761 = vcvt.s32.f32 %v1759
  %v1762 = vcvt.s32.f32 %v1760
  %1763 = vmin.xlane.f32.xlu0 %v1762
  %v1764 = vpop.xlane.xlu0 %1763
  %vm1765 = vcmp.eq.f32.partialorder %v1762, %v1764
  %v1766 = vsel %vm1765, %v1761, inf
  %1767 = vmin.xlane.f32.xlu0 %v1766
  %v1768 = vpop.xlane.xlu0 %1767
  %v1769 = vcvt.f32.s32 %v1768
  %v1770 = vcvt.f32.s32 %v1764
  %v1771 = vshll.u32 %v1770, 16
  %v1772 = vadd.s32 %v1771, %v1769
  %v1773 = vsel %vm111, %v1737, 2147483647
  %v1774 = vand.u32 %v1773, 65535
  %v1775 = vshra.s32 %v1773, 16
  %v1776 = vcvt.s32.f32 %v1774
  %v1777 = vcvt.s32.f32 %v1775
  %1778 = vmin.xlane.f32.xlu0 %v1777
  %v1779 = vpop.xlane.xlu0 %1778
  %vm1780 = vcmp.eq.f32.partialorder %v1777, %v1779
  %v1781 = vsel %vm1780, %v1776, inf
  %1782 = vmin.xlane.f32.xlu0 %v1781
  %v1783 = vpop.xlane.xlu0 %1782
  %v1784 = vcvt.f32.s32 %v1783
  %v1785 = vcvt.f32.s32 %v1779
  %v1786 = vshll.u32 %v1785, 16
  %v1787 = vadd.s32 %v1786, %v1784
  %v1788 = vsel %vm111, %v1738, 2147483647
  %v1789 = vand.u32 %v1788, 65535
  %v1790 = vshra.s32 %v1788, 16
  %v1791 = vcvt.s32.f32 %v1789
  %v1792 = vcvt.s32.f32 %v1790
  %1793 = vmin.xlane.f32.xlu0 %v1792
  %v1794 = vpop.xlane.xlu0 %1793
  %vm1795 = vcmp.eq.f32.partialorder %v1792, %v1794
  %v1796 = vsel %vm1795, %v1791, inf
  %1797 = vmin.xlane.f32.xlu0 %v1796
  %v1798 = vpop.xlane.xlu0 %1797
  %v1799 = vcvt.f32.s32 %v1798
  %v1800 = vcvt.f32.s32 %v1794
  %v1801 = vshll.u32 %v1800, 16
  %v1802 = vadd.s32 %v1801, %v1799
  %v1803 = vsel %vm111, %v1739, 2147483647
  %v1804 = vand.u32 %v1803, 65535
  %v1805 = vshra.s32 %v1803, 16
  %v1806 = vcvt.s32.f32 %v1804
  %v1807 = vcvt.s32.f32 %v1805
  %1808 = vmin.xlane.f32.xlu0 %v1807
  %v1809 = vpop.xlane.xlu0 %1808
  %vm1810 = vcmp.eq.f32.partialorder %v1807, %v1809
  %v1811 = vsel %vm1810, %v1806, inf
  %1812 = vmin.xlane.f32.xlu0 %v1811
  %v1813 = vpop.xlane.xlu0 %1812
  %v1814 = vcvt.f32.s32 %v1813
  %v1815 = vcvt.f32.s32 %v1809
  %v1816 = vshll.u32 %v1815, 16
  %v1817 = vadd.s32 %v1816, %v1814
  %v1818 = vsel %vm111, %v1740, 2147483647
  %v1819 = vand.u32 %v1818, 65535
  %v1820 = vshra.s32 %v1818, 16
  %v1821 = vcvt.s32.f32 %v1819
  %v1822 = vcvt.s32.f32 %v1820
  %1823 = vmin.xlane.f32.xlu0 %v1822
  %v1824 = vpop.xlane.xlu0 %1823
  %vm1825 = vcmp.eq.f32.partialorder %v1822, %v1824
  %v1826 = vsel %vm1825, %v1821, inf
  %1827 = vmin.xlane.f32.xlu0 %v1826
  %v1828 = vpop.xlane.xlu0 %1827
  %v1829 = vcvt.f32.s32 %v1828
  %v1830 = vcvt.f32.s32 %v1824
  %v1831 = vshll.u32 %v1830, 16
  %v1832 = vadd.s32 %v1831, %v1829
  %v1833 = vsel %vm111, %v1741, 2147483647
  %v1834 = vand.u32 %v1833, 65535
  %v1835 = vshra.s32 %v1833, 16
  %v1836 = vcvt.s32.f32 %v1834
  %v1837 = vcvt.s32.f32 %v1835
  %1838 = vmin.xlane.f32.xlu0 %v1837
  %v1839 = vpop.xlane.xlu0 %1838
  %vm1840 = vcmp.eq.f32.partialorder %v1837, %v1839
  %v1841 = vsel %vm1840, %v1836, inf
  %1842 = vmin.xlane.f32.xlu0 %v1841
  %v1843 = vpop.xlane.xlu0 %1842
  %v1844 = vcvt.f32.s32 %v1843
  %v1845 = vcvt.f32.s32 %v1839
  %v1846 = vshll.u32 %v1845, 16
  %v1847 = vadd.s32 %v1846, %v1844
  %v1848 = vsel %vm111, %v1742, 2147483647
  %v1849 = vand.u32 %v1848, 65535
  %v1850 = vshra.s32 %v1848, 16
  %v1851 = vcvt.s32.f32 %v1849
  %v1852 = vcvt.s32.f32 %v1850
  %1853 = vmin.xlane.f32.xlu0 %v1852
  %v1854 = vpop.xlane.xlu0 %1853
  %vm1855 = vcmp.eq.f32.partialorder %v1852, %v1854
  %v1856 = vsel %vm1855, %v1851, inf
  %1857 = vmin.xlane.f32.xlu0 %v1856
  %v1858 = vpop.xlane.xlu0 %1857
  %v1859 = vcvt.f32.s32 %v1858
  %v1860 = vcvt.f32.s32 %v1854
  %v1861 = vshll.u32 %v1860, 16
  %v1862 = vadd.s32 %v1861, %v1859
  %v1864 = vperm.slane %v1668, 0
  %v1865 = vlaneseq
  %v1866 = vshrl.u32 %v1865, 7
  %1868 = vset.pattern.permute.xlu0 %v1866
  %1869 = vperm.xlu0 %1868, %v1864
  %v1870 = vpop.permute.xlu0 %1869
  %v1871 = vperm.slane %v1668, 1
  %v1872 = vlaneseq
  %v1873 = vshrl.u32 %v1872, 7
  %1875 = vset.pattern.permute.xlu0 %v1873
  %1876 = vperm.xlu0 %1875, %v1871
  %v1877 = vpop.permute.xlu0 %1876
  %v1878 = vperm.slane %v1668, 2
  %v1879 = vlaneseq
  %v1880 = vshrl.u32 %v1879, 7
  %1882 = vset.pattern.permute.xlu0 %v1880
  %1883 = vperm.xlu0 %1882, %v1878
  %v1884 = vpop.permute.xlu0 %1883
  %v1885 = vperm.slane %v1668, 3
  %v1886 = vlaneseq
  %v1887 = vshrl.u32 %v1886, 7
  %1889 = vset.pattern.permute.xlu0 %v1887
  %1890 = vperm.xlu0 %1889, %v1885
  %v1891 = vpop.permute.xlu0 %1890
  %v1892 = vperm.slane %v1668, 4
  %v1893 = vlaneseq
  %v1894 = vshrl.u32 %v1893, 7
  %1896 = vset.pattern.permute.xlu0 %v1894
  %1897 = vperm.xlu0 %1896, %v1892
  %v1898 = vpop.permute.xlu0 %1897
  %v1899 = vperm.slane %v1668, 5
  %v1900 = vlaneseq
  %v1901 = vshrl.u32 %v1900, 7
  %1903 = vset.pattern.permute.xlu0 %v1901
  %1904 = vperm.xlu0 %1903, %v1899
  %v1905 = vpop.permute.xlu0 %1904
  %v1906 = vperm.slane %v1668, 6
  %v1907 = vlaneseq
  %v1908 = vshrl.u32 %v1907, 7
  %1910 = vset.pattern.permute.xlu0 %v1908
  %1911 = vperm.xlu0 %1910, %v1906
  %v1912 = vpop.permute.xlu0 %1911
  %v1913 = vperm.slane %v1668, 7
  %v1914 = vlaneseq
  %v1915 = vshrl.u32 %v1914, 7
  %1917 = vset.pattern.permute.xlu0 %v1915
  %1918 = vperm.xlu0 %1917, %v1913
  %v1919 = vpop.permute.xlu0 %1918
  %v1928 = vadd.f32 %v1705, %v1870
  %v1929 = vadd.f32 %v1708, %v1877
  %v1930 = vadd.f32 %v1711, %v1884
  %v1931 = vadd.f32 %v1714, %v1891
  %v1932 = vadd.f32 %v1717, %v1898
  %v1933 = vadd.f32 %v1720, %v1905
  %v1934 = vadd.f32 %v1723, %v1912
  %v1935 = vadd.f32 %v1726, %v1919
  %v1936 = vsel %vm1669, 1, 0
  %1937 = vset.pattern.permute.xlu0 0
  %1938 = vperm.xlu0 %1937, %v1936
  %v1939 = vpop.permute.xlu0 %1938
  %vm1940 = vcmp.eq.s32.totalorder %v1939, 1
  %1949 = vset.pattern.permute.xlu0 0
  %1950 = vperm.xlu0 %1949, %v1928
  %v1951 = vpop.permute.xlu0 %1950
  %1952 = vset.pattern.permute.xlu0 0
  %1953 = vperm.xlu0 %1952, %v1929
  %v1954 = vpop.permute.xlu0 %1953
  %1955 = vset.pattern.permute.xlu0 0
  %1956 = vperm.xlu0 %1955, %v1930
  %v1957 = vpop.permute.xlu0 %1956
  %1958 = vset.pattern.permute.xlu0 0
  %1959 = vperm.xlu0 %1958, %v1931
  %v1960 = vpop.permute.xlu0 %1959
  %1961 = vset.pattern.permute.xlu0 0
  %1962 = vperm.xlu0 %1961, %v1932
  %v1963 = vpop.permute.xlu0 %1962
  %1964 = vset.pattern.permute.xlu0 0
  %1965 = vperm.xlu0 %1964, %v1933
  %v1966 = vpop.permute.xlu0 %1965
  %1967 = vset.pattern.permute.xlu0 0
  %1968 = vperm.xlu0 %1967, %v1934
  %v1969 = vpop.permute.xlu0 %1968
  %1970 = vset.pattern.permute.xlu0 0
  %1971 = vperm.xlu0 %1970, %v1935
  %v1972 = vpop.permute.xlu0 %1971
  %v1973 = vperm.slane %v1951, %v126
  %v1974 = vperm.slane %v1954, %v126
  %v1975 = vperm.slane %v1957, %v126
  %v1976 = vperm.slane %v1960, %v126
  %v1977 = vperm.slane %v1963, %v126
  %v1978 = vperm.slane %v1966, %v126
  %v1979 = vperm.slane %v1969, %v126
  %v1980 = vperm.slane %v1972, %v126
  %v1981 = vsel %vm460, %v1974, %v1973
  %v1982 = vsel %vm462, %v1975, %v1981
  %v1983 = vsel %vm464, %v1976, %v1982
  %v1984 = vsel %vm466, %v1977, %v1983
  %v1985 = vsel %vm468, %v1978, %v1984
  %v1986 = vsel %vm470, %v1979, %v1985
  %v1987 = vsel %vm472, %v1980, %v1986
  %v1989 = vsel %vm1940, %v1987, %v1670
  %1990 = vst.msk [vmem:[#allocation3] sm:$0xff] %vm111, %v1989
  %v1991 = vperm.slane %v1757, %v126
  %v1992 = vperm.slane %v1772, %v126
  %v1993 = vperm.slane %v1787, %v126
  %v1994 = vperm.slane %v1802, %v126
  %v1995 = vperm.slane %v1817, %v126
  %v1996 = vperm.slane %v1832, %v126
  %v1997 = vperm.slane %v1847, %v126
  %v1998 = vperm.slane %v1862, %v126
  %v1999 = vsel %vm460, %v1992, %v1991
  %v2000 = vsel %vm462, %v1993, %v1999
  %v2001 = vsel %vm464, %v1994, %v2000
  %v2002 = vsel %vm466, %v1995, %v2001
  %v2003 = vsel %vm468, %v1996, %v2002
  %v2004 = vsel %vm470, %v1997, %v2003
  %v2005 = vsel %vm472, %v1998, %v2004
  %s2006 = scalar_lea.vmem %s10, 24
  %2007 = vst.msk [vmem:[%s2006] sm:$0xff] %vm111, %v2005
  %v2008 = vld [vmem:[#allocation4] sm:$0xff]
  %v2010 = vrot.slane %v2008, 1
  %v2011 = vrot.slane %v2008, 2
  %v2012 = vrot.slane %v2008, 3
  %v2013 = vrot.slane %v2008, 4
  %v2014 = vrot.slane %v2008, 5
  %v2015 = vrot.slane %v2008, 6
  %v2016 = vrot.slane %v2008, 7
  %v2017 = vperm.slane %v2008, 0
  %v2018 = vperm.slane %v2010, 0
  %v2019 = vperm.slane %v2011, 0
  %v2020 = vperm.slane %v2012, 0
  %v2021 = vperm.slane %v2013, 0
  %v2022 = vperm.slane %v2014, 0
  %v2023 = vperm.slane %v2015, 0
  %v2024 = vperm.slane %v2016, 0
  %v2033 = vadd.f32 %v2017, %v120
  %v2034 = vadd.f32 %v2018, %v120
  %v2035 = vadd.f32 %v2019, %v120
  %v2036 = vadd.f32 %v2020, %v120
  %v2037 = vadd.f32 %v2021, %v120
  %v2038 = vadd.f32 %v2022, %v120
  %v2039 = vadd.f32 %v2023, %v120
  %v2040 = vadd.f32 %v2024, %v120
  %v2041 = vperm.slane %v1668, 0
  %v2042 = vlaneseq
  %v2043 = vshrl.u32 %v2042, 7
  %2045 = vset.pattern.permute.xlu0 %v2043
  %2046 = vperm.xlu0 %2045, %v2041
  %v2047 = vpop.permute.xlu0 %2046
  %v2048 = vperm.slane %v1668, 1
  %v2049 = vlaneseq
  %v2050 = vshrl.u32 %v2049, 7
  %2052 = vset.pattern.permute.xlu0 %v2050
  %2053 = vperm.xlu0 %2052, %v2048
  %v2054 = vpop.permute.xlu0 %2053
  %v2055 = vperm.slane %v1668, 2
  %v2056 = vlaneseq
  %v2057 = vshrl.u32 %v2056, 7
  %2059 = vset.pattern.permute.xlu0 %v2057
  %2060 = vperm.xlu0 %2059, %v2055
  %v2061 = vpop.permute.xlu0 %2060
  %v2062 = vperm.slane %v1668, 3
  %v2063 = vlaneseq
  %v2064 = vshrl.u32 %v2063, 7
  %2066 = vset.pattern.permute.xlu0 %v2064
  %2067 = vperm.xlu0 %2066, %v2062
  %v2068 = vpop.permute.xlu0 %2067
  %v2069 = vperm.slane %v1668, 4
  %v2070 = vlaneseq
  %v2071 = vshrl.u32 %v2070, 7
  %2073 = vset.pattern.permute.xlu0 %v2071
  %2074 = vperm.xlu0 %2073, %v2069
  %v2075 = vpop.permute.xlu0 %2074
  %v2076 = vperm.slane %v1668, 5
  %v2077 = vlaneseq
  %v2078 = vshrl.u32 %v2077, 7
  %2080 = vset.pattern.permute.xlu0 %v2078
  %2081 = vperm.xlu0 %2080, %v2076
  %v2082 = vpop.permute.xlu0 %2081
  %v2083 = vperm.slane %v1668, 6
  %v2084 = vlaneseq
  %v2085 = vshrl.u32 %v2084, 7
  %2087 = vset.pattern.permute.xlu0 %v2085
  %2088 = vperm.xlu0 %2087, %v2083
  %v2089 = vpop.permute.xlu0 %2088
  %v2090 = vperm.slane %v1668, 7
  %v2091 = vlaneseq
  %v2092 = vshrl.u32 %v2091, 7
  %2094 = vset.pattern.permute.xlu0 %v2092
  %2095 = vperm.xlu0 %2094, %v2090
  %v2096 = vpop.permute.xlu0 %2095
  %v2097 = vadd.f32 %v2033, %v2047
  %v2098 = vadd.f32 %v2034, %v2054
  %v2099 = vadd.f32 %v2035, %v2061
  %v2100 = vadd.f32 %v2036, %v2068
  %v2101 = vadd.f32 %v2037, %v2075
  %v2102 = vadd.f32 %v2038, %v2082
  %v2103 = vadd.f32 %v2039, %v2089
  %v2104 = vadd.f32 %v2040, %v2096
  %v2105 = vsel %vm111, %v2097, -inf
  %2106 = vmax.xlane.f32.xlu0 %v2105
  %v2107 = vpop.xlane.xlu0 %2106
  %v2108 = vsel %vm111, %v2098, -inf
  %2109 = vmax.xlane.f32.xlu0 %v2108
  %v2110 = vpop.xlane.xlu0 %2109
  %v2111 = vsel %vm111, %v2099, -inf
  %2112 = vmax.xlane.f32.xlu0 %v2111
  %v2113 = vpop.xlane.xlu0 %2112
  %v2114 = vsel %vm111, %v2100, -inf
  %2115 = vmax.xlane.f32.xlu0 %v2114
  %v2116 = vpop.xlane.xlu0 %2115
  %v2117 = vsel %vm111, %v2101, -inf
  %2118 = vmax.xlane.f32.xlu0 %v2117
  %v2119 = vpop.xlane.xlu0 %2118
  %v2120 = vsel %vm111, %v2102, -inf
  %2121 = vmax.xlane.f32.xlu0 %v2120
  %v2122 = vpop.xlane.xlu0 %2121
  %v2123 = vsel %vm111, %v2103, -inf
  %2124 = vmax.xlane.f32.xlu0 %v2123
  %v2125 = vpop.xlane.xlu0 %2124
  %v2126 = vsel %vm111, %v2104, -inf
  %2127 = vmax.xlane.f32.xlu0 %v2126
  %v2128 = vpop.xlane.xlu0 %2127
  %v2129 = vsub.f32 %v2097, %v2107
  %v2130 = vsub.f32 %v2098, %v2110
  %v2131 = vsub.f32 %v2099, %v2113
  %v2132 = vsub.f32 %v2100, %v2116
  %v2133 = vsub.f32 %v2101, %v2119
  %v2134 = vsub.f32 %v2102, %v2122
  %v2135 = vsub.f32 %v2103, %v2125
  %v2136 = vsub.f32 %v2104, %v2128
  %v2137 = vmul.f32 %v2129, 1.442695
  %v2138 = vpow.pop %v2137
  %v2139 = vmul.f32 %v2130, 1.442695
  %v2140 = vpow.pop %v2139
  %v2141 = vmul.f32 %v2131, 1.442695
  %v2142 = vpow.pop %v2141
  %v2143 = vmul.f32 %v2132, 1.442695
  %v2144 = vpow.pop %v2143
  %v2145 = vmul.f32 %v2133, 1.442695
  %v2146 = vpow.pop %v2145
  %v2147 = vmul.f32 %v2134, 1.442695
  %v2148 = vpow.pop %v2147
  %v2149 = vmul.f32 %v2135, 1.442695
  %v2150 = vpow.pop %v2149
  %v2151 = vmul.f32 %v2136, 1.442695
  %v2152 = vpow.pop %v2151
  %v2153 = vsel %vm111, %v2138, 0.0
  %2154 = vadd.xlane.f32.xlu0 %v2153
  %v2155 = vpop.xlane.xlu0 %2154
  %v2156 = vsel %vm111, %v2140, 0.0
  %2157 = vadd.xlane.f32.xlu0 %v2156
  %v2158 = vpop.xlane.xlu0 %2157
  %v2159 = vsel %vm111, %v2142, 0.0
  %2160 = vadd.xlane.f32.xlu0 %v2159
  %v2161 = vpop.xlane.xlu0 %2160
  %v2162 = vsel %vm111, %v2144, 0.0
  %2163 = vadd.xlane.f32.xlu0 %v2162
  %v2164 = vpop.xlane.xlu0 %2163
  %v2165 = vsel %vm111, %v2146, 0.0
  %2166 = vadd.xlane.f32.xlu0 %v2165
  %v2167 = vpop.xlane.xlu0 %2166
  %v2168 = vsel %vm111, %v2148, 0.0
  %2169 = vadd.xlane.f32.xlu0 %v2168
  %v2170 = vpop.xlane.xlu0 %2169
  %v2171 = vsel %vm111, %v2150, 0.0
  %2172 = vadd.xlane.f32.xlu0 %v2171
  %v2173 = vpop.xlane.xlu0 %2172
  %v2174 = vsel %vm111, %v2152, 0.0
  %2175 = vadd.xlane.f32.xlu0 %v2174
  %v2176 = vpop.xlane.xlu0 %2175
  %v2177 = vlog2.pop %v2155
  %v2178 = vmul.f32 %v2177, 0.6931472
  %v2179 = vlog2.pop %v2158
  %v2180 = vmul.f32 %v2179, 0.6931472
  %v2181 = vlog2.pop %v2161
  %v2182 = vmul.f32 %v2181, 0.6931472
  %v2183 = vlog2.pop %v2164
  %v2184 = vmul.f32 %v2183, 0.6931472
  %v2185 = vlog2.pop %v2167
  %v2186 = vmul.f32 %v2185, 0.6931472
  %v2187 = vlog2.pop %v2170
  %v2188 = vmul.f32 %v2187, 0.6931472
  %v2189 = vlog2.pop %v2173
  %v2190 = vmul.f32 %v2189, 0.6931472
  %v2191 = vlog2.pop %v2176
  %v2192 = vmul.f32 %v2191, 0.6931472
  %v2193 = vadd.f32 %v2107, %v2178
  %v2194 = vadd.f32 %v2110, %v2180
  %v2195 = vadd.f32 %v2113, %v2182
  %v2196 = vadd.f32 %v2116, %v2184
  %v2197 = vadd.f32 %v2119, %v2186
  %v2198 = vadd.f32 %v2122, %v2188
  %v2199 = vadd.f32 %v2125, %v2190
  %v2200 = vadd.f32 %v2128, %v2192
  %v2209 = vperm.slane %v2193, %v126
  %v2210 = vperm.slane %v2194, %v126
  %v2211 = vperm.slane %v2195, %v126
  %v2212 = vperm.slane %v2196, %v126
  %v2213 = vperm.slane %v2197, %v126
  %v2214 = vperm.slane %v2198, %v126
  %v2215 = vperm.slane %v2199, %v126
  %v2216 = vperm.slane %v2200, %v126
  %v2217 = vsel %vm460, %v2210, %v2209
  %v2218 = vsel %vm462, %v2211, %v2217
  %v2219 = vsel %vm464, %v2212, %v2218
  %v2220 = vsel %vm466, %v2213, %v2219
  %v2221 = vsel %vm468, %v2214, %v2220
  %v2222 = vsel %vm470, %v2215, %v2221
  %v2223 = vsel %vm472, %v2216, %v2222
  %v2225 = vsel %vm1940, %v2223, %v2008
  %2226 = vst.msk [vmem:[#allocation4] sm:$0xff] %vm111, %v2225
  %s2227 = scalar_lea.vmem %s4, 24
  %v2228 = vld [vmem:[%s2227] sm:$0xff]
  %2229 = vset.pattern.permute.xlu0 0
  %2230 = vperm.xlu0 %2229, %v2228
  %v2231 = vpop.permute.xlu0 %2230
  %vm2232 = vcmp.eq.s32.totalorder %v126, %v2231
  %v2233 = vsel %vm2232, 1, 0
  %v2234 = vcvt.s32.f32 %v2233
  %v2236 = vrot.slane %v2234, 1
  %v2237 = vrot.slane %v2234, 2
  %v2238 = vrot.slane %v2234, 3
  %v2239 = vrot.slane %v2234, 4
  %v2240 = vrot.slane %v2234, 5
  %v2241 = vrot.slane %v2234, 6
  %v2242 = vrot.slane %v2234, 7
  %v2243 = vperm.slane %v2234, 0
  %v2244 = vperm.slane %v2236, 0
  %v2245 = vperm.slane %v2237, 0
  %v2246 = vperm.slane %v2238, 0
  %v2247 = vperm.slane %v2239, 0
  %v2248 = vperm.slane %v2240, 0
  %v2249 = vperm.slane %v2241, 0
  %v2250 = vperm.slane %v2242, 0
  %v2259 = vmul.f32 %v121, %v2243
  %v2260 = vmul.f32 %v121, %v2244
  %v2261 = vmul.f32 %v121, %v2245
  %v2262 = vmul.f32 %v121, %v2246
  %v2263 = vmul.f32 %v121, %v2247
  %v2264 = vmul.f32 %v121, %v2248
  %v2265 = vmul.f32 %v121, %v2249
  %v2266 = vmul.f32 %v121, %v2250
  %v2267 = vsel %vm111, %v2259, 0.0
  %2268 = vadd.xlane.f32.xlu0 %v2267
  %v2269 = vpop.xlane.xlu0 %2268
  %v2270 = vsel %vm111, %v2260, 0.0
  %2271 = vadd.xlane.f32.xlu0 %v2270
  %v2272 = vpop.xlane.xlu0 %2271
  %v2273 = vsel %vm111, %v2261, 0.0
  %2274 = vadd.xlane.f32.xlu0 %v2273
  %v2275 = vpop.xlane.xlu0 %2274
  %v2276 = vsel %vm111, %v2262, 0.0
  %2277 = vadd.xlane.f32.xlu0 %v2276
  %v2278 = vpop.xlane.xlu0 %2277
  %v2279 = vsel %vm111, %v2263, 0.0
  %2280 = vadd.xlane.f32.xlu0 %v2279
  %v2281 = vpop.xlane.xlu0 %2280
  %v2282 = vsel %vm111, %v2264, 0.0
  %2283 = vadd.xlane.f32.xlu0 %v2282
  %v2284 = vpop.xlane.xlu0 %2283
  %v2285 = vsel %vm111, %v2265, 0.0
  %2286 = vadd.xlane.f32.xlu0 %v2285
  %v2287 = vpop.xlane.xlu0 %2286
  %v2288 = vsel %vm111, %v2266, 0.0
  %2289 = vadd.xlane.f32.xlu0 %v2288
  %v2290 = vpop.xlane.xlu0 %2289
  %v2292 = vperm.slane %v1666, 0
  %v2293 = vlaneseq
  %v2294 = vshrl.u32 %v2293, 7
  %2296 = vset.pattern.permute.xlu0 %v2294
  %2297 = vperm.xlu0 %2296, %v2292
  %v2298 = vpop.permute.xlu0 %2297
  %v2299 = vperm.slane %v1666, 1
  %v2300 = vlaneseq
  %v2301 = vshrl.u32 %v2300, 7
  %2303 = vset.pattern.permute.xlu0 %v2301
  %2304 = vperm.xlu0 %2303, %v2299
  %v2305 = vpop.permute.xlu0 %2304
  %v2306 = vperm.slane %v1666, 2
  %v2307 = vlaneseq
  %v2308 = vshrl.u32 %v2307, 7
  %2310 = vset.pattern.permute.xlu0 %v2308
  %2311 = vperm.xlu0 %2310, %v2306
  %v2312 = vpop.permute.xlu0 %2311
  %v2313 = vperm.slane %v1666, 3
  %v2314 = vlaneseq
  %v2315 = vshrl.u32 %v2314, 7
  %2317 = vset.pattern.permute.xlu0 %v2315
  %2318 = vperm.xlu0 %2317, %v2313
  %v2319 = vpop.permute.xlu0 %2318
  %v2320 = vperm.slane %v1666, 4
  %v2321 = vlaneseq
  %v2322 = vshrl.u32 %v2321, 7
  %2324 = vset.pattern.permute.xlu0 %v2322
  %2325 = vperm.xlu0 %2324, %v2320
  %v2326 = vpop.permute.xlu0 %2325
  %v2327 = vperm.slane %v1666, 5
  %v2328 = vlaneseq
  %v2329 = vshrl.u32 %v2328, 7
  %2331 = vset.pattern.permute.xlu0 %v2329
  %2332 = vperm.xlu0 %2331, %v2327
  %v2333 = vpop.permute.xlu0 %2332
  %v2334 = vperm.slane %v1666, 6
  %v2335 = vlaneseq
  %v2336 = vshrl.u32 %v2335, 7
  %2338 = vset.pattern.permute.xlu0 %v2336
  %2339 = vperm.xlu0 %2338, %v2334
  %v2340 = vpop.permute.xlu0 %2339
  %v2341 = vperm.slane %v1666, 7
  %v2342 = vlaneseq
  %v2343 = vshrl.u32 %v2342, 7
  %2345 = vset.pattern.permute.xlu0 %v2343
  %2346 = vperm.xlu0 %2345, %v2341
  %v2347 = vpop.permute.xlu0 %2346
  %v2356 = vmul.f32 %v2269, %v2298
  %v2357 = vmul.f32 %v2272, %v2305
  %v2358 = vmul.f32 %v2275, %v2312
  %v2359 = vmul.f32 %v2278, %v2319
  %v2360 = vmul.f32 %v2281, %v2326
  %v2361 = vmul.f32 %v2284, %v2333
  %v2362 = vmul.f32 %v2287, %v2340
  %v2363 = vmul.f32 %v2290, %v2347
  %2372 = vset.pattern.permute.xlu0 0
  %2373 = vperm.xlu0 %2372, %v2356
  %v2374 = vpop.permute.xlu0 %2373
  %2375 = vset.pattern.permute.xlu0 0
  %2376 = vperm.xlu0 %2375, %v2357
  %v2377 = vpop.permute.xlu0 %2376
  %2378 = vset.pattern.permute.xlu0 0
  %2379 = vperm.xlu0 %2378, %v2358
  %v2380 = vpop.permute.xlu0 %2379
  %2381 = vset.pattern.permute.xlu0 0
  %2382 = vperm.xlu0 %2381, %v2359
  %v2383 = vpop.permute.xlu0 %2382
  %2384 = vset.pattern.permute.xlu0 0
  %2385 = vperm.xlu0 %2384, %v2360
  %v2386 = vpop.permute.xlu0 %2385
  %2387 = vset.pattern.permute.xlu0 0
  %2388 = vperm.xlu0 %2387, %v2361
  %v2389 = vpop.permute.xlu0 %2388
  %2390 = vset.pattern.permute.xlu0 0
  %2391 = vperm.xlu0 %2390, %v2362
  %v2392 = vpop.permute.xlu0 %2391
  %2393 = vset.pattern.permute.xlu0 0
  %2394 = vperm.xlu0 %2393, %v2363
  %v2395 = vpop.permute.xlu0 %2394
  %v2396 = vperm.slane %v2374, %v126
  %v2397 = vperm.slane %v2377, %v126
  %v2398 = vperm.slane %v2380, %v126
  %v2399 = vperm.slane %v2383, %v126
  %v2400 = vperm.slane %v2386, %v126
  %v2401 = vperm.slane %v2389, %v126
  %v2402 = vperm.slane %v2392, %v126
  %v2403 = vperm.slane %v2395, %v126
  %v2404 = vsel %vm460, %v2397, %v2396
  %v2405 = vsel %vm462, %v2398, %v2404
  %v2406 = vsel %vm464, %v2399, %v2405
  %v2407 = vsel %vm466, %v2400, %v2406
  %v2408 = vsel %vm468, %v2401, %v2407
  %v2409 = vsel %vm470, %v2402, %v2408
  %v2410 = vsel %vm472, %v2403, %v2409
  %v2412 = vsel %vm111, %v2410, 0.0
  %2413 = vadd.xlane.f32.xlu0 %v2412
  %v2414 = vpop.xlane.xlu0 %2413
  %v2415 = vmul.f32 %v1668, %v2234
  %v2416 = vsel %vm111, %v2415, 0.0
  %2417 = vadd.xlane.f32.xlu0 %v2416
  %v2418 = vpop.xlane.xlu0 %2417
  %v2419 = vadd.f32 %v2414, %v2418
  %v2420 = vcvt.s32.f32 %v1936
  %v2421 = vmul.f32 %v2419, %v2420
  %v2422 = vadd.f32 %v1665, %v2421
  %v2423 = vsel %vm1940, %v2234, %v1666
  %s2424 = scalar_lea.vmem [#allocation2], 32
  %v2425 = vld [vmem:[%s2424] sm:$0xff]
  %vm2426 = vcmp.gt.s32.totalorder %v124, 4
  %v2427 = vld [vmem:[#allocation3] sm:$0xff]
  %v2429 = vrot.slane %v2427, 1
  %v2430 = vrot.slane %v2427, 2
  %v2431 = vrot.slane %v2427, 3
  %v2432 = vrot.slane %v2427, 4
  %v2433 = vrot.slane %v2427, 5
  %v2434 = vrot.slane %v2427, 6
  %v2435 = vrot.slane %v2427, 7
  %v2436 = vperm.slane %v2427, 0
  %v2437 = vperm.slane %v2429, 0
  %v2438 = vperm.slane %v2430, 0
  %v2439 = vperm.slane %v2431, 0
  %v2440 = vperm.slane %v2432, 0
  %v2441 = vperm.slane %v2433, 0
  %v2442 = vperm.slane %v2434, 0
  %v2443 = vperm.slane %v2435, 0
  %v2452 = vadd.f32 %v2436, %v120
  %v2453 = vadd.f32 %v2437, %v120
  %v2454 = vadd.f32 %v2438, %v120
  %v2455 = vadd.f32 %v2439, %v120
  %v2456 = vadd.f32 %v2440, %v120
  %v2457 = vadd.f32 %v2441, %v120
  %v2458 = vadd.f32 %v2442, %v120
  %v2459 = vadd.f32 %v2443, %v120
  %v2460 = vsel %vm111, %v2452, -inf
  %2461 = vmax.xlane.f32.xlu0 %v2460
  %v2462 = vpop.xlane.xlu0 %2461
  %v2463 = vsel %vm111, %v2453, -inf
  %2464 = vmax.xlane.f32.xlu0 %v2463
  %v2465 = vpop.xlane.xlu0 %2464
  %v2466 = vsel %vm111, %v2454, -inf
  %2467 = vmax.xlane.f32.xlu0 %v2466
  %v2468 = vpop.xlane.xlu0 %2467
  %v2469 = vsel %vm111, %v2455, -inf
  %2470 = vmax.xlane.f32.xlu0 %v2469
  %v2471 = vpop.xlane.xlu0 %2470
  %v2472 = vsel %vm111, %v2456, -inf
  %2473 = vmax.xlane.f32.xlu0 %v2472
  %v2474 = vpop.xlane.xlu0 %2473
  %v2475 = vsel %vm111, %v2457, -inf
  %2476 = vmax.xlane.f32.xlu0 %v2475
  %v2477 = vpop.xlane.xlu0 %2476
  %v2478 = vsel %vm111, %v2458, -inf
  %2479 = vmax.xlane.f32.xlu0 %v2478
  %v2480 = vpop.xlane.xlu0 %2479
  %v2481 = vsel %vm111, %v2459, -inf
  %2482 = vmax.xlane.f32.xlu0 %v2481
  %v2483 = vpop.xlane.xlu0 %2482
  %vm2484 = vcmp.ge.f32.partialorder %v2452, %v2462
  %vm2485 = vcmp.ge.f32.partialorder %v2453, %v2465
  %vm2486 = vcmp.ge.f32.partialorder %v2454, %v2468
  %vm2487 = vcmp.ge.f32.partialorder %v2455, %v2471
  %vm2488 = vcmp.ge.f32.partialorder %v2456, %v2474
  %vm2489 = vcmp.ge.f32.partialorder %v2457, %v2477
  %vm2490 = vcmp.ge.f32.partialorder %v2458, %v2480
  %vm2491 = vcmp.ge.f32.partialorder %v2459, %v2483
  %v2492 = vsel %vm2484, %v126, 8
  %v2493 = vsel %vm2485, %v126, 8
  %v2494 = vsel %vm2486, %v126, 8
  %v2495 = vsel %vm2487, %v126, 8
  %v2496 = vsel %vm2488, %v126, 8
  %v2497 = vsel %vm2489, %v126, 8
  %v2498 = vsel %vm2490, %v126, 8
  %v2499 = vsel %vm2491, %v126, 8
  %v2500 = vsel %vm111, %v2492, 2147483647
  %v2501 = vand.u32 %v2500, 65535
  %v2502 = vshra.s32 %v2500, 16
  %v2503 = vcvt.s32.f32 %v2501
  %v2504 = vcvt.s32.f32 %v2502
  %2505 = vmin.xlane.f32.xlu0 %v2504
  %v2506 = vpop.xlane.xlu0 %2505
  %vm2507 = vcmp.eq.f32.partialorder %v2504, %v2506
  %v2508 = vsel %vm2507, %v2503, inf
  %2509 = vmin.xlane.f32.xlu0 %v2508
  %v2510 = vpop.xlane.xlu0 %2509
  %v2511 = vcvt.f32.s32 %v2510
  %v2512 = vcvt.f32.s32 %v2506
  %v2513 = vshll.u32 %v2512, 16
  %v2514 = vadd.s32 %v2513, %v2511
  %v2515 = vsel %vm111, %v2493, 2147483647
  %v2516 = vand.u32 %v2515, 65535
  %v2517 = vshra.s32 %v2515, 16
  %v2518 = vcvt.s32.f32 %v2516
  %v2519 = vcvt.s32.f32 %v2517
  %2520 = vmin.xlane.f32.xlu0 %v2519
  %v2521 = vpop.xlane.xlu0 %2520
  %vm2522 = vcmp.eq.f32.partialorder %v2519, %v2521
  %v2523 = vsel %vm2522, %v2518, inf
  %2524 = vmin.xlane.f32.xlu0 %v2523
  %v2525 = vpop.xlane.xlu0 %2524
  %v2526 = vcvt.f32.s32 %v2525
  %v2527 = vcvt.f32.s32 %v2521
  %v2528 = vshll.u32 %v2527, 16
  %v2529 = vadd.s32 %v2528, %v2526
  %v2530 = vsel %vm111, %v2494, 2147483647
  %v2531 = vand.u32 %v2530, 65535
  %v2532 = vshra.s32 %v2530, 16
  %v2533 = vcvt.s32.f32 %v2531
  %v2534 = vcvt.s32.f32 %v2532
  %2535 = vmin.xlane.f32.xlu0 %v2534
  %v2536 = vpop.xlane.xlu0 %2535
  %vm2537 = vcmp.eq.f32.partialorder %v2534, %v2536
  %v2538 = vsel %vm2537, %v2533, inf
  %2539 = vmin.xlane.f32.xlu0 %v2538
  %v2540 = vpop.xlane.xlu0 %2539
  %v2541 = vcvt.f32.s32 %v2540
  %v2542 = vcvt.f32.s32 %v2536
  %v2543 = vshll.u32 %v2542, 16
  %v2544 = vadd.s32 %v2543, %v2541
  %v2545 = vsel %vm111, %v2495, 2147483647
  %v2546 = vand.u32 %v2545, 65535
  %v2547 = vshra.s32 %v2545, 16
  %v2548 = vcvt.s32.f32 %v2546
  %v2549 = vcvt.s32.f32 %v2547
  %2550 = vmin.xlane.f32.xlu0 %v2549
  %v2551 = vpop.xlane.xlu0 %2550
  %vm2552 = vcmp.eq.f32.partialorder %v2549, %v2551
  %v2553 = vsel %vm2552, %v2548, inf
  %2554 = vmin.xlane.f32.xlu0 %v2553
  %v2555 = vpop.xlane.xlu0 %2554
  %v2556 = vcvt.f32.s32 %v2555
  %v2557 = vcvt.f32.s32 %v2551
  %v2558 = vshll.u32 %v2557, 16
  %v2559 = vadd.s32 %v2558, %v2556
  %v2560 = vsel %vm111, %v2496, 2147483647
  %v2561 = vand.u32 %v2560, 65535
  %v2562 = vshra.s32 %v2560, 16
  %v2563 = vcvt.s32.f32 %v2561
  %v2564 = vcvt.s32.f32 %v2562
  %2565 = vmin.xlane.f32.xlu0 %v2564
  %v2566 = vpop.xlane.xlu0 %2565
  %vm2567 = vcmp.eq.f32.partialorder %v2564, %v2566
  %v2568 = vsel %vm2567, %v2563, inf
  %2569 = vmin.xlane.f32.xlu0 %v2568
  %v2570 = vpop.xlane.xlu0 %2569
  %v2571 = vcvt.f32.s32 %v2570
  %v2572 = vcvt.f32.s32 %v2566
  %v2573 = vshll.u32 %v2572, 16
  %v2574 = vadd.s32 %v2573, %v2571
  %v2575 = vsel %vm111, %v2497, 2147483647
  %v2576 = vand.u32 %v2575, 65535
  %v2577 = vshra.s32 %v2575, 16
  %v2578 = vcvt.s32.f32 %v2576
  %v2579 = vcvt.s32.f32 %v2577
  %2580 = vmin.xlane.f32.xlu0 %v2579
  %v2581 = vpop.xlane.xlu0 %2580
  %vm2582 = vcmp.eq.f32.partialorder %v2579, %v2581
  %v2583 = vsel %vm2582, %v2578, inf
  %2584 = vmin.xlane.f32.xlu0 %v2583
  %v2585 = vpop.xlane.xlu0 %2584
  %v2586 = vcvt.f32.s32 %v2585
  %v2587 = vcvt.f32.s32 %v2581
  %v2588 = vshll.u32 %v2587, 16
  %v2589 = vadd.s32 %v2588, %v2586
  %v2590 = vsel %vm111, %v2498, 2147483647
  %v2591 = vand.u32 %v2590, 65535
  %v2592 = vshra.s32 %v2590, 16
  %v2593 = vcvt.s32.f32 %v2591
  %v2594 = vcvt.s32.f32 %v2592
  %2595 = vmin.xlane.f32.xlu0 %v2594
  %v2596 = vpop.xlane.xlu0 %2595
  %vm2597 = vcmp.eq.f32.partialorder %v2594, %v2596
  %v2598 = vsel %vm2597, %v2593, inf
  %2599 = vmin.xlane.f32.xlu0 %v2598
  %v2600 = vpop.xlane.xlu0 %2599
  %v2601 = vcvt.f32.s32 %v2600
  %v2602 = vcvt.f32.s32 %v2596
  %v2603 = vshll.u32 %v2602, 16
  %v2604 = vadd.s32 %v2603, %v2601
  %v2605 = vsel %vm111, %v2499, 2147483647
  %v2606 = vand.u32 %v2605, 65535
  %v2607 = vshra.s32 %v2605, 16
  %v2608 = vcvt.s32.f32 %v2606
  %v2609 = vcvt.s32.f32 %v2607
  %2610 = vmin.xlane.f32.xlu0 %v2609
  %v2611 = vpop.xlane.xlu0 %2610
  %vm2612 = vcmp.eq.f32.partialorder %v2609, %v2611
  %v2613 = vsel %vm2612, %v2608, inf
  %2614 = vmin.xlane.f32.xlu0 %v2613
  %v2615 = vpop.xlane.xlu0 %2614
  %v2616 = vcvt.f32.s32 %v2615
  %v2617 = vcvt.f32.s32 %v2611
  %v2618 = vshll.u32 %v2617, 16
  %v2619 = vadd.s32 %v2618, %v2616
  %v2621 = vperm.slane %v2425, 0
  %v2622 = vlaneseq
  %v2623 = vshrl.u32 %v2622, 7
  %2625 = vset.pattern.permute.xlu0 %v2623
  %2626 = vperm.xlu0 %2625, %v2621
  %v2627 = vpop.permute.xlu0 %2626
  %v2628 = vperm.slane %v2425, 1
  %v2629 = vlaneseq
  %v2630 = vshrl.u32 %v2629, 7
  %2632 = vset.pattern.permute.xlu0 %v2630
  %2633 = vperm.xlu0 %2632, %v2628
  %v2634 = vpop.permute.xlu0 %2633
  %v2635 = vperm.slane %v2425, 2
  %v2636 = vlaneseq
  %v2637 = vshrl.u32 %v2636, 7
  %2639 = vset.pattern.permute.xlu0 %v2637
  %2640 = vperm.xlu0 %2639, %v2635
  %v2641 = vpop.permute.xlu0 %2640
  %v2642 = vperm.slane %v2425, 3
  %v2643 = vlaneseq
  %v2644 = vshrl.u32 %v2643, 7
  %2646 = vset.pattern.permute.xlu0 %v2644
  %2647 = vperm.xlu0 %2646, %v2642
  %v2648 = vpop.permute.xlu0 %2647
  %v2649 = vperm.slane %v2425, 4
  %v2650 = vlaneseq
  %v2651 = vshrl.u32 %v2650, 7
  %2653 = vset.pattern.permute.xlu0 %v2651
  %2654 = vperm.xlu0 %2653, %v2649
  %v2655 = vpop.permute.xlu0 %2654
  %v2656 = vperm.slane %v2425, 5
  %v2657 = vlaneseq
  %v2658 = vshrl.u32 %v2657, 7
  %2660 = vset.pattern.permute.xlu0 %v2658
  %2661 = vperm.xlu0 %2660, %v2656
  %v2662 = vpop.permute.xlu0 %2661
  %v2663 = vperm.slane %v2425, 6
  %v2664 = vlaneseq
  %v2665 = vshrl.u32 %v2664, 7
  %2667 = vset.pattern.permute.xlu0 %v2665
  %2668 = vperm.xlu0 %2667, %v2663
  %v2669 = vpop.permute.xlu0 %2668
  %v2670 = vperm.slane %v2425, 7
  %v2671 = vlaneseq
  %v2672 = vshrl.u32 %v2671, 7
  %2674 = vset.pattern.permute.xlu0 %v2672
  %2675 = vperm.xlu0 %2674, %v2670
  %v2676 = vpop.permute.xlu0 %2675
  %v2685 = vadd.f32 %v2462, %v2627
  %v2686 = vadd.f32 %v2465, %v2634
  %v2687 = vadd.f32 %v2468, %v2641
  %v2688 = vadd.f32 %v2471, %v2648
  %v2689 = vadd.f32 %v2474, %v2655
  %v2690 = vadd.f32 %v2477, %v2662
  %v2691 = vadd.f32 %v2480, %v2669
  %v2692 = vadd.f32 %v2483, %v2676
  %v2693 = vsel %vm2426, 1, 0
  %2694 = vset.pattern.permute.xlu0 0
  %2695 = vperm.xlu0 %2694, %v2693
  %v2696 = vpop.permute.xlu0 %2695
  %vm2697 = vcmp.eq.s32.totalorder %v2696, 1
  %2706 = vset.pattern.permute.xlu0 0
  %2707 = vperm.xlu0 %2706, %v2685
  %v2708 = vpop.permute.xlu0 %2707
  %2709 = vset.pattern.permute.xlu0 0
  %2710 = vperm.xlu0 %2709, %v2686
  %v2711 = vpop.permute.xlu0 %2710
  %2712 = vset.pattern.permute.xlu0 0
  %2713 = vperm.xlu0 %2712, %v2687
  %v2714 = vpop.permute.xlu0 %2713
  %2715 = vset.pattern.permute.xlu0 0
  %2716 = vperm.xlu0 %2715, %v2688
  %v2717 = vpop.permute.xlu0 %2716
  %2718 = vset.pattern.permute.xlu0 0
  %2719 = vperm.xlu0 %2718, %v2689
  %v2720 = vpop.permute.xlu0 %2719
  %2721 = vset.pattern.permute.xlu0 0
  %2722 = vperm.xlu0 %2721, %v2690
  %v2723 = vpop.permute.xlu0 %2722
  %2724 = vset.pattern.permute.xlu0 0
  %2725 = vperm.xlu0 %2724, %v2691
  %v2726 = vpop.permute.xlu0 %2725
  %2727 = vset.pattern.permute.xlu0 0
  %2728 = vperm.xlu0 %2727, %v2692
  %v2729 = vpop.permute.xlu0 %2728
  %v2730 = vperm.slane %v2708, %v126
  %v2731 = vperm.slane %v2711, %v126
  %v2732 = vperm.slane %v2714, %v126
  %v2733 = vperm.slane %v2717, %v126
  %v2734 = vperm.slane %v2720, %v126
  %v2735 = vperm.slane %v2723, %v126
  %v2736 = vperm.slane %v2726, %v126
  %v2737 = vperm.slane %v2729, %v126
  %v2738 = vsel %vm460, %v2731, %v2730
  %v2739 = vsel %vm462, %v2732, %v2738
  %v2740 = vsel %vm464, %v2733, %v2739
  %v2741 = vsel %vm466, %v2734, %v2740
  %v2742 = vsel %vm468, %v2735, %v2741
  %v2743 = vsel %vm470, %v2736, %v2742
  %v2744 = vsel %vm472, %v2737, %v2743
  %v2746 = vsel %vm2697, %v2744, %v2427
  %2747 = vst.msk [vmem:[#allocation3] sm:$0xff] %vm111, %v2746
  %v2748 = vperm.slane %v2514, %v126
  %v2749 = vperm.slane %v2529, %v126
  %v2750 = vperm.slane %v2544, %v126
  %v2751 = vperm.slane %v2559, %v126
  %v2752 = vperm.slane %v2574, %v126
  %v2753 = vperm.slane %v2589, %v126
  %v2754 = vperm.slane %v2604, %v126
  %v2755 = vperm.slane %v2619, %v126
  %v2756 = vsel %vm460, %v2749, %v2748
  %v2757 = vsel %vm462, %v2750, %v2756
  %v2758 = vsel %vm464, %v2751, %v2757
  %v2759 = vsel %vm466, %v2752, %v2758
  %v2760 = vsel %vm468, %v2753, %v2759
  %v2761 = vsel %vm470, %v2754, %v2760
  %v2762 = vsel %vm472, %v2755, %v2761
  %s2763 = scalar_lea.vmem %s10, 32
  %2764 = vst.msk [vmem:[%s2763] sm:$0xff] %vm111, %v2762
  %v2765 = vld [vmem:[#allocation4] sm:$0xff]
  %v2767 = vrot.slane %v2765, 1
  %v2768 = vrot.slane %v2765, 2
  %v2769 = vrot.slane %v2765, 3
  %v2770 = vrot.slane %v2765, 4
  %v2771 = vrot.slane %v2765, 5
  %v2772 = vrot.slane %v2765, 6
  %v2773 = vrot.slane %v2765, 7
  %v2774 = vperm.slane %v2765, 0
  %v2775 = vperm.slane %v2767, 0
  %v2776 = vperm.slane %v2768, 0
  %v2777 = vperm.slane %v2769, 0
  %v2778 = vperm.slane %v2770, 0
  %v2779 = vperm.slane %v2771, 0
  %v2780 = vperm.slane %v2772, 0
  %v2781 = vperm.slane %v2773, 0
  %v2790 = vadd.f32 %v2774, %v120
  %v2791 = vadd.f32 %v2775, %v120
  %v2792 = vadd.f32 %v2776, %v120
  %v2793 = vadd.f32 %v2777, %v120
  %v2794 = vadd.f32 %v2778, %v120
  %v2795 = vadd.f32 %v2779, %v120
  %v2796 = vadd.f32 %v2780, %v120
  %v2797 = vadd.f32 %v2781, %v120
  %v2798 = vperm.slane %v2425, 0
  %v2799 = vlaneseq
  %v2800 = vshrl.u32 %v2799, 7
  %2802 = vset.pattern.permute.xlu0 %v2800
  %2803 = vperm.xlu0 %2802, %v2798
  %v2804 = vpop.permute.xlu0 %2803
  %v2805 = vperm.slane %v2425, 1
  %v2806 = vlaneseq
  %v2807 = vshrl.u32 %v2806, 7
  %2809 = vset.pattern.permute.xlu0 %v2807
  %2810 = vperm.xlu0 %2809, %v2805
  %v2811 = vpop.permute.xlu0 %2810
  %v2812 = vperm.slane %v2425, 2
  %v2813 = vlaneseq
  %v2814 = vshrl.u32 %v2813, 7
  %2816 = vset.pattern.permute.xlu0 %v2814
  %2817 = vperm.xlu0 %2816, %v2812
  %v2818 = vpop.permute.xlu0 %2817
  %v2819 = vperm.slane %v2425, 3
  %v2820 = vlaneseq
  %v2821 = vshrl.u32 %v2820, 7
  %2823 = vset.pattern.permute.xlu0 %v2821
  %2824 = vperm.xlu0 %2823, %v2819
  %v2825 = vpop.permute.xlu0 %2824
  %v2826 = vperm.slane %v2425, 4
  %v2827 = vlaneseq
  %v2828 = vshrl.u32 %v2827, 7
  %2830 = vset.pattern.permute.xlu0 %v2828
  %2831 = vperm.xlu0 %2830, %v2826
  %v2832 = vpop.permute.xlu0 %2831
  %v2833 = vperm.slane %v2425, 5
  %v2834 = vlaneseq
  %v2835 = vshrl.u32 %v2834, 7
  %2837 = vset.pattern.permute.xlu0 %v2835
  %2838 = vperm.xlu0 %2837, %v2833
  %v2839 = vpop.permute.xlu0 %2838
  %v2840 = vperm.slane %v2425, 6
  %v2841 = vlaneseq
  %v2842 = vshrl.u32 %v2841, 7
  %2844 = vset.pattern.permute.xlu0 %v2842
  %2845 = vperm.xlu0 %2844, %v2840
  %v2846 = vpop.permute.xlu0 %2845
  %v2847 = vperm.slane %v2425, 7
  %v2848 = vlaneseq
  %v2849 = vshrl.u32 %v2848, 7
  %2851 = vset.pattern.permute.xlu0 %v2849
  %2852 = vperm.xlu0 %2851, %v2847
  %v2853 = vpop.permute.xlu0 %2852
  %v2854 = vadd.f32 %v2790, %v2804
  %v2855 = vadd.f32 %v2791, %v2811
  %v2856 = vadd.f32 %v2792, %v2818
  %v2857 = vadd.f32 %v2793, %v2825
  %v2858 = vadd.f32 %v2794, %v2832
  %v2859 = vadd.f32 %v2795, %v2839
  %v2860 = vadd.f32 %v2796, %v2846
  %v2861 = vadd.f32 %v2797, %v2853
  %v2862 = vsel %vm111, %v2854, -inf
  %2863 = vmax.xlane.f32.xlu0 %v2862
  %v2864 = vpop.xlane.xlu0 %2863
  %v2865 = vsel %vm111, %v2855, -inf
  %2866 = vmax.xlane.f32.xlu0 %v2865
  %v2867 = vpop.xlane.xlu0 %2866
  %v2868 = vsel %vm111, %v2856, -inf
  %2869 = vmax.xlane.f32.xlu0 %v2868
  %v2870 = vpop.xlane.xlu0 %2869
  %v2871 = vsel %vm111, %v2857, -inf
  %2872 = vmax.xlane.f32.xlu0 %v2871
  %v2873 = vpop.xlane.xlu0 %2872
  %v2874 = vsel %vm111, %v2858, -inf
  %2875 = vmax.xlane.f32.xlu0 %v2874
  %v2876 = vpop.xlane.xlu0 %2875
  %v2877 = vsel %vm111, %v2859, -inf
  %2878 = vmax.xlane.f32.xlu0 %v2877
  %v2879 = vpop.xlane.xlu0 %2878
  %v2880 = vsel %vm111, %v2860, -inf
  %2881 = vmax.xlane.f32.xlu0 %v2880
  %v2882 = vpop.xlane.xlu0 %2881
  %v2883 = vsel %vm111, %v2861, -inf
  %2884 = vmax.xlane.f32.xlu0 %v2883
  %v2885 = vpop.xlane.xlu0 %2884
  %v2886 = vsub.f32 %v2854, %v2864
  %v2887 = vsub.f32 %v2855, %v2867
  %v2888 = vsub.f32 %v2856, %v2870
  %v2889 = vsub.f32 %v2857, %v2873
  %v2890 = vsub.f32 %v2858, %v2876
  %v2891 = vsub.f32 %v2859, %v2879
  %v2892 = vsub.f32 %v2860, %v2882
  %v2893 = vsub.f32 %v2861, %v2885
  %v2894 = vmul.f32 %v2886, 1.442695
  %v2895 = vpow.pop %v2894
  %v2896 = vmul.f32 %v2887, 1.442695
  %v2897 = vpow.pop %v2896
  %v2898 = vmul.f32 %v2888, 1.442695
  %v2899 = vpow.pop %v2898
  %v2900 = vmul.f32 %v2889, 1.442695
  %v2901 = vpow.pop %v2900
  %v2902 = vmul.f32 %v2890, 1.442695
  %v2903 = vpow.pop %v2902
  %v2904 = vmul.f32 %v2891, 1.442695
  %v2905 = vpow.pop %v2904
  %v2906 = vmul.f32 %v2892, 1.442695
  %v2907 = vpow.pop %v2906
  %v2908 = vmul.f32 %v2893, 1.442695
  %v2909 = vpow.pop %v2908
  %v2910 = vsel %vm111, %v2895, 0.0
  %2911 = vadd.xlane.f32.xlu0 %v2910
  %v2912 = vpop.xlane.xlu0 %2911
  %v2913 = vsel %vm111, %v2897, 0.0
  %2914 = vadd.xlane.f32.xlu0 %v2913
  %v2915 = vpop.xlane.xlu0 %2914
  %v2916 = vsel %vm111, %v2899, 0.0
  %2917 = vadd.xlane.f32.xlu0 %v2916
  %v2918 = vpop.xlane.xlu0 %2917
  %v2919 = vsel %vm111, %v2901, 0.0
  %2920 = vadd.xlane.f32.xlu0 %v2919
  %v2921 = vpop.xlane.xlu0 %2920
  %v2922 = vsel %vm111, %v2903, 0.0
  %2923 = vadd.xlane.f32.xlu0 %v2922
  %v2924 = vpop.xlane.xlu0 %2923
  %v2925 = vsel %vm111, %v2905, 0.0
  %2926 = vadd.xlane.f32.xlu0 %v2925
  %v2927 = vpop.xlane.xlu0 %2926
  %v2928 = vsel %vm111, %v2907, 0.0
  %2929 = vadd.xlane.f32.xlu0 %v2928
  %v2930 = vpop.xlane.xlu0 %2929
  %v2931 = vsel %vm111, %v2909, 0.0
  %2932 = vadd.xlane.f32.xlu0 %v2931
  %v2933 = vpop.xlane.xlu0 %2932
  %v2934 = vlog2.pop %v2912
  %v2935 = vmul.f32 %v2934, 0.6931472
  %v2936 = vlog2.pop %v2915
  %v2937 = vmul.f32 %v2936, 0.6931472
  %v2938 = vlog2.pop %v2918
  %v2939 = vmul.f32 %v2938, 0.6931472
  %v2940 = vlog2.pop %v2921
  %v2941 = vmul.f32 %v2940, 0.6931472
  %v2942 = vlog2.pop %v2924
  %v2943 = vmul.f32 %v2942, 0.6931472
  %v2944 = vlog2.pop %v2927
  %v2945 = vmul.f32 %v2944, 0.6931472
  %v2946 = vlog2.pop %v2930
  %v2947 = vmul.f32 %v2946, 0.6931472
  %v2948 = vlog2.pop %v2933
  %v2949 = vmul.f32 %v2948, 0.6931472
  %v2950 = vadd.f32 %v2864, %v2935
  %v2951 = vadd.f32 %v2867, %v2937
  %v2952 = vadd.f32 %v2870, %v2939
  %v2953 = vadd.f32 %v2873, %v2941
  %v2954 = vadd.f32 %v2876, %v2943
  %v2955 = vadd.f32 %v2879, %v2945
  %v2956 = vadd.f32 %v2882, %v2947
  %v2957 = vadd.f32 %v2885, %v2949
  %v2966 = vperm.slane %v2950, %v126
  %v2967 = vperm.slane %v2951, %v126
  %v2968 = vperm.slane %v2952, %v126
  %v2969 = vperm.slane %v2953, %v126
  %v2970 = vperm.slane %v2954, %v126
  %v2971 = vperm.slane %v2955, %v126
  %v2972 = vperm.slane %v2956, %v126
  %v2973 = vperm.slane %v2957, %v126
  %v2974 = vsel %vm460, %v2967, %v2966
  %v2975 = vsel %vm462, %v2968, %v2974
  %v2976 = vsel %vm464, %v2969, %v2975
  %v2977 = vsel %vm466, %v2970, %v2976
  %v2978 = vsel %vm468, %v2971, %v2977
  %v2979 = vsel %vm470, %v2972, %v2978
  %v2980 = vsel %vm472, %v2973, %v2979
  %v2982 = vsel %vm2697, %v2980, %v2765
  %2983 = vst.msk [vmem:[#allocation4] sm:$0xff] %vm111, %v2982
  %s2984 = scalar_lea.vmem %s4, 32
  %v2985 = vld [vmem:[%s2984] sm:$0xff]
  %2986 = vset.pattern.permute.xlu0 0
  %2987 = vperm.xlu0 %2986, %v2985
  %v2988 = vpop.permute.xlu0 %2987
  %vm2989 = vcmp.eq.s32.totalorder %v126, %v2988
  %v2990 = vsel %vm2989, 1, 0
  %v2991 = vcvt.s32.f32 %v2990
  %v2993 = vrot.slane %v2991, 1
  %v2994 = vrot.slane %v2991, 2
  %v2995 = vrot.slane %v2991, 3
  %v2996 = vrot.slane %v2991, 4
  %v2997 = vrot.slane %v2991, 5
  %v2998 = vrot.slane %v2991, 6
  %v2999 = vrot.slane %v2991, 7
  %v3000 = vperm.slane %v2991, 0
  %v3001 = vperm.slane %v2993, 0
  %v3002 = vperm.slane %v2994, 0
  %v3003 = vperm.slane %v2995, 0
  %v3004 = vperm.slane %v2996, 0
  %v3005 = vperm.slane %v2997, 0
  %v3006 = vperm.slane %v2998, 0
  %v3007 = vperm.slane %v2999, 0
  %v3016 = vmul.f32 %v121, %v3000
  %v3017 = vmul.f32 %v121, %v3001
  %v3018 = vmul.f32 %v121, %v3002
  %v3019 = vmul.f32 %v121, %v3003
  %v3020 = vmul.f32 %v121, %v3004
  %v3021 = vmul.f32 %v121, %v3005
  %v3022 = vmul.f32 %v121, %v3006
  %v3023 = vmul.f32 %v121, %v3007
  %v3024 = vsel %vm111, %v3016, 0.0
  %3025 = vadd.xlane.f32.xlu0 %v3024
  %v3026 = vpop.xlane.xlu0 %3025
  %v3027 = vsel %vm111, %v3017, 0.0
  %3028 = vadd.xlane.f32.xlu0 %v3027
  %v3029 = vpop.xlane.xlu0 %3028
  %v3030 = vsel %vm111, %v3018, 0.0
  %3031 = vadd.xlane.f32.xlu0 %v3030
  %v3032 = vpop.xlane.xlu0 %3031
  %v3033 = vsel %vm111, %v3019, 0.0
  %3034 = vadd.xlane.f32.xlu0 %v3033
  %v3035 = vpop.xlane.xlu0 %3034
  %v3036 = vsel %vm111, %v3020, 0.0
  %3037 = vadd.xlane.f32.xlu0 %v3036
  %v3038 = vpop.xlane.xlu0 %3037
  %v3039 = vsel %vm111, %v3021, 0.0
  %3040 = vadd.xlane.f32.xlu0 %v3039
  %v3041 = vpop.xlane.xlu0 %3040
  %v3042 = vsel %vm111, %v3022, 0.0
  %3043 = vadd.xlane.f32.xlu0 %v3042
  %v3044 = vpop.xlane.xlu0 %3043
  %v3045 = vsel %vm111, %v3023, 0.0
  %3046 = vadd.xlane.f32.xlu0 %v3045
  %v3047 = vpop.xlane.xlu0 %3046
  %v3049 = vperm.slane %v2423, 0
  %v3050 = vlaneseq
  %v3051 = vshrl.u32 %v3050, 7
  %3053 = vset.pattern.permute.xlu0 %v3051
  %3054 = vperm.xlu0 %3053, %v3049
  %v3055 = vpop.permute.xlu0 %3054
  %v3056 = vperm.slane %v2423, 1
  %v3057 = vlaneseq
  %v3058 = vshrl.u32 %v3057, 7
  %3060 = vset.pattern.permute.xlu0 %v3058
  %3061 = vperm.xlu0 %3060, %v3056
  %v3062 = vpop.permute.xlu0 %3061
  %v3063 = vperm.slane %v2423, 2
  %v3064 = vlaneseq
  %v3065 = vshrl.u32 %v3064, 7
  %3067 = vset.pattern.permute.xlu0 %v3065
  %3068 = vperm.xlu0 %3067, %v3063
  %v3069 = vpop.permute.xlu0 %3068
  %v3070 = vperm.slane %v2423, 3
  %v3071 = vlaneseq
  %v3072 = vshrl.u32 %v3071, 7
  %3074 = vset.pattern.permute.xlu0 %v3072
  %3075 = vperm.xlu0 %3074, %v3070
  %v3076 = vpop.permute.xlu0 %3075
  %v3077 = vperm.slane %v2423, 4
  %v3078 = vlaneseq
  %v3079 = vshrl.u32 %v3078, 7
  %3081 = vset.pattern.permute.xlu0 %v3079
  %3082 = vperm.xlu0 %3081, %v3077
  %v3083 = vpop.permute.xlu0 %3082
  %v3084 = vperm.slane %v2423, 5
  %v3085 = vlaneseq
  %v3086 = vshrl.u32 %v3085, 7
  %3088 = vset.pattern.permute.xlu0 %v3086
  %3089 = vperm.xlu0 %3088, %v3084
  %v3090 = vpop.permute.xlu0 %3089
  %v3091 = vperm.slane %v2423, 6
  %v3092 = vlaneseq
  %v3093 = vshrl.u32 %v3092, 7
  %3095 = vset.pattern.permute.xlu0 %v3093
  %3096 = vperm.xlu0 %3095, %v3091
  %v3097 = vpop.permute.xlu0 %3096
  %v3098 = vperm.slane %v2423, 7
  %v3099 = vlaneseq
  %v3100 = vshrl.u32 %v3099, 7
  %3102 = vset.pattern.permute.xlu0 %v3100
  %3103 = vperm.xlu0 %3102, %v3098
  %v3104 = vpop.permute.xlu0 %3103
  %v3113 = vmul.f32 %v3026, %v3055
  %v3114 = vmul.f32 %v3029, %v3062
  %v3115 = vmul.f32 %v3032, %v3069
  %v3116 = vmul.f32 %v3035, %v3076
  %v3117 = vmul.f32 %v3038, %v3083
  %v3118 = vmul.f32 %v3041, %v3090
  %v3119 = vmul.f32 %v3044, %v3097
  %v3120 = vmul.f32 %v3047, %v3104
  %3129 = vset.pattern.permute.xlu0 0
  %3130 = vperm.xlu0 %3129, %v3113
  %v3131 = vpop.permute.xlu0 %3130
  %3132 = vset.pattern.permute.xlu0 0
  %3133 = vperm.xlu0 %3132, %v3114
  %v3134 = vpop.permute.xlu0 %3133
  %3135 = vset.pattern.permute.xlu0 0
  %3136 = vperm.xlu0 %3135, %v3115
  %v3137 = vpop.permute.xlu0 %3136
  %3138 = vset.pattern.permute.xlu0 0
  %3139 = vperm.xlu0 %3138, %v3116
  %v3140 = vpop.permute.xlu0 %3139
  %3141 = vset.pattern.permute.xlu0 0
  %3142 = vperm.xlu0 %3141, %v3117
  %v3143 = vpop.permute.xlu0 %3142
  %3144 = vset.pattern.permute.xlu0 0
  %3145 = vperm.xlu0 %3144, %v3118
  %v3146 = vpop.permute.xlu0 %3145
  %3147 = vset.pattern.permute.xlu0 0
  %3148 = vperm.xlu0 %3147, %v3119
  %v3149 = vpop.permute.xlu0 %3148
  %3150 = vset.pattern.permute.xlu0 0
  %3151 = vperm.xlu0 %3150, %v3120
  %v3152 = vpop.permute.xlu0 %3151
  %v3153 = vperm.slane %v3131, %v126
  %v3154 = vperm.slane %v3134, %v126
  %v3155 = vperm.slane %v3137, %v126
  %v3156 = vperm.slane %v3140, %v126
  %v3157 = vperm.slane %v3143, %v126
  %v3158 = vperm.slane %v3146, %v126
  %v3159 = vperm.slane %v3149, %v126
  %v3160 = vperm.slane %v3152, %v126
  %v3161 = vsel %vm460, %v3154, %v3153
  %v3162 = vsel %vm462, %v3155, %v3161
  %v3163 = vsel %vm464, %v3156, %v3162
  %v3164 = vsel %vm466, %v3157, %v3163
  %v3165 = vsel %vm468, %v3158, %v3164
  %v3166 = vsel %vm470, %v3159, %v3165
  %v3167 = vsel %vm472, %v3160, %v3166
  %v3169 = vsel %vm111, %v3167, 0.0
  %3170 = vadd.xlane.f32.xlu0 %v3169
  %v3171 = vpop.xlane.xlu0 %3170
  %v3172 = vmul.f32 %v2425, %v2991
  %v3173 = vsel %vm111, %v3172, 0.0
  %3174 = vadd.xlane.f32.xlu0 %v3173
  %v3175 = vpop.xlane.xlu0 %3174
  %v3176 = vadd.f32 %v3171, %v3175
  %v3177 = vcvt.s32.f32 %v2693
  %v3178 = vmul.f32 %v3176, %v3177
  %v3179 = vadd.f32 %v2422, %v3178
  %v3180 = vsel %vm2697, %v2991, %v2423
  %s3181 = scalar_lea.vmem [#allocation2], 40
  %v3182 = vld [vmem:[%s3181] sm:$0xff]
  %vm3183 = vcmp.gt.s32.totalorder %v124, 5
  %v3184 = vld [vmem:[#allocation3] sm:$0xff]
  %v3186 = vrot.slane %v3184, 1
  %v3187 = vrot.slane %v3184, 2
  %v3188 = vrot.slane %v3184, 3
  %v3189 = vrot.slane %v3184, 4
  %v3190 = vrot.slane %v3184, 5
  %v3191 = vrot.slane %v3184, 6
  %v3192 = vrot.slane %v3184, 7
  %v3193 = vperm.slane %v3184, 0
  %v3194 = vperm.slane %v3186, 0
  %v3195 = vperm.slane %v3187, 0
  %v3196 = vperm.slane %v3188, 0
  %v3197 = vperm.slane %v3189, 0
  %v3198 = vperm.slane %v3190, 0
  %v3199 = vperm.slane %v3191, 0
  %v3200 = vperm.slane %v3192, 0
  %v3209 = vadd.f32 %v3193, %v120
  %v3210 = vadd.f32 %v3194, %v120
  %v3211 = vadd.f32 %v3195, %v120
  %v3212 = vadd.f32 %v3196, %v120
  %v3213 = vadd.f32 %v3197, %v120
  %v3214 = vadd.f32 %v3198, %v120
  %v3215 = vadd.f32 %v3199, %v120
  %v3216 = vadd.f32 %v3200, %v120
  %v3217 = vsel %vm111, %v3209, -inf
  %3218 = vmax.xlane.f32.xlu0 %v3217
  %v3219 = vpop.xlane.xlu0 %3218
  %v3220 = vsel %vm111, %v3210, -inf
  %3221 = vmax.xlane.f32.xlu0 %v3220
  %v3222 = vpop.xlane.xlu0 %3221
  %v3223 = vsel %vm111, %v3211, -inf
  %3224 = vmax.xlane.f32.xlu0 %v3223
  %v3225 = vpop.xlane.xlu0 %3224
  %v3226 = vsel %vm111, %v3212, -inf
  %3227 = vmax.xlane.f32.xlu0 %v3226
  %v3228 = vpop.xlane.xlu0 %3227
  %v3229 = vsel %vm111, %v3213, -inf
  %3230 = vmax.xlane.f32.xlu0 %v3229
  %v3231 = vpop.xlane.xlu0 %3230
  %v3232 = vsel %vm111, %v3214, -inf
  %3233 = vmax.xlane.f32.xlu0 %v3232
  %v3234 = vpop.xlane.xlu0 %3233
  %v3235 = vsel %vm111, %v3215, -inf
  %3236 = vmax.xlane.f32.xlu0 %v3235
  %v3237 = vpop.xlane.xlu0 %3236
  %v3238 = vsel %vm111, %v3216, -inf
  %3239 = vmax.xlane.f32.xlu0 %v3238
  %v3240 = vpop.xlane.xlu0 %3239
  %vm3241 = vcmp.ge.f32.partialorder %v3209, %v3219
  %vm3242 = vcmp.ge.f32.partialorder %v3210, %v3222
  %vm3243 = vcmp.ge.f32.partialorder %v3211, %v3225
  %vm3244 = vcmp.ge.f32.partialorder %v3212, %v3228
  %vm3245 = vcmp.ge.f32.partialorder %v3213, %v3231
  %vm3246 = vcmp.ge.f32.partialorder %v3214, %v3234
  %vm3247 = vcmp.ge.f32.partialorder %v3215, %v3237
  %vm3248 = vcmp.ge.f32.partialorder %v3216, %v3240
  %v3249 = vsel %vm3241, %v126, 8
  %v3250 = vsel %vm3242, %v126, 8
  %v3251 = vsel %vm3243, %v126, 8
  %v3252 = vsel %vm3244, %v126, 8
  %v3253 = vsel %vm3245, %v126, 8
  %v3254 = vsel %vm3246, %v126, 8
  %v3255 = vsel %vm3247, %v126, 8
  %v3256 = vsel %vm3248, %v126, 8
  %v3257 = vsel %vm111, %v3249, 2147483647
  %v3258 = vand.u32 %v3257, 65535
  %v3259 = vshra.s32 %v3257, 16
  %v3260 = vcvt.s32.f32 %v3258
  %v3261 = vcvt.s32.f32 %v3259
  %3262 = vmin.xlane.f32.xlu0 %v3261
  %v3263 = vpop.xlane.xlu0 %3262
  %vm3264 = vcmp.eq.f32.partialorder %v3261, %v3263
  %v3265 = vsel %vm3264, %v3260, inf
  %3266 = vmin.xlane.f32.xlu0 %v3265
  %v3267 = vpop.xlane.xlu0 %3266
  %v3268 = vcvt.f32.s32 %v3267
  %v3269 = vcvt.f32.s32 %v3263
  %v3270 = vshll.u32 %v3269, 16
  %v3271 = vadd.s32 %v3270, %v3268
  %v3272 = vsel %vm111, %v3250, 2147483647
  %v3273 = vand.u32 %v3272, 65535
  %v3274 = vshra.s32 %v3272, 16
  %v3275 = vcvt.s32.f32 %v3273
  %v3276 = vcvt.s32.f32 %v3274
  %3277 = vmin.xlane.f32.xlu0 %v3276
  %v3278 = vpop.xlane.xlu0 %3277
  %vm3279 = vcmp.eq.f32.partialorder %v3276, %v3278
  %v3280 = vsel %vm3279, %v3275, inf
  %3281 = vmin.xlane.f32.xlu0 %v3280
  %v3282 = vpop.xlane.xlu0 %3281
  %v3283 = vcvt.f32.s32 %v3282
  %v3284 = vcvt.f32.s32 %v3278
  %v3285 = vshll.u32 %v3284, 16
  %v3286 = vadd.s32 %v3285, %v3283
  %v3287 = vsel %vm111, %v3251, 2147483647
  %v3288 = vand.u32 %v3287, 65535
  %v3289 = vshra.s32 %v3287, 16
  %v3290 = vcvt.s32.f32 %v3288
  %v3291 = vcvt.s32.f32 %v3289
  %3292 = vmin.xlane.f32.xlu0 %v3291
  %v3293 = vpop.xlane.xlu0 %3292
  %vm3294 = vcmp.eq.f32.partialorder %v3291, %v3293
  %v3295 = vsel %vm3294, %v3290, inf
  %3296 = vmin.xlane.f32.xlu0 %v3295
  %v3297 = vpop.xlane.xlu0 %3296
  %v3298 = vcvt.f32.s32 %v3297
  %v3299 = vcvt.f32.s32 %v3293
  %v3300 = vshll.u32 %v3299, 16
  %v3301 = vadd.s32 %v3300, %v3298
  %v3302 = vsel %vm111, %v3252, 2147483647
  %v3303 = vand.u32 %v3302, 65535
  %v3304 = vshra.s32 %v3302, 16
  %v3305 = vcvt.s32.f32 %v3303
  %v3306 = vcvt.s32.f32 %v3304
  %3307 = vmin.xlane.f32.xlu0 %v3306
  %v3308 = vpop.xlane.xlu0 %3307
  %vm3309 = vcmp.eq.f32.partialorder %v3306, %v3308
  %v3310 = vsel %vm3309, %v3305, inf
  %3311 = vmin.xlane.f32.xlu0 %v3310
  %v3312 = vpop.xlane.xlu0 %3311
  %v3313 = vcvt.f32.s32 %v3312
  %v3314 = vcvt.f32.s32 %v3308
  %v3315 = vshll.u32 %v3314, 16
  %v3316 = vadd.s32 %v3315, %v3313
  %v3317 = vsel %vm111, %v3253, 2147483647
  %v3318 = vand.u32 %v3317, 65535
  %v3319 = vshra.s32 %v3317, 16
  %v3320 = vcvt.s32.f32 %v3318
  %v3321 = vcvt.s32.f32 %v3319
  %3322 = vmin.xlane.f32.xlu0 %v3321
  %v3323 = vpop.xlane.xlu0 %3322
  %vm3324 = vcmp.eq.f32.partialorder %v3321, %v3323
  %v3325 = vsel %vm3324, %v3320, inf
  %3326 = vmin.xlane.f32.xlu0 %v3325
  %v3327 = vpop.xlane.xlu0 %3326
  %v3328 = vcvt.f32.s32 %v3327
  %v3329 = vcvt.f32.s32 %v3323
  %v3330 = vshll.u32 %v3329, 16
  %v3331 = vadd.s32 %v3330, %v3328
  %v3332 = vsel %vm111, %v3254, 2147483647
  %v3333 = vand.u32 %v3332, 65535
  %v3334 = vshra.s32 %v3332, 16
  %v3335 = vcvt.s32.f32 %v3333
  %v3336 = vcvt.s32.f32 %v3334
  %3337 = vmin.xlane.f32.xlu0 %v3336
  %v3338 = vpop.xlane.xlu0 %3337
  %vm3339 = vcmp.eq.f32.partialorder %v3336, %v3338
  %v3340 = vsel %vm3339, %v3335, inf
  %3341 = vmin.xlane.f32.xlu0 %v3340
  %v3342 = vpop.xlane.xlu0 %3341
  %v3343 = vcvt.f32.s32 %v3342
  %v3344 = vcvt.f32.s32 %v3338
  %v3345 = vshll.u32 %v3344, 16
  %v3346 = vadd.s32 %v3345, %v3343
  %v3347 = vsel %vm111, %v3255, 2147483647
  %v3348 = vand.u32 %v3347, 65535
  %v3349 = vshra.s32 %v3347, 16
  %v3350 = vcvt.s32.f32 %v3348
  %v3351 = vcvt.s32.f32 %v3349
  %3352 = vmin.xlane.f32.xlu0 %v3351
  %v3353 = vpop.xlane.xlu0 %3352
  %vm3354 = vcmp.eq.f32.partialorder %v3351, %v3353
  %v3355 = vsel %vm3354, %v3350, inf
  %3356 = vmin.xlane.f32.xlu0 %v3355
  %v3357 = vpop.xlane.xlu0 %3356
  %v3358 = vcvt.f32.s32 %v3357
  %v3359 = vcvt.f32.s32 %v3353
  %v3360 = vshll.u32 %v3359, 16
  %v3361 = vadd.s32 %v3360, %v3358
  %v3362 = vsel %vm111, %v3256, 2147483647
  %v3363 = vand.u32 %v3362, 65535
  %v3364 = vshra.s32 %v3362, 16
  %v3365 = vcvt.s32.f32 %v3363
  %v3366 = vcvt.s32.f32 %v3364
  %3367 = vmin.xlane.f32.xlu0 %v3366
  %v3368 = vpop.xlane.xlu0 %3367
  %vm3369 = vcmp.eq.f32.partialorder %v3366, %v3368
  %v3370 = vsel %vm3369, %v3365, inf
  %3371 = vmin.xlane.f32.xlu0 %v3370
  %v3372 = vpop.xlane.xlu0 %3371
  %v3373 = vcvt.f32.s32 %v3372
  %v3374 = vcvt.f32.s32 %v3368
  %v3375 = vshll.u32 %v3374, 16
  %v3376 = vadd.s32 %v3375, %v3373
  %v3378 = vperm.slane %v3182, 0
  %v3379 = vlaneseq
  %v3380 = vshrl.u32 %v3379, 7
  %3382 = vset.pattern.permute.xlu0 %v3380
  %3383 = vperm.xlu0 %3382, %v3378
  %v3384 = vpop.permute.xlu0 %3383
  %v3385 = vperm.slane %v3182, 1
  %v3386 = vlaneseq
  %v3387 = vshrl.u32 %v3386, 7
  %3389 = vset.pattern.permute.xlu0 %v3387
  %3390 = vperm.xlu0 %3389, %v3385
  %v3391 = vpop.permute.xlu0 %3390
  %v3392 = vperm.slane %v3182, 2
  %v3393 = vlaneseq
  %v3394 = vshrl.u32 %v3393, 7
  %3396 = vset.pattern.permute.xlu0 %v3394
  %3397 = vperm.xlu0 %3396, %v3392
  %v3398 = vpop.permute.xlu0 %3397
  %v3399 = vperm.slane %v3182, 3
  %v3400 = vlaneseq
  %v3401 = vshrl.u32 %v3400, 7
  %3403 = vset.pattern.permute.xlu0 %v3401
  %3404 = vperm.xlu0 %3403, %v3399
  %v3405 = vpop.permute.xlu0 %3404
  %v3406 = vperm.slane %v3182, 4
  %v3407 = vlaneseq
  %v3408 = vshrl.u32 %v3407, 7
  %3410 = vset.pattern.permute.xlu0 %v3408
  %3411 = vperm.xlu0 %3410, %v3406
  %v3412 = vpop.permute.xlu0 %3411
  %v3413 = vperm.slane %v3182, 5
  %v3414 = vlaneseq
  %v3415 = vshrl.u32 %v3414, 7
  %3417 = vset.pattern.permute.xlu0 %v3415
  %3418 = vperm.xlu0 %3417, %v3413
  %v3419 = vpop.permute.xlu0 %3418
  %v3420 = vperm.slane %v3182, 6
  %v3421 = vlaneseq
  %v3422 = vshrl.u32 %v3421, 7
  %3424 = vset.pattern.permute.xlu0 %v3422
  %3425 = vperm.xlu0 %3424, %v3420
  %v3426 = vpop.permute.xlu0 %3425
  %v3427 = vperm.slane %v3182, 7
  %v3428 = vlaneseq
  %v3429 = vshrl.u32 %v3428, 7
  %3431 = vset.pattern.permute.xlu0 %v3429
  %3432 = vperm.xlu0 %3431, %v3427
  %v3433 = vpop.permute.xlu0 %3432
  %v3442 = vadd.f32 %v3219, %v3384
  %v3443 = vadd.f32 %v3222, %v3391
  %v3444 = vadd.f32 %v3225, %v3398
  %v3445 = vadd.f32 %v3228, %v3405
  %v3446 = vadd.f32 %v3231, %v3412
  %v3447 = vadd.f32 %v3234, %v3419
  %v3448 = vadd.f32 %v3237, %v3426
  %v3449 = vadd.f32 %v3240, %v3433
  %v3450 = vsel %vm3183, 1, 0
  %3451 = vset.pattern.permute.xlu0 0
  %3452 = vperm.xlu0 %3451, %v3450
  %v3453 = vpop.permute.xlu0 %3452
  %vm3454 = vcmp.eq.s32.totalorder %v3453, 1
  %3463 = vset.pattern.permute.xlu0 0
  %3464 = vperm.xlu0 %3463, %v3442
  %v3465 = vpop.permute.xlu0 %3464
  %3466 = vset.pattern.permute.xlu0 0
  %3467 = vperm.xlu0 %3466, %v3443
  %v3468 = vpop.permute.xlu0 %3467
  %3469 = vset.pattern.permute.xlu0 0
  %3470 = vperm.xlu0 %3469, %v3444
  %v3471 = vpop.permute.xlu0 %3470
  %3472 = vset.pattern.permute.xlu0 0
  %3473 = vperm.xlu0 %3472, %v3445
  %v3474 = vpop.permute.xlu0 %3473
  %3475 = vset.pattern.permute.xlu0 0
  %3476 = vperm.xlu0 %3475, %v3446
  %v3477 = vpop.permute.xlu0 %3476
  %3478 = vset.pattern.permute.xlu0 0
  %3479 = vperm.xlu0 %3478, %v3447
  %v3480 = vpop.permute.xlu0 %3479
  %3481 = vset.pattern.permute.xlu0 0
  %3482 = vperm.xlu0 %3481, %v3448
  %v3483 = vpop.permute.xlu0 %3482
  %3484 = vset.pattern.permute.xlu0 0
  %3485 = vperm.xlu0 %3484, %v3449
  %v3486 = vpop.permute.xlu0 %3485
  %v3487 = vperm.slane %v3465, %v126
  %v3488 = vperm.slane %v3468, %v126
  %v3489 = vperm.slane %v3471, %v126
  %v3490 = vperm.slane %v3474, %v126
  %v3491 = vperm.slane %v3477, %v126
  %v3492 = vperm.slane %v3480, %v126
  %v3493 = vperm.slane %v3483, %v126
  %v3494 = vperm.slane %v3486, %v126
  %v3495 = vsel %vm460, %v3488, %v3487
  %v3496 = vsel %vm462, %v3489, %v3495
  %v3497 = vsel %vm464, %v3490, %v3496
  %v3498 = vsel %vm466, %v3491, %v3497
  %v3499 = vsel %vm468, %v3492, %v3498
  %v3500 = vsel %vm470, %v3493, %v3499
  %v3501 = vsel %vm472, %v3494, %v3500
  %v3503 = vsel %vm3454, %v3501, %v3184
  %3504 = vst.msk [vmem:[#allocation3] sm:$0xff] %vm111, %v3503
  %v3505 = vperm.slane %v3271, %v126
  %v3506 = vperm.slane %v3286, %v126
  %v3507 = vperm.slane %v3301, %v126
  %v3508 = vperm.slane %v3316, %v126
  %v3509 = vperm.slane %v3331, %v126
  %v3510 = vperm.slane %v3346, %v126
  %v3511 = vperm.slane %v3361, %v126
  %v3512 = vperm.slane %v3376, %v126
  %v3513 = vsel %vm460, %v3506, %v3505
  %v3514 = vsel %vm462, %v3507, %v3513
  %v3515 = vsel %vm464, %v3508, %v3514
  %v3516 = vsel %vm466, %v3509, %v3515
  %v3517 = vsel %vm468, %v3510, %v3516
  %v3518 = vsel %vm470, %v3511, %v3517
  %v3519 = vsel %vm472, %v3512, %v3518
  %s3520 = scalar_lea.vmem %s10, 40
  %3521 = vst.msk [vmem:[%s3520] sm:$0xff] %vm111, %v3519
  %v3522 = vld [vmem:[#allocation4] sm:$0xff]
  %v3524 = vrot.slane %v3522, 1
  %v3525 = vrot.slane %v3522, 2
  %v3526 = vrot.slane %v3522, 3
  %v3527 = vrot.slane %v3522, 4
  %v3528 = vrot.slane %v3522, 5
  %v3529 = vrot.slane %v3522, 6
  %v3530 = vrot.slane %v3522, 7
  %v3531 = vperm.slane %v3522, 0
  %v3532 = vperm.slane %v3524, 0
  %v3533 = vperm.slane %v3525, 0
  %v3534 = vperm.slane %v3526, 0
  %v3535 = vperm.slane %v3527, 0
  %v3536 = vperm.slane %v3528, 0
  %v3537 = vperm.slane %v3529, 0
  %v3538 = vperm.slane %v3530, 0
  %v3547 = vadd.f32 %v3531, %v120
  %v3548 = vadd.f32 %v3532, %v120
  %v3549 = vadd.f32 %v3533, %v120
  %v3550 = vadd.f32 %v3534, %v120
  %v3551 = vadd.f32 %v3535, %v120
  %v3552 = vadd.f32 %v3536, %v120
  %v3553 = vadd.f32 %v3537, %v120
  %v3554 = vadd.f32 %v3538, %v120
  %v3555 = vperm.slane %v3182, 0
  %v3556 = vlaneseq
  %v3557 = vshrl.u32 %v3556, 7
  %3559 = vset.pattern.permute.xlu0 %v3557
  %3560 = vperm.xlu0 %3559, %v3555
  %v3561 = vpop.permute.xlu0 %3560
  %v3562 = vperm.slane %v3182, 1
  %v3563 = vlaneseq
  %v3564 = vshrl.u32 %v3563, 7
  %3566 = vset.pattern.permute.xlu0 %v3564
  %3567 = vperm.xlu0 %3566, %v3562
  %v3568 = vpop.permute.xlu0 %3567
  %v3569 = vperm.slane %v3182, 2
  %v3570 = vlaneseq
  %v3571 = vshrl.u32 %v3570, 7
  %3573 = vset.pattern.permute.xlu0 %v3571
  %3574 = vperm.xlu0 %3573, %v3569
  %v3575 = vpop.permute.xlu0 %3574
  %v3576 = vperm.slane %v3182, 3
  %v3577 = vlaneseq
  %v3578 = vshrl.u32 %v3577, 7
  %3580 = vset.pattern.permute.xlu0 %v3578
  %3581 = vperm.xlu0 %3580, %v3576
  %v3582 = vpop.permute.xlu0 %3581
  %v3583 = vperm.slane %v3182, 4
  %v3584 = vlaneseq
  %v3585 = vshrl.u32 %v3584, 7
  %3587 = vset.pattern.permute.xlu0 %v3585
  %3588 = vperm.xlu0 %3587, %v3583
  %v3589 = vpop.permute.xlu0 %3588
  %v3590 = vperm.slane %v3182, 5
  %v3591 = vlaneseq
  %v3592 = vshrl.u32 %v3591, 7
  %3594 = vset.pattern.permute.xlu0 %v3592
  %3595 = vperm.xlu0 %3594, %v3590
  %v3596 = vpop.permute.xlu0 %3595
  %v3597 = vperm.slane %v3182, 6
  %v3598 = vlaneseq
  %v3599 = vshrl.u32 %v3598, 7
  %3601 = vset.pattern.permute.xlu0 %v3599
  %3602 = vperm.xlu0 %3601, %v3597
  %v3603 = vpop.permute.xlu0 %3602
  %v3604 = vperm.slane %v3182, 7
  %v3605 = vlaneseq
  %v3606 = vshrl.u32 %v3605, 7
  %3608 = vset.pattern.permute.xlu0 %v3606
  %3609 = vperm.xlu0 %3608, %v3604
  %v3610 = vpop.permute.xlu0 %3609
  %v3611 = vadd.f32 %v3547, %v3561
  %v3612 = vadd.f32 %v3548, %v3568
  %v3613 = vadd.f32 %v3549, %v3575
  %v3614 = vadd.f32 %v3550, %v3582
  %v3615 = vadd.f32 %v3551, %v3589
  %v3616 = vadd.f32 %v3552, %v3596
  %v3617 = vadd.f32 %v3553, %v3603
  %v3618 = vadd.f32 %v3554, %v3610
  %v3619 = vsel %vm111, %v3611, -inf
  %3620 = vmax.xlane.f32.xlu0 %v3619
  %v3621 = vpop.xlane.xlu0 %3620
  %v3622 = vsel %vm111, %v3612, -inf
  %3623 = vmax.xlane.f32.xlu0 %v3622
  %v3624 = vpop.xlane.xlu0 %3623
  %v3625 = vsel %vm111, %v3613, -inf
  %3626 = vmax.xlane.f32.xlu0 %v3625
  %v3627 = vpop.xlane.xlu0 %3626
  %v3628 = vsel %vm111, %v3614, -inf
  %3629 = vmax.xlane.f32.xlu0 %v3628
  %v3630 = vpop.xlane.xlu0 %3629
  %v3631 = vsel %vm111, %v3615, -inf
  %3632 = vmax.xlane.f32.xlu0 %v3631
  %v3633 = vpop.xlane.xlu0 %3632
  %v3634 = vsel %vm111, %v3616, -inf
  %3635 = vmax.xlane.f32.xlu0 %v3634
  %v3636 = vpop.xlane.xlu0 %3635
  %v3637 = vsel %vm111, %v3617, -inf
  %3638 = vmax.xlane.f32.xlu0 %v3637
  %v3639 = vpop.xlane.xlu0 %3638
  %v3640 = vsel %vm111, %v3618, -inf
  %3641 = vmax.xlane.f32.xlu0 %v3640
  %v3642 = vpop.xlane.xlu0 %3641
  %v3643 = vsub.f32 %v3611, %v3621
  %v3644 = vsub.f32 %v3612, %v3624
  %v3645 = vsub.f32 %v3613, %v3627
  %v3646 = vsub.f32 %v3614, %v3630
  %v3647 = vsub.f32 %v3615, %v3633
  %v3648 = vsub.f32 %v3616, %v3636
  %v3649 = vsub.f32 %v3617, %v3639
  %v3650 = vsub.f32 %v3618, %v3642
  %v3651 = vmul.f32 %v3643, 1.442695
  %v3652 = vpow.pop %v3651
  %v3653 = vmul.f32 %v3644, 1.442695
  %v3654 = vpow.pop %v3653
  %v3655 = vmul.f32 %v3645, 1.442695
  %v3656 = vpow.pop %v3655
  %v3657 = vmul.f32 %v3646, 1.442695
  %v3658 = vpow.pop %v3657
  %v3659 = vmul.f32 %v3647, 1.442695
  %v3660 = vpow.pop %v3659
  %v3661 = vmul.f32 %v3648, 1.442695
  %v3662 = vpow.pop %v3661
  %v3663 = vmul.f32 %v3649, 1.442695
  %v3664 = vpow.pop %v3663
  %v3665 = vmul.f32 %v3650, 1.442695
  %v3666 = vpow.pop %v3665
  %v3667 = vsel %vm111, %v3652, 0.0
  %3668 = vadd.xlane.f32.xlu0 %v3667
  %v3669 = vpop.xlane.xlu0 %3668
  %v3670 = vsel %vm111, %v3654, 0.0
  %3671 = vadd.xlane.f32.xlu0 %v3670
  %v3672 = vpop.xlane.xlu0 %3671
  %v3673 = vsel %vm111, %v3656, 0.0
  %3674 = vadd.xlane.f32.xlu0 %v3673
  %v3675 = vpop.xlane.xlu0 %3674
  %v3676 = vsel %vm111, %v3658, 0.0
  %3677 = vadd.xlane.f32.xlu0 %v3676
  %v3678 = vpop.xlane.xlu0 %3677
  %v3679 = vsel %vm111, %v3660, 0.0
  %3680 = vadd.xlane.f32.xlu0 %v3679
  %v3681 = vpop.xlane.xlu0 %3680
  %v3682 = vsel %vm111, %v3662, 0.0
  %3683 = vadd.xlane.f32.xlu0 %v3682
  %v3684 = vpop.xlane.xlu0 %3683
  %v3685 = vsel %vm111, %v3664, 0.0
  %3686 = vadd.xlane.f32.xlu0 %v3685
  %v3687 = vpop.xlane.xlu0 %3686
  %v3688 = vsel %vm111, %v3666, 0.0
  %3689 = vadd.xlane.f32.xlu0 %v3688
  %v3690 = vpop.xlane.xlu0 %3689
  %v3691 = vlog2.pop %v3669
  %v3692 = vmul.f32 %v3691, 0.6931472
  %v3693 = vlog2.pop %v3672
  %v3694 = vmul.f32 %v3693, 0.6931472
  %v3695 = vlog2.pop %v3675
  %v3696 = vmul.f32 %v3695, 0.6931472
  %v3697 = vlog2.pop %v3678
  %v3698 = vmul.f32 %v3697, 0.6931472
  %v3699 = vlog2.pop %v3681
  %v3700 = vmul.f32 %v3699, 0.6931472
  %v3701 = vlog2.pop %v3684
  %v3702 = vmul.f32 %v3701, 0.6931472
  %v3703 = vlog2.pop %v3687
  %v3704 = vmul.f32 %v3703, 0.6931472
  %v3705 = vlog2.pop %v3690
  %v3706 = vmul.f32 %v3705, 0.6931472
  %v3707 = vadd.f32 %v3621, %v3692
  %v3708 = vadd.f32 %v3624, %v3694
  %v3709 = vadd.f32 %v3627, %v3696
  %v3710 = vadd.f32 %v3630, %v3698
  %v3711 = vadd.f32 %v3633, %v3700
  %v3712 = vadd.f32 %v3636, %v3702
  %v3713 = vadd.f32 %v3639, %v3704
  %v3714 = vadd.f32 %v3642, %v3706
  %v3723 = vperm.slane %v3707, %v126
  %v3724 = vperm.slane %v3708, %v126
  %v3725 = vperm.slane %v3709, %v126
  %v3726 = vperm.slane %v3710, %v126
  %v3727 = vperm.slane %v3711, %v126
  %v3728 = vperm.slane %v3712, %v126
  %v3729 = vperm.slane %v3713, %v126
  %v3730 = vperm.slane %v3714, %v126
  %v3731 = vsel %vm460, %v3724, %v3723
  %v3732 = vsel %vm462, %v3725, %v3731
  %v3733 = vsel %vm464, %v3726, %v3732
  %v3734 = vsel %vm466, %v3727, %v3733
  %v3735 = vsel %vm468, %v3728, %v3734
  %v3736 = vsel %vm470, %v3729, %v3735
  %v3737 = vsel %vm472, %v3730, %v3736
  %v3739 = vsel %vm3454, %v3737, %v3522
  %3740 = vst.msk [vmem:[#allocation4] sm:$0xff] %vm111, %v3739
  %s3741 = scalar_lea.vmem %s4, 40
  %v3742 = vld [vmem:[%s3741] sm:$0xff]
  %3743 = vset.pattern.permute.xlu0 0
  %3744 = vperm.xlu0 %3743, %v3742
  %v3745 = vpop.permute.xlu0 %3744
  %vm3746 = vcmp.eq.s32.totalorder %v126, %v3745
  %v3747 = vsel %vm3746, 1, 0
  %v3748 = vcvt.s32.f32 %v3747
  %v3750 = vrot.slane %v3748, 1
  %v3751 = vrot.slane %v3748, 2
  %v3752 = vrot.slane %v3748, 3
  %v3753 = vrot.slane %v3748, 4
  %v3754 = vrot.slane %v3748, 5
  %v3755 = vrot.slane %v3748, 6
  %v3756 = vrot.slane %v3748, 7
  %v3757 = vperm.slane %v3748, 0
  %v3758 = vperm.slane %v3750, 0
  %v3759 = vperm.slane %v3751, 0
  %v3760 = vperm.slane %v3752, 0
  %v3761 = vperm.slane %v3753, 0
  %v3762 = vperm.slane %v3754, 0
  %v3763 = vperm.slane %v3755, 0
  %v3764 = vperm.slane %v3756, 0
  %v3773 = vmul.f32 %v121, %v3757
  %v3774 = vmul.f32 %v121, %v3758
  %v3775 = vmul.f32 %v121, %v3759
  %v3776 = vmul.f32 %v121, %v3760
  %v3777 = vmul.f32 %v121, %v3761
  %v3778 = vmul.f32 %v121, %v3762
  %v3779 = vmul.f32 %v121, %v3763
  %v3780 = vmul.f32 %v121, %v3764
  %v3781 = vsel %vm111, %v3773, 0.0
  %3782 = vadd.xlane.f32.xlu0 %v3781
  %v3783 = vpop.xlane.xlu0 %3782
  %v3784 = vsel %vm111, %v3774, 0.0
  %3785 = vadd.xlane.f32.xlu0 %v3784
  %v3786 = vpop.xlane.xlu0 %3785
  %v3787 = vsel %vm111, %v3775, 0.0
  %3788 = vadd.xlane.f32.xlu0 %v3787
  %v3789 = vpop.xlane.xlu0 %3788
  %v3790 = vsel %vm111, %v3776, 0.0
  %3791 = vadd.xlane.f32.xlu0 %v3790
  %v3792 = vpop.xlane.xlu0 %3791
  %v3793 = vsel %vm111, %v3777, 0.0
  %3794 = vadd.xlane.f32.xlu0 %v3793
  %v3795 = vpop.xlane.xlu0 %3794
  %v3796 = vsel %vm111, %v3778, 0.0
  %3797 = vadd.xlane.f32.xlu0 %v3796
  %v3798 = vpop.xlane.xlu0 %3797
  %v3799 = vsel %vm111, %v3779, 0.0
  %3800 = vadd.xlane.f32.xlu0 %v3799
  %v3801 = vpop.xlane.xlu0 %3800
  %v3802 = vsel %vm111, %v3780, 0.0
  %3803 = vadd.xlane.f32.xlu0 %v3802
  %v3804 = vpop.xlane.xlu0 %3803
  %v3806 = vperm.slane %v3180, 0
  %v3807 = vlaneseq
  %v3808 = vshrl.u32 %v3807, 7
  %3810 = vset.pattern.permute.xlu0 %v3808
  %3811 = vperm.xlu0 %3810, %v3806
  %v3812 = vpop.permute.xlu0 %3811
  %v3813 = vperm.slane %v3180, 1
  %v3814 = vlaneseq
  %v3815 = vshrl.u32 %v3814, 7
  %3817 = vset.pattern.permute.xlu0 %v3815
  %3818 = vperm.xlu0 %3817, %v3813
  %v3819 = vpop.permute.xlu0 %3818
  %v3820 = vperm.slane %v3180, 2
  %v3821 = vlaneseq
  %v3822 = vshrl.u32 %v3821, 7
  %3824 = vset.pattern.permute.xlu0 %v3822
  %3825 = vperm.xlu0 %3824, %v3820
  %v3826 = vpop.permute.xlu0 %3825
  %v3827 = vperm.slane %v3180, 3
  %v3828 = vlaneseq
  %v3829 = vshrl.u32 %v3828, 7
  %3831 = vset.pattern.permute.xlu0 %v3829
  %3832 = vperm.xlu0 %3831, %v3827
  %v3833 = vpop.permute.xlu0 %3832
  %v3834 = vperm.slane %v3180, 4
  %v3835 = vlaneseq
  %v3836 = vshrl.u32 %v3835, 7
  %3838 = vset.pattern.permute.xlu0 %v3836
  %3839 = vperm.xlu0 %3838, %v3834
  %v3840 = vpop.permute.xlu0 %3839
  %v3841 = vperm.slane %v3180, 5
  %v3842 = vlaneseq
  %v3843 = vshrl.u32 %v3842, 7
  %3845 = vset.pattern.permute.xlu0 %v3843
  %3846 = vperm.xlu0 %3845, %v3841
  %v3847 = vpop.permute.xlu0 %3846
  %v3848 = vperm.slane %v3180, 6
  %v3849 = vlaneseq
  %v3850 = vshrl.u32 %v3849, 7
  %3852 = vset.pattern.permute.xlu0 %v3850
  %3853 = vperm.xlu0 %3852, %v3848
  %v3854 = vpop.permute.xlu0 %3853
  %v3855 = vperm.slane %v3180, 7
  %v3856 = vlaneseq
  %v3857 = vshrl.u32 %v3856, 7
  %3859 = vset.pattern.permute.xlu0 %v3857
  %3860 = vperm.xlu0 %3859, %v3855
  %v3861 = vpop.permute.xlu0 %3860
  %v3870 = vmul.f32 %v3783, %v3812
  %v3871 = vmul.f32 %v3786, %v3819
  %v3872 = vmul.f32 %v3789, %v3826
  %v3873 = vmul.f32 %v3792, %v3833
  %v3874 = vmul.f32 %v3795, %v3840
  %v3875 = vmul.f32 %v3798, %v3847
  %v3876 = vmul.f32 %v3801, %v3854
  %v3877 = vmul.f32 %v3804, %v3861
  %3886 = vset.pattern.permute.xlu0 0
  %3887 = vperm.xlu0 %3886, %v3870
  %v3888 = vpop.permute.xlu0 %3887
  %3889 = vset.pattern.permute.xlu0 0
  %3890 = vperm.xlu0 %3889, %v3871
  %v3891 = vpop.permute.xlu0 %3890
  %3892 = vset.pattern.permute.xlu0 0
  %3893 = vperm.xlu0 %3892, %v3872
  %v3894 = vpop.permute.xlu0 %3893
  %3895 = vset.pattern.permute.xlu0 0
  %3896 = vperm.xlu0 %3895, %v3873
  %v3897 = vpop.permute.xlu0 %3896
  %3898 = vset.pattern.permute.xlu0 0
  %3899 = vperm.xlu0 %3898, %v3874
  %v3900 = vpop.permute.xlu0 %3899
  %3901 = vset.pattern.permute.xlu0 0
  %3902 = vperm.xlu0 %3901, %v3875
  %v3903 = vpop.permute.xlu0 %3902
  %3904 = vset.pattern.permute.xlu0 0
  %3905 = vperm.xlu0 %3904, %v3876
  %v3906 = vpop.permute.xlu0 %3905
  %3907 = vset.pattern.permute.xlu0 0
  %3908 = vperm.xlu0 %3907, %v3877
  %v3909 = vpop.permute.xlu0 %3908
  %v3910 = vperm.slane %v3888, %v126
  %v3911 = vperm.slane %v3891, %v126
  %v3912 = vperm.slane %v3894, %v126
  %v3913 = vperm.slane %v3897, %v126
  %v3914 = vperm.slane %v3900, %v126
  %v3915 = vperm.slane %v3903, %v126
  %v3916 = vperm.slane %v3906, %v126
  %v3917 = vperm.slane %v3909, %v126
  %v3918 = vsel %vm460, %v3911, %v3910
  %v3919 = vsel %vm462, %v3912, %v3918
  %v3920 = vsel %vm464, %v3913, %v3919
  %v3921 = vsel %vm466, %v3914, %v3920
  %v3922 = vsel %vm468, %v3915, %v3921
  %v3923 = vsel %vm470, %v3916, %v3922
  %v3924 = vsel %vm472, %v3917, %v3923
  %v3926 = vsel %vm111, %v3924, 0.0
  %3927 = vadd.xlane.f32.xlu0 %v3926
  %v3928 = vpop.xlane.xlu0 %3927
  %v3929 = vmul.f32 %v3182, %v3748
  %v3930 = vsel %vm111, %v3929, 0.0
  %3931 = vadd.xlane.f32.xlu0 %v3930
  %v3932 = vpop.xlane.xlu0 %3931
  %v3933 = vadd.f32 %v3928, %v3932
  %v3934 = vcvt.s32.f32 %v3450
  %v3935 = vmul.f32 %v3933, %v3934
  %v3936 = vadd.f32 %v3179, %v3935
  %v3937 = vsel %vm3454, %v3748, %v3180
  %s3938 = scalar_lea.vmem [#allocation2], 48
  %v3939 = vld [vmem:[%s3938] sm:$0xff]
  %vm3940 = vcmp.gt.s32.totalorder %v124, 6
  %v3941 = vld [vmem:[#allocation3] sm:$0xff]
  %v3943 = vrot.slane %v3941, 1
  %v3944 = vrot.slane %v3941, 2
  %v3945 = vrot.slane %v3941, 3
  %v3946 = vrot.slane %v3941, 4
  %v3947 = vrot.slane %v3941, 5
  %v3948 = vrot.slane %v3941, 6
  %v3949 = vrot.slane %v3941, 7
  %v3950 = vperm.slane %v3941, 0
  %v3951 = vperm.slane %v3943, 0
  %v3952 = vperm.slane %v3944, 0
  %v3953 = vperm.slane %v3945, 0
  %v3954 = vperm.slane %v3946, 0
  %v3955 = vperm.slane %v3947, 0
  %v3956 = vperm.slane %v3948, 0
  %v3957 = vperm.slane %v3949, 0
  %v3966 = vadd.f32 %v3950, %v120
  %v3967 = vadd.f32 %v3951, %v120
  %v3968 = vadd.f32 %v3952, %v120
  %v3969 = vadd.f32 %v3953, %v120
  %v3970 = vadd.f32 %v3954, %v120
  %v3971 = vadd.f32 %v3955, %v120
  %v3972 = vadd.f32 %v3956, %v120
  %v3973 = vadd.f32 %v3957, %v120
  %v3974 = vsel %vm111, %v3966, -inf
  %3975 = vmax.xlane.f32.xlu0 %v3974
  %v3976 = vpop.xlane.xlu0 %3975
  %v3977 = vsel %vm111, %v3967, -inf
  %3978 = vmax.xlane.f32.xlu0 %v3977
  %v3979 = vpop.xlane.xlu0 %3978
  %v3980 = vsel %vm111, %v3968, -inf
  %3981 = vmax.xlane.f32.xlu0 %v3980
  %v3982 = vpop.xlane.xlu0 %3981
  %v3983 = vsel %vm111, %v3969, -inf
  %3984 = vmax.xlane.f32.xlu0 %v3983
  %v3985 = vpop.xlane.xlu0 %3984
  %v3986 = vsel %vm111, %v3970, -inf
  %3987 = vmax.xlane.f32.xlu0 %v3986
  %v3988 = vpop.xlane.xlu0 %3987
  %v3989 = vsel %vm111, %v3971, -inf
  %3990 = vmax.xlane.f32.xlu0 %v3989
  %v3991 = vpop.xlane.xlu0 %3990
  %v3992 = vsel %vm111, %v3972, -inf
  %3993 = vmax.xlane.f32.xlu0 %v3992
  %v3994 = vpop.xlane.xlu0 %3993
  %v3995 = vsel %vm111, %v3973, -inf
  %3996 = vmax.xlane.f32.xlu0 %v3995
  %v3997 = vpop.xlane.xlu0 %3996
  %vm3998 = vcmp.ge.f32.partialorder %v3966, %v3976
  %vm3999 = vcmp.ge.f32.partialorder %v3967, %v3979
  %vm4000 = vcmp.ge.f32.partialorder %v3968, %v3982
  %vm4001 = vcmp.ge.f32.partialorder %v3969, %v3985
  %vm4002 = vcmp.ge.f32.partialorder %v3970, %v3988
  %vm4003 = vcmp.ge.f32.partialorder %v3971, %v3991
  %vm4004 = vcmp.ge.f32.partialorder %v3972, %v3994
  %vm4005 = vcmp.ge.f32.partialorder %v3973, %v3997
  %v4006 = vsel %vm3998, %v126, 8
  %v4007 = vsel %vm3999, %v126, 8
  %v4008 = vsel %vm4000, %v126, 8
  %v4009 = vsel %vm4001, %v126, 8
  %v4010 = vsel %vm4002, %v126, 8
  %v4011 = vsel %vm4003, %v126, 8
  %v4012 = vsel %vm4004, %v126, 8
  %v4013 = vsel %vm4005, %v126, 8
  %v4014 = vsel %vm111, %v4006, 2147483647
  %v4015 = vand.u32 %v4014, 65535
  %v4016 = vshra.s32 %v4014, 16
  %v4017 = vcvt.s32.f32 %v4015
  %v4018 = vcvt.s32.f32 %v4016
  %4019 = vmin.xlane.f32.xlu0 %v4018
  %v4020 = vpop.xlane.xlu0 %4019
  %vm4021 = vcmp.eq.f32.partialorder %v4018, %v4020
  %v4022 = vsel %vm4021, %v4017, inf
  %4023 = vmin.xlane.f32.xlu0 %v4022
  %v4024 = vpop.xlane.xlu0 %4023
  %v4025 = vcvt.f32.s32 %v4024
  %v4026 = vcvt.f32.s32 %v4020
  %v4027 = vshll.u32 %v4026, 16
  %v4028 = vadd.s32 %v4027, %v4025
  %v4029 = vsel %vm111, %v4007, 2147483647
  %v4030 = vand.u32 %v4029, 65535
  %v4031 = vshra.s32 %v4029, 16
  %v4032 = vcvt.s32.f32 %v4030
  %v4033 = vcvt.s32.f32 %v4031
  %4034 = vmin.xlane.f32.xlu0 %v4033
  %v4035 = vpop.xlane.xlu0 %4034
  %vm4036 = vcmp.eq.f32.partialorder %v4033, %v4035
  %v4037 = vsel %vm4036, %v4032, inf
  %4038 = vmin.xlane.f32.xlu0 %v4037
  %v4039 = vpop.xlane.xlu0 %4038
  %v4040 = vcvt.f32.s32 %v4039
  %v4041 = vcvt.f32.s32 %v4035
  %v4042 = vshll.u32 %v4041, 16
  %v4043 = vadd.s32 %v4042, %v4040
  %v4044 = vsel %vm111, %v4008, 2147483647
  %v4045 = vand.u32 %v4044, 65535
  %v4046 = vshra.s32 %v4044, 16
  %v4047 = vcvt.s32.f32 %v4045
  %v4048 = vcvt.s32.f32 %v4046
  %4049 = vmin.xlane.f32.xlu0 %v4048
  %v4050 = vpop.xlane.xlu0 %4049
  %vm4051 = vcmp.eq.f32.partialorder %v4048, %v4050
  %v4052 = vsel %vm4051, %v4047, inf
  %4053 = vmin.xlane.f32.xlu0 %v4052
  %v4054 = vpop.xlane.xlu0 %4053
  %v4055 = vcvt.f32.s32 %v4054
  %v4056 = vcvt.f32.s32 %v4050
  %v4057 = vshll.u32 %v4056, 16
  %v4058 = vadd.s32 %v4057, %v4055
  %v4059 = vsel %vm111, %v4009, 2147483647
  %v4060 = vand.u32 %v4059, 65535
  %v4061 = vshra.s32 %v4059, 16
  %v4062 = vcvt.s32.f32 %v4060
  %v4063 = vcvt.s32.f32 %v4061
  %4064 = vmin.xlane.f32.xlu0 %v4063
  %v4065 = vpop.xlane.xlu0 %4064
  %vm4066 = vcmp.eq.f32.partialorder %v4063, %v4065
  %v4067 = vsel %vm4066, %v4062, inf
  %4068 = vmin.xlane.f32.xlu0 %v4067
  %v4069 = vpop.xlane.xlu0 %4068
  %v4070 = vcvt.f32.s32 %v4069
  %v4071 = vcvt.f32.s32 %v4065
  %v4072 = vshll.u32 %v4071, 16
  %v4073 = vadd.s32 %v4072, %v4070
  %v4074 = vsel %vm111, %v4010, 2147483647
  %v4075 = vand.u32 %v4074, 65535
  %v4076 = vshra.s32 %v4074, 16
  %v4077 = vcvt.s32.f32 %v4075
  %v4078 = vcvt.s32.f32 %v4076
  %4079 = vmin.xlane.f32.xlu0 %v4078
  %v4080 = vpop.xlane.xlu0 %4079
  %vm4081 = vcmp.eq.f32.partialorder %v4078, %v4080
  %v4082 = vsel %vm4081, %v4077, inf
  %4083 = vmin.xlane.f32.xlu0 %v4082
  %v4084 = vpop.xlane.xlu0 %4083
  %v4085 = vcvt.f32.s32 %v4084
  %v4086 = vcvt.f32.s32 %v4080
  %v4087 = vshll.u32 %v4086, 16
  %v4088 = vadd.s32 %v4087, %v4085
  %v4089 = vsel %vm111, %v4011, 2147483647
  %v4090 = vand.u32 %v4089, 65535
  %v4091 = vshra.s32 %v4089, 16
  %v4092 = vcvt.s32.f32 %v4090
  %v4093 = vcvt.s32.f32 %v4091
  %4094 = vmin.xlane.f32.xlu0 %v4093
  %v4095 = vpop.xlane.xlu0 %4094
  %vm4096 = vcmp.eq.f32.partialorder %v4093, %v4095
  %v4097 = vsel %vm4096, %v4092, inf
  %4098 = vmin.xlane.f32.xlu0 %v4097
  %v4099 = vpop.xlane.xlu0 %4098
  %v4100 = vcvt.f32.s32 %v4099
  %v4101 = vcvt.f32.s32 %v4095
  %v4102 = vshll.u32 %v4101, 16
  %v4103 = vadd.s32 %v4102, %v4100
  %v4104 = vsel %vm111, %v4012, 2147483647
  %v4105 = vand.u32 %v4104, 65535
  %v4106 = vshra.s32 %v4104, 16
  %v4107 = vcvt.s32.f32 %v4105
  %v4108 = vcvt.s32.f32 %v4106
  %4109 = vmin.xlane.f32.xlu0 %v4108
  %v4110 = vpop.xlane.xlu0 %4109
  %vm4111 = vcmp.eq.f32.partialorder %v4108, %v4110
  %v4112 = vsel %vm4111, %v4107, inf
  %4113 = vmin.xlane.f32.xlu0 %v4112
  %v4114 = vpop.xlane.xlu0 %4113
  %v4115 = vcvt.f32.s32 %v4114
  %v4116 = vcvt.f32.s32 %v4110
  %v4117 = vshll.u32 %v4116, 16
  %v4118 = vadd.s32 %v4117, %v4115
  %v4119 = vsel %vm111, %v4013, 2147483647
  %v4120 = vand.u32 %v4119, 65535
  %v4121 = vshra.s32 %v4119, 16
  %v4122 = vcvt.s32.f32 %v4120
  %v4123 = vcvt.s32.f32 %v4121
  %4124 = vmin.xlane.f32.xlu0 %v4123
  %v4125 = vpop.xlane.xlu0 %4124
  %vm4126 = vcmp.eq.f32.partialorder %v4123, %v4125
  %v4127 = vsel %vm4126, %v4122, inf
  %4128 = vmin.xlane.f32.xlu0 %v4127
  %v4129 = vpop.xlane.xlu0 %4128
  %v4130 = vcvt.f32.s32 %v4129
  %v4131 = vcvt.f32.s32 %v4125
  %v4132 = vshll.u32 %v4131, 16
  %v4133 = vadd.s32 %v4132, %v4130
  %v4135 = vperm.slane %v3939, 0
  %v4136 = vlaneseq
  %v4137 = vshrl.u32 %v4136, 7
  %4139 = vset.pattern.permute.xlu0 %v4137
  %4140 = vperm.xlu0 %4139, %v4135
  %v4141 = vpop.permute.xlu0 %4140
  %v4142 = vperm.slane %v3939, 1
  %v4143 = vlaneseq
  %v4144 = vshrl.u32 %v4143, 7
  %4146 = vset.pattern.permute.xlu0 %v4144
  %4147 = vperm.xlu0 %4146, %v4142
  %v4148 = vpop.permute.xlu0 %4147
  %v4149 = vperm.slane %v3939, 2
  %v4150 = vlaneseq
  %v4151 = vshrl.u32 %v4150, 7
  %4153 = vset.pattern.permute.xlu0 %v4151
  %4154 = vperm.xlu0 %4153, %v4149
  %v4155 = vpop.permute.xlu0 %4154
  %v4156 = vperm.slane %v3939, 3
  %v4157 = vlaneseq
  %v4158 = vshrl.u32 %v4157, 7
  %4160 = vset.pattern.permute.xlu0 %v4158
  %4161 = vperm.xlu0 %4160, %v4156
  %v4162 = vpop.permute.xlu0 %4161
  %v4163 = vperm.slane %v3939, 4
  %v4164 = vlaneseq
  %v4165 = vshrl.u32 %v4164, 7
  %4167 = vset.pattern.permute.xlu0 %v4165
  %4168 = vperm.xlu0 %4167, %v4163
  %v4169 = vpop.permute.xlu0 %4168
  %v4170 = vperm.slane %v3939, 5
  %v4171 = vlaneseq
  %v4172 = vshrl.u32 %v4171, 7
  %4174 = vset.pattern.permute.xlu0 %v4172
  %4175 = vperm.xlu0 %4174, %v4170
  %v4176 = vpop.permute.xlu0 %4175
  %v4177 = vperm.slane %v3939, 6
  %v4178 = vlaneseq
  %v4179 = vshrl.u32 %v4178, 7
  %4181 = vset.pattern.permute.xlu0 %v4179
  %4182 = vperm.xlu0 %4181, %v4177
  %v4183 = vpop.permute.xlu0 %4182
  %v4184 = vperm.slane %v3939, 7
  %v4185 = vlaneseq
  %v4186 = vshrl.u32 %v4185, 7
  %4188 = vset.pattern.permute.xlu0 %v4186
  %4189 = vperm.xlu0 %4188, %v4184
  %v4190 = vpop.permute.xlu0 %4189
  %v4199 = vadd.f32 %v3976, %v4141
  %v4200 = vadd.f32 %v3979, %v4148
  %v4201 = vadd.f32 %v3982, %v4155
  %v4202 = vadd.f32 %v3985, %v4162
  %v4203 = vadd.f32 %v3988, %v4169
  %v4204 = vadd.f32 %v3991, %v4176
  %v4205 = vadd.f32 %v3994, %v4183
  %v4206 = vadd.f32 %v3997, %v4190
  %v4207 = vsel %vm3940, 1, 0
  %4208 = vset.pattern.permute.xlu0 0
  %4209 = vperm.xlu0 %4208, %v4207
  %v4210 = vpop.permute.xlu0 %4209
  %vm4211 = vcmp.eq.s32.totalorder %v4210, 1
  %4220 = vset.pattern.permute.xlu0 0
  %4221 = vperm.xlu0 %4220, %v4199
  %v4222 = vpop.permute.xlu0 %4221
  %4223 = vset.pattern.permute.xlu0 0
  %4224 = vperm.xlu0 %4223, %v4200
  %v4225 = vpop.permute.xlu0 %4224
  %4226 = vset.pattern.permute.xlu0 0
  %4227 = vperm.xlu0 %4226, %v4201
  %v4228 = vpop.permute.xlu0 %4227
  %4229 = vset.pattern.permute.xlu0 0
  %4230 = vperm.xlu0 %4229, %v4202
  %v4231 = vpop.permute.xlu0 %4230
  %4232 = vset.pattern.permute.xlu0 0
  %4233 = vperm.xlu0 %4232, %v4203
  %v4234 = vpop.permute.xlu0 %4233
  %4235 = vset.pattern.permute.xlu0 0
  %4236 = vperm.xlu0 %4235, %v4204
  %v4237 = vpop.permute.xlu0 %4236
  %4238 = vset.pattern.permute.xlu0 0
  %4239 = vperm.xlu0 %4238, %v4205
  %v4240 = vpop.permute.xlu0 %4239
  %4241 = vset.pattern.permute.xlu0 0
  %4242 = vperm.xlu0 %4241, %v4206
  %v4243 = vpop.permute.xlu0 %4242
  %v4244 = vperm.slane %v4222, %v126
  %v4245 = vperm.slane %v4225, %v126
  %v4246 = vperm.slane %v4228, %v126
  %v4247 = vperm.slane %v4231, %v126
  %v4248 = vperm.slane %v4234, %v126
  %v4249 = vperm.slane %v4237, %v126
  %v4250 = vperm.slane %v4240, %v126
  %v4251 = vperm.slane %v4243, %v126
  %v4252 = vsel %vm460, %v4245, %v4244
  %v4253 = vsel %vm462, %v4246, %v4252
  %v4254 = vsel %vm464, %v4247, %v4253
  %v4255 = vsel %vm466, %v4248, %v4254
  %v4256 = vsel %vm468, %v4249, %v4255
  %v4257 = vsel %vm470, %v4250, %v4256
  %v4258 = vsel %vm472, %v4251, %v4257
  %v4260 = vsel %vm4211, %v4258, %v3941
  %4261 = vst.msk [vmem:[#allocation3] sm:$0xff] %vm111, %v4260
  %v4262 = vperm.slane %v4028, %v126
  %v4263 = vperm.slane %v4043, %v126
  %v4264 = vperm.slane %v4058, %v126
  %v4265 = vperm.slane %v4073, %v126
  %v4266 = vperm.slane %v4088, %v126
  %v4267 = vperm.slane %v4103, %v126
  %v4268 = vperm.slane %v4118, %v126
  %v4269 = vperm.slane %v4133, %v126
  %v4270 = vsel %vm460, %v4263, %v4262
  %v4271 = vsel %vm462, %v4264, %v4270
  %v4272 = vsel %vm464, %v4265, %v4271
  %v4273 = vsel %vm466, %v4266, %v4272
  %v4274 = vsel %vm468, %v4267, %v4273
  %v4275 = vsel %vm470, %v4268, %v4274
  %v4276 = vsel %vm472, %v4269, %v4275
  %s4277 = scalar_lea.vmem %s10, 48
  %4278 = vst.msk [vmem:[%s4277] sm:$0xff] %vm111, %v4276
  %v4279 = vld [vmem:[#allocation4] sm:$0xff]
  %v4281 = vrot.slane %v4279, 1
  %v4282 = vrot.slane %v4279, 2
  %v4283 = vrot.slane %v4279, 3
  %v4284 = vrot.slane %v4279, 4
  %v4285 = vrot.slane %v4279, 5
  %v4286 = vrot.slane %v4279, 6
  %v4287 = vrot.slane %v4279, 7
  %v4288 = vperm.slane %v4279, 0
  %v4289 = vperm.slane %v4281, 0
  %v4290 = vperm.slane %v4282, 0
  %v4291 = vperm.slane %v4283, 0
  %v4292 = vperm.slane %v4284, 0
  %v4293 = vperm.slane %v4285, 0
  %v4294 = vperm.slane %v4286, 0
  %v4295 = vperm.slane %v4287, 0
  %v4304 = vadd.f32 %v4288, %v120
  %v4305 = vadd.f32 %v4289, %v120
  %v4306 = vadd.f32 %v4290, %v120
  %v4307 = vadd.f32 %v4291, %v120
  %v4308 = vadd.f32 %v4292, %v120
  %v4309 = vadd.f32 %v4293, %v120
  %v4310 = vadd.f32 %v4294, %v120
  %v4311 = vadd.f32 %v4295, %v120
  %v4312 = vperm.slane %v3939, 0
  %v4313 = vlaneseq
  %v4314 = vshrl.u32 %v4313, 7
  %4316 = vset.pattern.permute.xlu0 %v4314
  %4317 = vperm.xlu0 %4316, %v4312
  %v4318 = vpop.permute.xlu0 %4317
  %v4319 = vperm.slane %v3939, 1
  %v4320 = vlaneseq
  %v4321 = vshrl.u32 %v4320, 7
  %4323 = vset.pattern.permute.xlu0 %v4321
  %4324 = vperm.xlu0 %4323, %v4319
  %v4325 = vpop.permute.xlu0 %4324
  %v4326 = vperm.slane %v3939, 2
  %v4327 = vlaneseq
  %v4328 = vshrl.u32 %v4327, 7
  %4330 = vset.pattern.permute.xlu0 %v4328
  %4331 = vperm.xlu0 %4330, %v4326
  %v4332 = vpop.permute.xlu0 %4331
  %v4333 = vperm.slane %v3939, 3
  %v4334 = vlaneseq
  %v4335 = vshrl.u32 %v4334, 7
  %4337 = vset.pattern.permute.xlu0 %v4335
  %4338 = vperm.xlu0 %4337, %v4333
  %v4339 = vpop.permute.xlu0 %4338
  %v4340 = vperm.slane %v3939, 4
  %v4341 = vlaneseq
  %v4342 = vshrl.u32 %v4341, 7
  %4344 = vset.pattern.permute.xlu0 %v4342
  %4345 = vperm.xlu0 %4344, %v4340
  %v4346 = vpop.permute.xlu0 %4345
  %v4347 = vperm.slane %v3939, 5
  %v4348 = vlaneseq
  %v4349 = vshrl.u32 %v4348, 7
  %4351 = vset.pattern.permute.xlu0 %v4349
  %4352 = vperm.xlu0 %4351, %v4347
  %v4353 = vpop.permute.xlu0 %4352
  %v4354 = vperm.slane %v3939, 6
  %v4355 = vlaneseq
  %v4356 = vshrl.u32 %v4355, 7
  %4358 = vset.pattern.permute.xlu0 %v4356
  %4359 = vperm.xlu0 %4358, %v4354
  %v4360 = vpop.permute.xlu0 %4359
  %v4361 = vperm.slane %v3939, 7
  %v4362 = vlaneseq
  %v4363 = vshrl.u32 %v4362, 7
  %4365 = vset.pattern.permute.xlu0 %v4363
  %4366 = vperm.xlu0 %4365, %v4361
  %v4367 = vpop.permute.xlu0 %4366
  %v4368 = vadd.f32 %v4304, %v4318
  %v4369 = vadd.f32 %v4305, %v4325
  %v4370 = vadd.f32 %v4306, %v4332
  %v4371 = vadd.f32 %v4307, %v4339
  %v4372 = vadd.f32 %v4308, %v4346
  %v4373 = vadd.f32 %v4309, %v4353
  %v4374 = vadd.f32 %v4310, %v4360
  %v4375 = vadd.f32 %v4311, %v4367
  %v4376 = vsel %vm111, %v4368, -inf
  %4377 = vmax.xlane.f32.xlu0 %v4376
  %v4378 = vpop.xlane.xlu0 %4377
  %v4379 = vsel %vm111, %v4369, -inf
  %4380 = vmax.xlane.f32.xlu0 %v4379
  %v4381 = vpop.xlane.xlu0 %4380
  %v4382 = vsel %vm111, %v4370, -inf
  %4383 = vmax.xlane.f32.xlu0 %v4382
  %v4384 = vpop.xlane.xlu0 %4383
  %v4385 = vsel %vm111, %v4371, -inf
  %4386 = vmax.xlane.f32.xlu0 %v4385
  %v4387 = vpop.xlane.xlu0 %4386
  %v4388 = vsel %vm111, %v4372, -inf
  %4389 = vmax.xlane.f32.xlu0 %v4388
  %v4390 = vpop.xlane.xlu0 %4389
  %v4391 = vsel %vm111, %v4373, -inf
  %4392 = vmax.xlane.f32.xlu0 %v4391
  %v4393 = vpop.xlane.xlu0 %4392
  %v4394 = vsel %vm111, %v4374, -inf
  %4395 = vmax.xlane.f32.xlu0 %v4394
  %v4396 = vpop.xlane.xlu0 %4395
  %v4397 = vsel %vm111, %v4375, -inf
  %4398 = vmax.xlane.f32.xlu0 %v4397
  %v4399 = vpop.xlane.xlu0 %4398
  %v4400 = vsub.f32 %v4368, %v4378
  %v4401 = vsub.f32 %v4369, %v4381
  %v4402 = vsub.f32 %v4370, %v4384
  %v4403 = vsub.f32 %v4371, %v4387
  %v4404 = vsub.f32 %v4372, %v4390
  %v4405 = vsub.f32 %v4373, %v4393
  %v4406 = vsub.f32 %v4374, %v4396
  %v4407 = vsub.f32 %v4375, %v4399
  %v4408 = vmul.f32 %v4400, 1.442695
  %v4409 = vpow.pop %v4408
  %v4410 = vmul.f32 %v4401, 1.442695
  %v4411 = vpow.pop %v4410
  %v4412 = vmul.f32 %v4402, 1.442695
  %v4413 = vpow.pop %v4412
  %v4414 = vmul.f32 %v4403, 1.442695
  %v4415 = vpow.pop %v4414
  %v4416 = vmul.f32 %v4404, 1.442695
  %v4417 = vpow.pop %v4416
  %v4418 = vmul.f32 %v4405, 1.442695
  %v4419 = vpow.pop %v4418
  %v4420 = vmul.f32 %v4406, 1.442695
  %v4421 = vpow.pop %v4420
  %v4422 = vmul.f32 %v4407, 1.442695
  %v4423 = vpow.pop %v4422
  %v4424 = vsel %vm111, %v4409, 0.0
  %4425 = vadd.xlane.f32.xlu0 %v4424
  %v4426 = vpop.xlane.xlu0 %4425
  %v4427 = vsel %vm111, %v4411, 0.0
  %4428 = vadd.xlane.f32.xlu0 %v4427
  %v4429 = vpop.xlane.xlu0 %4428
  %v4430 = vsel %vm111, %v4413, 0.0
  %4431 = vadd.xlane.f32.xlu0 %v4430
  %v4432 = vpop.xlane.xlu0 %4431
  %v4433 = vsel %vm111, %v4415, 0.0
  %4434 = vadd.xlane.f32.xlu0 %v4433
  %v4435 = vpop.xlane.xlu0 %4434
  %v4436 = vsel %vm111, %v4417, 0.0
  %4437 = vadd.xlane.f32.xlu0 %v4436
  %v4438 = vpop.xlane.xlu0 %4437
  %v4439 = vsel %vm111, %v4419, 0.0
  %4440 = vadd.xlane.f32.xlu0 %v4439
  %v4441 = vpop.xlane.xlu0 %4440
  %v4442 = vsel %vm111, %v4421, 0.0
  %4443 = vadd.xlane.f32.xlu0 %v4442
  %v4444 = vpop.xlane.xlu0 %4443
  %v4445 = vsel %vm111, %v4423, 0.0
  %4446 = vadd.xlane.f32.xlu0 %v4445
  %v4447 = vpop.xlane.xlu0 %4446
  %v4448 = vlog2.pop %v4426
  %v4449 = vmul.f32 %v4448, 0.6931472
  %v4450 = vlog2.pop %v4429
  %v4451 = vmul.f32 %v4450, 0.6931472
  %v4452 = vlog2.pop %v4432
  %v4453 = vmul.f32 %v4452, 0.6931472
  %v4454 = vlog2.pop %v4435
  %v4455 = vmul.f32 %v4454, 0.6931472
  %v4456 = vlog2.pop %v4438
  %v4457 = vmul.f32 %v4456, 0.6931472
  %v4458 = vlog2.pop %v4441
  %v4459 = vmul.f32 %v4458, 0.6931472
  %v4460 = vlog2.pop %v4444
  %v4461 = vmul.f32 %v4460, 0.6931472
  %v4462 = vlog2.pop %v4447
  %v4463 = vmul.f32 %v4462, 0.6931472
  %v4464 = vadd.f32 %v4378, %v4449
  %v4465 = vadd.f32 %v4381, %v4451
  %v4466 = vadd.f32 %v4384, %v4453
  %v4467 = vadd.f32 %v4387, %v4455
  %v4468 = vadd.f32 %v4390, %v4457
  %v4469 = vadd.f32 %v4393, %v4459
  %v4470 = vadd.f32 %v4396, %v4461
  %v4471 = vadd.f32 %v4399, %v4463
  %v4480 = vperm.slane %v4464, %v126
  %v4481 = vperm.slane %v4465, %v126
  %v4482 = vperm.slane %v4466, %v126
  %v4483 = vperm.slane %v4467, %v126
  %v4484 = vperm.slane %v4468, %v126
  %v4485 = vperm.slane %v4469, %v126
  %v4486 = vperm.slane %v4470, %v126
  %v4487 = vperm.slane %v4471, %v126
  %v4488 = vsel %vm460, %v4481, %v4480
  %v4489 = vsel %vm462, %v4482, %v4488
  %v4490 = vsel %vm464, %v4483, %v4489
  %v4491 = vsel %vm466, %v4484, %v4490
  %v4492 = vsel %vm468, %v4485, %v4491
  %v4493 = vsel %vm470, %v4486, %v4492
  %v4494 = vsel %vm472, %v4487, %v4493
  %v4496 = vsel %vm4211, %v4494, %v4279
  %4497 = vst.msk [vmem:[#allocation4] sm:$0xff] %vm111, %v4496
  %s4498 = scalar_lea.vmem %s4, 48
  %v4499 = vld [vmem:[%s4498] sm:$0xff]
  %4500 = vset.pattern.permute.xlu0 0
  %4501 = vperm.xlu0 %4500, %v4499
  %v4502 = vpop.permute.xlu0 %4501
  %vm4503 = vcmp.eq.s32.totalorder %v126, %v4502
  %v4504 = vsel %vm4503, 1, 0
  %v4505 = vcvt.s32.f32 %v4504
  %v4507 = vrot.slane %v4505, 1
  %v4508 = vrot.slane %v4505, 2
  %v4509 = vrot.slane %v4505, 3
  %v4510 = vrot.slane %v4505, 4
  %v4511 = vrot.slane %v4505, 5
  %v4512 = vrot.slane %v4505, 6
  %v4513 = vrot.slane %v4505, 7
  %v4514 = vperm.slane %v4505, 0
  %v4515 = vperm.slane %v4507, 0
  %v4516 = vperm.slane %v4508, 0
  %v4517 = vperm.slane %v4509, 0
  %v4518 = vperm.slane %v4510, 0
  %v4519 = vperm.slane %v4511, 0
  %v4520 = vperm.slane %v4512, 0
  %v4521 = vperm.slane %v4513, 0
  %v4530 = vmul.f32 %v121, %v4514
  %v4531 = vmul.f32 %v121, %v4515
  %v4532 = vmul.f32 %v121, %v4516
  %v4533 = vmul.f32 %v121, %v4517
  %v4534 = vmul.f32 %v121, %v4518
  %v4535 = vmul.f32 %v121, %v4519
  %v4536 = vmul.f32 %v121, %v4520
  %v4537 = vmul.f32 %v121, %v4521
  %v4538 = vsel %vm111, %v4530, 0.0
  %4539 = vadd.xlane.f32.xlu0 %v4538
  %v4540 = vpop.xlane.xlu0 %4539
  %v4541 = vsel %vm111, %v4531, 0.0
  %4542 = vadd.xlane.f32.xlu0 %v4541
  %v4543 = vpop.xlane.xlu0 %4542
  %v4544 = vsel %vm111, %v4532, 0.0
  %4545 = vadd.xlane.f32.xlu0 %v4544
  %v4546 = vpop.xlane.xlu0 %4545
  %v4547 = vsel %vm111, %v4533, 0.0
  %4548 = vadd.xlane.f32.xlu0 %v4547
  %v4549 = vpop.xlane.xlu0 %4548
  %v4550 = vsel %vm111, %v4534, 0.0
  %4551 = vadd.xlane.f32.xlu0 %v4550
  %v4552 = vpop.xlane.xlu0 %4551
  %v4553 = vsel %vm111, %v4535, 0.0
  %4554 = vadd.xlane.f32.xlu0 %v4553
  %v4555 = vpop.xlane.xlu0 %4554
  %v4556 = vsel %vm111, %v4536, 0.0
  %4557 = vadd.xlane.f32.xlu0 %v4556
  %v4558 = vpop.xlane.xlu0 %4557
  %v4559 = vsel %vm111, %v4537, 0.0
  %4560 = vadd.xlane.f32.xlu0 %v4559
  %v4561 = vpop.xlane.xlu0 %4560
  %v4563 = vperm.slane %v3937, 0
  %v4564 = vlaneseq
  %v4565 = vshrl.u32 %v4564, 7
  %4567 = vset.pattern.permute.xlu0 %v4565
  %4568 = vperm.xlu0 %4567, %v4563
  %v4569 = vpop.permute.xlu0 %4568
  %v4570 = vperm.slane %v3937, 1
  %v4571 = vlaneseq
  %v4572 = vshrl.u32 %v4571, 7
  %4574 = vset.pattern.permute.xlu0 %v4572
  %4575 = vperm.xlu0 %4574, %v4570
  %v4576 = vpop.permute.xlu0 %4575
  %v4577 = vperm.slane %v3937, 2
  %v4578 = vlaneseq
  %v4579 = vshrl.u32 %v4578, 7
  %4581 = vset.pattern.permute.xlu0 %v4579
  %4582 = vperm.xlu0 %4581, %v4577
  %v4583 = vpop.permute.xlu0 %4582
  %v4584 = vperm.slane %v3937, 3
  %v4585 = vlaneseq
  %v4586 = vshrl.u32 %v4585, 7
  %4588 = vset.pattern.permute.xlu0 %v4586
  %4589 = vperm.xlu0 %4588, %v4584
  %v4590 = vpop.permute.xlu0 %4589
  %v4591 = vperm.slane %v3937, 4
  %v4592 = vlaneseq
  %v4593 = vshrl.u32 %v4592, 7
  %4595 = vset.pattern.permute.xlu0 %v4593
  %4596 = vperm.xlu0 %4595, %v4591
  %v4597 = vpop.permute.xlu0 %4596
  %v4598 = vperm.slane %v3937, 5
  %v4599 = vlaneseq
  %v4600 = vshrl.u32 %v4599, 7
  %4602 = vset.pattern.permute.xlu0 %v4600
  %4603 = vperm.xlu0 %4602, %v4598
  %v4604 = vpop.permute.xlu0 %4603
  %v4605 = vperm.slane %v3937, 6
  %v4606 = vlaneseq
  %v4607 = vshrl.u32 %v4606, 7
  %4609 = vset.pattern.permute.xlu0 %v4607
  %4610 = vperm.xlu0 %4609, %v4605
  %v4611 = vpop.permute.xlu0 %4610
  %v4612 = vperm.slane %v3937, 7
  %v4613 = vlaneseq
  %v4614 = vshrl.u32 %v4613, 7
  %4616 = vset.pattern.permute.xlu0 %v4614
  %4617 = vperm.xlu0 %4616, %v4612
  %v4618 = vpop.permute.xlu0 %4617
  %v4627 = vmul.f32 %v4540, %v4569
  %v4628 = vmul.f32 %v4543, %v4576
  %v4629 = vmul.f32 %v4546, %v4583
  %v4630 = vmul.f32 %v4549, %v4590
  %v4631 = vmul.f32 %v4552, %v4597
  %v4632 = vmul.f32 %v4555, %v4604
  %v4633 = vmul.f32 %v4558, %v4611
  %v4634 = vmul.f32 %v4561, %v4618
  %4643 = vset.pattern.permute.xlu0 0
  %4644 = vperm.xlu0 %4643, %v4627
  %v4645 = vpop.permute.xlu0 %4644
  %4646 = vset.pattern.permute.xlu0 0
  %4647 = vperm.xlu0 %4646, %v4628
  %v4648 = vpop.permute.xlu0 %4647
  %4649 = vset.pattern.permute.xlu0 0
  %4650 = vperm.xlu0 %4649, %v4629
  %v4651 = vpop.permute.xlu0 %4650
  %4652 = vset.pattern.permute.xlu0 0
  %4653 = vperm.xlu0 %4652, %v4630
  %v4654 = vpop.permute.xlu0 %4653
  %4655 = vset.pattern.permute.xlu0 0
  %4656 = vperm.xlu0 %4655, %v4631
  %v4657 = vpop.permute.xlu0 %4656
  %4658 = vset.pattern.permute.xlu0 0
  %4659 = vperm.xlu0 %4658, %v4632
  %v4660 = vpop.permute.xlu0 %4659
  %4661 = vset.pattern.permute.xlu0 0
  %4662 = vperm.xlu0 %4661, %v4633
  %v4663 = vpop.permute.xlu0 %4662
  %4664 = vset.pattern.permute.xlu0 0
  %4665 = vperm.xlu0 %4664, %v4634
  %v4666 = vpop.permute.xlu0 %4665
  %v4667 = vperm.slane %v4645, %v126
  %v4668 = vperm.slane %v4648, %v126
  %v4669 = vperm.slane %v4651, %v126
  %v4670 = vperm.slane %v4654, %v126
  %v4671 = vperm.slane %v4657, %v126
  %v4672 = vperm.slane %v4660, %v126
  %v4673 = vperm.slane %v4663, %v126
  %v4674 = vperm.slane %v4666, %v126
  %v4675 = vsel %vm460, %v4668, %v4667
  %v4676 = vsel %vm462, %v4669, %v4675
  %v4677 = vsel %vm464, %v4670, %v4676
  %v4678 = vsel %vm466, %v4671, %v4677
  %v4679 = vsel %vm468, %v4672, %v4678
  %v4680 = vsel %vm470, %v4673, %v4679
  %v4681 = vsel %vm472, %v4674, %v4680
  %v4683 = vsel %vm111, %v4681, 0.0
  %4684 = vadd.xlane.f32.xlu0 %v4683
  %v4685 = vpop.xlane.xlu0 %4684
  %v4686 = vmul.f32 %v3939, %v4505
  %v4687 = vsel %vm111, %v4686, 0.0
  %4688 = vadd.xlane.f32.xlu0 %v4687
  %v4689 = vpop.xlane.xlu0 %4688
  %v4690 = vadd.f32 %v4685, %v4689
  %v4691 = vcvt.s32.f32 %v4207
  %v4692 = vmul.f32 %v4690, %v4691
  %v4693 = vadd.f32 %v3936, %v4692
  %v4694 = vsel %vm4211, %v4505, %v3937
  %s4695 = scalar_lea.vmem [#allocation2], 56
  %v4696 = vld [vmem:[%s4695] sm:$0xff]
  %vm4697 = vcmp.gt.s32.totalorder %v124, 7
  %v4698 = vld [vmem:[#allocation3] sm:$0xff]
  %v4700 = vrot.slane %v4698, 1
  %v4701 = vrot.slane %v4698, 2
  %v4702 = vrot.slane %v4698, 3
  %v4703 = vrot.slane %v4698, 4
  %v4704 = vrot.slane %v4698, 5
  %v4705 = vrot.slane %v4698, 6
  %v4706 = vrot.slane %v4698, 7
  %v4707 = vperm.slane %v4698, 0
  %v4708 = vperm.slane %v4700, 0
  %v4709 = vperm.slane %v4701, 0
  %v4710 = vperm.slane %v4702, 0
  %v4711 = vperm.slane %v4703, 0
  %v4712 = vperm.slane %v4704, 0
  %v4713 = vperm.slane %v4705, 0
  %v4714 = vperm.slane %v4706, 0
  %v4723 = vadd.f32 %v4707, %v120
  %v4724 = vadd.f32 %v4708, %v120
  %v4725 = vadd.f32 %v4709, %v120
  %v4726 = vadd.f32 %v4710, %v120
  %v4727 = vadd.f32 %v4711, %v120
  %v4728 = vadd.f32 %v4712, %v120
  %v4729 = vadd.f32 %v4713, %v120
  %v4730 = vadd.f32 %v4714, %v120
  %v4731 = vsel %vm111, %v4723, -inf
  %4732 = vmax.xlane.f32.xlu0 %v4731
  %v4733 = vpop.xlane.xlu0 %4732
  %v4734 = vsel %vm111, %v4724, -inf
  %4735 = vmax.xlane.f32.xlu0 %v4734
  %v4736 = vpop.xlane.xlu0 %4735
  %v4737 = vsel %vm111, %v4725, -inf
  %4738 = vmax.xlane.f32.xlu0 %v4737
  %v4739 = vpop.xlane.xlu0 %4738
  %v4740 = vsel %vm111, %v4726, -inf
  %4741 = vmax.xlane.f32.xlu0 %v4740
  %v4742 = vpop.xlane.xlu0 %4741
  %v4743 = vsel %vm111, %v4727, -inf
  %4744 = vmax.xlane.f32.xlu0 %v4743
  %v4745 = vpop.xlane.xlu0 %4744
  %v4746 = vsel %vm111, %v4728, -inf
  %4747 = vmax.xlane.f32.xlu0 %v4746
  %v4748 = vpop.xlane.xlu0 %4747
  %v4749 = vsel %vm111, %v4729, -inf
  %4750 = vmax.xlane.f32.xlu0 %v4749
  %v4751 = vpop.xlane.xlu0 %4750
  %v4752 = vsel %vm111, %v4730, -inf
  %4753 = vmax.xlane.f32.xlu0 %v4752
  %v4754 = vpop.xlane.xlu0 %4753
  %vm4755 = vcmp.ge.f32.partialorder %v4723, %v4733
  %vm4756 = vcmp.ge.f32.partialorder %v4724, %v4736
  %vm4757 = vcmp.ge.f32.partialorder %v4725, %v4739
  %vm4758 = vcmp.ge.f32.partialorder %v4726, %v4742
  %vm4759 = vcmp.ge.f32.partialorder %v4727, %v4745
  %vm4760 = vcmp.ge.f32.partialorder %v4728, %v4748
  %vm4761 = vcmp.ge.f32.partialorder %v4729, %v4751
  %vm4762 = vcmp.ge.f32.partialorder %v4730, %v4754
  %v4763 = vsel %vm4755, %v126, 8
  %v4764 = vsel %vm4756, %v126, 8
  %v4765 = vsel %vm4757, %v126, 8
  %v4766 = vsel %vm4758, %v126, 8
  %v4767 = vsel %vm4759, %v126, 8
  %v4768 = vsel %vm4760, %v126, 8
  %v4769 = vsel %vm4761, %v126, 8
  %v4770 = vsel %vm4762, %v126, 8
  %v4771 = vsel %vm111, %v4763, 2147483647
  %v4772 = vand.u32 %v4771, 65535
  %v4773 = vshra.s32 %v4771, 16
  %v4774 = vcvt.s32.f32 %v4772
  %v4775 = vcvt.s32.f32 %v4773
  %4776 = vmin.xlane.f32.xlu0 %v4775
  %v4777 = vpop.xlane.xlu0 %4776
  %vm4778 = vcmp.eq.f32.partialorder %v4775, %v4777
  %v4779 = vsel %vm4778, %v4774, inf
  %4780 = vmin.xlane.f32.xlu0 %v4779
  %v4781 = vpop.xlane.xlu0 %4780
  %v4782 = vcvt.f32.s32 %v4781
  %v4783 = vcvt.f32.s32 %v4777
  %v4784 = vshll.u32 %v4783, 16
  %v4785 = vadd.s32 %v4784, %v4782
  %v4786 = vsel %vm111, %v4764, 2147483647
  %v4787 = vand.u32 %v4786, 65535
  %v4788 = vshra.s32 %v4786, 16
  %v4789 = vcvt.s32.f32 %v4787
  %v4790 = vcvt.s32.f32 %v4788
  %4791 = vmin.xlane.f32.xlu0 %v4790
  %v4792 = vpop.xlane.xlu0 %4791
  %vm4793 = vcmp.eq.f32.partialorder %v4790, %v4792
  %v4794 = vsel %vm4793, %v4789, inf
  %4795 = vmin.xlane.f32.xlu0 %v4794
  %v4796 = vpop.xlane.xlu0 %4795
  %v4797 = vcvt.f32.s32 %v4796
  %v4798 = vcvt.f32.s32 %v4792
  %v4799 = vshll.u32 %v4798, 16
  %v4800 = vadd.s32 %v4799, %v4797
  %v4801 = vsel %vm111, %v4765, 2147483647
  %v4802 = vand.u32 %v4801, 65535
  %v4803 = vshra.s32 %v4801, 16
  %v4804 = vcvt.s32.f32 %v4802
  %v4805 = vcvt.s32.f32 %v4803
  %4806 = vmin.xlane.f32.xlu0 %v4805
  %v4807 = vpop.xlane.xlu0 %4806
  %vm4808 = vcmp.eq.f32.partialorder %v4805, %v4807
  %v4809 = vsel %vm4808, %v4804, inf
  %4810 = vmin.xlane.f32.xlu0 %v4809
  %v4811 = vpop.xlane.xlu0 %4810
  %v4812 = vcvt.f32.s32 %v4811
  %v4813 = vcvt.f32.s32 %v4807
  %v4814 = vshll.u32 %v4813, 16
  %v4815 = vadd.s32 %v4814, %v4812
  %v4816 = vsel %vm111, %v4766, 2147483647
  %v4817 = vand.u32 %v4816, 65535
  %v4818 = vshra.s32 %v4816, 16
  %v4819 = vcvt.s32.f32 %v4817
  %v4820 = vcvt.s32.f32 %v4818
  %4821 = vmin.xlane.f32.xlu0 %v4820
  %v4822 = vpop.xlane.xlu0 %4821
  %vm4823 = vcmp.eq.f32.partialorder %v4820, %v4822
  %v4824 = vsel %vm4823, %v4819, inf
  %4825 = vmin.xlane.f32.xlu0 %v4824
  %v4826 = vpop.xlane.xlu0 %4825
  %v4827 = vcvt.f32.s32 %v4826
  %v4828 = vcvt.f32.s32 %v4822
  %v4829 = vshll.u32 %v4828, 16
  %v4830 = vadd.s32 %v4829, %v4827
  %v4831 = vsel %vm111, %v4767, 2147483647
  %v4832 = vand.u32 %v4831, 65535
  %v4833 = vshra.s32 %v4831, 16
  %v4834 = vcvt.s32.f32 %v4832
  %v4835 = vcvt.s32.f32 %v4833
  %4836 = vmin.xlane.f32.xlu0 %v4835
  %v4837 = vpop.xlane.xlu0 %4836
  %vm4838 = vcmp.eq.f32.partialorder %v4835, %v4837
  %v4839 = vsel %vm4838, %v4834, inf
  %4840 = vmin.xlane.f32.xlu0 %v4839
  %v4841 = vpop.xlane.xlu0 %4840
  %v4842 = vcvt.f32.s32 %v4841
  %v4843 = vcvt.f32.s32 %v4837
  %v4844 = vshll.u32 %v4843, 16
  %v4845 = vadd.s32 %v4844, %v4842
  %v4846 = vsel %vm111, %v4768, 2147483647
  %v4847 = vand.u32 %v4846, 65535
  %v4848 = vshra.s32 %v4846, 16
  %v4849 = vcvt.s32.f32 %v4847
  %v4850 = vcvt.s32.f32 %v4848
  %4851 = vmin.xlane.f32.xlu0 %v4850
  %v4852 = vpop.xlane.xlu0 %4851
  %vm4853 = vcmp.eq.f32.partialorder %v4850, %v4852
  %v4854 = vsel %vm4853, %v4849, inf
  %4855 = vmin.xlane.f32.xlu0 %v4854
  %v4856 = vpop.xlane.xlu0 %4855
  %v4857 = vcvt.f32.s32 %v4856
  %v4858 = vcvt.f32.s32 %v4852
  %v4859 = vshll.u32 %v4858, 16
  %v4860 = vadd.s32 %v4859, %v4857
  %v4861 = vsel %vm111, %v4769, 2147483647
  %v4862 = vand.u32 %v4861, 65535
  %v4863 = vshra.s32 %v4861, 16
  %v4864 = vcvt.s32.f32 %v4862
  %v4865 = vcvt.s32.f32 %v4863
  %4866 = vmin.xlane.f32.xlu0 %v4865
  %v4867 = vpop.xlane.xlu0 %4866
  %vm4868 = vcmp.eq.f32.partialorder %v4865, %v4867
  %v4869 = vsel %vm4868, %v4864, inf
  %4870 = vmin.xlane.f32.xlu0 %v4869
  %v4871 = vpop.xlane.xlu0 %4870
  %v4872 = vcvt.f32.s32 %v4871
  %v4873 = vcvt.f32.s32 %v4867
  %v4874 = vshll.u32 %v4873, 16
  %v4875 = vadd.s32 %v4874, %v4872
  %v4876 = vsel %vm111, %v4770, 2147483647
  %v4877 = vand.u32 %v4876, 65535
  %v4878 = vshra.s32 %v4876, 16
  %v4879 = vcvt.s32.f32 %v4877
  %v4880 = vcvt.s32.f32 %v4878
  %4881 = vmin.xlane.f32.xlu0 %v4880
  %v4882 = vpop.xlane.xlu0 %4881
  %vm4883 = vcmp.eq.f32.partialorder %v4880, %v4882
  %v4884 = vsel %vm4883, %v4879, inf
  %4885 = vmin.xlane.f32.xlu0 %v4884
  %v4886 = vpop.xlane.xlu0 %4885
  %v4887 = vcvt.f32.s32 %v4886
  %v4888 = vcvt.f32.s32 %v4882
  %v4889 = vshll.u32 %v4888, 16
  %v4890 = vadd.s32 %v4889, %v4887
  %v4892 = vperm.slane %v4696, 0
  %v4893 = vlaneseq
  %v4894 = vshrl.u32 %v4893, 7
  %4896 = vset.pattern.permute.xlu0 %v4894
  %4897 = vperm.xlu0 %4896, %v4892
  %v4898 = vpop.permute.xlu0 %4897
  %v4899 = vperm.slane %v4696, 1
  %v4900 = vlaneseq
  %v4901 = vshrl.u32 %v4900, 7
  %4903 = vset.pattern.permute.xlu0 %v4901
  %4904 = vperm.xlu0 %4903, %v4899
  %v4905 = vpop.permute.xlu0 %4904
  %v4906 = vperm.slane %v4696, 2
  %v4907 = vlaneseq
  %v4908 = vshrl.u32 %v4907, 7
  %4910 = vset.pattern.permute.xlu0 %v4908
  %4911 = vperm.xlu0 %4910, %v4906
  %v4912 = vpop.permute.xlu0 %4911
  %v4913 = vperm.slane %v4696, 3
  %v4914 = vlaneseq
  %v4915 = vshrl.u32 %v4914, 7
  %4917 = vset.pattern.permute.xlu0 %v4915
  %4918 = vperm.xlu0 %4917, %v4913
  %v4919 = vpop.permute.xlu0 %4918
  %v4920 = vperm.slane %v4696, 4
  %v4921 = vlaneseq
  %v4922 = vshrl.u32 %v4921, 7
  %4924 = vset.pattern.permute.xlu0 %v4922
  %4925 = vperm.xlu0 %4924, %v4920
  %v4926 = vpop.permute.xlu0 %4925
  %v4927 = vperm.slane %v4696, 5
  %v4928 = vlaneseq
  %v4929 = vshrl.u32 %v4928, 7
  %4931 = vset.pattern.permute.xlu0 %v4929
  %4932 = vperm.xlu0 %4931, %v4927
  %v4933 = vpop.permute.xlu0 %4932
  %v4934 = vperm.slane %v4696, 6
  %v4935 = vlaneseq
  %v4936 = vshrl.u32 %v4935, 7
  %4938 = vset.pattern.permute.xlu0 %v4936
  %4939 = vperm.xlu0 %4938, %v4934
  %v4940 = vpop.permute.xlu0 %4939
  %v4941 = vperm.slane %v4696, 7
  %v4942 = vlaneseq
  %v4943 = vshrl.u32 %v4942, 7
  %4945 = vset.pattern.permute.xlu0 %v4943
  %4946 = vperm.xlu0 %4945, %v4941
  %v4947 = vpop.permute.xlu0 %4946
  %v4956 = vadd.f32 %v4733, %v4898
  %v4957 = vadd.f32 %v4736, %v4905
  %v4958 = vadd.f32 %v4739, %v4912
  %v4959 = vadd.f32 %v4742, %v4919
  %v4960 = vadd.f32 %v4745, %v4926
  %v4961 = vadd.f32 %v4748, %v4933
  %v4962 = vadd.f32 %v4751, %v4940
  %v4963 = vadd.f32 %v4754, %v4947
  %v4964 = vsel %vm4697, 1, 0
  %4965 = vset.pattern.permute.xlu0 0
  %4966 = vperm.xlu0 %4965, %v4964
  %v4967 = vpop.permute.xlu0 %4966
  %vm4968 = vcmp.eq.s32.totalorder %v4967, 1
  %4977 = vset.pattern.permute.xlu0 0
  %4978 = vperm.xlu0 %4977, %v4956
  %v4979 = vpop.permute.xlu0 %4978
  %4980 = vset.pattern.permute.xlu0 0
  %4981 = vperm.xlu0 %4980, %v4957
  %v4982 = vpop.permute.xlu0 %4981
  %4983 = vset.pattern.permute.xlu0 0
  %4984 = vperm.xlu0 %4983, %v4958
  %v4985 = vpop.permute.xlu0 %4984
  %4986 = vset.pattern.permute.xlu0 0
  %4987 = vperm.xlu0 %4986, %v4959
  %v4988 = vpop.permute.xlu0 %4987
  %4989 = vset.pattern.permute.xlu0 0
  %4990 = vperm.xlu0 %4989, %v4960
  %v4991 = vpop.permute.xlu0 %4990
  %4992 = vset.pattern.permute.xlu0 0
  %4993 = vperm.xlu0 %4992, %v4961
  %v4994 = vpop.permute.xlu0 %4993
  %4995 = vset.pattern.permute.xlu0 0
  %4996 = vperm.xlu0 %4995, %v4962
  %v4997 = vpop.permute.xlu0 %4996
  %4998 = vset.pattern.permute.xlu0 0
  %4999 = vperm.xlu0 %4998, %v4963
  %v5000 = vpop.permute.xlu0 %4999
  %v5001 = vperm.slane %v4979, %v126
  %v5002 = vperm.slane %v4982, %v126
  %v5003 = vperm.slane %v4985, %v126
  %v5004 = vperm.slane %v4988, %v126
  %v5005 = vperm.slane %v4991, %v126
  %v5006 = vperm.slane %v4994, %v126
  %v5007 = vperm.slane %v4997, %v126
  %v5008 = vperm.slane %v5000, %v126
  %v5009 = vsel %vm460, %v5002, %v5001
  %v5010 = vsel %vm462, %v5003, %v5009
  %v5011 = vsel %vm464, %v5004, %v5010
  %v5012 = vsel %vm466, %v5005, %v5011
  %v5013 = vsel %vm468, %v5006, %v5012
  %v5014 = vsel %vm470, %v5007, %v5013
  %v5015 = vsel %vm472, %v5008, %v5014
  %v5017 = vsel %vm4968, %v5015, %v4698
  %5018 = vst.msk [vmem:[#allocation3] sm:$0xff] %vm111, %v5017
  %v5019 = vperm.slane %v4785, %v126
  %v5020 = vperm.slane %v4800, %v126
  %v5021 = vperm.slane %v4815, %v126
  %v5022 = vperm.slane %v4830, %v126
  %v5023 = vperm.slane %v4845, %v126
  %v5024 = vperm.slane %v4860, %v126
  %v5025 = vperm.slane %v4875, %v126
  %v5026 = vperm.slane %v4890, %v126
  %v5027 = vsel %vm460, %v5020, %v5019
  %v5028 = vsel %vm462, %v5021, %v5027
  %v5029 = vsel %vm464, %v5022, %v5028
  %v5030 = vsel %vm466, %v5023, %v5029
  %v5031 = vsel %vm468, %v5024, %v5030
  %v5032 = vsel %vm470, %v5025, %v5031
  %v5033 = vsel %vm472, %v5026, %v5032
  %s5034 = scalar_lea.vmem %s10, 56
  %5035 = vst.msk [vmem:[%s5034] sm:$0xff] %vm111, %v5033
  %v5036 = vld [vmem:[#allocation4] sm:$0xff]
  %v5038 = vrot.slane %v5036, 1
  %v5039 = vrot.slane %v5036, 2
  %v5040 = vrot.slane %v5036, 3
  %v5041 = vrot.slane %v5036, 4
  %v5042 = vrot.slane %v5036, 5
  %v5043 = vrot.slane %v5036, 6
  %v5044 = vrot.slane %v5036, 7
  %v5045 = vperm.slane %v5036, 0
  %v5046 = vperm.slane %v5038, 0
  %v5047 = vperm.slane %v5039, 0
  %v5048 = vperm.slane %v5040, 0
  %v5049 = vperm.slane %v5041, 0
  %v5050 = vperm.slane %v5042, 0
  %v5051 = vperm.slane %v5043, 0
  %v5052 = vperm.slane %v5044, 0
  %v5061 = vadd.f32 %v5045, %v120
  %v5062 = vadd.f32 %v5046, %v120
  %v5063 = vadd.f32 %v5047, %v120
  %v5064 = vadd.f32 %v5048, %v120
  %v5065 = vadd.f32 %v5049, %v120
  %v5066 = vadd.f32 %v5050, %v120
  %v5067 = vadd.f32 %v5051, %v120
  %v5068 = vadd.f32 %v5052, %v120
  %v5069 = vperm.slane %v4696, 0
  %v5070 = vlaneseq
  %v5071 = vshrl.u32 %v5070, 7
  %5073 = vset.pattern.permute.xlu0 %v5071
  %5074 = vperm.xlu0 %5073, %v5069
  %v5075 = vpop.permute.xlu0 %5074
  %v5076 = vperm.slane %v4696, 1
  %v5077 = vlaneseq
  %v5078 = vshrl.u32 %v5077, 7
  %5080 = vset.pattern.permute.xlu0 %v5078
  %5081 = vperm.xlu0 %5080, %v5076
  %v5082 = vpop.permute.xlu0 %5081
  %v5083 = vperm.slane %v4696, 2
  %v5084 = vlaneseq
  %v5085 = vshrl.u32 %v5084, 7
  %5087 = vset.pattern.permute.xlu0 %v5085
  %5088 = vperm.xlu0 %5087, %v5083
  %v5089 = vpop.permute.xlu0 %5088
  %v5090 = vperm.slane %v4696, 3
  %v5091 = vlaneseq
  %v5092 = vshrl.u32 %v5091, 7
  %5094 = vset.pattern.permute.xlu0 %v5092
  %5095 = vperm.xlu0 %5094, %v5090
  %v5096 = vpop.permute.xlu0 %5095
  %v5097 = vperm.slane %v4696, 4
  %v5098 = vlaneseq
  %v5099 = vshrl.u32 %v5098, 7
  %5101 = vset.pattern.permute.xlu0 %v5099
  %5102 = vperm.xlu0 %5101, %v5097
  %v5103 = vpop.permute.xlu0 %5102
  %v5104 = vperm.slane %v4696, 5
  %v5105 = vlaneseq
  %v5106 = vshrl.u32 %v5105, 7
  %5108 = vset.pattern.permute.xlu0 %v5106
  %5109 = vperm.xlu0 %5108, %v5104
  %v5110 = vpop.permute.xlu0 %5109
  %v5111 = vperm.slane %v4696, 6
  %v5112 = vlaneseq
  %v5113 = vshrl.u32 %v5112, 7
  %5115 = vset.pattern.permute.xlu0 %v5113
  %5116 = vperm.xlu0 %5115, %v5111
  %v5117 = vpop.permute.xlu0 %5116
  %v5118 = vperm.slane %v4696, 7
  %v5119 = vlaneseq
  %v5120 = vshrl.u32 %v5119, 7
  %5122 = vset.pattern.permute.xlu0 %v5120
  %5123 = vperm.xlu0 %5122, %v5118
  %v5124 = vpop.permute.xlu0 %5123
  %v5125 = vadd.f32 %v5061, %v5075
  %v5126 = vadd.f32 %v5062, %v5082
  %v5127 = vadd.f32 %v5063, %v5089
  %v5128 = vadd.f32 %v5064, %v5096
  %v5129 = vadd.f32 %v5065, %v5103
  %v5130 = vadd.f32 %v5066, %v5110
  %v5131 = vadd.f32 %v5067, %v5117
  %v5132 = vadd.f32 %v5068, %v5124
  %v5133 = vsel %vm111, %v5125, -inf
  %5134 = vmax.xlane.f32.xlu0 %v5133
  %v5135 = vpop.xlane.xlu0 %5134
  %v5136 = vsel %vm111, %v5126, -inf
  %5137 = vmax.xlane.f32.xlu0 %v5136
  %v5138 = vpop.xlane.xlu0 %5137
  %v5139 = vsel %vm111, %v5127, -inf
  %5140 = vmax.xlane.f32.xlu0 %v5139
  %v5141 = vpop.xlane.xlu0 %5140
  %v5142 = vsel %vm111, %v5128, -inf
  %5143 = vmax.xlane.f32.xlu0 %v5142
  %v5144 = vpop.xlane.xlu0 %5143
  %v5145 = vsel %vm111, %v5129, -inf
  %5146 = vmax.xlane.f32.xlu0 %v5145
  %v5147 = vpop.xlane.xlu0 %5146
  %v5148 = vsel %vm111, %v5130, -inf
  %5149 = vmax.xlane.f32.xlu0 %v5148
  %v5150 = vpop.xlane.xlu0 %5149
  %v5151 = vsel %vm111, %v5131, -inf
  %5152 = vmax.xlane.f32.xlu0 %v5151
  %v5153 = vpop.xlane.xlu0 %5152
  %v5154 = vsel %vm111, %v5132, -inf
  %5155 = vmax.xlane.f32.xlu0 %v5154
  %v5156 = vpop.xlane.xlu0 %5155
  %v5157 = vsub.f32 %v5125, %v5135
  %v5158 = vsub.f32 %v5126, %v5138
  %v5159 = vsub.f32 %v5127, %v5141
  %v5160 = vsub.f32 %v5128, %v5144
  %v5161 = vsub.f32 %v5129, %v5147
  %v5162 = vsub.f32 %v5130, %v5150
  %v5163 = vsub.f32 %v5131, %v5153
  %v5164 = vsub.f32 %v5132, %v5156
  %v5165 = vmul.f32 %v5157, 1.442695
  %v5166 = vpow.pop %v5165
  %v5167 = vmul.f32 %v5158, 1.442695
  %v5168 = vpow.pop %v5167
  %v5169 = vmul.f32 %v5159, 1.442695
  %v5170 = vpow.pop %v5169
  %v5171 = vmul.f32 %v5160, 1.442695
  %v5172 = vpow.pop %v5171
  %v5173 = vmul.f32 %v5161, 1.442695
  %v5174 = vpow.pop %v5173
  %v5175 = vmul.f32 %v5162, 1.442695
  %v5176 = vpow.pop %v5175
  %v5177 = vmul.f32 %v5163, 1.442695
  %v5178 = vpow.pop %v5177
  %v5179 = vmul.f32 %v5164, 1.442695
  %v5180 = vpow.pop %v5179
  %v5181 = vsel %vm111, %v5166, 0.0
  %5182 = vadd.xlane.f32.xlu0 %v5181
  %v5183 = vpop.xlane.xlu0 %5182
  %v5184 = vsel %vm111, %v5168, 0.0
  %5185 = vadd.xlane.f32.xlu0 %v5184
  %v5186 = vpop.xlane.xlu0 %5185
  %v5187 = vsel %vm111, %v5170, 0.0
  %5188 = vadd.xlane.f32.xlu0 %v5187
  %v5189 = vpop.xlane.xlu0 %5188
  %v5190 = vsel %vm111, %v5172, 0.0
  %5191 = vadd.xlane.f32.xlu0 %v5190
  %v5192 = vpop.xlane.xlu0 %5191
  %v5193 = vsel %vm111, %v5174, 0.0
  %5194 = vadd.xlane.f32.xlu0 %v5193
  %v5195 = vpop.xlane.xlu0 %5194
  %v5196 = vsel %vm111, %v5176, 0.0
  %5197 = vadd.xlane.f32.xlu0 %v5196
  %v5198 = vpop.xlane.xlu0 %5197
  %v5199 = vsel %vm111, %v5178, 0.0
  %5200 = vadd.xlane.f32.xlu0 %v5199
  %v5201 = vpop.xlane.xlu0 %5200
  %v5202 = vsel %vm111, %v5180, 0.0
  %5203 = vadd.xlane.f32.xlu0 %v5202
  %v5204 = vpop.xlane.xlu0 %5203
  %v5205 = vlog2.pop %v5183
  %v5206 = vmul.f32 %v5205, 0.6931472
  %v5207 = vlog2.pop %v5186
  %v5208 = vmul.f32 %v5207, 0.6931472
  %v5209 = vlog2.pop %v5189
  %v5210 = vmul.f32 %v5209, 0.6931472
  %v5211 = vlog2.pop %v5192
  %v5212 = vmul.f32 %v5211, 0.6931472
  %v5213 = vlog2.pop %v5195
  %v5214 = vmul.f32 %v5213, 0.6931472
  %v5215 = vlog2.pop %v5198
  %v5216 = vmul.f32 %v5215, 0.6931472
  %v5217 = vlog2.pop %v5201
  %v5218 = vmul.f32 %v5217, 0.6931472
  %v5219 = vlog2.pop %v5204
  %v5220 = vmul.f32 %v5219, 0.6931472
  %v5221 = vadd.f32 %v5135, %v5206
  %v5222 = vadd.f32 %v5138, %v5208
  %v5223 = vadd.f32 %v5141, %v5210
  %v5224 = vadd.f32 %v5144, %v5212
  %v5225 = vadd.f32 %v5147, %v5214
  %v5226 = vadd.f32 %v5150, %v5216
  %v5227 = vadd.f32 %v5153, %v5218
  %v5228 = vadd.f32 %v5156, %v5220
  %v5237 = vperm.slane %v5221, %v126
  %v5238 = vperm.slane %v5222, %v126
  %v5239 = vperm.slane %v5223, %v126
  %v5240 = vperm.slane %v5224, %v126
  %v5241 = vperm.slane %v5225, %v126
  %v5242 = vperm.slane %v5226, %v126
  %v5243 = vperm.slane %v5227, %v126
  %v5244 = vperm.slane %v5228, %v126
  %v5245 = vsel %vm460, %v5238, %v5237
  %v5246 = vsel %vm462, %v5239, %v5245
  %v5247 = vsel %vm464, %v5240, %v5246
  %v5248 = vsel %vm466, %v5241, %v5247
  %v5249 = vsel %vm468, %v5242, %v5248
  %v5250 = vsel %vm470, %v5243, %v5249
  %v5251 = vsel %vm472, %v5244, %v5250
  %v5253 = vsel %vm4968, %v5251, %v5036
  %5254 = vst.msk [vmem:[#allocation4] sm:$0xff] %vm111, %v5253
  %s5255 = scalar_lea.vmem %s4, 56
  %v5256 = vld [vmem:[%s5255] sm:$0xff]
  %5257 = vset.pattern.permute.xlu0 0
  %5258 = vperm.xlu0 %5257, %v5256
  %v5259 = vpop.permute.xlu0 %5258
  %vm5260 = vcmp.eq.s32.totalorder %v126, %v5259
  %v5261 = vsel %vm5260, 1, 0
  %v5262 = vcvt.s32.f32 %v5261
  %v5264 = vrot.slane %v5262, 1
  %v5265 = vrot.slane %v5262, 2
  %v5266 = vrot.slane %v5262, 3
  %v5267 = vrot.slane %v5262, 4
  %v5268 = vrot.slane %v5262, 5
  %v5269 = vrot.slane %v5262, 6
  %v5270 = vrot.slane %v5262, 7
  %v5271 = vperm.slane %v5262, 0
  %v5272 = vperm.slane %v5264, 0
  %v5273 = vperm.slane %v5265, 0
  %v5274 = vperm.slane %v5266, 0
  %v5275 = vperm.slane %v5267, 0
  %v5276 = vperm.slane %v5268, 0
  %v5277 = vperm.slane %v5269, 0
  %v5278 = vperm.slane %v5270, 0
  %v5287 = vmul.f32 %v121, %v5271
  %v5288 = vmul.f32 %v121, %v5272
  %v5289 = vmul.f32 %v121, %v5273
  %v5290 = vmul.f32 %v121, %v5274
  %v5291 = vmul.f32 %v121, %v5275
  %v5292 = vmul.f32 %v121, %v5276
  %v5293 = vmul.f32 %v121, %v5277
  %v5294 = vmul.f32 %v121, %v5278
  %v5295 = vsel %vm111, %v5287, 0.0
  %5296 = vadd.xlane.f32.xlu0 %v5295
  %v5297 = vpop.xlane.xlu0 %5296
  %v5298 = vsel %vm111, %v5288, 0.0
  %5299 = vadd.xlane.f32.xlu0 %v5298
  %v5300 = vpop.xlane.xlu0 %5299
  %v5301 = vsel %vm111, %v5289, 0.0
  %5302 = vadd.xlane.f32.xlu0 %v5301
  %v5303 = vpop.xlane.xlu0 %5302
  %v5304 = vsel %vm111, %v5290, 0.0
  %5305 = vadd.xlane.f32.xlu0 %v5304
  %v5306 = vpop.xlane.xlu0 %5305
  %v5307 = vsel %vm111, %v5291, 0.0
  %5308 = vadd.xlane.f32.xlu0 %v5307
  %v5309 = vpop.xlane.xlu0 %5308
  %v5310 = vsel %vm111, %v5292, 0.0
  %5311 = vadd.xlane.f32.xlu0 %v5310
  %v5312 = vpop.xlane.xlu0 %5311
  %v5313 = vsel %vm111, %v5293, 0.0
  %5314 = vadd.xlane.f32.xlu0 %v5313
  %v5315 = vpop.xlane.xlu0 %5314
  %v5316 = vsel %vm111, %v5294, 0.0
  %5317 = vadd.xlane.f32.xlu0 %v5316
  %v5318 = vpop.xlane.xlu0 %5317
  %v5320 = vperm.slane %v4694, 0
  %v5321 = vlaneseq
  %v5322 = vshrl.u32 %v5321, 7
  %5324 = vset.pattern.permute.xlu0 %v5322
  %5325 = vperm.xlu0 %5324, %v5320
  %v5326 = vpop.permute.xlu0 %5325
  %v5327 = vperm.slane %v4694, 1
  %v5328 = vlaneseq
  %v5329 = vshrl.u32 %v5328, 7
  %5331 = vset.pattern.permute.xlu0 %v5329
  %5332 = vperm.xlu0 %5331, %v5327
  %v5333 = vpop.permute.xlu0 %5332
  %v5334 = vperm.slane %v4694, 2
  %v5335 = vlaneseq
  %v5336 = vshrl.u32 %v5335, 7
  %5338 = vset.pattern.permute.xlu0 %v5336
  %5339 = vperm.xlu0 %5338, %v5334
  %v5340 = vpop.permute.xlu0 %5339
  %v5341 = vperm.slane %v4694, 3
  %v5342 = vlaneseq
  %v5343 = vshrl.u32 %v5342, 7
  %5345 = vset.pattern.permute.xlu0 %v5343
  %5346 = vperm.xlu0 %5345, %v5341
  %v5347 = vpop.permute.xlu0 %5346
  %v5348 = vperm.slane %v4694, 4
  %v5349 = vlaneseq
  %v5350 = vshrl.u32 %v5349, 7
  %5352 = vset.pattern.permute.xlu0 %v5350
  %5353 = vperm.xlu0 %5352, %v5348
  %v5354 = vpop.permute.xlu0 %5353
  %v5355 = vperm.slane %v4694, 5
  %v5356 = vlaneseq
  %v5357 = vshrl.u32 %v5356, 7
  %5359 = vset.pattern.permute.xlu0 %v5357
  %5360 = vperm.xlu0 %5359, %v5355
  %v5361 = vpop.permute.xlu0 %5360
  %v5362 = vperm.slane %v4694, 6
  %v5363 = vlaneseq
  %v5364 = vshrl.u32 %v5363, 7
  %5366 = vset.pattern.permute.xlu0 %v5364
  %5367 = vperm.xlu0 %5366, %v5362
  %v5368 = vpop.permute.xlu0 %5367
  %v5369 = vperm.slane %v4694, 7
  %v5370 = vlaneseq
  %v5371 = vshrl.u32 %v5370, 7
  %5373 = vset.pattern.permute.xlu0 %v5371
  %5374 = vperm.xlu0 %5373, %v5369
  %v5375 = vpop.permute.xlu0 %5374
  %v5384 = vmul.f32 %v5297, %v5326
  %v5385 = vmul.f32 %v5300, %v5333
  %v5386 = vmul.f32 %v5303, %v5340
  %v5387 = vmul.f32 %v5306, %v5347
  %v5388 = vmul.f32 %v5309, %v5354
  %v5389 = vmul.f32 %v5312, %v5361
  %v5390 = vmul.f32 %v5315, %v5368
  %v5391 = vmul.f32 %v5318, %v5375
  %5400 = vset.pattern.permute.xlu0 0
  %5401 = vperm.xlu0 %5400, %v5384
  %v5402 = vpop.permute.xlu0 %5401
  %5403 = vset.pattern.permute.xlu0 0
  %5404 = vperm.xlu0 %5403, %v5385
  %v5405 = vpop.permute.xlu0 %5404
  %5406 = vset.pattern.permute.xlu0 0
  %5407 = vperm.xlu0 %5406, %v5386
  %v5408 = vpop.permute.xlu0 %5407
  %5409 = vset.pattern.permute.xlu0 0
  %5410 = vperm.xlu0 %5409, %v5387
  %v5411 = vpop.permute.xlu0 %5410
  %5412 = vset.pattern.permute.xlu0 0
  %5413 = vperm.xlu0 %5412, %v5388
  %v5414 = vpop.permute.xlu0 %5413
  %5415 = vset.pattern.permute.xlu0 0
  %5416 = vperm.xlu0 %5415, %v5389
  %v5417 = vpop.permute.xlu0 %5416
  %5418 = vset.pattern.permute.xlu0 0
  %5419 = vperm.xlu0 %5418, %v5390
  %v5420 = vpop.permute.xlu0 %5419
  %5421 = vset.pattern.permute.xlu0 0
  %5422 = vperm.xlu0 %5421, %v5391
  %v5423 = vpop.permute.xlu0 %5422
  %v5424 = vperm.slane %v5402, %v126
  %v5425 = vperm.slane %v5405, %v126
  %v5426 = vperm.slane %v5408, %v126
  %v5427 = vperm.slane %v5411, %v126
  %v5428 = vperm.slane %v5414, %v126
  %v5429 = vperm.slane %v5417, %v126
  %v5430 = vperm.slane %v5420, %v126
  %v5431 = vperm.slane %v5423, %v126
  %v5432 = vsel %vm460, %v5425, %v5424
  %v5433 = vsel %vm462, %v5426, %v5432
  %v5434 = vsel %vm464, %v5427, %v5433
  %v5435 = vsel %vm466, %v5428, %v5434
  %v5436 = vsel %vm468, %v5429, %v5435
  %v5437 = vsel %vm470, %v5430, %v5436
  %v5438 = vsel %vm472, %v5431, %v5437
  %v5440 = vsel %vm111, %v5438, 0.0
  %5441 = vadd.xlane.f32.xlu0 %v5440
  %v5442 = vpop.xlane.xlu0 %5441
  %v5443 = vmul.f32 %v4696, %v5262
  %v5444 = vsel %vm111, %v5443, 0.0
  %5445 = vadd.xlane.f32.xlu0 %v5444
  %v5446 = vpop.xlane.xlu0 %5445
  %v5447 = vadd.f32 %v5442, %v5446
  %v5448 = vcvt.s32.f32 %v4964
  %v5449 = vmul.f32 %v5447, %v5448
  %v5450 = vadd.f32 %v4693, %v5449
  %v5451 = vsel %vm4968, %v5262, %v4694
  %v5452 = vld [vmem:[#allocation3] sm:$0xff]
  %v5454 = vperm.slane %v122, 0
  %v5456 = vadd.f32 %v5452, %v5454
  %5457 = vst.msk [vmem:[%s9] sm:$0xff] %vm111, %v5456
  %v5458 = vld [vmem:[#allocation4] sm:$0xff]
  %v5459 = vadd.f32 %v5458, %v5454
  %v5460 = vsel %vm111, %v5459, -inf
  %5461 = vmax.xlane.f32.xlu0 %v5460
  %v5462 = vpop.xlane.xlu0 %5461
  %v5463 = vsub.f32 %v5459, %v5462
  %v5464 = vmul.f32 %v5463, 1.442695
  %v5465 = vpow.pop %v5464
  %v5466 = vsel %vm111, %v5465, 0.0
  %5467 = vadd.xlane.f32.xlu0 %v5466
  %v5468 = vpop.xlane.xlu0 %5467
  %v5469 = vlog2.pop %v5468
  %v5470 = vmul.f32 %v5469, 0.6931472
  %v5471 = vadd.f32 %v5462, %v5470
  %vm5472 = vcmask 7168
  %5473 = vst.msk [vmem:[%s11] sm:$0xff] %vm5472, %v5471
  %v5474 = vmul.f32 %v5454, %v5451
  %v5475 = vsel %vm111, %v5474, 0.0
  %5476 = vadd.xlane.f32.xlu0 %v5475
  %v5477 = vpop.xlane.xlu0 %5476
  %v5478 = vadd.f32 %v5450, %v5477
  %5479 = vst.msk [vmem:[%s12] sm:$0xff] %vm5472, %v5478
  // Predicated region
  $region38: #{ner_forward.3} parent=0 // pred_check
    _
  $region39: #{ner_forward.3} parent=0 // pred_check_branch
    %5481 = sbr.rel (0) target = $region41
  $region40: #{ner_forward.3} parent=0 // pred_region
    _
  $region41: #{ner_forward.3} parent=0 // pred_fallthru
    _
  // Predicated region
  $region42: #{ner_forward.3} parent=0 // pred_check
    _
  $region43: #{ner_forward.3} parent=0 // pred_check_branch
    %5483 = sbr.rel (0) target = $region45
  $region44: #{ner_forward.3} parent=0 // pred_region
    _
  $region45: #{ner_forward.3} parent=0 // pred_fallthru
    _
  // Predicated region
  $region46: #{ner_forward.3} parent=0 // pred_check
    _
  $region47: #{ner_forward.3} parent=0 // pred_check_branch
    %5485 = sbr.rel (0) target = $region49
  $region48: #{ner_forward.3} parent=0 // pred_region
    _
  $region49: #{ner_forward.3} parent=0 // pred_fallthru
    _
  // Predicated region
  $region50: #{ner_forward.3} parent=0 // pred_check
    _
  $region51: #{ner_forward.3} parent=0 // pred_check_branch
    %5487 = sbr.rel (0) target = $region53
  $region52: #{ner_forward.3} parent=0 // pred_region
    _
  $region53: #{ner_forward.3} parent=0 // pred_fallthru
    _
  // Predicated region
  $region54: #{ner_forward.3} parent=0 // pred_check
    _
  $region55: #{ner_forward.3} parent=0 // pred_check_branch
    %5489 = sbr.rel (0) target = $region57
  $region56: #{ner_forward.3} parent=0 // pred_region
    _
  $region57: #{ner_forward.3} parent=0 // pred_fallthru
    _
  // Predicated region
  $region58: #{ner_forward.3} parent=0 // pred_check
    _
  $region59: #{ner_forward.3} parent=0 // pred_check_branch
    %5491 = sbr.rel (0) target = $region61
  $region60: #{ner_forward.3} parent=0 // pred_region
    _
  $region61: #{ner_forward.3} parent=0 // pred_fallthru
    _
  // Predicated region
  $region62: #{ner_forward.3} parent=0 // pred_check
    _
  $region63: #{ner_forward.3} parent=0 // pred_check_branch
    %5493 = sbr.rel (0) target = $region65
  $region64: #{ner_forward.3} parent=0 // pred_region
    _
  $region65: #{ner_forward.3} parent=0 // pred_fallthru
    _
  // Predicated region
  $region66: #{ner_forward.3} parent=0 // pred_check
    _
  $region67: #{ner_forward.3} parent=0 // pred_check_branch
    %5495 = sbr.rel (0) target = $region69
  $region68: #{ner_forward.3} parent=0 // pred_region
    _
  $region69: #{ner_forward.3} parent=0 // pred_fallthru
    _

</llo_original>
